<compile_context>
chip_gen: v7x
topology: tpu7x:2x2x1
jax: 0.10.0
libtpu: 0.0.40
codegen_flags: <defaults>
</compile_context>

<pallas_src>
import functools

import numpy as np
import jax
import jax.numpy as jnp
from jax.experimental import pallas as pl
from jax.experimental.pallas import tpu as pltpu


# ----------------------------------------------------------------------------
# Kernel helpers
# ----------------------------------------------------------------------------
def _tap_offsets(dil, H, W):
    """Flattened lane offsets of the 27 taps (tap = kz*9 + ky*3 + kx)."""
    offs = []
    for kz in range(3):
        for ky in range(3):
            for kx in range(3):
                offs.append(dil * ((kz - 1) * H * W + (ky - 1) * W + (kx - 1)))
    return offs


def _build_cols(act, mask_ref, col_ref, dil, *, H, W, width):
    """Write the im2col matrix of a dilated 3x3x3 'same' conv into col_ref.

    act     : (C, width) f32 value; `width` may be k*DHW with k volumes
              concatenated along lanes (roll wrap-around across the seams is
              exactly the set of positions the masks zero out).
    mask_ref: (27, width) f32 0/1 host-precomputed validity masks.
    col_ref : (27*C, >=width) VMEM scratch; rows [tap*C:(tap+1)*C], lanes
              [:width] are overwritten.  Row order matches the host-side
              (Cout, 27*Cin) weight reshape (column = tap*Cin + ci).
    """
    C = act.shape[0]
    for tap, off in enumerate(_tap_offsets(dil, H, W)):
        if off == 0:
            slab = act                                  # centre tap: no shift, all valid
        else:
            slab = pltpu.roll(act, shift=(-off) % width, axis=1)
            slab = slab * mask_ref[tap:tap + 1, :]      # zero out-of-bounds neighbours
        col_ref[tap * C:(tap + 1) * C, :width] = slab


def _dacblock_kernel(x_ref, m1_ref, m3_ref, m5_ref,
                     w1_ref, b1_ref, w2_ref, b2_ref, w3_ref, b3_ref,
                     w4_ref, b4_ref, o_ref, col_ref, *, H, W):
    C, N = x_ref.shape                                  # (channels, D*H*W)

    def conv(width, w_ref, b_ref):                      # one MXU matmul per 3x3x3 conv
        return jnp.dot(w_ref[...], col_ref[:, :width],
                       preferred_element_type=jnp.float32) + b_ref[...]

    def conv1x1_relu(v):
        r = jnp.dot(w4_ref[...], v, preferred_element_type=jnp.float32)
        return jnp.maximum(r + b4_ref[...], 0.0)

    x = x_ref[...].astype(jnp.float32)

    # dilate1(x) — pre-ReLU (the ReLU'd copy only feeds the residual sum).
    _build_cols(x, m1_ref, col_ref, 1, H=H, W=W, width=N)
    a1 = conv(N, w1_ref, b1_ref)

    # dilate2 applied to BOTH x and a1 (same weights), batched along lanes.
    _build_cols(jnp.concatenate([x, a1], axis=1), m3_ref, col_ref, 3,
                H=H, W=W, width=2 * N)
    t_b = conv(2 * N, w2_ref, b2_ref)                   # [ dilate2(x) | dilate2(dilate1(x)) ]
    d23 = conv1x1_relu(t_b)                             # both 1x1+ReLU branches in one matmul
    b12 = t_b[:, N:]                                    # pre-1x1 / pre-ReLU -> feeds dilate3

    # dilate3(dilate2(dilate1(x))).
    _build_cols(b12, m5_ref, col_ref, 5, H=H, W=W, width=N)
    d4 = conv1x1_relu(conv(N, w3_ref, b3_ref))

    out = x + jnp.maximum(a1, 0.0) + d23[:, :N] + d23[:, N:] + d4
    o_ref[...] = out.astype(o_ref.dtype)                # lane-dense store (last dim = DHW)


# ----------------------------------------------------------------------------
# Host-side mask precomputation (constants folded into the trace)
# ----------------------------------------------------------------------------
def _conv_masks(D, H, W, dil, reps=1):
    """(27, reps*D*H*W) f32 validity masks of a dilated 3x3x3 'same' conv."""
    z = np.arange(D)[:, None, None]
    y = np.arange(H)[None, :, None]
    x = np.arange(W)[None, None, :]
    rows = []
    for kz in range(3):
        for ky in range(3):
            for kx in range(3):
                dz, dy, dx = (kz - 1) * dil, (ky - 1) * dil, (kx - 1) * dil
                ok = ((z + dz >= 0) & (z + dz < D) &
                      (y + dy >= 0) & (y + dy < H) &
                      (x + dx >= 0) & (x + dx < W))
                rows.append(np.broadcast_to(ok, (D, H, W)).reshape(-1))
    m = np.stack(rows).astype(np.float32)               # (27, DHW)
    return np.tile(m, (1, reps))


# ----------------------------------------------------------------------------
# pallas_call wrapper
# ----------------------------------------------------------------------------
def dacblock_forward(params, x):
    """x: (N, C, D, H, W) float32 (PyTorch NCDHW). Returns the same layout."""
    N, C, D, H, W = x.shape
    DHW = D * H * W
    xf = x.reshape(N, C, DHW)                           # free reshape: spatial on lanes

    # Dilation-3 masks are pre-tiled to 2*DHW since dilate2 runs on [x | a1].
    m1 = jnp.asarray(_conv_masks(D, H, W, 1))
    m3 = jnp.asarray(_conv_masks(D, H, W, 3, reps=2))
    m5 = jnp.asarray(_conv_masks(D, H, W, 5))

    kernel = functools.partial(_dacblock_kernel, H=H, W=W)
    resident = lambda a: pl.BlockSpec(a.shape, lambda n: (0,) * a.ndim)
    sample = pl.BlockSpec((pl.Squeezed(), C, DHW), lambda n: (n, 0, 0))

    inputs = (xf, m1, m3, m5,
              params["w1"], params["b1"], params["w2"], params["b2"],
              params["w3"], params["b3"], params["w4"], params["b4"])

    # TODO(synk): for realistic channel counts / volumes, tile the spatial axis
    # (recomputing masks/offsets with halo handling), cast im2col slabs and
    # 3x3x3 weights to bf16 (f32 accumulation), and re-derive tile sizes against
    # v7x's 64 MiB VMEM with vmem_limit_bytes set explicitly.
    out = pl.pallas_call(
        kernel,
        out_shape=jax.ShapeDtypeStruct((N, C, DHW), x.dtype),
        grid=(N,),
        in_specs=[sample] + [resident(a) for a in inputs[1:]],
        out_specs=sample,
        scratch_shapes=[pltpu.VMEM((27 * C, 2 * DHW), jnp.float32)],
        compiler_params=pltpu.CompilerParams(
            dimension_semantics=("parallel",)),
    )(*inputs)
    return out.reshape(N, C, D, H, W)


# ----------------------------------------------------------------------------
# Pure-JAX reference (PyTorch-layout params) for the correctness check
# ----------------------------------------------------------------------------
def _conv3_ref(x, w, b, dil):
    out = jax.lax.conv_general_dilated(
        x, w, window_strides=(1, 1, 1), padding=[(dil, dil)] * 3,
        rhs_dilation=(dil, dil, dil),
        dimension_numbers=("NCDHW", "OIDHW", "NCDHW"))
    return out + b.reshape(1, -1, 1, 1, 1)


def _conv1_ref(x, w, b):
    w2d = w.reshape(w.shape[0], w.shape[1])
    return jnp.einsum("oi,nidhw->nodhw", w2d, x) + b.reshape(1, -1, 1, 1, 1)


def dacblock_ref(params, x):
    relu = lambda v: jnp.maximum(v, 0.0)
    a1 = _conv3_ref(x, params["w1"], params["b1"], 1)
    d1 = relu(a1)
    d2 = relu(_conv1_ref(_conv3_ref(x, params["w2"], params["b2"], 3),
                         params["w4"], params["b4"]))
    b12 = _conv3_ref(a1, params["w2"], params["b2"], 3)
    d3 = relu(_conv1_ref(b12, params["w4"], params["b4"]))
    c123 = _conv3_ref(b12, params["w3"], params["b3"], 5)
    d4 = relu(_conv1_ref(c123, params["w4"], params["b4"]))
    return x + d1 + d2 + d3 + d4


# ----------------------------------------------------------------------------
# Deterministic params (PyTorch layout) + conversion to kernel layout
# ----------------------------------------------------------------------------
def init_params(key, channel):
    ks = jax.random.split(key, 8)

    def u(k, shape, fan_in):
        bound = 1.0 / jnp.sqrt(jnp.float32(fan_in))
        return jax.random.uniform(k, shape, jnp.float32, -bound, bound)

    fan3 = channel * 27
    return {
        "w1": u(ks[0], (channel, channel, 3, 3, 3), fan3),
        "b1": u(ks[1], (channel,), fan3),
        "w2": u(ks[2], (channel, channel, 3, 3, 3), fan3),
        "b2": u(ks[3], (channel,), fan3),
        "w3": u(ks[4], (channel, channel, 3, 3, 3), fan3),
        "b3": u(ks[5], (channel,), fan3),
        "w4": u(ks[6], (channel, channel, 1, 1, 1), channel),
        "b4": u(ks[7], (channel,), channel),
    }


def to_kernel_params(p):
    def conv_w(w):   # (Co,Ci,3,3,3) -> (Co, 27*Ci); column = (kz*9+ky*3+kx)*Ci + ci
        co, ci = w.shape[0], w.shape[1]
        return jnp.transpose(w, (0, 2, 3, 4, 1)).reshape(co, 27 * ci)

    return {
        "w1": conv_w(p["w1"]), "b1": p["b1"].reshape(-1, 1),
        "w2": conv_w(p["w2"]), "b2": p["b2"].reshape(-1, 1),
        "w3": conv_w(p["w3"]), "b3": p["b3"].reshape(-1, 1),
        "w4": p["w4"].reshape(p["w4"].shape[0], p["w4"].shape[1]),
        "b4": p["b4"].reshape(-1, 1),
    }


if __name__ == "__main__":
    key = jax.random.PRNGKey(0)
    k_param, k_x = jax.random.split(key)

    channel = 4
    N, D, H, W = 2, 8, 8, 8
    pt_params = init_params(k_param, channel)
    k_params = to_kernel_params(pt_params)

    # PyTorch-style NCDHW input.
    x = jax.random.normal(k_x, (N, channel, D, H, W), jnp.float32)

    fwd = jax.jit(dacblock_forward)
    out = jax.block_until_ready(fwd(k_params, x))

    ref = dacblock_ref(pt_params, x)
    assert out.shape == (N, channel, D, H, W)
    max_err = jnp.max(jnp.abs(out - ref))
    assert jnp.allclose(out, ref, atol=1e-3, rtol=1e-3), (
        f"Pallas output mismatch vs reference (max abs err {max_err:.3e})")

    print("KERNEL_OK")
</pallas_src>

<mosaic_0001>
module attributes {stable_mosaic.version = 11 : i64} {
  func.func @_dacblock_kernel(%arg0: i32, %arg1: memref<1x4x512xf32, #tpu.memory_space<vmem>>, %arg2: memref<27x512xf32, #tpu.memory_space<vmem>>, %arg3: memref<27x1024xf32, #tpu.memory_space<vmem>>, %arg4: memref<27x512xf32, #tpu.memory_space<vmem>>, %arg5: memref<4x108xf32, #tpu.memory_space<vmem>>, %arg6: memref<4x1xf32, #tpu.memory_space<vmem>>, %arg7: memref<4x108xf32, #tpu.memory_space<vmem>>, %arg8: memref<4x1xf32, #tpu.memory_space<vmem>>, %arg9: memref<4x108xf32, #tpu.memory_space<vmem>>, %arg10: memref<4x1xf32, #tpu.memory_space<vmem>>, %arg11: memref<4x4xf32, #tpu.memory_space<vmem>>, %arg12: memref<4x1xf32, #tpu.memory_space<vmem>>, %arg13: memref<1x4x512xf32, #tpu.memory_space<vmem>>, %arg14: memref<108x1024xf32, #tpu.memory_space<vmem>>) attributes {dimension_semantics = [#tpu.dimension_semantics<parallel>], iteration_bounds = array<i64: 2>, scalar_prefetch = 0 : i64, scratch_operands = 1 : i64, tpu.core_type = #tpu.core_type<tc>, window_params = [{transform_indices = @transform_0, window_bounds = array<i64: 1, 4, 512>}, {pipeline_mode = #tpu.pipeline_mode<synchronous>, transform_indices = @transform_1, window_bounds = array<i64: 27, 512>}, {pipeline_mode = #tpu.pipeline_mode<synchronous>, transform_indices = @transform_2, window_bounds = array<i64: 27, 1024>}, {pipeline_mode = #tpu.pipeline_mode<synchronous>, transform_indices = @transform_3, window_bounds = array<i64: 27, 512>}, {pipeline_mode = #tpu.pipeline_mode<synchronous>, transform_indices = @transform_4, window_bounds = array<i64: 4, 108>}, {pipeline_mode = #tpu.pipeline_mode<synchronous>, transform_indices = @transform_5, window_bounds = array<i64: 4, 1>}, {pipeline_mode = #tpu.pipeline_mode<synchronous>, transform_indices = @transform_6, window_bounds = array<i64: 4, 108>}, {pipeline_mode = #tpu.pipeline_mode<synchronous>, transform_indices = @transform_7, window_bounds = array<i64: 4, 1>}, {pipeline_mode = #tpu.pipeline_mode<synchronous>, transform_indices = @transform_8, window_bounds = array<i64: 4, 108>}, {pipeline_mode = #tpu.pipeline_mode<synchronous>, transform_indices = @transform_9, window_bounds = array<i64: 4, 1>}, {pipeline_mode = #tpu.pipeline_mode<synchronous>, transform_indices = @transform_10, window_bounds = array<i64: 4, 4>}, {pipeline_mode = #tpu.pipeline_mode<synchronous>, transform_indices = @transform_11, window_bounds = array<i64: 4, 1>}, {transform_indices = @transform_12, window_bounds = array<i64: 1, 4, 512>}]} {
    %c0 = arith.constant 0 : index
    %c0_0 = arith.constant 0 : index
    %c0_1 = arith.constant 0 : index
    %0 = vector.load %arg1[%c0, %c0_0, %c0_1] : memref<1x4x512xf32, #tpu.memory_space<vmem>>, vector<1x4x512xf32>
    %1 = vector.shape_cast %0 : vector<1x4x512xf32> to vector<4x512xf32>
    %c73_i32 = arith.constant 73 : i32
    %2 = tpu.dynamic_rotate %1 by %c73_i32 dim 1 : vector<4x512xf32>, i32 -> vector<4x512xf32>
    %c0_2 = arith.constant 0 : index
    %c0_3 = arith.constant 0 : index
    %3 = vector.load %arg2[%c0_2, %c0_3] : memref<27x512xf32, #tpu.memory_space<vmem>>, vector<1x512xf32>
    %4 = vector.broadcast %3 : vector<1x512xf32> to vector<4x512xf32>
    %5 = arith.mulf %2, %4 : vector<4x512xf32>
    %c0_4 = arith.constant 0 : index
    %c0_5 = arith.constant 0 : index
    %6 = vector.load %arg14[%c0_4, %c0_5] : memref<108x1024xf32, #tpu.memory_space<vmem>>, vector<4x512xf32>
    tpu.vector_store %arg14[%c0_4, %c0_5], %5 {strides = array<i32>} : memref<108x1024xf32, #tpu.memory_space<vmem>>, vector<4x512xf32>,
    %c72_i32 = arith.constant 72 : i32
    %7 = tpu.dynamic_rotate %1 by %c72_i32 dim 1 : vector<4x512xf32>, i32 -> vector<4x512xf32>
    %c1 = arith.constant 1 : index
    %c0_6 = arith.constant 0 : index
    %8 = vector.load %arg2[%c1, %c0_6] : memref<27x512xf32, #tpu.memory_space<vmem>>, vector<1x512xf32>
    %9 = vector.broadcast %8 : vector<1x512xf32> to vector<4x512xf32>
    %10 = arith.mulf %7, %9 : vector<4x512xf32>
    %c4 = arith.constant 4 : index
    %c0_7 = arith.constant 0 : index
    %11 = vector.load %arg14[%c4, %c0_7] : memref<108x1024xf32, #tpu.memory_space<vmem>>, vector<4x512xf32>
    tpu.vector_store %arg14[%c4, %c0_7], %10 {strides = array<i32>} : memref<108x1024xf32, #tpu.memory_space<vmem>>, vector<4x512xf32>,
    %c71_i32 = arith.constant 71 : i32
    %12 = tpu.dynamic_rotate %1 by %c71_i32 dim 1 : vector<4x512xf32>, i32 -> vector<4x512xf32>
    %c2 = arith.constant 2 : index
    %c0_8 = arith.constant 0 : index
    %13 = vector.load %arg2[%c2, %c0_8] : memref<27x512xf32, #tpu.memory_space<vmem>>, vector<1x512xf32>
    %14 = vector.broadcast %13 : vector<1x512xf32> to vector<4x512xf32>
    %15 = arith.mulf %12, %14 : vector<4x512xf32>
    %c8 = arith.constant 8 : index
    %c0_9 = arith.constant 0 : index
    %16 = vector.load %arg14[%c8, %c0_9] : memref<108x1024xf32, #tpu.memory_space<vmem>>, vector<4x512xf32>
    tpu.vector_store %arg14[%c8, %c0_9], %15 {strides = array<i32>} : memref<108x1024xf32, #tpu.memory_space<vmem>>, vector<4x512xf32>,
    %c65_i32 = arith.constant 65 : i32
    %17 = tpu.dynamic_rotate %1 by %c65_i32 dim 1 : vector<4x512xf32>, i32 -> vector<4x512xf32>
    %c3 = arith.constant 3 : index
    %c0_10 = arith.constant 0 : index
    %18 = vector.load %arg2[%c3, %c0_10] : memref<27x512xf32, #tpu.memory_space<vmem>>, vector<1x512xf32>
    %19 = vector.broadcast %18 : vector<1x512xf32> to vector<4x512xf32>
    %20 = arith.mulf %17, %19 : vector<4x512xf32>
    %c12 = arith.constant 12 : index
    %c0_11 = arith.constant 0 : index
    %21 = vector.load %arg14[%c12, %c0_11] : memref<108x1024xf32, #tpu.memory_space<vmem>>, vector<4x512xf32>
    tpu.vector_store %arg14[%c12, %c0_11], %20 {strides = array<i32>} : memref<108x1024xf32, #tpu.memory_space<vmem>>, vector<4x512xf32>,
    %c64_i32 = arith.constant 64 : i32
    %22 = tpu.dynamic_rotate %1 by %c64_i32 dim 1 : vector<4x512xf32>, i32 -> vector<4x512xf32>
    %c4_12 = arith.constant 4 : index
    %c0_13 = arith.constant 0 : index
    %23 = vector.load %arg2[%c4_12, %c0_13] : memref<27x512xf32, #tpu.memory_space<vmem>>, vector<1x512xf32>
    %24 = vector.broadcast %23 : vector<1x512xf32> to vector<4x512xf32>
    %25 = arith.mulf %22, %24 : vector<4x512xf32>
    %c16 = arith.constant 16 : index
    %c0_14 = arith.constant 0 : index
    %26 = vector.load %arg14[%c16, %c0_14] : memref<108x1024xf32, #tpu.memory_space<vmem>>, vector<4x512xf32>
    tpu.vector_store %arg14[%c16, %c0_14], %25 {strides = array<i32>} : memref<108x1024xf32, #tpu.memory_space<vmem>>, vector<4x512xf32>,
    %c63_i32 = arith.constant 63 : i32
    %27 = tpu.dynamic_rotate %1 by %c63_i32 dim 1 : vector<4x512xf32>, i32 -> vector<4x512xf32>
    %c5 = arith.constant 5 : index
    %c0_15 = arith.constant 0 : index
    %28 = vector.load %arg2[%c5, %c0_15] : memref<27x512xf32, #tpu.memory_space<vmem>>, vector<1x512xf32>
    %29 = vector.broadcast %28 : vector<1x512xf32> to vector<4x512xf32>
    %30 = arith.mulf %27, %29 : vector<4x512xf32>
    %c20 = arith.constant 20 : index
    %c0_16 = arith.constant 0 : index
    %31 = vector.load %arg14[%c20, %c0_16] : memref<108x1024xf32, #tpu.memory_space<vmem>>, vector<4x512xf32>
    tpu.vector_store %arg14[%c20, %c0_16], %30 {strides = array<i32>} : memref<108x1024xf32, #tpu.memory_space<vmem>>, vector<4x512xf32>,
    %c57_i32 = arith.constant 57 : i32
    %32 = tpu.dynamic_rotate %1 by %c57_i32 dim 1 : vector<4x512xf32>, i32 -> vector<4x512xf32>
    %c6 = arith.constant 6 : index
    %c0_17 = arith.constant 0 : index
    %33 = vector.load %arg2[%c6, %c0_17] : memref<27x512xf32, #tpu.memory_space<vmem>>, vector<1x512xf32>
    %34 = vector.broadcast %33 : vector<1x512xf32> to vector<4x512xf32>
    %35 = arith.mulf %32, %34 : vector<4x512xf32>
    %c24 = arith.constant 24 : index
    %c0_18 = arith.constant 0 : index
    %36 = vector.load %arg14[%c24, %c0_18] : memref<108x1024xf32, #tpu.memory_space<vmem>>, vector<4x512xf32>
    tpu.vector_store %arg14[%c24, %c0_18], %35 {strides = array<i32>} : memref<108x1024xf32, #tpu.memory_space<vmem>>, vector<4x512xf32>,
    %c56_i32 = arith.constant 56 : i32
    %37 = tpu.dynamic_rotate %1 by %c56_i32 dim 1 : vector<4x512xf32>, i32 -> vector<4x512xf32>
    %c7 = arith.constant 7 : index
    %c0_19 = arith.constant 0 : index
    %38 = vector.load %arg2[%c7, %c0_19] : memref<27x512xf32, #tpu.memory_space<vmem>>, vector<1x512xf32>
    %39 = vector.broadcast %38 : vector<1x512xf32> to vector<4x512xf32>
    %40 = arith.mulf %37, %39 : vector<4x512xf32>
    %c28 = arith.constant 28 : index
    %c0_20 = arith.constant 0 : index
    %41 = vector.load %arg14[%c28, %c0_20] : memref<108x1024xf32, #tpu.memory_space<vmem>>, vector<4x512xf32>
    tpu.vector_store %arg14[%c28, %c0_20], %40 {strides = array<i32>} : memref<108x1024xf32, #tpu.memory_space<vmem>>, vector<4x512xf32>,
    %c55_i32 = arith.constant 55 : i32
    %42 = tpu.dynamic_rotate %1 by %c55_i32 dim 1 : vector<4x512xf32>, i32 -> vector<4x512xf32>
    %c8_21 = arith.constant 8 : index
    %c0_22 = arith.constant 0 : index
    %43 = vector.load %arg2[%c8_21, %c0_22] : memref<27x512xf32, #tpu.memory_space<vmem>>, vector<1x512xf32>
    %44 = vector.broadcast %43 : vector<1x512xf32> to vector<4x512xf32>
    %45 = arith.mulf %42, %44 : vector<4x512xf32>
    %c32 = arith.constant 32 : index
    %c0_23 = arith.constant 0 : index
    %46 = vector.load %arg14[%c32, %c0_23] : memref<108x1024xf32, #tpu.memory_space<vmem>>, vector<4x512xf32>
    tpu.vector_store %arg14[%c32, %c0_23], %45 {strides = array<i32>} : memref<108x1024xf32, #tpu.memory_space<vmem>>, vector<4x512xf32>,
    %c9_i32 = arith.constant 9 : i32
    %47 = tpu.dynamic_rotate %1 by %c9_i32 dim 1 : vector<4x512xf32>, i32 -> vector<4x512xf32>
    %c9 = arith.constant 9 : index
    %c0_24 = arith.constant 0 : index
    %48 = vector.load %arg2[%c9, %c0_24] : memref<27x512xf32, #tpu.memory_space<vmem>>, vector<1x512xf32>
    %49 = vector.broadcast %48 : vector<1x512xf32> to vector<4x512xf32>
    %50 = arith.mulf %47, %49 : vector<4x512xf32>
    %c36 = arith.constant 36 : index
    %c0_25 = arith.constant 0 : index
    %51 = vector.load %arg14[%c36, %c0_25] : memref<108x1024xf32, #tpu.memory_space<vmem>>, vector<4x512xf32>
    tpu.vector_store %arg14[%c36, %c0_25], %50 {strides = array<i32>} : memref<108x1024xf32, #tpu.memory_space<vmem>>, vector<4x512xf32>,
    %c8_i32 = arith.constant 8 : i32
    %52 = tpu.dynamic_rotate %1 by %c8_i32 dim 1 : vector<4x512xf32>, i32 -> vector<4x512xf32>
    %c10 = arith.constant 10 : index
    %c0_26 = arith.constant 0 : index
    %53 = vector.load %arg2[%c10, %c0_26] : memref<27x512xf32, #tpu.memory_space<vmem>>, vector<1x512xf32>
    %54 = vector.broadcast %53 : vector<1x512xf32> to vector<4x512xf32>
    %55 = arith.mulf %52, %54 : vector<4x512xf32>
    %c40 = arith.constant 40 : index
    %c0_27 = arith.constant 0 : index
    %56 = vector.load %arg14[%c40, %c0_27] : memref<108x1024xf32, #tpu.memory_space<vmem>>, vector<4x512xf32>
    tpu.vector_store %arg14[%c40, %c0_27], %55 {strides = array<i32>} : memref<108x1024xf32, #tpu.memory_space<vmem>>, vector<4x512xf32>,
    %c7_i32 = arith.constant 7 : i32
    %57 = tpu.dynamic_rotate %1 by %c7_i32 dim 1 : vector<4x512xf32>, i32 -> vector<4x512xf32>
    %c11 = arith.constant 11 : index
    %c0_28 = arith.constant 0 : index
    %58 = vector.load %arg2[%c11, %c0_28] : memref<27x512xf32, #tpu.memory_space<vmem>>, vector<1x512xf32>
    %59 = vector.broadcast %58 : vector<1x512xf32> to vector<4x512xf32>
    %60 = arith.mulf %57, %59 : vector<4x512xf32>
    %c44 = arith.constant 44 : index
    %c0_29 = arith.constant 0 : index
    %61 = vector.load %arg14[%c44, %c0_29] : memref<108x1024xf32, #tpu.memory_space<vmem>>, vector<4x512xf32>
    tpu.vector_store %arg14[%c44, %c0_29], %60 {strides = array<i32>} : memref<108x1024xf32, #tpu.memory_space<vmem>>, vector<4x512xf32>,
    %c1_i32 = arith.constant 1 : i32
    %62 = tpu.dynamic_rotate %1 by %c1_i32 dim 1 : vector<4x512xf32>, i32 -> vector<4x512xf32>
    %c12_30 = arith.constant 12 : index
    %c0_31 = arith.constant 0 : index
    %63 = vector.load %arg2[%c12_30, %c0_31] : memref<27x512xf32, #tpu.memory_space<vmem>>, vector<1x512xf32>
    %64 = vector.broadcast %63 : vector<1x512xf32> to vector<4x512xf32>
    %65 = arith.mulf %62, %64 : vector<4x512xf32>
    %c48 = arith.constant 48 : index
    %c0_32 = arith.constant 0 : index
    %66 = vector.load %arg14[%c48, %c0_32] : memref<108x1024xf32, #tpu.memory_space<vmem>>, vector<4x512xf32>
    tpu.vector_store %arg14[%c48, %c0_32], %65 {strides = array<i32>} : memref<108x1024xf32, #tpu.memory_space<vmem>>, vector<4x512xf32>,
    %c52 = arith.constant 52 : index
    %c0_33 = arith.constant 0 : index
    %67 = vector.load %arg14[%c52, %c0_33] : memref<108x1024xf32, #tpu.memory_space<vmem>>, vector<4x512xf32>
    tpu.vector_store %arg14[%c52, %c0_33], %1 {strides = array<i32>} : memref<108x1024xf32, #tpu.memory_space<vmem>>, vector<4x512xf32>,
    %c511_i32 = arith.constant 511 : i32
    %68 = tpu.dynamic_rotate %1 by %c511_i32 dim 1 : vector<4x512xf32>, i32 -> vector<4x512xf32>
    %c14 = arith.constant 14 : index
    %c0_34 = arith.constant 0 : index
    %69 = vector.load %arg2[%c14, %c0_34] : memref<27x512xf32, #tpu.memory_space<vmem>>, vector<1x512xf32>
    %70 = vector.broadcast %69 : vector<1x512xf32> to vector<4x512xf32>
    %71 = arith.mulf %68, %70 : vector<4x512xf32>
    %c56 = arith.constant 56 : index
    %c0_35 = arith.constant 0 : index
    %72 = vector.load %arg14[%c56, %c0_35] : memref<108x1024xf32, #tpu.memory_space<vmem>>, vector<4x512xf32>
    tpu.vector_store %arg14[%c56, %c0_35], %71 {strides = array<i32>} : memref<108x1024xf32, #tpu.memory_space<vmem>>, vector<4x512xf32>,
    %c505_i32 = arith.constant 505 : i32
    %73 = tpu.dynamic_rotate %1 by %c505_i32 dim 1 : vector<4x512xf32>, i32 -> vector<4x512xf32>
    %c15 = arith.constant 15 : index
    %c0_36 = arith.constant 0 : index
    %74 = vector.load %arg2[%c15, %c0_36] : memref<27x512xf32, #tpu.memory_space<vmem>>, vector<1x512xf32>
    %75 = vector.broadcast %74 : vector<1x512xf32> to vector<4x512xf32>
    %76 = arith.mulf %73, %75 : vector<4x512xf32>
    %c60 = arith.constant 60 : index
    %c0_37 = arith.constant 0 : index
    %77 = vector.load %arg14[%c60, %c0_37] : memref<108x1024xf32, #tpu.memory_space<vmem>>, vector<4x512xf32>
    tpu.vector_store %arg14[%c60, %c0_37], %76 {strides = array<i32>} : memref<108x1024xf32, #tpu.memory_space<vmem>>, vector<4x512xf32>,
    %c504_i32 = arith.constant 504 : i32
    %78 = tpu.dynamic_rotate %1 by %c504_i32 dim 1 : vector<4x512xf32>, i32 -> vector<4x512xf32>
    %c16_38 = arith.constant 16 : index
    %c0_39 = arith.constant 0 : index
    %79 = vector.load %arg2[%c16_38, %c0_39] : memref<27x512xf32, #tpu.memory_space<vmem>>, vector<1x512xf32>
    %80 = vector.broadcast %79 : vector<1x512xf32> to vector<4x512xf32>
    %81 = arith.mulf %78, %80 : vector<4x512xf32>
    %c64 = arith.constant 64 : index
    %c0_40 = arith.constant 0 : index
    %82 = vector.load %arg14[%c64, %c0_40] : memref<108x1024xf32, #tpu.memory_space<vmem>>, vector<4x512xf32>
    tpu.vector_store %arg14[%c64, %c0_40], %81 {strides = array<i32>} : memref<108x1024xf32, #tpu.memory_space<vmem>>, vector<4x512xf32>,
    %c503_i32 = arith.constant 503 : i32
    %83 = tpu.dynamic_rotate %1 by %c503_i32 dim 1 : vector<4x512xf32>, i32 -> vector<4x512xf32>
    %c17 = arith.constant 17 : index
    %c0_41 = arith.constant 0 : index
    %84 = vector.load %arg2[%c17, %c0_41] : memref<27x512xf32, #tpu.memory_space<vmem>>, vector<1x512xf32>
    %85 = vector.broadcast %84 : vector<1x512xf32> to vector<4x512xf32>
    %86 = arith.mulf %83, %85 : vector<4x512xf32>
    %c68 = arith.constant 68 : index
    %c0_42 = arith.constant 0 : index
    %87 = vector.load %arg14[%c68, %c0_42] : memref<108x1024xf32, #tpu.memory_space<vmem>>, vector<4x512xf32>
    tpu.vector_store %arg14[%c68, %c0_42], %86 {strides = array<i32>} : memref<108x1024xf32, #tpu.memory_space<vmem>>, vector<4x512xf32>,
    %c457_i32 = arith.constant 457 : i32
    %88 = tpu.dynamic_rotate %1 by %c457_i32 dim 1 : vector<4x512xf32>, i32 -> vector<4x512xf32>
    %c18 = arith.constant 18 : index
    %c0_43 = arith.constant 0 : index
    %89 = vector.load %arg2[%c18, %c0_43] : memref<27x512xf32, #tpu.memory_space<vmem>>, vector<1x512xf32>
    %90 = vector.broadcast %89 : vector<1x512xf32> to vector<4x512xf32>
    %91 = arith.mulf %88, %90 : vector<4x512xf32>
    %c72 = arith.constant 72 : index
    %c0_44 = arith.constant 0 : index
    %92 = vector.load %arg14[%c72, %c0_44] : memref<108x1024xf32, #tpu.memory_space<vmem>>, vector<4x512xf32>
    tpu.vector_store %arg14[%c72, %c0_44], %91 {strides = array<i32>} : memref<108x1024xf32, #tpu.memory_space<vmem>>, vector<4x512xf32>,
    %c456_i32 = arith.constant 456 : i32
    %93 = tpu.dynamic_rotate %1 by %c456_i32 dim 1 : vector<4x512xf32>, i32 -> vector<4x512xf32>
    %c19 = arith.constant 19 : index
    %c0_45 = arith.constant 0 : index
    %94 = vector.load %arg2[%c19, %c0_45] : memref<27x512xf32, #tpu.memory_space<vmem>>, vector<1x512xf32>
    %95 = vector.broadcast %94 : vector<1x512xf32> to vector<4x512xf32>
    %96 = arith.mulf %93, %95 : vector<4x512xf32>
    %c76 = arith.constant 76 : index
    %c0_46 = arith.constant 0 : index
    %97 = vector.load %arg14[%c76, %c0_46] : memref<108x1024xf32, #tpu.memory_space<vmem>>, vector<4x512xf32>
    tpu.vector_store %arg14[%c76, %c0_46], %96 {strides = array<i32>} : memref<108x1024xf32, #tpu.memory_space<vmem>>, vector<4x512xf32>,
    %c455_i32 = arith.constant 455 : i32
    %98 = tpu.dynamic_rotate %1 by %c455_i32 dim 1 : vector<4x512xf32>, i32 -> vector<4x512xf32>
    %c20_47 = arith.constant 20 : index
    %c0_48 = arith.constant 0 : index
    %99 = vector.load %arg2[%c20_47, %c0_48] : memref<27x512xf32, #tpu.memory_space<vmem>>, vector<1x512xf32>
    %100 = vector.broadcast %99 : vector<1x512xf32> to vector<4x512xf32>
    %101 = arith.mulf %98, %100 : vector<4x512xf32>
    %c80 = arith.constant 80 : index
    %c0_49 = arith.constant 0 : index
    %102 = vector.load %arg14[%c80, %c0_49] : memref<108x1024xf32, #tpu.memory_space<vmem>>, vector<4x512xf32>
    tpu.vector_store %arg14[%c80, %c0_49], %101 {strides = array<i32>} : memref<108x1024xf32, #tpu.memory_space<vmem>>, vector<4x512xf32>,
    %c449_i32 = arith.constant 449 : i32
    %103 = tpu.dynamic_rotate %1 by %c449_i32 dim 1 : vector<4x512xf32>, i32 -> vector<4x512xf32>
    %c21 = arith.constant 21 : index
    %c0_50 = arith.constant 0 : index
    %104 = vector.load %arg2[%c21, %c0_50] : memref<27x512xf32, #tpu.memory_space<vmem>>, vector<1x512xf32>
    %105 = vector.broadcast %104 : vector<1x512xf32> to vector<4x512xf32>
    %106 = arith.mulf %103, %105 : vector<4x512xf32>
    %c84 = arith.constant 84 : index
    %c0_51 = arith.constant 0 : index
    %107 = vector.load %arg14[%c84, %c0_51] : memref<108x1024xf32, #tpu.memory_space<vmem>>, vector<4x512xf32>
    tpu.vector_store %arg14[%c84, %c0_51], %106 {strides = array<i32>} : memref<108x1024xf32, #tpu.memory_space<vmem>>, vector<4x512xf32>,
    %c448_i32 = arith.constant 448 : i32
    %108 = tpu.dynamic_rotate %1 by %c448_i32 dim 1 : vector<4x512xf32>, i32 -> vector<4x512xf32>
    %c22 = arith.constant 22 : index
    %c0_52 = arith.constant 0 : index
    %109 = vector.load %arg2[%c22, %c0_52] : memref<27x512xf32, #tpu.memory_space<vmem>>, vector<1x512xf32>
    %110 = vector.broadcast %109 : vector<1x512xf32> to vector<4x512xf32>
    %111 = arith.mulf %108, %110 : vector<4x512xf32>
    %c88 = arith.constant 88 : index
    %c0_53 = arith.constant 0 : index
    %112 = vector.load %arg14[%c88, %c0_53] : memref<108x1024xf32, #tpu.memory_space<vmem>>, vector<4x512xf32>
    tpu.vector_store %arg14[%c88, %c0_53], %111 {strides = array<i32>} : memref<108x1024xf32, #tpu.memory_space<vmem>>, vector<4x512xf32>,
    %c447_i32 = arith.constant 447 : i32
    %113 = tpu.dynamic_rotate %1 by %c447_i32 dim 1 : vector<4x512xf32>, i32 -> vector<4x512xf32>
    %c23 = arith.constant 23 : index
    %c0_54 = arith.constant 0 : index
    %114 = vector.load %arg2[%c23, %c0_54] : memref<27x512xf32, #tpu.memory_space<vmem>>, vector<1x512xf32>
    %115 = vector.broadcast %114 : vector<1x512xf32> to vector<4x512xf32>
    %116 = arith.mulf %113, %115 : vector<4x512xf32>
    %c92 = arith.constant 92 : index
    %c0_55 = arith.constant 0 : index
    %117 = vector.load %arg14[%c92, %c0_55] : memref<108x1024xf32, #tpu.memory_space<vmem>>, vector<4x512xf32>
    tpu.vector_store %arg14[%c92, %c0_55], %116 {strides = array<i32>} : memref<108x1024xf32, #tpu.memory_space<vmem>>, vector<4x512xf32>,
    %c441_i32 = arith.constant 441 : i32
    %118 = tpu.dynamic_rotate %1 by %c441_i32 dim 1 : vector<4x512xf32>, i32 -> vector<4x512xf32>
    %c24_56 = arith.constant 24 : index
    %c0_57 = arith.constant 0 : index
    %119 = vector.load %arg2[%c24_56, %c0_57] : memref<27x512xf32, #tpu.memory_space<vmem>>, vector<1x512xf32>
    %120 = vector.broadcast %119 : vector<1x512xf32> to vector<4x512xf32>
    %121 = arith.mulf %118, %120 : vector<4x512xf32>
    %c96 = arith.constant 96 : index
    %c0_58 = arith.constant 0 : index
    %122 = vector.load %arg14[%c96, %c0_58] : memref<108x1024xf32, #tpu.memory_space<vmem>>, vector<4x512xf32>
    tpu.vector_store %arg14[%c96, %c0_58], %121 {strides = array<i32>} : memref<108x1024xf32, #tpu.memory_space<vmem>>, vector<4x512xf32>,
    %c440_i32 = arith.constant 440 : i32
    %123 = tpu.dynamic_rotate %1 by %c440_i32 dim 1 : vector<4x512xf32>, i32 -> vector<4x512xf32>
    %c25 = arith.constant 25 : index
    %c0_59 = arith.constant 0 : index
    %124 = vector.load %arg2[%c25, %c0_59] : memref<27x512xf32, #tpu.memory_space<vmem>>, vector<1x512xf32>
    %125 = vector.broadcast %124 : vector<1x512xf32> to vector<4x512xf32>
    %126 = arith.mulf %123, %125 : vector<4x512xf32>
    %c100 = arith.constant 100 : index
    %c0_60 = arith.constant 0 : index
    %127 = vector.load %arg14[%c100, %c0_60] : memref<108x1024xf32, #tpu.memory_space<vmem>>, vector<4x512xf32>
    tpu.vector_store %arg14[%c100, %c0_60], %126 {strides = array<i32>} : memref<108x1024xf32, #tpu.memory_space<vmem>>, vector<4x512xf32>,
    %c439_i32 = arith.constant 439 : i32
    %128 = tpu.dynamic_rotate %1 by %c439_i32 dim 1 : vector<4x512xf32>, i32 -> vector<4x512xf32>
    %c26 = arith.constant 26 : index
    %c0_61 = arith.constant 0 : index
    %129 = vector.load %arg2[%c26, %c0_61] : memref<27x512xf32, #tpu.memory_space<vmem>>, vector<1x512xf32>
    %130 = vector.broadcast %129 : vector<1x512xf32> to vector<4x512xf32>
    %131 = arith.mulf %128, %130 : vector<4x512xf32>
    %c104 = arith.constant 104 : index
    %c0_62 = arith.constant 0 : index
    %132 = vector.load %arg14[%c104, %c0_62] : memref<108x1024xf32, #tpu.memory_space<vmem>>, vector<4x512xf32>
    tpu.vector_store %arg14[%c104, %c0_62], %131 {strides = array<i32>} : memref<108x1024xf32, #tpu.memory_space<vmem>>, vector<4x512xf32>,
    %c0_63 = arith.constant 0 : index
    %c0_64 = arith.constant 0 : index
    %133 = vector.load %arg5[%c0_63, %c0_64] : memref<4x108xf32, #tpu.memory_space<vmem>>, vector<4x108xf32>
    %c0_65 = arith.constant 0 : index
    %c0_66 = arith.constant 0 : index
    %134 = vector.load %arg14[%c0_65, %c0_66] : memref<108x1024xf32, #tpu.memory_space<vmem>>, vector<108x512xf32>
    %cst = arith.constant dense<0.000000e+00> : vector<4x512xf32>
    %135 = tpu.matmul %133, %134, %cst {dimension_numbers = #tpu.dot_dimension_numbers<[1], [0], [0], [1], [0, 0, 1, 1], [], []>} : vector<4x108xf32>, vector<108x512xf32>, vector<4x512xf32> -> vector<4x512xf32>
    %c0_67 = arith.constant 0 : index
    %c0_68 = arith.constant 0 : index
    %136 = vector.load %arg6[%c0_67, %c0_68] : memref<4x1xf32, #tpu.memory_space<vmem>>, vector<4x1xf32>
    %137 = vector.broadcast %136 : vector<4x1xf32> to vector<4x512xf32>
    %138 = arith.addf %135, %137 : vector<4x512xf32>
    %139 = tpu.concatenate %1, %138 in 1 : vector<4x512xf32>, vector<4x512xf32> -> vector<4x1024xf32>
    %c219_i32 = arith.constant 219 : i32
    %140 = tpu.dynamic_rotate %139 by %c219_i32 dim 1 : vector<4x1024xf32>, i32 -> vector<4x1024xf32>
    %c0_69 = arith.constant 0 : index
    %c0_70 = arith.constant 0 : index
    %141 = vector.load %arg3[%c0_69, %c0_70] : memref<27x1024xf32, #tpu.memory_space<vmem>>, vector<1x1024xf32>
    %142 = vector.broadcast %141 : vector<1x1024xf32> to vector<4x1024xf32>
    %143 = arith.mulf %140, %142 : vector<4x1024xf32>
    %c0_71 = arith.constant 0 : index
    %c0_72 = arith.constant 0 : index
    %144 = vector.load %arg14[%c0_71, %c0_72] : memref<108x1024xf32, #tpu.memory_space<vmem>>, vector<4x1024xf32>
    tpu.vector_store %arg14[%c0_71, %c0_72], %143 {strides = array<i32>} : memref<108x1024xf32, #tpu.memory_space<vmem>>, vector<4x1024xf32>,
    %c216_i32 = arith.constant 216 : i32
    %145 = tpu.dynamic_rotate %139 by %c216_i32 dim 1 : vector<4x1024xf32>, i32 -> vector<4x1024xf32>
    %c1_73 = arith.constant 1 : index
    %c0_74 = arith.constant 0 : index
    %146 = vector.load %arg3[%c1_73, %c0_74] : memref<27x1024xf32, #tpu.memory_space<vmem>>, vector<1x1024xf32>
    %147 = vector.broadcast %146 : vector<1x1024xf32> to vector<4x1024xf32>
    %148 = arith.mulf %145, %147 : vector<4x1024xf32>
    %c4_75 = arith.constant 4 : index
    %c0_76 = arith.constant 0 : index
    %149 = vector.load %arg14[%c4_75, %c0_76] : memref<108x1024xf32, #tpu.memory_space<vmem>>, vector<4x1024xf32>
    tpu.vector_store %arg14[%c4_75, %c0_76], %148 {strides = array<i32>} : memref<108x1024xf32, #tpu.memory_space<vmem>>, vector<4x1024xf32>,
    %c213_i32 = arith.constant 213 : i32
    %150 = tpu.dynamic_rotate %139 by %c213_i32 dim 1 : vector<4x1024xf32>, i32 -> vector<4x1024xf32>
    %c2_77 = arith.constant 2 : index
    %c0_78 = arith.constant 0 : index
    %151 = vector.load %arg3[%c2_77, %c0_78] : memref<27x1024xf32, #tpu.memory_space<vmem>>, vector<1x1024xf32>
    %152 = vector.broadcast %151 : vector<1x1024xf32> to vector<4x1024xf32>
    %153 = arith.mulf %150, %152 : vector<4x1024xf32>
    %c8_79 = arith.constant 8 : index
    %c0_80 = arith.constant 0 : index
    %154 = vector.load %arg14[%c8_79, %c0_80] : memref<108x1024xf32, #tpu.memory_space<vmem>>, vector<4x1024xf32>
    tpu.vector_store %arg14[%c8_79, %c0_80], %153 {strides = array<i32>} : memref<108x1024xf32, #tpu.memory_space<vmem>>, vector<4x1024xf32>,
    %c195_i32 = arith.constant 195 : i32
    %155 = tpu.dynamic_rotate %139 by %c195_i32 dim 1 : vector<4x1024xf32>, i32 -> vector<4x1024xf32>
    %c3_81 = arith.constant 3 : index
    %c0_82 = arith.constant 0 : index
    %156 = vector.load %arg3[%c3_81, %c0_82] : memref<27x1024xf32, #tpu.memory_space<vmem>>, vector<1x1024xf32>
    %157 = vector.broadcast %156 : vector<1x1024xf32> to vector<4x1024xf32>
    %158 = arith.mulf %155, %157 : vector<4x1024xf32>
    %c12_83 = arith.constant 12 : index
    %c0_84 = arith.constant 0 : index
    %159 = vector.load %arg14[%c12_83, %c0_84] : memref<108x1024xf32, #tpu.memory_space<vmem>>, vector<4x1024xf32>
    tpu.vector_store %arg14[%c12_83, %c0_84], %158 {strides = array<i32>} : memref<108x1024xf32, #tpu.memory_space<vmem>>, vector<4x1024xf32>,
    %c192_i32 = arith.constant 192 : i32
    %160 = tpu.dynamic_rotate %139 by %c192_i32 dim 1 : vector<4x1024xf32>, i32 -> vector<4x1024xf32>
    %c4_85 = arith.constant 4 : index
    %c0_86 = arith.constant 0 : index
    %161 = vector.load %arg3[%c4_85, %c0_86] : memref<27x1024xf32, #tpu.memory_space<vmem>>, vector<1x1024xf32>
    %162 = vector.broadcast %161 : vector<1x1024xf32> to vector<4x1024xf32>
    %163 = arith.mulf %160, %162 : vector<4x1024xf32>
    %c16_87 = arith.constant 16 : index
    %c0_88 = arith.constant 0 : index
    %164 = vector.load %arg14[%c16_87, %c0_88] : memref<108x1024xf32, #tpu.memory_space<vmem>>, vector<4x1024xf32>
    tpu.vector_store %arg14[%c16_87, %c0_88], %163 {strides = array<i32>} : memref<108x1024xf32, #tpu.memory_space<vmem>>, vector<4x1024xf32>,
    %c189_i32 = arith.constant 189 : i32
    %165 = tpu.dynamic_rotate %139 by %c189_i32 dim 1 : vector<4x1024xf32>, i32 -> vector<4x1024xf32>
    %c5_89 = arith.constant 5 : index
    %c0_90 = arith.constant 0 : index
    %166 = vector.load %arg3[%c5_89, %c0_90] : memref<27x1024xf32, #tpu.memory_space<vmem>>, vector<1x1024xf32>
    %167 = vector.broadcast %166 : vector<1x1024xf32> to vector<4x1024xf32>
    %168 = arith.mulf %165, %167 : vector<4x1024xf32>
    %c20_91 = arith.constant 20 : index
    %c0_92 = arith.constant 0 : index
    %169 = vector.load %arg14[%c20_91, %c0_92] : memref<108x1024xf32, #tpu.memory_space<vmem>>, vector<4x1024xf32>
    tpu.vector_store %arg14[%c20_91, %c0_92], %168 {strides = array<i32>} : memref<108x1024xf32, #tpu.memory_space<vmem>>, vector<4x1024xf32>,
    %c171_i32 = arith.constant 171 : i32
    %170 = tpu.dynamic_rotate %139 by %c171_i32 dim 1 : vector<4x1024xf32>, i32 -> vector<4x1024xf32>
    %c6_93 = arith.constant 6 : index
    %c0_94 = arith.constant 0 : index
    %171 = vector.load %arg3[%c6_93, %c0_94] : memref<27x1024xf32, #tpu.memory_space<vmem>>, vector<1x1024xf32>
    %172 = vector.broadcast %171 : vector<1x1024xf32> to vector<4x1024xf32>
    %173 = arith.mulf %170, %172 : vector<4x1024xf32>
    %c24_95 = arith.constant 24 : index
    %c0_96 = arith.constant 0 : index
    %174 = vector.load %arg14[%c24_95, %c0_96] : memref<108x1024xf32, #tpu.memory_space<vmem>>, vector<4x1024xf32>
    tpu.vector_store %arg14[%c24_95, %c0_96], %173 {strides = array<i32>} : memref<108x1024xf32, #tpu.memory_space<vmem>>, vector<4x1024xf32>,
    %c168_i32 = arith.constant 168 : i32
    %175 = tpu.dynamic_rotate %139 by %c168_i32 dim 1 : vector<4x1024xf32>, i32 -> vector<4x1024xf32>
    %c7_97 = arith.constant 7 : index
    %c0_98 = arith.constant 0 : index
    %176 = vector.load %arg3[%c7_97, %c0_98] : memref<27x1024xf32, #tpu.memory_space<vmem>>, vector<1x1024xf32>
    %177 = vector.broadcast %176 : vector<1x1024xf32> to vector<4x1024xf32>
    %178 = arith.mulf %175, %177 : vector<4x1024xf32>
    %c28_99 = arith.constant 28 : index
    %c0_100 = arith.constant 0 : index
    %179 = vector.load %arg14[%c28_99, %c0_100] : memref<108x1024xf32, #tpu.memory_space<vmem>>, vector<4x1024xf32>
    tpu.vector_store %arg14[%c28_99, %c0_100], %178 {strides = array<i32>} : memref<108x1024xf32, #tpu.memory_space<vmem>>, vector<4x1024xf32>,
    %c165_i32 = arith.constant 165 : i32
    %180 = tpu.dynamic_rotate %139 by %c165_i32 dim 1 : vector<4x1024xf32>, i32 -> vector<4x1024xf32>
    %c8_101 = arith.constant 8 : index
    %c0_102 = arith.constant 0 : index
    %181 = vector.load %arg3[%c8_101, %c0_102] : memref<27x1024xf32, #tpu.memory_space<vmem>>, vector<1x1024xf32>
    %182 = vector.broadcast %181 : vector<1x1024xf32> to vector<4x1024xf32>
    %183 = arith.mulf %180, %182 : vector<4x1024xf32>
    %c32_103 = arith.constant 32 : index
    %c0_104 = arith.constant 0 : index
    %184 = vector.load %arg14[%c32_103, %c0_104] : memref<108x1024xf32, #tpu.memory_space<vmem>>, vector<4x1024xf32>
    tpu.vector_store %arg14[%c32_103, %c0_104], %183 {strides = array<i32>} : memref<108x1024xf32, #tpu.memory_space<vmem>>, vector<4x1024xf32>,
    %c27_i32 = arith.constant 27 : i32
    %185 = tpu.dynamic_rotate %139 by %c27_i32 dim 1 : vector<4x1024xf32>, i32 -> vector<4x1024xf32>
    %c9_105 = arith.constant 9 : index
    %c0_106 = arith.constant 0 : index
    %186 = vector.load %arg3[%c9_105, %c0_106] : memref<27x1024xf32, #tpu.memory_space<vmem>>, vector<1x1024xf32>
    %187 = vector.broadcast %186 : vector<1x1024xf32> to vector<4x1024xf32>
    %188 = arith.mulf %185, %187 : vector<4x1024xf32>
    %c36_107 = arith.constant 36 : index
    %c0_108 = arith.constant 0 : index
    %189 = vector.load %arg14[%c36_107, %c0_108] : memref<108x1024xf32, #tpu.memory_space<vmem>>, vector<4x1024xf32>
    tpu.vector_store %arg14[%c36_107, %c0_108], %188 {strides = array<i32>} : memref<108x1024xf32, #tpu.memory_space<vmem>>, vector<4x1024xf32>,
    %c24_i32 = arith.constant 24 : i32
    %190 = tpu.dynamic_rotate %139 by %c24_i32 dim 1 : vector<4x1024xf32>, i32 -> vector<4x1024xf32>
    %c10_109 = arith.constant 10 : index
    %c0_110 = arith.constant 0 : index
    %191 = vector.load %arg3[%c10_109, %c0_110] : memref<27x1024xf32, #tpu.memory_space<vmem>>, vector<1x1024xf32>
    %192 = vector.broadcast %191 : vector<1x1024xf32> to vector<4x1024xf32>
    %193 = arith.mulf %190, %192 : vector<4x1024xf32>
    %c40_111 = arith.constant 40 : index
    %c0_112 = arith.constant 0 : index
    %194 = vector.load %arg14[%c40_111, %c0_112] : memref<108x1024xf32, #tpu.memory_space<vmem>>, vector<4x1024xf32>
    tpu.vector_store %arg14[%c40_111, %c0_112], %193 {strides = array<i32>} : memref<108x1024xf32, #tpu.memory_space<vmem>>, vector<4x1024xf32>,
    %c21_i32 = arith.constant 21 : i32
    %195 = tpu.dynamic_rotate %139 by %c21_i32 dim 1 : vector<4x1024xf32>, i32 -> vector<4x1024xf32>
    %c11_113 = arith.constant 11 : index
    %c0_114 = arith.constant 0 : index
    %196 = vector.load %arg3[%c11_113, %c0_114] : memref<27x1024xf32, #tpu.memory_space<vmem>>, vector<1x1024xf32>
    %197 = vector.broadcast %196 : vector<1x1024xf32> to vector<4x1024xf32>
    %198 = arith.mulf %195, %197 : vector<4x1024xf32>
    %c44_115 = arith.constant 44 : index
    %c0_116 = arith.constant 0 : index
    %199 = vector.load %arg14[%c44_115, %c0_116] : memref<108x1024xf32, #tpu.memory_space<vmem>>, vector<4x1024xf32>
    tpu.vector_store %arg14[%c44_115, %c0_116], %198 {strides = array<i32>} : memref<108x1024xf32, #tpu.memory_space<vmem>>, vector<4x1024xf32>,
    %c3_i32 = arith.constant 3 : i32
    %200 = tpu.dynamic_rotate %139 by %c3_i32 dim 1 : vector<4x1024xf32>, i32 -> vector<4x1024xf32>
    %c12_117 = arith.constant 12 : index
    %c0_118 = arith.constant 0 : index
    %201 = vector.load %arg3[%c12_117, %c0_118] : memref<27x1024xf32, #tpu.memory_space<vmem>>, vector<1x1024xf32>
    %202 = vector.broadcast %201 : vector<1x1024xf32> to vector<4x1024xf32>
    %203 = arith.mulf %200, %202 : vector<4x1024xf32>
    %c48_119 = arith.constant 48 : index
    %c0_120 = arith.constant 0 : index
    %204 = vector.load %arg14[%c48_119, %c0_120] : memref<108x1024xf32, #tpu.memory_space<vmem>>, vector<4x1024xf32>
    tpu.vector_store %arg14[%c48_119, %c0_120], %203 {strides = array<i32>} : memref<108x1024xf32, #tpu.memory_space<vmem>>, vector<4x1024xf32>,
    %c52_121 = arith.constant 52 : index
    %c0_122 = arith.constant 0 : index
    %205 = vector.load %arg14[%c52_121, %c0_122] : memref<108x1024xf32, #tpu.memory_space<vmem>>, vector<4x1024xf32>
    tpu.vector_store %arg14[%c52_121, %c0_122], %139 {strides = array<i32>} : memref<108x1024xf32, #tpu.memory_space<vmem>>, vector<4x1024xf32>,
    %c1021_i32 = arith.constant 1021 : i32
    %206 = tpu.dynamic_rotate %139 by %c1021_i32 dim 1 : vector<4x1024xf32>, i32 -> vector<4x1024xf32>
    %c14_123 = arith.constant 14 : index
    %c0_124 = arith.constant 0 : index
    %207 = vector.load %arg3[%c14_123, %c0_124] : memref<27x1024xf32, #tpu.memory_space<vmem>>, vector<1x1024xf32>
    %208 = vector.broadcast %207 : vector<1x1024xf32> to vector<4x1024xf32>
    %209 = arith.mulf %206, %208 : vector<4x1024xf32>
    %c56_125 = arith.constant 56 : index
    %c0_126 = arith.constant 0 : index
    %210 = vector.load %arg14[%c56_125, %c0_126] : memref<108x1024xf32, #tpu.memory_space<vmem>>, vector<4x1024xf32>
    tpu.vector_store %arg14[%c56_125, %c0_126], %209 {strides = array<i32>} : memref<108x1024xf32, #tpu.memory_space<vmem>>, vector<4x1024xf32>,
    %c1003_i32 = arith.constant 1003 : i32
    %211 = tpu.dynamic_rotate %139 by %c1003_i32 dim 1 : vector<4x1024xf32>, i32 -> vector<4x1024xf32>
    %c15_127 = arith.constant 15 : index
    %c0_128 = arith.constant 0 : index
    %212 = vector.load %arg3[%c15_127, %c0_128] : memref<27x1024xf32, #tpu.memory_space<vmem>>, vector<1x1024xf32>
    %213 = vector.broadcast %212 : vector<1x1024xf32> to vector<4x1024xf32>
    %214 = arith.mulf %211, %213 : vector<4x1024xf32>
    %c60_129 = arith.constant 60 : index
    %c0_130 = arith.constant 0 : index
    %215 = vector.load %arg14[%c60_129, %c0_130] : memref<108x1024xf32, #tpu.memory_space<vmem>>, vector<4x1024xf32>
    tpu.vector_store %arg14[%c60_129, %c0_130], %214 {strides = array<i32>} : memref<108x1024xf32, #tpu.memory_space<vmem>>, vector<4x1024xf32>,
    %c1000_i32 = arith.constant 1000 : i32
    %216 = tpu.dynamic_rotate %139 by %c1000_i32 dim 1 : vector<4x1024xf32>, i32 -> vector<4x1024xf32>
    %c16_131 = arith.constant 16 : index
    %c0_132 = arith.constant 0 : index
    %217 = vector.load %arg3[%c16_131, %c0_132] : memref<27x1024xf32, #tpu.memory_space<vmem>>, vector<1x1024xf32>
    %218 = vector.broadcast %217 : vector<1x1024xf32> to vector<4x1024xf32>
    %219 = arith.mulf %216, %218 : vector<4x1024xf32>
    %c64_133 = arith.constant 64 : index
    %c0_134 = arith.constant 0 : index
    %220 = vector.load %arg14[%c64_133, %c0_134] : memref<108x1024xf32, #tpu.memory_space<vmem>>, vector<4x1024xf32>
    tpu.vector_store %arg14[%c64_133, %c0_134], %219 {strides = array<i32>} : memref<108x1024xf32, #tpu.memory_space<vmem>>, vector<4x1024xf32>,
    %c997_i32 = arith.constant 997 : i32
    %221 = tpu.dynamic_rotate %139 by %c997_i32 dim 1 : vector<4x1024xf32>, i32 -> vector<4x1024xf32>
    %c17_135 = arith.constant 17 : index
    %c0_136 = arith.constant 0 : index
    %222 = vector.load %arg3[%c17_135, %c0_136] : memref<27x1024xf32, #tpu.memory_space<vmem>>, vector<1x1024xf32>
    %223 = vector.broadcast %222 : vector<1x1024xf32> to vector<4x1024xf32>
    %224 = arith.mulf %221, %223 : vector<4x1024xf32>
    %c68_137 = arith.constant 68 : index
    %c0_138 = arith.constant 0 : index
    %225 = vector.load %arg14[%c68_137, %c0_138] : memref<108x1024xf32, #tpu.memory_space<vmem>>, vector<4x1024xf32>
    tpu.vector_store %arg14[%c68_137, %c0_138], %224 {strides = array<i32>} : memref<108x1024xf32, #tpu.memory_space<vmem>>, vector<4x1024xf32>,
    %c859_i32 = arith.constant 859 : i32
    %226 = tpu.dynamic_rotate %139 by %c859_i32 dim 1 : vector<4x1024xf32>, i32 -> vector<4x1024xf32>
    %c18_139 = arith.constant 18 : index
    %c0_140 = arith.constant 0 : index
    %227 = vector.load %arg3[%c18_139, %c0_140] : memref<27x1024xf32, #tpu.memory_space<vmem>>, vector<1x1024xf32>
    %228 = vector.broadcast %227 : vector<1x1024xf32> to vector<4x1024xf32>
    %229 = arith.mulf %226, %228 : vector<4x1024xf32>
    %c72_141 = arith.constant 72 : index
    %c0_142 = arith.constant 0 : index
    %230 = vector.load %arg14[%c72_141, %c0_142] : memref<108x1024xf32, #tpu.memory_space<vmem>>, vector<4x1024xf32>
    tpu.vector_store %arg14[%c72_141, %c0_142], %229 {strides = array<i32>} : memref<108x1024xf32, #tpu.memory_space<vmem>>, vector<4x1024xf32>,
    %c856_i32 = arith.constant 856 : i32
    %231 = tpu.dynamic_rotate %139 by %c856_i32 dim 1 : vector<4x1024xf32>, i32 -> vector<4x1024xf32>
    %c19_143 = arith.constant 19 : index
    %c0_144 = arith.constant 0 : index
    %232 = vector.load %arg3[%c19_143, %c0_144] : memref<27x1024xf32, #tpu.memory_space<vmem>>, vector<1x1024xf32>
    %233 = vector.broadcast %232 : vector<1x1024xf32> to vector<4x1024xf32>
    %234 = arith.mulf %231, %233 : vector<4x1024xf32>
    %c76_145 = arith.constant 76 : index
    %c0_146 = arith.constant 0 : index
    %235 = vector.load %arg14[%c76_145, %c0_146] : memref<108x1024xf32, #tpu.memory_space<vmem>>, vector<4x1024xf32>
    tpu.vector_store %arg14[%c76_145, %c0_146], %234 {strides = array<i32>} : memref<108x1024xf32, #tpu.memory_space<vmem>>, vector<4x1024xf32>,
    %c853_i32 = arith.constant 853 : i32
    %236 = tpu.dynamic_rotate %139 by %c853_i32 dim 1 : vector<4x1024xf32>, i32 -> vector<4x1024xf32>
    %c20_147 = arith.constant 20 : index
    %c0_148 = arith.constant 0 : index
    %237 = vector.load %arg3[%c20_147, %c0_148] : memref<27x1024xf32, #tpu.memory_space<vmem>>, vector<1x1024xf32>
    %238 = vector.broadcast %237 : vector<1x1024xf32> to vector<4x1024xf32>
    %239 = arith.mulf %236, %238 : vector<4x1024xf32>
    %c80_149 = arith.constant 80 : index
    %c0_150 = arith.constant 0 : index
    %240 = vector.load %arg14[%c80_149, %c0_150] : memref<108x1024xf32, #tpu.memory_space<vmem>>, vector<4x1024xf32>
    tpu.vector_store %arg14[%c80_149, %c0_150], %239 {strides = array<i32>} : memref<108x1024xf32, #tpu.memory_space<vmem>>, vector<4x1024xf32>,
    %c835_i32 = arith.constant 835 : i32
    %241 = tpu.dynamic_rotate %139 by %c835_i32 dim 1 : vector<4x1024xf32>, i32 -> vector<4x1024xf32>
    %c21_151 = arith.constant 21 : index
    %c0_152 = arith.constant 0 : index
    %242 = vector.load %arg3[%c21_151, %c0_152] : memref<27x1024xf32, #tpu.memory_space<vmem>>, vector<1x1024xf32>
    %243 = vector.broadcast %242 : vector<1x1024xf32> to vector<4x1024xf32>
    %244 = arith.mulf %241, %243 : vector<4x1024xf32>
    %c84_153 = arith.constant 84 : index
    %c0_154 = arith.constant 0 : index
    %245 = vector.load %arg14[%c84_153, %c0_154] : memref<108x1024xf32, #tpu.memory_space<vmem>>, vector<4x1024xf32>
    tpu.vector_store %arg14[%c84_153, %c0_154], %244 {strides = array<i32>} : memref<108x1024xf32, #tpu.memory_space<vmem>>, vector<4x1024xf32>,
    %c832_i32 = arith.constant 832 : i32
    %246 = tpu.dynamic_rotate %139 by %c832_i32 dim 1 : vector<4x1024xf32>, i32 -> vector<4x1024xf32>
    %c22_155 = arith.constant 22 : index
    %c0_156 = arith.constant 0 : index
    %247 = vector.load %arg3[%c22_155, %c0_156] : memref<27x1024xf32, #tpu.memory_space<vmem>>, vector<1x1024xf32>
    %248 = vector.broadcast %247 : vector<1x1024xf32> to vector<4x1024xf32>
    %249 = arith.mulf %246, %248 : vector<4x1024xf32>
    %c88_157 = arith.constant 88 : index
    %c0_158 = arith.constant 0 : index
    %250 = vector.load %arg14[%c88_157, %c0_158] : memref<108x1024xf32, #tpu.memory_space<vmem>>, vector<4x1024xf32>
    tpu.vector_store %arg14[%c88_157, %c0_158], %249 {strides = array<i32>} : memref<108x1024xf32, #tpu.memory_space<vmem>>, vector<4x1024xf32>,
    %c829_i32 = arith.constant 829 : i32
    %251 = tpu.dynamic_rotate %139 by %c829_i32 dim 1 : vector<4x1024xf32>, i32 -> vector<4x1024xf32>
    %c23_159 = arith.constant 23 : index
    %c0_160 = arith.constant 0 : index
    %252 = vector.load %arg3[%c23_159, %c0_160] : memref<27x1024xf32, #tpu.memory_space<vmem>>, vector<1x1024xf32>
    %253 = vector.broadcast %252 : vector<1x1024xf32> to vector<4x1024xf32>
    %254 = arith.mulf %251, %253 : vector<4x1024xf32>
    %c92_161 = arith.constant 92 : index
    %c0_162 = arith.constant 0 : index
    %255 = vector.load %arg14[%c92_161, %c0_162] : memref<108x1024xf32, #tpu.memory_space<vmem>>, vector<4x1024xf32>
    tpu.vector_store %arg14[%c92_161, %c0_162], %254 {strides = array<i32>} : memref<108x1024xf32, #tpu.memory_space<vmem>>, vector<4x1024xf32>,
    %c811_i32 = arith.constant 811 : i32
    %256 = tpu.dynamic_rotate %139 by %c811_i32 dim 1 : vector<4x1024xf32>, i32 -> vector<4x1024xf32>
    %c24_163 = arith.constant 24 : index
    %c0_164 = arith.constant 0 : index
    %257 = vector.load %arg3[%c24_163, %c0_164] : memref<27x1024xf32, #tpu.memory_space<vmem>>, vector<1x1024xf32>
    %258 = vector.broadcast %257 : vector<1x1024xf32> to vector<4x1024xf32>
    %259 = arith.mulf %256, %258 : vector<4x1024xf32>
    %c96_165 = arith.constant 96 : index
    %c0_166 = arith.constant 0 : index
    %260 = vector.load %arg14[%c96_165, %c0_166] : memref<108x1024xf32, #tpu.memory_space<vmem>>, vector<4x1024xf32>
    tpu.vector_store %arg14[%c96_165, %c0_166], %259 {strides = array<i32>} : memref<108x1024xf32, #tpu.memory_space<vmem>>, vector<4x1024xf32>,
    %c808_i32 = arith.constant 808 : i32
    %261 = tpu.dynamic_rotate %139 by %c808_i32 dim 1 : vector<4x1024xf32>, i32 -> vector<4x1024xf32>
    %c25_167 = arith.constant 25 : index
    %c0_168 = arith.constant 0 : index
    %262 = vector.load %arg3[%c25_167, %c0_168] : memref<27x1024xf32, #tpu.memory_space<vmem>>, vector<1x1024xf32>
    %263 = vector.broadcast %262 : vector<1x1024xf32> to vector<4x1024xf32>
    %264 = arith.mulf %261, %263 : vector<4x1024xf32>
    %c100_169 = arith.constant 100 : index
    %c0_170 = arith.constant 0 : index
    %265 = vector.load %arg14[%c100_169, %c0_170] : memref<108x1024xf32, #tpu.memory_space<vmem>>, vector<4x1024xf32>
    tpu.vector_store %arg14[%c100_169, %c0_170], %264 {strides = array<i32>} : memref<108x1024xf32, #tpu.memory_space<vmem>>, vector<4x1024xf32>,
    %c805_i32 = arith.constant 805 : i32
    %266 = tpu.dynamic_rotate %139 by %c805_i32 dim 1 : vector<4x1024xf32>, i32 -> vector<4x1024xf32>
    %c26_171 = arith.constant 26 : index
    %c0_172 = arith.constant 0 : index
    %267 = vector.load %arg3[%c26_171, %c0_172] : memref<27x1024xf32, #tpu.memory_space<vmem>>, vector<1x1024xf32>
    %268 = vector.broadcast %267 : vector<1x1024xf32> to vector<4x1024xf32>
    %269 = arith.mulf %266, %268 : vector<4x1024xf32>
    %c104_173 = arith.constant 104 : index
    %c0_174 = arith.constant 0 : index
    %270 = vector.load %arg14[%c104_173, %c0_174] : memref<108x1024xf32, #tpu.memory_space<vmem>>, vector<4x1024xf32>
    tpu.vector_store %arg14[%c104_173, %c0_174], %269 {strides = array<i32>} : memref<108x1024xf32, #tpu.memory_space<vmem>>, vector<4x1024xf32>,
    %c0_175 = arith.constant 0 : index
    %c0_176 = arith.constant 0 : index
    %271 = vector.load %arg7[%c0_175, %c0_176] : memref<4x108xf32, #tpu.memory_space<vmem>>, vector<4x108xf32>
    %c0_177 = arith.constant 0 : index
    %c0_178 = arith.constant 0 : index
    %272 = vector.load %arg14[%c0_177, %c0_178] : memref<108x1024xf32, #tpu.memory_space<vmem>>, vector<108x1024xf32>
    %cst_179 = arith.constant dense<0.000000e+00> : vector<4x1024xf32>
    %273 = tpu.matmul %271, %272, %cst_179 {dimension_numbers = #tpu.dot_dimension_numbers<[1], [0], [0], [1], [0, 0, 1, 1], [], []>} : vector<4x108xf32>, vector<108x1024xf32>, vector<4x1024xf32> -> vector<4x1024xf32>
    %c0_180 = arith.constant 0 : index
    %c0_181 = arith.constant 0 : index
    %274 = vector.load %arg8[%c0_180, %c0_181] : memref<4x1xf32, #tpu.memory_space<vmem>>, vector<4x1xf32>
    %275 = vector.broadcast %274 : vector<4x1xf32> to vector<4x1024xf32>
    %276 = arith.addf %273, %275 : vector<4x1024xf32>
    %c0_182 = arith.constant 0 : index
    %c0_183 = arith.constant 0 : index
    %277 = vector.load %arg11[%c0_182, %c0_183] : memref<4x4xf32, #tpu.memory_space<vmem>>, vector<4x4xf32>
    %cst_184 = arith.constant dense<0.000000e+00> : vector<4x1024xf32>
    %278 = tpu.matmul %277, %276, %cst_184 {dimension_numbers = #tpu.dot_dimension_numbers<[1], [0], [0], [1], [0, 0, 1, 1], [], []>} : vector<4x4xf32>, vector<4x1024xf32>, vector<4x1024xf32> -> vector<4x1024xf32>
    %c0_185 = arith.constant 0 : index
    %c0_186 = arith.constant 0 : index
    %279 = vector.load %arg12[%c0_185, %c0_186] : memref<4x1xf32, #tpu.memory_space<vmem>>, vector<4x1xf32>
    %280 = vector.broadcast %279 : vector<4x1xf32> to vector<4x1024xf32>
    %281 = arith.addf %278, %280 : vector<4x1024xf32>
    %cst_187 = arith.constant 0.000000e+00 : f32
    %282 = vector.broadcast %cst_187 : f32 to vector<4x1024xf32>
    %283 = arith.maximumf %281, %282 : vector<4x1024xf32>
    %284 = vector.extract_strided_slice %276 {offsets = [0, 512], sizes = [4, 512], strides = [1, 1]} : vector<4x1024xf32> to vector<4x512xf32>
    %c365_i32 = arith.constant 365 : i32
    %285 = tpu.dynamic_rotate %284 by %c365_i32 dim 1 : vector<4x512xf32>, i32 -> vector<4x512xf32>
    %c0_188 = arith.constant 0 : index
    %c0_189 = arith.constant 0 : index
    %286 = vector.load %arg4[%c0_188, %c0_189] : memref<27x512xf32, #tpu.memory_space<vmem>>, vector<1x512xf32>
    %287 = vector.broadcast %286 : vector<1x512xf32> to vector<4x512xf32>
    %288 = arith.mulf %285, %287 : vector<4x512xf32>
    %c0_190 = arith.constant 0 : index
    %c0_191 = arith.constant 0 : index
    %289 = vector.load %arg14[%c0_190, %c0_191] : memref<108x1024xf32, #tpu.memory_space<vmem>>, vector<4x512xf32>
    tpu.vector_store %arg14[%c0_190, %c0_191], %288 {strides = array<i32>} : memref<108x1024xf32, #tpu.memory_space<vmem>>, vector<4x512xf32>,
    %c360_i32 = arith.constant 360 : i32
    %290 = tpu.dynamic_rotate %284 by %c360_i32 dim 1 : vector<4x512xf32>, i32 -> vector<4x512xf32>
    %c1_192 = arith.constant 1 : index
    %c0_193 = arith.constant 0 : index
    %291 = vector.load %arg4[%c1_192, %c0_193] : memref<27x512xf32, #tpu.memory_space<vmem>>, vector<1x512xf32>
    %292 = vector.broadcast %291 : vector<1x512xf32> to vector<4x512xf32>
    %293 = arith.mulf %290, %292 : vector<4x512xf32>
    %c4_194 = arith.constant 4 : index
    %c0_195 = arith.constant 0 : index
    %294 = vector.load %arg14[%c4_194, %c0_195] : memref<108x1024xf32, #tpu.memory_space<vmem>>, vector<4x512xf32>
    tpu.vector_store %arg14[%c4_194, %c0_195], %293 {strides = array<i32>} : memref<108x1024xf32, #tpu.memory_space<vmem>>, vector<4x512xf32>,
    %c355_i32 = arith.constant 355 : i32
    %295 = tpu.dynamic_rotate %284 by %c355_i32 dim 1 : vector<4x512xf32>, i32 -> vector<4x512xf32>
    %c2_196 = arith.constant 2 : index
    %c0_197 = arith.constant 0 : index
    %296 = vector.load %arg4[%c2_196, %c0_197] : memref<27x512xf32, #tpu.memory_space<vmem>>, vector<1x512xf32>
    %297 = vector.broadcast %296 : vector<1x512xf32> to vector<4x512xf32>
    %298 = arith.mulf %295, %297 : vector<4x512xf32>
    %c8_198 = arith.constant 8 : index
    %c0_199 = arith.constant 0 : index
    %299 = vector.load %arg14[%c8_198, %c0_199] : memref<108x1024xf32, #tpu.memory_space<vmem>>, vector<4x512xf32>
    tpu.vector_store %arg14[%c8_198, %c0_199], %298 {strides = array<i32>} : memref<108x1024xf32, #tpu.memory_space<vmem>>, vector<4x512xf32>,
    %c325_i32 = arith.constant 325 : i32
    %300 = tpu.dynamic_rotate %284 by %c325_i32 dim 1 : vector<4x512xf32>, i32 -> vector<4x512xf32>
    %c3_200 = arith.constant 3 : index
    %c0_201 = arith.constant 0 : index
    %301 = vector.load %arg4[%c3_200, %c0_201] : memref<27x512xf32, #tpu.memory_space<vmem>>, vector<1x512xf32>
    %302 = vector.broadcast %301 : vector<1x512xf32> to vector<4x512xf32>
    %303 = arith.mulf %300, %302 : vector<4x512xf32>
    %c12_202 = arith.constant 12 : index
    %c0_203 = arith.constant 0 : index
    %304 = vector.load %arg14[%c12_202, %c0_203] : memref<108x1024xf32, #tpu.memory_space<vmem>>, vector<4x512xf32>
    tpu.vector_store %arg14[%c12_202, %c0_203], %303 {strides = array<i32>} : memref<108x1024xf32, #tpu.memory_space<vmem>>, vector<4x512xf32>,
    %c320_i32 = arith.constant 320 : i32
    %305 = tpu.dynamic_rotate %284 by %c320_i32 dim 1 : vector<4x512xf32>, i32 -> vector<4x512xf32>
    %c4_204 = arith.constant 4 : index
    %c0_205 = arith.constant 0 : index
    %306 = vector.load %arg4[%c4_204, %c0_205] : memref<27x512xf32, #tpu.memory_space<vmem>>, vector<1x512xf32>
    %307 = vector.broadcast %306 : vector<1x512xf32> to vector<4x512xf32>
    %308 = arith.mulf %305, %307 : vector<4x512xf32>
    %c16_206 = arith.constant 16 : index
    %c0_207 = arith.constant 0 : index
    %309 = vector.load %arg14[%c16_206, %c0_207] : memref<108x1024xf32, #tpu.memory_space<vmem>>, vector<4x512xf32>
    tpu.vector_store %arg14[%c16_206, %c0_207], %308 {strides = array<i32>} : memref<108x1024xf32, #tpu.memory_space<vmem>>, vector<4x512xf32>,
    %c315_i32 = arith.constant 315 : i32
    %310 = tpu.dynamic_rotate %284 by %c315_i32 dim 1 : vector<4x512xf32>, i32 -> vector<4x512xf32>
    %c5_208 = arith.constant 5 : index
    %c0_209 = arith.constant 0 : index
    %311 = vector.load %arg4[%c5_208, %c0_209] : memref<27x512xf32, #tpu.memory_space<vmem>>, vector<1x512xf32>
    %312 = vector.broadcast %311 : vector<1x512xf32> to vector<4x512xf32>
    %313 = arith.mulf %310, %312 : vector<4x512xf32>
    %c20_210 = arith.constant 20 : index
    %c0_211 = arith.constant 0 : index
    %314 = vector.load %arg14[%c20_210, %c0_211] : memref<108x1024xf32, #tpu.memory_space<vmem>>, vector<4x512xf32>
    tpu.vector_store %arg14[%c20_210, %c0_211], %313 {strides = array<i32>} : memref<108x1024xf32, #tpu.memory_space<vmem>>, vector<4x512xf32>,
    %c285_i32 = arith.constant 285 : i32
    %315 = tpu.dynamic_rotate %284 by %c285_i32 dim 1 : vector<4x512xf32>, i32 -> vector<4x512xf32>
    %c6_212 = arith.constant 6 : index
    %c0_213 = arith.constant 0 : index
    %316 = vector.load %arg4[%c6_212, %c0_213] : memref<27x512xf32, #tpu.memory_space<vmem>>, vector<1x512xf32>
    %317 = vector.broadcast %316 : vector<1x512xf32> to vector<4x512xf32>
    %318 = arith.mulf %315, %317 : vector<4x512xf32>
    %c24_214 = arith.constant 24 : index
    %c0_215 = arith.constant 0 : index
    %319 = vector.load %arg14[%c24_214, %c0_215] : memref<108x1024xf32, #tpu.memory_space<vmem>>, vector<4x512xf32>
    tpu.vector_store %arg14[%c24_214, %c0_215], %318 {strides = array<i32>} : memref<108x1024xf32, #tpu.memory_space<vmem>>, vector<4x512xf32>,
    %c280_i32 = arith.constant 280 : i32
    %320 = tpu.dynamic_rotate %284 by %c280_i32 dim 1 : vector<4x512xf32>, i32 -> vector<4x512xf32>
    %c7_216 = arith.constant 7 : index
    %c0_217 = arith.constant 0 : index
    %321 = vector.load %arg4[%c7_216, %c0_217] : memref<27x512xf32, #tpu.memory_space<vmem>>, vector<1x512xf32>
    %322 = vector.broadcast %321 : vector<1x512xf32> to vector<4x512xf32>
    %323 = arith.mulf %320, %322 : vector<4x512xf32>
    %c28_218 = arith.constant 28 : index
    %c0_219 = arith.constant 0 : index
    %324 = vector.load %arg14[%c28_218, %c0_219] : memref<108x1024xf32, #tpu.memory_space<vmem>>, vector<4x512xf32>
    tpu.vector_store %arg14[%c28_218, %c0_219], %323 {strides = array<i32>} : memref<108x1024xf32, #tpu.memory_space<vmem>>, vector<4x512xf32>,
    %c275_i32 = arith.constant 275 : i32
    %325 = tpu.dynamic_rotate %284 by %c275_i32 dim 1 : vector<4x512xf32>, i32 -> vector<4x512xf32>
    %c8_220 = arith.constant 8 : index
    %c0_221 = arith.constant 0 : index
    %326 = vector.load %arg4[%c8_220, %c0_221] : memref<27x512xf32, #tpu.memory_space<vmem>>, vector<1x512xf32>
    %327 = vector.broadcast %326 : vector<1x512xf32> to vector<4x512xf32>
    %328 = arith.mulf %325, %327 : vector<4x512xf32>
    %c32_222 = arith.constant 32 : index
    %c0_223 = arith.constant 0 : index
    %329 = vector.load %arg14[%c32_222, %c0_223] : memref<108x1024xf32, #tpu.memory_space<vmem>>, vector<4x512xf32>
    tpu.vector_store %arg14[%c32_222, %c0_223], %328 {strides = array<i32>} : memref<108x1024xf32, #tpu.memory_space<vmem>>, vector<4x512xf32>,
    %c45_i32 = arith.constant 45 : i32
    %330 = tpu.dynamic_rotate %284 by %c45_i32 dim 1 : vector<4x512xf32>, i32 -> vector<4x512xf32>
    %c9_224 = arith.constant 9 : index
    %c0_225 = arith.constant 0 : index
    %331 = vector.load %arg4[%c9_224, %c0_225] : memref<27x512xf32, #tpu.memory_space<vmem>>, vector<1x512xf32>
    %332 = vector.broadcast %331 : vector<1x512xf32> to vector<4x512xf32>
    %333 = arith.mulf %330, %332 : vector<4x512xf32>
    %c36_226 = arith.constant 36 : index
    %c0_227 = arith.constant 0 : index
    %334 = vector.load %arg14[%c36_226, %c0_227] : memref<108x1024xf32, #tpu.memory_space<vmem>>, vector<4x512xf32>
    tpu.vector_store %arg14[%c36_226, %c0_227], %333 {strides = array<i32>} : memref<108x1024xf32, #tpu.memory_space<vmem>>, vector<4x512xf32>,
    %c40_i32 = arith.constant 40 : i32
    %335 = tpu.dynamic_rotate %284 by %c40_i32 dim 1 : vector<4x512xf32>, i32 -> vector<4x512xf32>
    %c10_228 = arith.constant 10 : index
    %c0_229 = arith.constant 0 : index
    %336 = vector.load %arg4[%c10_228, %c0_229] : memref<27x512xf32, #tpu.memory_space<vmem>>, vector<1x512xf32>
    %337 = vector.broadcast %336 : vector<1x512xf32> to vector<4x512xf32>
    %338 = arith.mulf %335, %337 : vector<4x512xf32>
    %c40_230 = arith.constant 40 : index
    %c0_231 = arith.constant 0 : index
    %339 = vector.load %arg14[%c40_230, %c0_231] : memref<108x1024xf32, #tpu.memory_space<vmem>>, vector<4x512xf32>
    tpu.vector_store %arg14[%c40_230, %c0_231], %338 {strides = array<i32>} : memref<108x1024xf32, #tpu.memory_space<vmem>>, vector<4x512xf32>,
    %c35_i32 = arith.constant 35 : i32
    %340 = tpu.dynamic_rotate %284 by %c35_i32 dim 1 : vector<4x512xf32>, i32 -> vector<4x512xf32>
    %c11_232 = arith.constant 11 : index
    %c0_233 = arith.constant 0 : index
    %341 = vector.load %arg4[%c11_232, %c0_233] : memref<27x512xf32, #tpu.memory_space<vmem>>, vector<1x512xf32>
    %342 = vector.broadcast %341 : vector<1x512xf32> to vector<4x512xf32>
    %343 = arith.mulf %340, %342 : vector<4x512xf32>
    %c44_234 = arith.constant 44 : index
    %c0_235 = arith.constant 0 : index
    %344 = vector.load %arg14[%c44_234, %c0_235] : memref<108x1024xf32, #tpu.memory_space<vmem>>, vector<4x512xf32>
    tpu.vector_store %arg14[%c44_234, %c0_235], %343 {strides = array<i32>} : memref<108x1024xf32, #tpu.memory_space<vmem>>, vector<4x512xf32>,
    %c5_i32 = arith.constant 5 : i32
    %345 = tpu.dynamic_rotate %284 by %c5_i32 dim 1 : vector<4x512xf32>, i32 -> vector<4x512xf32>
    %c12_236 = arith.constant 12 : index
    %c0_237 = arith.constant 0 : index
    %346 = vector.load %arg4[%c12_236, %c0_237] : memref<27x512xf32, #tpu.memory_space<vmem>>, vector<1x512xf32>
    %347 = vector.broadcast %346 : vector<1x512xf32> to vector<4x512xf32>
    %348 = arith.mulf %345, %347 : vector<4x512xf32>
    %c48_238 = arith.constant 48 : index
    %c0_239 = arith.constant 0 : index
    %349 = vector.load %arg14[%c48_238, %c0_239] : memref<108x1024xf32, #tpu.memory_space<vmem>>, vector<4x512xf32>
    tpu.vector_store %arg14[%c48_238, %c0_239], %348 {strides = array<i32>} : memref<108x1024xf32, #tpu.memory_space<vmem>>, vector<4x512xf32>,
    %c52_240 = arith.constant 52 : index
    %c0_241 = arith.constant 0 : index
    %350 = vector.load %arg14[%c52_240, %c0_241] : memref<108x1024xf32, #tpu.memory_space<vmem>>, vector<4x512xf32>
    tpu.vector_store %arg14[%c52_240, %c0_241], %284 {strides = array<i32>} : memref<108x1024xf32, #tpu.memory_space<vmem>>, vector<4x512xf32>,
    %c507_i32 = arith.constant 507 : i32
    %351 = tpu.dynamic_rotate %284 by %c507_i32 dim 1 : vector<4x512xf32>, i32 -> vector<4x512xf32>
    %c14_242 = arith.constant 14 : index
    %c0_243 = arith.constant 0 : index
    %352 = vector.load %arg4[%c14_242, %c0_243] : memref<27x512xf32, #tpu.memory_space<vmem>>, vector<1x512xf32>
    %353 = vector.broadcast %352 : vector<1x512xf32> to vector<4x512xf32>
    %354 = arith.mulf %351, %353 : vector<4x512xf32>
    %c56_244 = arith.constant 56 : index
    %c0_245 = arith.constant 0 : index
    %355 = vector.load %arg14[%c56_244, %c0_245] : memref<108x1024xf32, #tpu.memory_space<vmem>>, vector<4x512xf32>
    tpu.vector_store %arg14[%c56_244, %c0_245], %354 {strides = array<i32>} : memref<108x1024xf32, #tpu.memory_space<vmem>>, vector<4x512xf32>,
    %c477_i32 = arith.constant 477 : i32
    %356 = tpu.dynamic_rotate %284 by %c477_i32 dim 1 : vector<4x512xf32>, i32 -> vector<4x512xf32>
    %c15_246 = arith.constant 15 : index
    %c0_247 = arith.constant 0 : index
    %357 = vector.load %arg4[%c15_246, %c0_247] : memref<27x512xf32, #tpu.memory_space<vmem>>, vector<1x512xf32>
    %358 = vector.broadcast %357 : vector<1x512xf32> to vector<4x512xf32>
    %359 = arith.mulf %356, %358 : vector<4x512xf32>
    %c60_248 = arith.constant 60 : index
    %c0_249 = arith.constant 0 : index
    %360 = vector.load %arg14[%c60_248, %c0_249] : memref<108x1024xf32, #tpu.memory_space<vmem>>, vector<4x512xf32>
    tpu.vector_store %arg14[%c60_248, %c0_249], %359 {strides = array<i32>} : memref<108x1024xf32, #tpu.memory_space<vmem>>, vector<4x512xf32>,
    %c472_i32 = arith.constant 472 : i32
    %361 = tpu.dynamic_rotate %284 by %c472_i32 dim 1 : vector<4x512xf32>, i32 -> vector<4x512xf32>
    %c16_250 = arith.constant 16 : index
    %c0_251 = arith.constant 0 : index
    %362 = vector.load %arg4[%c16_250, %c0_251] : memref<27x512xf32, #tpu.memory_space<vmem>>, vector<1x512xf32>
    %363 = vector.broadcast %362 : vector<1x512xf32> to vector<4x512xf32>
    %364 = arith.mulf %361, %363 : vector<4x512xf32>
    %c64_252 = arith.constant 64 : index
    %c0_253 = arith.constant 0 : index
    %365 = vector.load %arg14[%c64_252, %c0_253] : memref<108x1024xf32, #tpu.memory_space<vmem>>, vector<4x512xf32>
    tpu.vector_store %arg14[%c64_252, %c0_253], %364 {strides = array<i32>} : memref<108x1024xf32, #tpu.memory_space<vmem>>, vector<4x512xf32>,
    %c467_i32 = arith.constant 467 : i32
    %366 = tpu.dynamic_rotate %284 by %c467_i32 dim 1 : vector<4x512xf32>, i32 -> vector<4x512xf32>
    %c17_254 = arith.constant 17 : index
    %c0_255 = arith.constant 0 : index
    %367 = vector.load %arg4[%c17_254, %c0_255] : memref<27x512xf32, #tpu.memory_space<vmem>>, vector<1x512xf32>
    %368 = vector.broadcast %367 : vector<1x512xf32> to vector<4x512xf32>
    %369 = arith.mulf %366, %368 : vector<4x512xf32>
    %c68_256 = arith.constant 68 : index
    %c0_257 = arith.constant 0 : index
    %370 = vector.load %arg14[%c68_256, %c0_257] : memref<108x1024xf32, #tpu.memory_space<vmem>>, vector<4x512xf32>
    tpu.vector_store %arg14[%c68_256, %c0_257], %369 {strides = array<i32>} : memref<108x1024xf32, #tpu.memory_space<vmem>>, vector<4x512xf32>,
    %c237_i32 = arith.constant 237 : i32
    %371 = tpu.dynamic_rotate %284 by %c237_i32 dim 1 : vector<4x512xf32>, i32 -> vector<4x512xf32>
    %c18_258 = arith.constant 18 : index
    %c0_259 = arith.constant 0 : index
    %372 = vector.load %arg4[%c18_258, %c0_259] : memref<27x512xf32, #tpu.memory_space<vmem>>, vector<1x512xf32>
    %373 = vector.broadcast %372 : vector<1x512xf32> to vector<4x512xf32>
    %374 = arith.mulf %371, %373 : vector<4x512xf32>
    %c72_260 = arith.constant 72 : index
    %c0_261 = arith.constant 0 : index
    %375 = vector.load %arg14[%c72_260, %c0_261] : memref<108x1024xf32, #tpu.memory_space<vmem>>, vector<4x512xf32>
    tpu.vector_store %arg14[%c72_260, %c0_261], %374 {strides = array<i32>} : memref<108x1024xf32, #tpu.memory_space<vmem>>, vector<4x512xf32>,
    %c232_i32 = arith.constant 232 : i32
    %376 = tpu.dynamic_rotate %284 by %c232_i32 dim 1 : vector<4x512xf32>, i32 -> vector<4x512xf32>
    %c19_262 = arith.constant 19 : index
    %c0_263 = arith.constant 0 : index
    %377 = vector.load %arg4[%c19_262, %c0_263] : memref<27x512xf32, #tpu.memory_space<vmem>>, vector<1x512xf32>
    %378 = vector.broadcast %377 : vector<1x512xf32> to vector<4x512xf32>
    %379 = arith.mulf %376, %378 : vector<4x512xf32>
    %c76_264 = arith.constant 76 : index
    %c0_265 = arith.constant 0 : index
    %380 = vector.load %arg14[%c76_264, %c0_265] : memref<108x1024xf32, #tpu.memory_space<vmem>>, vector<4x512xf32>
    tpu.vector_store %arg14[%c76_264, %c0_265], %379 {strides = array<i32>} : memref<108x1024xf32, #tpu.memory_space<vmem>>, vector<4x512xf32>,
    %c227_i32 = arith.constant 227 : i32
    %381 = tpu.dynamic_rotate %284 by %c227_i32 dim 1 : vector<4x512xf32>, i32 -> vector<4x512xf32>
    %c20_266 = arith.constant 20 : index
    %c0_267 = arith.constant 0 : index
    %382 = vector.load %arg4[%c20_266, %c0_267] : memref<27x512xf32, #tpu.memory_space<vmem>>, vector<1x512xf32>
    %383 = vector.broadcast %382 : vector<1x512xf32> to vector<4x512xf32>
    %384 = arith.mulf %381, %383 : vector<4x512xf32>
    %c80_268 = arith.constant 80 : index
    %c0_269 = arith.constant 0 : index
    %385 = vector.load %arg14[%c80_268, %c0_269] : memref<108x1024xf32, #tpu.memory_space<vmem>>, vector<4x512xf32>
    tpu.vector_store %arg14[%c80_268, %c0_269], %384 {strides = array<i32>} : memref<108x1024xf32, #tpu.memory_space<vmem>>, vector<4x512xf32>,
    %c197_i32 = arith.constant 197 : i32
    %386 = tpu.dynamic_rotate %284 by %c197_i32 dim 1 : vector<4x512xf32>, i32 -> vector<4x512xf32>
    %c21_270 = arith.constant 21 : index
    %c0_271 = arith.constant 0 : index
    %387 = vector.load %arg4[%c21_270, %c0_271] : memref<27x512xf32, #tpu.memory_space<vmem>>, vector<1x512xf32>
    %388 = vector.broadcast %387 : vector<1x512xf32> to vector<4x512xf32>
    %389 = arith.mulf %386, %388 : vector<4x512xf32>
    %c84_272 = arith.constant 84 : index
    %c0_273 = arith.constant 0 : index
    %390 = vector.load %arg14[%c84_272, %c0_273] : memref<108x1024xf32, #tpu.memory_space<vmem>>, vector<4x512xf32>
    tpu.vector_store %arg14[%c84_272, %c0_273], %389 {strides = array<i32>} : memref<108x1024xf32, #tpu.memory_space<vmem>>, vector<4x512xf32>,
    %c192_i32_274 = arith.constant 192 : i32
    %391 = tpu.dynamic_rotate %284 by %c192_i32_274 dim 1 : vector<4x512xf32>, i32 -> vector<4x512xf32>
    %c22_275 = arith.constant 22 : index
    %c0_276 = arith.constant 0 : index
    %392 = vector.load %arg4[%c22_275, %c0_276] : memref<27x512xf32, #tpu.memory_space<vmem>>, vector<1x512xf32>
    %393 = vector.broadcast %392 : vector<1x512xf32> to vector<4x512xf32>
    %394 = arith.mulf %391, %393 : vector<4x512xf32>
    %c88_277 = arith.constant 88 : index
    %c0_278 = arith.constant 0 : index
    %395 = vector.load %arg14[%c88_277, %c0_278] : memref<108x1024xf32, #tpu.memory_space<vmem>>, vector<4x512xf32>
    tpu.vector_store %arg14[%c88_277, %c0_278], %394 {strides = array<i32>} : memref<108x1024xf32, #tpu.memory_space<vmem>>, vector<4x512xf32>,
    %c187_i32 = arith.constant 187 : i32
    %396 = tpu.dynamic_rotate %284 by %c187_i32 dim 1 : vector<4x512xf32>, i32 -> vector<4x512xf32>
    %c23_279 = arith.constant 23 : index
    %c0_280 = arith.constant 0 : index
    %397 = vector.load %arg4[%c23_279, %c0_280] : memref<27x512xf32, #tpu.memory_space<vmem>>, vector<1x512xf32>
    %398 = vector.broadcast %397 : vector<1x512xf32> to vector<4x512xf32>
    %399 = arith.mulf %396, %398 : vector<4x512xf32>
    %c92_281 = arith.constant 92 : index
    %c0_282 = arith.constant 0 : index
    %400 = vector.load %arg14[%c92_281, %c0_282] : memref<108x1024xf32, #tpu.memory_space<vmem>>, vector<4x512xf32>
    tpu.vector_store %arg14[%c92_281, %c0_282], %399 {strides = array<i32>} : memref<108x1024xf32, #tpu.memory_space<vmem>>, vector<4x512xf32>,
    %c157_i32 = arith.constant 157 : i32
    %401 = tpu.dynamic_rotate %284 by %c157_i32 dim 1 : vector<4x512xf32>, i32 -> vector<4x512xf32>
    %c24_283 = arith.constant 24 : index
    %c0_284 = arith.constant 0 : index
    %402 = vector.load %arg4[%c24_283, %c0_284] : memref<27x512xf32, #tpu.memory_space<vmem>>, vector<1x512xf32>
    %403 = vector.broadcast %402 : vector<1x512xf32> to vector<4x512xf32>
    %404 = arith.mulf %401, %403 : vector<4x512xf32>
    %c96_285 = arith.constant 96 : index
    %c0_286 = arith.constant 0 : index
    %405 = vector.load %arg14[%c96_285, %c0_286] : memref<108x1024xf32, #tpu.memory_space<vmem>>, vector<4x512xf32>
    tpu.vector_store %arg14[%c96_285, %c0_286], %404 {strides = array<i32>} : memref<108x1024xf32, #tpu.memory_space<vmem>>, vector<4x512xf32>,
    %c152_i32 = arith.constant 152 : i32
    %406 = tpu.dynamic_rotate %284 by %c152_i32 dim 1 : vector<4x512xf32>, i32 -> vector<4x512xf32>
    %c25_287 = arith.constant 25 : index
    %c0_288 = arith.constant 0 : index
    %407 = vector.load %arg4[%c25_287, %c0_288] : memref<27x512xf32, #tpu.memory_space<vmem>>, vector<1x512xf32>
    %408 = vector.broadcast %407 : vector<1x512xf32> to vector<4x512xf32>
    %409 = arith.mulf %406, %408 : vector<4x512xf32>
    %c100_289 = arith.constant 100 : index
    %c0_290 = arith.constant 0 : index
    %410 = vector.load %arg14[%c100_289, %c0_290] : memref<108x1024xf32, #tpu.memory_space<vmem>>, vector<4x512xf32>
    tpu.vector_store %arg14[%c100_289, %c0_290], %409 {strides = array<i32>} : memref<108x1024xf32, #tpu.memory_space<vmem>>, vector<4x512xf32>,
    %c147_i32 = arith.constant 147 : i32
    %411 = tpu.dynamic_rotate %284 by %c147_i32 dim 1 : vector<4x512xf32>, i32 -> vector<4x512xf32>
    %c26_291 = arith.constant 26 : index
    %c0_292 = arith.constant 0 : index
    %412 = vector.load %arg4[%c26_291, %c0_292] : memref<27x512xf32, #tpu.memory_space<vmem>>, vector<1x512xf32>
    %413 = vector.broadcast %412 : vector<1x512xf32> to vector<4x512xf32>
    %414 = arith.mulf %411, %413 : vector<4x512xf32>
    %c104_293 = arith.constant 104 : index
    %c0_294 = arith.constant 0 : index
    %415 = vector.load %arg14[%c104_293, %c0_294] : memref<108x1024xf32, #tpu.memory_space<vmem>>, vector<4x512xf32>
    tpu.vector_store %arg14[%c104_293, %c0_294], %414 {strides = array<i32>} : memref<108x1024xf32, #tpu.memory_space<vmem>>, vector<4x512xf32>,
    %c0_295 = arith.constant 0 : index
    %c0_296 = arith.constant 0 : index
    %416 = vector.load %arg9[%c0_295, %c0_296] : memref<4x108xf32, #tpu.memory_space<vmem>>, vector<4x108xf32>
    %c0_297 = arith.constant 0 : index
    %c0_298 = arith.constant 0 : index
    %417 = vector.load %arg14[%c0_297, %c0_298] : memref<108x1024xf32, #tpu.memory_space<vmem>>, vector<108x512xf32>
    %cst_299 = arith.constant dense<0.000000e+00> : vector<4x512xf32>
    %418 = tpu.matmul %416, %417, %cst_299 {dimension_numbers = #tpu.dot_dimension_numbers<[1], [0], [0], [1], [0, 0, 1, 1], [], []>} : vector<4x108xf32>, vector<108x512xf32>, vector<4x512xf32> -> vector<4x512xf32>
    %c0_300 = arith.constant 0 : index
    %c0_301 = arith.constant 0 : index
    %419 = vector.load %arg10[%c0_300, %c0_301] : memref<4x1xf32, #tpu.memory_space<vmem>>, vector<4x1xf32>
    %420 = vector.broadcast %419 : vector<4x1xf32> to vector<4x512xf32>
    %421 = arith.addf %418, %420 : vector<4x512xf32>
    %c0_302 = arith.constant 0 : index
    %c0_303 = arith.constant 0 : index
    %422 = vector.load %arg11[%c0_302, %c0_303] : memref<4x4xf32, #tpu.memory_space<vmem>>, vector<4x4xf32>
    %cst_304 = arith.constant dense<0.000000e+00> : vector<4x512xf32>
    %423 = tpu.matmul %422, %421, %cst_304 {dimension_numbers = #tpu.dot_dimension_numbers<[1], [0], [0], [1], [0, 0, 1, 1], [], []>} : vector<4x4xf32>, vector<4x512xf32>, vector<4x512xf32> -> vector<4x512xf32>
    %c0_305 = arith.constant 0 : index
    %c0_306 = arith.constant 0 : index
    %424 = vector.load %arg12[%c0_305, %c0_306] : memref<4x1xf32, #tpu.memory_space<vmem>>, vector<4x1xf32>
    %425 = vector.broadcast %424 : vector<4x1xf32> to vector<4x512xf32>
    %426 = arith.addf %423, %425 : vector<4x512xf32>
    %cst_307 = arith.constant 0.000000e+00 : f32
    %427 = vector.broadcast %cst_307 : f32 to vector<4x512xf32>
    %428 = arith.maximumf %426, %427 : vector<4x512xf32>
    %cst_308 = arith.constant 0.000000e+00 : f32
    %429 = vector.broadcast %cst_308 : f32 to vector<4x512xf32>
    %430 = arith.maximumf %138, %429 : vector<4x512xf32>
    %431 = arith.addf %1, %430 : vector<4x512xf32>
    %432 = vector.extract_strided_slice %283 {offsets = [0, 0], sizes = [4, 512], strides = [1, 1]} : vector<4x1024xf32> to vector<4x512xf32>
    %433 = arith.addf %431, %432 : vector<4x512xf32>
    %434 = vector.extract_strided_slice %283 {offsets = [0, 512], sizes = [4, 512], strides = [1, 1]} : vector<4x1024xf32> to vector<4x512xf32>
    %435 = arith.addf %433, %434 : vector<4x512xf32>
    %436 = arith.addf %435, %428 : vector<4x512xf32>
    %c0_309 = arith.constant 0 : index
    %c0_310 = arith.constant 0 : index
    %c0_311 = arith.constant 0 : index
    %437 = vector.load %arg13[%c0_309, %c0_310, %c0_311] : memref<1x4x512xf32, #tpu.memory_space<vmem>>, vector<1x4x512xf32>
    %438 = vector.shape_cast %437 : vector<1x4x512xf32> to vector<4x512xf32>
    %439 = vector.shape_cast %436 : vector<4x512xf32> to vector<1x4x512xf32>
    tpu.vector_store %arg13[%c0_309, %c0_310, %c0_311], %439 {strides = array<i32>} : memref<1x4x512xf32, #tpu.memory_space<vmem>>, vector<1x4x512xf32>,
    return
  }
  func.func @transform_0(%arg0: i32) -> (i32, i32, i32) {
    %c0_i32 = arith.constant 0 : i32
    %c0_i32_0 = arith.constant 0 : i32
    %c0_i32_1 = arith.constant 0 : i32
    return %arg0, %c0_i32, %c0_i32_0 : i32, i32, i32
  }
  func.func @transform_1(%arg0: i32) -> (i32, i32) {
    %c0_i32 = arith.constant 0 : i32
    %c0_i32_0 = arith.constant 0 : i32
    %c0_i32_1 = arith.constant 0 : i32
    return %c0_i32, %c0_i32_0 : i32, i32
  }
  func.func @transform_2(%arg0: i32) -> (i32, i32) {
    %c0_i32 = arith.constant 0 : i32
    %c0_i32_0 = arith.constant 0 : i32
    %c0_i32_1 = arith.constant 0 : i32
    return %c0_i32, %c0_i32_0 : i32, i32
  }
  func.func @transform_3(%arg0: i32) -> (i32, i32) {
    %c0_i32 = arith.constant 0 : i32
    %c0_i32_0 = arith.constant 0 : i32
    %c0_i32_1 = arith.constant 0 : i32
    return %c0_i32, %c0_i32_0 : i32, i32
  }
  func.func @transform_4(%arg0: i32) -> (i32, i32) {
    %c0_i32 = arith.constant 0 : i32
    %c0_i32_0 = arith.constant 0 : i32
    %c0_i32_1 = arith.constant 0 : i32
    return %c0_i32, %c0_i32_0 : i32, i32
  }
  func.func @transform_5(%arg0: i32) -> (i32, i32) {
    %c0_i32 = arith.constant 0 : i32
    %c0_i32_0 = arith.constant 0 : i32
    %c0_i32_1 = arith.constant 0 : i32
    return %c0_i32, %c0_i32_0 : i32, i32
  }
  func.func @transform_6(%arg0: i32) -> (i32, i32) {
    %c0_i32 = arith.constant 0 : i32
    %c0_i32_0 = arith.constant 0 : i32
    %c0_i32_1 = arith.constant 0 : i32
    return %c0_i32, %c0_i32_0 : i32, i32
  }
  func.func @transform_7(%arg0: i32) -> (i32, i32) {
    %c0_i32 = arith.constant 0 : i32
    %c0_i32_0 = arith.constant 0 : i32
    %c0_i32_1 = arith.constant 0 : i32
    return %c0_i32, %c0_i32_0 : i32, i32
  }
  func.func @transform_8(%arg0: i32) -> (i32, i32) {
    %c0_i32 = arith.constant 0 : i32
    %c0_i32_0 = arith.constant 0 : i32
    %c0_i32_1 = arith.constant 0 : i32
    return %c0_i32, %c0_i32_0 : i32, i32
  }
  func.func @transform_9(%arg0: i32) -> (i32, i32) {
    %c0_i32 = arith.constant 0 : i32
    %c0_i32_0 = arith.constant 0 : i32
    %c0_i32_1 = arith.constant 0 : i32
    return %c0_i32, %c0_i32_0 : i32, i32
  }
  func.func @transform_10(%arg0: i32) -> (i32, i32) {
    %c0_i32 = arith.constant 0 : i32
    %c0_i32_0 = arith.constant 0 : i32
    %c0_i32_1 = arith.constant 0 : i32
    return %c0_i32, %c0_i32_0 : i32, i32
  }
  func.func @transform_11(%arg0: i32) -> (i32, i32) {
    %c0_i32 = arith.constant 0 : i32
    %c0_i32_0 = arith.constant 0 : i32
    %c0_i32_1 = arith.constant 0 : i32
    return %c0_i32, %c0_i32_0 : i32, i32
  }
  func.func @transform_12(%arg0: i32) -> (i32, i32, i32) {
    %c0_i32 = arith.constant 0 : i32
    %c0_i32_0 = arith.constant 0 : i32
    %c0_i32_1 = arith.constant 0 : i32
    return %arg0, %c0_i32, %c0_i32_0 : i32, i32, i32
  }
}

</mosaic_0001>

<llo_original>
// kernel: dacblock_forward.1
$region0: #{dacblock_forward.1}
  #allocation0 [shape = 'u32[]', space=smem, size = 0x4, offset = 0x4, fixed_abs, tag = 'smem constant byte address 0x4 - core index']
  #allocation1 [shape = 'u32[144,128]{1,0:T(1,128)}', space=vmem, size = 0x12000, scoped, tag = 'internal scratch']
  #allocation2 [shape = 'f32[108,1024]{1,0:T(8,128)}', space=vmem, size = 0x70000, scoped, tag = 'scratch operand']
  %s0 = inlined_call_operand.vmem [shape: f32[2,4,512], index: 0, kind: input, shape index: {}]
  %s1 = inlined_call_operand.vmem [shape: f32[27,512], index: 1, kind: input, shape index: {}]
  %s2 = inlined_call_operand.vmem [shape: f32[27,1024], index: 2, kind: input, shape index: {}]
  %s3 = inlined_call_operand.vmem [shape: f32[27,512], index: 3, kind: input, shape index: {}]
  %s4 = inlined_call_operand.vmem [shape: f32[4,108], index: 4, kind: input, shape index: {}]
  %s5 = inlined_call_operand.vmem [shape: f32[4,1], index: 5, kind: input, shape index: {}]
  %s6 = inlined_call_operand.vmem [shape: f32[4,108], index: 6, kind: input, shape index: {}]
  %s7 = inlined_call_operand.vmem [shape: f32[4,1], index: 7, kind: input, shape index: {}]
  %s8 = inlined_call_operand.vmem [shape: f32[4,108], index: 8, kind: input, shape index: {}]
  %s9 = inlined_call_operand.vmem [shape: f32[4,1], index: 9, kind: input, shape index: {}]
  %s10 = inlined_call_operand.vmem [shape: f32[4,4], index: 10, kind: input, shape index: {}]
  %s11 = inlined_call_operand.vmem [shape: f32[4,1], index: 11, kind: input, shape index: {}]
  %s12 = inlined_call_operand.vmem [shape: f32[2,4,512], index: 12, kind: output, shape index: {}]
  %s13 = sld [smem:[#allocation0]]
  $region81: #{dacblock_forward.1} parent=0
    _
  %s15 = ssub.s32 1, %s13
  %s16 = scalar_select 0, %s15, %s13
  loop: start=0, step=1, limit=4
  $region2: #{dacblock_forward.1} parent=0 // loop_pre_header
    _
  $region3: #{dacblock_forward.1} parent=0 // loop_header
    %s18 = sphi 0, %s22
    %p19 = scmp.ge.s32.totalorder %s18, 4
    %s28 = sphi 0, %s30
    %s31 = sphi 0, %s28
    %s32 = sphi 0, %s31
    %s48 = sphi 0, %s32
    %s52 = sphi 0, %s52
    %s54 = sphi 0, %s52
    %s55 = sphi 0, %s54
    %s69 = sphi 0, %s55
    %s73 = sphi 0, %s73
    %s75 = sphi 0, %s73
    %s76 = sphi 0, %s75
    %s90 = sphi 0, %s76
    %s94 = sphi 0, %s94
    %s96 = sphi 0, %s94
    %s97 = sphi 0, %s96
    %s111 = sphi 0, %s97
    %s115 = sphi 0, %s115
    %s117 = sphi 0, %s115
    %s118 = sphi 0, %s117
    %s132 = sphi 0, %s118
    %s136 = sphi 0, %s136
    %s138 = sphi 0, %s136
    %s139 = sphi 0, %s138
    %s153 = sphi 0, %s139
    %s157 = sphi 0, %s157
    %s159 = sphi 0, %s157
    %s160 = sphi 0, %s159
    %s174 = sphi 0, %s160
    %s178 = sphi 0, %s178
    %s180 = sphi 0, %s178
    %s181 = sphi 0, %s180
    %s195 = sphi 0, %s181
    %s199 = sphi 0, %s199
    %s201 = sphi 0, %s199
    %s202 = sphi 0, %s201
    %s216 = sphi 0, %s202
    %s220 = sphi 0, %s220
    %s222 = sphi 0, %s220
    %s223 = sphi 0, %s222
    %s237 = sphi 0, %s223
    %s241 = sphi 0, %s241
    %s243 = sphi 0, %s241
    %s244 = sphi 0, %s243
    %s258 = sphi 0, %s244
    %s262 = sphi 0, %s262
    %s264 = sphi 0, %s262
    %s265 = sphi 0, %s264
    %s279 = sphi 0, %s265
    %s285 = sphi 0, %s287
    %s288 = sphi 0, %s285
    %s289 = sphi 0, %s288
    %s305 = sphi 0, %s289
  $region4: #{dacblock_forward.1} parent=0 // loop_header_branch
    %21 = sbr.rel (%p19) target = $region8
  $region5: #{dacblock_forward.1} parent=0 // loop_body
    %s23 = ssub.s32 %s18, 1
    %s24 = ssub.s32 %s18, 2
    %s25 = sadd.s32 %s18, 1
    %s26 = ssub.s32 %s18, %s25
    %p27 = scmp.eq.s32.totalorder %s26, 0
    %s29 = sadd.s32 %s28, 1
    %s30 = scalar_select %p27, %s28, %s29
    %p33 = pneg %p27
    %p34 = scmp.eq.s32.totalorder %s18, 1
    %p35 = por %p33, %p34
    %p36 = scmp.ne.s32.totalorder %s28, %s31
    %p37 = scmp.eq.s32.totalorder %s18, 0
    %p38 = por %p36, %p37
    %p39 = scmp.ne.s32.totalorder %s28, %s31
    %p40 = scmp.eq.s32.totalorder %s23, 1
    %p41 = por %p39, %p40
    %p42 = scmp.ne.s32.totalorder %s31, %s32
    %p43 = scmp.eq.s32.totalorder %s23, 0
    %p44 = por %p42, %p43
    %p45 = scmp.ne.s32.totalorder %s31, %s32
    %p46 = scmp.eq.s32.totalorder %s24, 1
    %p47 = por %p45, %p46
    %p49 = scmp.ne.s32.totalorder %s32, %s48
    %p50 = scmp.eq.s32.totalorder %s24, 0
    %p51 = por %p49, %p50
    %s53 = sadd.s32 %s52, 1
    %p56 = scmp.eq.s32.totalorder %s18, 1
    %p57 = scmp.ne.s32.totalorder %s52, %s54
    %p58 = scmp.eq.s32.totalorder %s18, 0
    %p59 = por %p57, %p58
    %p60 = scmp.ne.s32.totalorder %s52, %s54
    %p61 = scmp.eq.s32.totalorder %s23, 1
    %p62 = por %p60, %p61
    %p63 = scmp.ne.s32.totalorder %s54, %s55
    %p64 = scmp.eq.s32.totalorder %s23, 0
    %p65 = por %p63, %p64
    %p66 = scmp.ne.s32.totalorder %s54, %s55
    %p67 = scmp.eq.s32.totalorder %s24, 1
    %p68 = por %p66, %p67
    %p70 = scmp.ne.s32.totalorder %s55, %s69
    %p71 = scmp.eq.s32.totalorder %s24, 0
    %p72 = por %p70, %p71
    %s74 = sadd.s32 %s73, 1
    %p77 = scmp.eq.s32.totalorder %s18, 1
    %p78 = scmp.ne.s32.totalorder %s73, %s75
    %p79 = scmp.eq.s32.totalorder %s18, 0
    %p80 = por %p78, %p79
    %p81 = scmp.ne.s32.totalorder %s73, %s75
    %p82 = scmp.eq.s32.totalorder %s23, 1
    %p83 = por %p81, %p82
    %p84 = scmp.ne.s32.totalorder %s75, %s76
    %p85 = scmp.eq.s32.totalorder %s23, 0
    %p86 = por %p84, %p85
    %p87 = scmp.ne.s32.totalorder %s75, %s76
    %p88 = scmp.eq.s32.totalorder %s24, 1
    %p89 = por %p87, %p88
    %p91 = scmp.ne.s32.totalorder %s76, %s90
    %p92 = scmp.eq.s32.totalorder %s24, 0
    %p93 = por %p91, %p92
    %s95 = sadd.s32 %s94, 1
    %p98 = scmp.eq.s32.totalorder %s18, 1
    %p99 = scmp.ne.s32.totalorder %s94, %s96
    %p100 = scmp.eq.s32.totalorder %s18, 0
    %p101 = por %p99, %p100
    %p102 = scmp.ne.s32.totalorder %s94, %s96
    %p103 = scmp.eq.s32.totalorder %s23, 1
    %p104 = por %p102, %p103
    %p105 = scmp.ne.s32.totalorder %s96, %s97
    %p106 = scmp.eq.s32.totalorder %s23, 0
    %p107 = por %p105, %p106
    %p108 = scmp.ne.s32.totalorder %s96, %s97
    %p109 = scmp.eq.s32.totalorder %s24, 1
    %p110 = por %p108, %p109
    %p112 = scmp.ne.s32.totalorder %s97, %s111
    %p113 = scmp.eq.s32.totalorder %s24, 0
    %p114 = por %p112, %p113
    %s116 = sadd.s32 %s115, 1
    %p119 = scmp.eq.s32.totalorder %s18, 1
    %p120 = scmp.ne.s32.totalorder %s115, %s117
    %p121 = scmp.eq.s32.totalorder %s18, 0
    %p122 = por %p120, %p121
    %p123 = scmp.ne.s32.totalorder %s115, %s117
    %p124 = scmp.eq.s32.totalorder %s23, 1
    %p125 = por %p123, %p124
    %p126 = scmp.ne.s32.totalorder %s117, %s118
    %p127 = scmp.eq.s32.totalorder %s23, 0
    %p128 = por %p126, %p127
    %p129 = scmp.ne.s32.totalorder %s117, %s118
    %p130 = scmp.eq.s32.totalorder %s24, 1
    %p131 = por %p129, %p130
    %p133 = scmp.ne.s32.totalorder %s118, %s132
    %p134 = scmp.eq.s32.totalorder %s24, 0
    %p135 = por %p133, %p134
    %s137 = sadd.s32 %s136, 1
    %p140 = scmp.eq.s32.totalorder %s18, 1
    %p141 = scmp.ne.s32.totalorder %s136, %s138
    %p142 = scmp.eq.s32.totalorder %s18, 0
    %p143 = por %p141, %p142
    %p144 = scmp.ne.s32.totalorder %s136, %s138
    %p145 = scmp.eq.s32.totalorder %s23, 1
    %p146 = por %p144, %p145
    %p147 = scmp.ne.s32.totalorder %s138, %s139
    %p148 = scmp.eq.s32.totalorder %s23, 0
    %p149 = por %p147, %p148
    %p150 = scmp.ne.s32.totalorder %s138, %s139
    %p151 = scmp.eq.s32.totalorder %s24, 1
    %p152 = por %p150, %p151
    %p154 = scmp.ne.s32.totalorder %s139, %s153
    %p155 = scmp.eq.s32.totalorder %s24, 0
    %p156 = por %p154, %p155
    %s158 = sadd.s32 %s157, 1
    %p161 = scmp.eq.s32.totalorder %s18, 1
    %p162 = scmp.ne.s32.totalorder %s157, %s159
    %p163 = scmp.eq.s32.totalorder %s18, 0
    %p164 = por %p162, %p163
    %p165 = scmp.ne.s32.totalorder %s157, %s159
    %p166 = scmp.eq.s32.totalorder %s23, 1
    %p167 = por %p165, %p166
    %p168 = scmp.ne.s32.totalorder %s159, %s160
    %p169 = scmp.eq.s32.totalorder %s23, 0
    %p170 = por %p168, %p169
    %p171 = scmp.ne.s32.totalorder %s159, %s160
    %p172 = scmp.eq.s32.totalorder %s24, 1
    %p173 = por %p171, %p172
    %p175 = scmp.ne.s32.totalorder %s160, %s174
    %p176 = scmp.eq.s32.totalorder %s24, 0
    %p177 = por %p175, %p176
    %s179 = sadd.s32 %s178, 1
    %p182 = scmp.eq.s32.totalorder %s18, 1
    %p183 = scmp.ne.s32.totalorder %s178, %s180
    %p184 = scmp.eq.s32.totalorder %s18, 0
    %p185 = por %p183, %p184
    %p186 = scmp.ne.s32.totalorder %s178, %s180
    %p187 = scmp.eq.s32.totalorder %s23, 1
    %p188 = por %p186, %p187
    %p189 = scmp.ne.s32.totalorder %s180, %s181
    %p190 = scmp.eq.s32.totalorder %s23, 0
    %p191 = por %p189, %p190
    %p192 = scmp.ne.s32.totalorder %s180, %s181
    %p193 = scmp.eq.s32.totalorder %s24, 1
    %p194 = por %p192, %p193
    %p196 = scmp.ne.s32.totalorder %s181, %s195
    %p197 = scmp.eq.s32.totalorder %s24, 0
    %p198 = por %p196, %p197
    %s200 = sadd.s32 %s199, 1
    %p203 = scmp.eq.s32.totalorder %s18, 1
    %p204 = scmp.ne.s32.totalorder %s199, %s201
    %p205 = scmp.eq.s32.totalorder %s18, 0
    %p206 = por %p204, %p205
    %p207 = scmp.ne.s32.totalorder %s199, %s201
    %p208 = scmp.eq.s32.totalorder %s23, 1
    %p209 = por %p207, %p208
    %p210 = scmp.ne.s32.totalorder %s201, %s202
    %p211 = scmp.eq.s32.totalorder %s23, 0
    %p212 = por %p210, %p211
    %p213 = scmp.ne.s32.totalorder %s201, %s202
    %p214 = scmp.eq.s32.totalorder %s24, 1
    %p215 = por %p213, %p214
    %p217 = scmp.ne.s32.totalorder %s202, %s216
    %p218 = scmp.eq.s32.totalorder %s24, 0
    %p219 = por %p217, %p218
    %s221 = sadd.s32 %s220, 1
    %p224 = scmp.eq.s32.totalorder %s18, 1
    %p225 = scmp.ne.s32.totalorder %s220, %s222
    %p226 = scmp.eq.s32.totalorder %s18, 0
    %p227 = por %p225, %p226
    %p228 = scmp.ne.s32.totalorder %s220, %s222
    %p229 = scmp.eq.s32.totalorder %s23, 1
    %p230 = por %p228, %p229
    %p231 = scmp.ne.s32.totalorder %s222, %s223
    %p232 = scmp.eq.s32.totalorder %s23, 0
    %p233 = por %p231, %p232
    %p234 = scmp.ne.s32.totalorder %s222, %s223
    %p235 = scmp.eq.s32.totalorder %s24, 1
    %p236 = por %p234, %p235
    %p238 = scmp.ne.s32.totalorder %s223, %s237
    %p239 = scmp.eq.s32.totalorder %s24, 0
    %p240 = por %p238, %p239
    %s242 = sadd.s32 %s241, 1
    %p245 = scmp.eq.s32.totalorder %s18, 1
    %p246 = scmp.ne.s32.totalorder %s241, %s243
    %p247 = scmp.eq.s32.totalorder %s18, 0
    %p248 = por %p246, %p247
    %p249 = scmp.ne.s32.totalorder %s241, %s243
    %p250 = scmp.eq.s32.totalorder %s23, 1
    %p251 = por %p249, %p250
    %p252 = scmp.ne.s32.totalorder %s243, %s244
    %p253 = scmp.eq.s32.totalorder %s23, 0
    %p254 = por %p252, %p253
    %p255 = scmp.ne.s32.totalorder %s243, %s244
    %p256 = scmp.eq.s32.totalorder %s24, 1
    %p257 = por %p255, %p256
    %p259 = scmp.ne.s32.totalorder %s244, %s258
    %p260 = scmp.eq.s32.totalorder %s24, 0
    %p261 = por %p259, %p260
    %s263 = sadd.s32 %s262, 1
    %p266 = scmp.eq.s32.totalorder %s18, 1
    %p267 = scmp.ne.s32.totalorder %s262, %s264
    %p268 = scmp.eq.s32.totalorder %s18, 0
    %p269 = por %p267, %p268
    %p270 = scmp.ne.s32.totalorder %s262, %s264
    %p271 = scmp.eq.s32.totalorder %s23, 1
    %p272 = por %p270, %p271
    %p273 = scmp.ne.s32.totalorder %s264, %s265
    %p274 = scmp.eq.s32.totalorder %s23, 0
    %p275 = por %p273, %p274
    %p276 = scmp.ne.s32.totalorder %s264, %s265
    %p277 = scmp.eq.s32.totalorder %s24, 1
    %p278 = por %p276, %p277
    %p280 = scmp.ne.s32.totalorder %s265, %s279
    %p281 = scmp.eq.s32.totalorder %s24, 0
    %p282 = por %p280, %p281
    %s283 = ssub.s32 %s18, %s25
    %p284 = scmp.eq.s32.totalorder %s283, 0
    %s286 = sadd.s32 %s285, 1
    %s287 = scalar_select %p284, %s285, %s286
    %p290 = pneg %p284
    %p291 = scmp.eq.s32.totalorder %s18, 1
    %p292 = por %p290, %p291
    %p293 = scmp.ne.s32.totalorder %s285, %s288
    %p294 = scmp.eq.s32.totalorder %s18, 0
    %p295 = por %p293, %p294
    %p296 = scmp.ne.s32.totalorder %s285, %s288
    %p297 = scmp.eq.s32.totalorder %s23, 1
    %p298 = por %p296, %p297
    %p299 = scmp.ne.s32.totalorder %s288, %s289
    %p300 = scmp.eq.s32.totalorder %s23, 0
    %p301 = por %p299, %p300
    %p302 = scmp.ne.s32.totalorder %s288, %s289
    %p303 = scmp.eq.s32.totalorder %s24, 1
    %p304 = por %p302, %p303
    %p306 = scmp.ne.s32.totalorder %s289, %s305
    %p307 = scmp.eq.s32.totalorder %s24, 0
    %p308 = por %p306, %p307
    %p309 = scmp.le.s32.totalorder 1, %s18
    %p310 = scmp.lt.s32.totalorder %s18, 3
    %p311 = pnand %p309, %p310
    %p312 = pneg %p311
    // Predicated region
    $region9: #{dacblock_forward.1} parent=5 // pred_check
      _
    $region10: #{dacblock_forward.1} parent=5 // pred_check_branch
      %314 = sbr.rel (%p311) target = $region12
    $region11: #{dacblock_forward.1} parent=5 // pred_region
      %s315 = ssub.s32 %s18, 1
      // Predicated region
      $region13: #{dacblock_forward.1} parent=11 // pred_check
        %p316 = pneg %p65
      $region14: #{dacblock_forward.1} parent=11 // pred_check_branch
        %318 = sbr.rel (%p316) target = $region16
      $region15: #{dacblock_forward.1} parent=11 // pred_region
        _
      $region16: #{dacblock_forward.1} parent=11 // pred_fallthru
        _
      // Predicated region
      $region17: #{dacblock_forward.1} parent=11 // pred_check
        %p319 = pneg %p86
      $region18: #{dacblock_forward.1} parent=11 // pred_check_branch
        %321 = sbr.rel (%p319) target = $region20
      $region19: #{dacblock_forward.1} parent=11 // pred_region
        _
      $region20: #{dacblock_forward.1} parent=11 // pred_fallthru
        _
      // Predicated region
      $region21: #{dacblock_forward.1} parent=11 // pred_check
        %p322 = pneg %p107
      $region22: #{dacblock_forward.1} parent=11 // pred_check_branch
        %324 = sbr.rel (%p322) target = $region24
      $region23: #{dacblock_forward.1} parent=11 // pred_region
        _
      $region24: #{dacblock_forward.1} parent=11 // pred_fallthru
        _
      // Predicated region
      $region25: #{dacblock_forward.1} parent=11 // pred_check
        %p325 = pneg %p128
      $region26: #{dacblock_forward.1} parent=11 // pred_check_branch
        %327 = sbr.rel (%p325) target = $region28
      $region27: #{dacblock_forward.1} parent=11 // pred_region
        _
      $region28: #{dacblock_forward.1} parent=11 // pred_fallthru
        _
      // Predicated region
      $region29: #{dacblock_forward.1} parent=11 // pred_check
        %p328 = pneg %p149
      $region30: #{dacblock_forward.1} parent=11 // pred_check_branch
        %330 = sbr.rel (%p328) target = $region32
      $region31: #{dacblock_forward.1} parent=11 // pred_region
        _
      $region32: #{dacblock_forward.1} parent=11 // pred_fallthru
        _
      // Predicated region
      $region33: #{dacblock_forward.1} parent=11 // pred_check
        %p331 = pneg %p170
      $region34: #{dacblock_forward.1} parent=11 // pred_check_branch
        %333 = sbr.rel (%p331) target = $region36
      $region35: #{dacblock_forward.1} parent=11 // pred_region
        _
      $region36: #{dacblock_forward.1} parent=11 // pred_fallthru
        _
      // Predicated region
      $region37: #{dacblock_forward.1} parent=11 // pred_check
        %p334 = pneg %p191
      $region38: #{dacblock_forward.1} parent=11 // pred_check_branch
        %336 = sbr.rel (%p334) target = $region40
      $region39: #{dacblock_forward.1} parent=11 // pred_region
        _
      $region40: #{dacblock_forward.1} parent=11 // pred_fallthru
        _
      // Predicated region
      $region41: #{dacblock_forward.1} parent=11 // pred_check
        %p337 = pneg %p212
      $region42: #{dacblock_forward.1} parent=11 // pred_check_branch
        %339 = sbr.rel (%p337) target = $region44
      $region43: #{dacblock_forward.1} parent=11 // pred_region
        _
      $region44: #{dacblock_forward.1} parent=11 // pred_fallthru
        _
      // Predicated region
      $region45: #{dacblock_forward.1} parent=11 // pred_check
        %p340 = pneg %p233
      $region46: #{dacblock_forward.1} parent=11 // pred_check_branch
        %342 = sbr.rel (%p340) target = $region48
      $region47: #{dacblock_forward.1} parent=11 // pred_region
        _
      $region48: #{dacblock_forward.1} parent=11 // pred_fallthru
        _
      // Predicated region
      $region49: #{dacblock_forward.1} parent=11 // pred_check
        %p343 = pneg %p254
      $region50: #{dacblock_forward.1} parent=11 // pred_check_branch
        %345 = sbr.rel (%p343) target = $region52
      $region51: #{dacblock_forward.1} parent=11 // pred_region
        _
      $region52: #{dacblock_forward.1} parent=11 // pred_fallthru
        _
      // Predicated region
      $region53: #{dacblock_forward.1} parent=11 // pred_check
        %p346 = pneg %p275
      $region54: #{dacblock_forward.1} parent=11 // pred_check_branch
        %348 = sbr.rel (%p346) target = $region56
      $region55: #{dacblock_forward.1} parent=11 // pred_region
        _
      $region56: #{dacblock_forward.1} parent=11 // pred_fallthru
        _
    $region12: #{dacblock_forward.1} parent=5 // pred_fallthru
      _
    %p349 = scmp.lt.s32.totalorder %s18, 2
    // Predicated region
    $region57: #{dacblock_forward.1} parent=5 // pred_check
      %p350 = pneg %p349
    $region58: #{dacblock_forward.1} parent=5 // pred_check_branch
      %352 = sbr.rel (%p350) target = $region60
    $region59: #{dacblock_forward.1} parent=5 // pred_region
      // Predicated region
      $region61: #{dacblock_forward.1} parent=59 // pred_check
        %p353 = pneg %p38
      $region62: #{dacblock_forward.1} parent=59 // pred_check_branch
        %355 = sbr.rel (%p353) target = $region64
      $region63: #{dacblock_forward.1} parent=59 // pred_region
        %p356 = scmp.lt.s32.totalorder %s18, 1
        %s357 = scalar_select %p356, %s18, 1
        %s358 = smul.addr %s357, 4
        %s359 = smul.addr %s358, 4
        %s360 = scalar_lea.vmem %s0, %s359
      $region64: #{dacblock_forward.1} parent=59 // pred_fallthru
        _
    $region60: #{dacblock_forward.1} parent=5 // pred_fallthru
      _
    %p361 = scmp.le.s32.totalorder 1, %s18
    %p362 = scmp.lt.s32.totalorder %s18, 3
    %p363 = pnand %p361, %p362
    %p364 = pneg %p363
    // Predicated region
    $region65: #{dacblock_forward.1} parent=5 // pred_check
      _
    $region66: #{dacblock_forward.1} parent=5 // pred_check_branch
      %366 = sbr.rel (%p363) target = $region68
    $region67: #{dacblock_forward.1} parent=5 // pred_region
      %s367 = ssub.s32 %s18, 1
      %p368 = scmp.lt.s32.totalorder %s23, 1
      %s369 = scalar_select %p368, %s23, 1
      %s370 = smul.addr %s369, 4
      %s371 = smul.addr %s370, 4
      %s372 = scalar_lea.vmem %s0, %s371
      %p373 = pneg %p44
      %p374 = pneg %p41
      %p375 = pneg %p65
      %p376 = pneg %p62
      %p377 = pneg %p86
      %p378 = pneg %p83
      %p379 = pneg %p107
      %p380 = pneg %p104
      %p381 = pneg %p128
      %p382 = pneg %p125
      %p383 = pneg %p149
      %p384 = pneg %p146
      %p385 = pneg %p170
      %p386 = pneg %p167
      %p387 = pneg %p191
      %p388 = pneg %p188
      %p389 = pneg %p212
      %p390 = pneg %p209
      %p391 = pneg %p233
      %p392 = pneg %p230
      %p393 = pneg %p254
      %p394 = pneg %p251
      %p395 = pneg %p275
      %p396 = pneg %p272
      %p397 = pneg %p301
      %p398 = pneg %p298
      %p399 = scmp.lt.s32.totalorder %s23, 1
      %s400 = scalar_select %p399, %s23, 1
      %s401 = smul.addr %s400, 4
      %s402 = smul.addr %s401, 4
      %s403 = scalar_lea.vmem %s12, %s402
      %p404 = scmp.lt.s32.totalorder %s23, 1
      %s405 = scalar_select %p404, %s23, 1
      %s406 = smul.addr %s405, 4
      %s407 = smul.addr %s406, 4
      %s408 = scalar_lea.vmem %s0, %s407
      %p409 = scmp.lt.s32.totalorder %s23, 1
      %s410 = scalar_select %p409, %s23, 1
      %s411 = smul.addr %s410, 4
      %s412 = smul.addr %s411, 4
      %s413 = scalar_lea.vmem %s12, %s412
      %v414 = vld [vmem:[%s408] sm:$0xff]
      %v415 = vld [vmem:[%s408 + $0x8] sm:$0xff]
      %v418 = vcombine.high %v414, %v414
      %v419 = vcombine.high %v415, %v415
      %422 = vrot.lane.b32.xlu0 %v414, 73
      %v423 = vpop.permute.xlu0 %422
      %424 = vrot.lane.b32.xlu0 %v418, 73
      %v425 = vpop.permute.xlu0 %424
      %426 = vrot.lane.b32.xlu0 %v415, 73
      %v427 = vpop.permute.xlu0 %426
      %428 = vrot.lane.b32.xlu0 %v419, 73
      %v429 = vpop.permute.xlu0 %428
      %v430 = vlaneseq
      %v431 = vand.u32 %v430, 127
      %vm432 = vcmp.lt.s32.totalorder %v431, 73
      %v433 = vsel %vm432, %v427, %v429
      %v434 = vsel %vm432, %v425, %v427
      %v435 = vsel %vm432, %v423, %v425
      %v436 = vsel %vm432, %v429, %v423
      %v437 = vld [vmem:[%s1] ss:$8 sm:$0xf]
      %v439 = vlaneseq
      %v440 = vshrl.u32 %v439, 7
      %v441 = vsub.s32 0, %v440
      %v442 = vrot.slane %v437, %v441
      %v443 = vlaneseq
      %v444 = vshrl.u32 %v443, 7
      %v445 = vsub.s32 1, %v444
      %v446 = vrot.slane %v437, %v445
      %v447 = vlaneseq
      %v448 = vshrl.u32 %v447, 7
      %v449 = vsub.s32 2, %v448
      %v450 = vrot.slane %v437, %v449
      %v451 = vlaneseq
      %v452 = vshrl.u32 %v451, 7
      %v453 = vsub.s32 3, %v452
      %v454 = vrot.slane %v437, %v453
      %v459 = vmul.f32 %v436, %v442
      %v460 = vmul.f32 %v435, %v446
      %v461 = vmul.f32 %v434, %v450
      %v462 = vmul.f32 %v433, %v454
      %463 = vst [vmem:[#allocation2] sm:$0xf] %v459
      %464 = vst [vmem:[#allocation2 + $0x8] sm:$0xf] %v460
      %465 = vst [vmem:[#allocation2 + $0x10] sm:$0xf] %v461
      %466 = vst [vmem:[#allocation2 + $0x18] sm:$0xf] %v462
      %467 = vrot.lane.b32.xlu0 %v414, 72
      %v468 = vpop.permute.xlu0 %467
      %469 = vrot.lane.b32.xlu0 %v418, 72
      %v470 = vpop.permute.xlu0 %469
      %471 = vrot.lane.b32.xlu0 %v415, 72
      %v472 = vpop.permute.xlu0 %471
      %473 = vrot.lane.b32.xlu0 %v419, 72
      %v474 = vpop.permute.xlu0 %473
      %vm475 = vcmp.lt.s32.totalorder %v431, 72
      %v476 = vsel %vm475, %v472, %v474
      %v477 = vsel %vm475, %v470, %v472
      %v478 = vsel %vm475, %v468, %v470
      %v479 = vsel %vm475, %v474, %v468
      %s480 = scalar_lea.vmem %s1, 1
      %v481 = vld [vmem:[%s480] ss:$8 sm:$0xf]
      %v483 = vlaneseq
      %v484 = vshrl.u32 %v483, 7
      %v485 = vsub.s32 0, %v484
      %v486 = vrot.slane %v481, %v485
      %v487 = vlaneseq
      %v488 = vshrl.u32 %v487, 7
      %v489 = vsub.s32 1, %v488
      %v490 = vrot.slane %v481, %v489
      %v491 = vlaneseq
      %v492 = vshrl.u32 %v491, 7
      %v493 = vsub.s32 2, %v492
      %v494 = vrot.slane %v481, %v493
      %v495 = vlaneseq
      %v496 = vshrl.u32 %v495, 7
      %v497 = vsub.s32 3, %v496
      %v498 = vrot.slane %v481, %v497
      %v503 = vmul.f32 %v479, %v486
      %v504 = vmul.f32 %v478, %v490
      %v505 = vmul.f32 %v477, %v494
      %v506 = vmul.f32 %v476, %v498
      %v511 = vrot.slane %v503, 4
      %v512 = vrot.slane %v504, 4
      %v513 = vrot.slane %v505, 4
      %v514 = vrot.slane %v506, 4
      %519 = vst [vmem:[#allocation2] sm:$0xf0] %v511
      %520 = vst [vmem:[#allocation2 + $0x8] sm:$0xf0] %v512
      %521 = vst [vmem:[#allocation2 + $0x10] sm:$0xf0] %v513
      %522 = vst [vmem:[#allocation2 + $0x18] sm:$0xf0] %v514
      %523 = vrot.lane.b32.xlu0 %v414, 71
      %v524 = vpop.permute.xlu0 %523
      %525 = vrot.lane.b32.xlu0 %v418, 71
      %v526 = vpop.permute.xlu0 %525
      %527 = vrot.lane.b32.xlu0 %v415, 71
      %v528 = vpop.permute.xlu0 %527
      %529 = vrot.lane.b32.xlu0 %v419, 71
      %v530 = vpop.permute.xlu0 %529
      %vm531 = vcmp.lt.s32.totalorder %v431, 71
      %v532 = vsel %vm531, %v528, %v530
      %v533 = vsel %vm531, %v526, %v528
      %v534 = vsel %vm531, %v524, %v526
      %v535 = vsel %vm531, %v530, %v524
      %s536 = scalar_lea.vmem %s1, 2
      %v537 = vld [vmem:[%s536] ss:$8 sm:$0xf]
      %v539 = vlaneseq
      %v540 = vshrl.u32 %v539, 7
      %v541 = vsub.s32 0, %v540
      %v542 = vrot.slane %v537, %v541
      %v543 = vlaneseq
      %v544 = vshrl.u32 %v543, 7
      %v545 = vsub.s32 1, %v544
      %v546 = vrot.slane %v537, %v545
      %v547 = vlaneseq
      %v548 = vshrl.u32 %v547, 7
      %v549 = vsub.s32 2, %v548
      %v550 = vrot.slane %v537, %v549
      %v551 = vlaneseq
      %v552 = vshrl.u32 %v551, 7
      %v553 = vsub.s32 3, %v552
      %v554 = vrot.slane %v537, %v553
      %v559 = vmul.f32 %v535, %v542
      %v560 = vmul.f32 %v534, %v546
      %v561 = vmul.f32 %v533, %v550
      %v562 = vmul.f32 %v532, %v554
      %563 = vst [vmem:[#allocation2 + $0x40] sm:$0xf] %v559
      %564 = vst [vmem:[#allocation2 + $0x48] sm:$0xf] %v560
      %565 = vst [vmem:[#allocation2 + $0x50] sm:$0xf] %v561
      %566 = vst [vmem:[#allocation2 + $0x58] sm:$0xf] %v562
      %567 = vrot.lane.b32.xlu0 %v414, 65
      %v568 = vpop.permute.xlu0 %567
      %569 = vrot.lane.b32.xlu0 %v418, 65
      %v570 = vpop.permute.xlu0 %569
      %571 = vrot.lane.b32.xlu0 %v415, 65
      %v572 = vpop.permute.xlu0 %571
      %573 = vrot.lane.b32.xlu0 %v419, 65
      %v574 = vpop.permute.xlu0 %573
      %vm575 = vcmp.lt.s32.totalorder %v431, 65
      %v576 = vsel %vm575, %v572, %v574
      %v577 = vsel %vm575, %v570, %v572
      %v578 = vsel %vm575, %v568, %v570
      %v579 = vsel %vm575, %v574, %v568
      %s580 = scalar_lea.vmem %s1, 3
      %v581 = vld [vmem:[%s580] ss:$8 sm:$0xf]
      %v583 = vlaneseq
      %v584 = vshrl.u32 %v583, 7
      %v585 = vsub.s32 0, %v584
      %v586 = vrot.slane %v581, %v585
      %v587 = vlaneseq
      %v588 = vshrl.u32 %v587, 7
      %v589 = vsub.s32 1, %v588
      %v590 = vrot.slane %v581, %v589
      %v591 = vlaneseq
      %v592 = vshrl.u32 %v591, 7
      %v593 = vsub.s32 2, %v592
      %v594 = vrot.slane %v581, %v593
      %v595 = vlaneseq
      %v596 = vshrl.u32 %v595, 7
      %v597 = vsub.s32 3, %v596
      %v598 = vrot.slane %v581, %v597
      %v603 = vmul.f32 %v579, %v586
      %v604 = vmul.f32 %v578, %v590
      %v605 = vmul.f32 %v577, %v594
      %v606 = vmul.f32 %v576, %v598
      %v611 = vrot.slane %v603, 4
      %v612 = vrot.slane %v604, 4
      %v613 = vrot.slane %v605, 4
      %v614 = vrot.slane %v606, 4
      %619 = vst [vmem:[#allocation2 + $0x40] sm:$0xf0] %v611
      %620 = vst [vmem:[#allocation2 + $0x48] sm:$0xf0] %v612
      %621 = vst [vmem:[#allocation2 + $0x50] sm:$0xf0] %v613
      %622 = vst [vmem:[#allocation2 + $0x58] sm:$0xf0] %v614
      %623 = vrot.lane.b32.xlu0 %v414, 64
      %v624 = vpop.permute.xlu0 %623
      %625 = vrot.lane.b32.xlu0 %v418, 64
      %v626 = vpop.permute.xlu0 %625
      %627 = vrot.lane.b32.xlu0 %v415, 64
      %v628 = vpop.permute.xlu0 %627
      %629 = vrot.lane.b32.xlu0 %v419, 64
      %v630 = vpop.permute.xlu0 %629
      %vm631 = vcmp.lt.s32.totalorder %v431, 64
      %v632 = vsel %vm631, %v628, %v630
      %v633 = vsel %vm631, %v626, %v628
      %v634 = vsel %vm631, %v624, %v626
      %v635 = vsel %vm631, %v630, %v624
      %s636 = scalar_lea.vmem %s1, 4
      %v637 = vld [vmem:[%s636] ss:$8 sm:$0xf]
      %v639 = vlaneseq
      %v640 = vshrl.u32 %v639, 7
      %v641 = vsub.s32 0, %v640
      %v642 = vrot.slane %v637, %v641
      %v643 = vlaneseq
      %v644 = vshrl.u32 %v643, 7
      %v645 = vsub.s32 1, %v644
      %v646 = vrot.slane %v637, %v645
      %v647 = vlaneseq
      %v648 = vshrl.u32 %v647, 7
      %v649 = vsub.s32 2, %v648
      %v650 = vrot.slane %v637, %v649
      %v651 = vlaneseq
      %v652 = vshrl.u32 %v651, 7
      %v653 = vsub.s32 3, %v652
      %v654 = vrot.slane %v637, %v653
      %v659 = vmul.f32 %v635, %v642
      %v660 = vmul.f32 %v634, %v646
      %v661 = vmul.f32 %v633, %v650
      %v662 = vmul.f32 %v632, %v654
      %663 = vst [vmem:[#allocation2 + $0x80] sm:$0xf] %v659
      %664 = vst [vmem:[#allocation2 + $0x88] sm:$0xf] %v660
      %665 = vst [vmem:[#allocation2 + $0x90] sm:$0xf] %v661
      %666 = vst [vmem:[#allocation2 + $0x98] sm:$0xf] %v662
      %667 = vrot.lane.b32.xlu0 %v414, 63
      %v668 = vpop.permute.xlu0 %667
      %669 = vrot.lane.b32.xlu0 %v418, 63
      %v670 = vpop.permute.xlu0 %669
      %671 = vrot.lane.b32.xlu0 %v415, 63
      %v672 = vpop.permute.xlu0 %671
      %673 = vrot.lane.b32.xlu0 %v419, 63
      %v674 = vpop.permute.xlu0 %673
      %vm675 = vcmp.lt.s32.totalorder %v431, 63
      %v676 = vsel %vm675, %v672, %v674
      %v677 = vsel %vm675, %v670, %v672
      %v678 = vsel %vm675, %v668, %v670
      %v679 = vsel %vm675, %v674, %v668
      %s680 = scalar_lea.vmem %s1, 5
      %v681 = vld [vmem:[%s680] ss:$8 sm:$0xf]
      %v683 = vlaneseq
      %v684 = vshrl.u32 %v683, 7
      %v685 = vsub.s32 0, %v684
      %v686 = vrot.slane %v681, %v685
      %v687 = vlaneseq
      %v688 = vshrl.u32 %v687, 7
      %v689 = vsub.s32 1, %v688
      %v690 = vrot.slane %v681, %v689
      %v691 = vlaneseq
      %v692 = vshrl.u32 %v691, 7
      %v693 = vsub.s32 2, %v692
      %v694 = vrot.slane %v681, %v693
      %v695 = vlaneseq
      %v696 = vshrl.u32 %v695, 7
      %v697 = vsub.s32 3, %v696
      %v698 = vrot.slane %v681, %v697
      %v703 = vmul.f32 %v679, %v686
      %v704 = vmul.f32 %v678, %v690
      %v705 = vmul.f32 %v677, %v694
      %v706 = vmul.f32 %v676, %v698
      %v711 = vrot.slane %v703, 4
      %v712 = vrot.slane %v704, 4
      %v713 = vrot.slane %v705, 4
      %v714 = vrot.slane %v706, 4
      %719 = vst [vmem:[#allocation2 + $0x80] sm:$0xf0] %v711
      %720 = vst [vmem:[#allocation2 + $0x88] sm:$0xf0] %v712
      %721 = vst [vmem:[#allocation2 + $0x90] sm:$0xf0] %v713
      %722 = vst [vmem:[#allocation2 + $0x98] sm:$0xf0] %v714
      %723 = vrot.lane.b32.xlu0 %v414, 57
      %v724 = vpop.permute.xlu0 %723
      %725 = vrot.lane.b32.xlu0 %v418, 57
      %v726 = vpop.permute.xlu0 %725
      %727 = vrot.lane.b32.xlu0 %v415, 57
      %v728 = vpop.permute.xlu0 %727
      %729 = vrot.lane.b32.xlu0 %v419, 57
      %v730 = vpop.permute.xlu0 %729
      %vm731 = vcmp.lt.s32.totalorder %v431, 57
      %v732 = vsel %vm731, %v728, %v730
      %v733 = vsel %vm731, %v726, %v728
      %v734 = vsel %vm731, %v724, %v726
      %v735 = vsel %vm731, %v730, %v724
      %s736 = scalar_lea.vmem %s1, 6
      %v737 = vld [vmem:[%s736] ss:$8 sm:$0xf]
      %v739 = vlaneseq
      %v740 = vshrl.u32 %v739, 7
      %v741 = vsub.s32 0, %v740
      %v742 = vrot.slane %v737, %v741
      %v743 = vlaneseq
      %v744 = vshrl.u32 %v743, 7
      %v745 = vsub.s32 1, %v744
      %v746 = vrot.slane %v737, %v745
      %v747 = vlaneseq
      %v748 = vshrl.u32 %v747, 7
      %v749 = vsub.s32 2, %v748
      %v750 = vrot.slane %v737, %v749
      %v751 = vlaneseq
      %v752 = vshrl.u32 %v751, 7
      %v753 = vsub.s32 3, %v752
      %v754 = vrot.slane %v737, %v753
      %v759 = vmul.f32 %v735, %v742
      %v760 = vmul.f32 %v734, %v746
      %v761 = vmul.f32 %v733, %v750
      %v762 = vmul.f32 %v732, %v754
      %763 = vst [vmem:[#allocation2 + $0xc0] sm:$0xf] %v759
      %764 = vst [vmem:[#allocation2 + $0xc8] sm:$0xf] %v760
      %765 = vst [vmem:[#allocation2 + $0xd0] sm:$0xf] %v761
      %766 = vst [vmem:[#allocation2 + $0xd8] sm:$0xf] %v762
      %767 = vrot.lane.b32.xlu0 %v414, 56
      %v768 = vpop.permute.xlu0 %767
      %769 = vrot.lane.b32.xlu0 %v418, 56
      %v770 = vpop.permute.xlu0 %769
      %771 = vrot.lane.b32.xlu0 %v415, 56
      %v772 = vpop.permute.xlu0 %771
      %773 = vrot.lane.b32.xlu0 %v419, 56
      %v774 = vpop.permute.xlu0 %773
      %vm775 = vcmp.lt.s32.totalorder %v431, 56
      %v776 = vsel %vm775, %v772, %v774
      %v777 = vsel %vm775, %v770, %v772
      %v778 = vsel %vm775, %v768, %v770
      %v779 = vsel %vm775, %v774, %v768
      %s780 = scalar_lea.vmem %s1, 7
      %v781 = vld [vmem:[%s780] ss:$8 sm:$0xf]
      %v783 = vlaneseq
      %v784 = vshrl.u32 %v783, 7
      %v785 = vsub.s32 0, %v784
      %v786 = vrot.slane %v781, %v785
      %v787 = vlaneseq
      %v788 = vshrl.u32 %v787, 7
      %v789 = vsub.s32 1, %v788
      %v790 = vrot.slane %v781, %v789
      %v791 = vlaneseq
      %v792 = vshrl.u32 %v791, 7
      %v793 = vsub.s32 2, %v792
      %v794 = vrot.slane %v781, %v793
      %v795 = vlaneseq
      %v796 = vshrl.u32 %v795, 7
      %v797 = vsub.s32 3, %v796
      %v798 = vrot.slane %v781, %v797
      %v803 = vmul.f32 %v779, %v786
      %v804 = vmul.f32 %v778, %v790
      %v805 = vmul.f32 %v777, %v794
      %v806 = vmul.f32 %v776, %v798
      %v811 = vrot.slane %v803, 4
      %v812 = vrot.slane %v804, 4
      %v813 = vrot.slane %v805, 4
      %v814 = vrot.slane %v806, 4
      %819 = vst [vmem:[#allocation2 + $0xc0] sm:$0xf0] %v811
      %820 = vst [vmem:[#allocation2 + $0xc8] sm:$0xf0] %v812
      %821 = vst [vmem:[#allocation2 + $0xd0] sm:$0xf0] %v813
      %822 = vst [vmem:[#allocation2 + $0xd8] sm:$0xf0] %v814
      %823 = vrot.lane.b32.xlu0 %v414, 55
      %v824 = vpop.permute.xlu0 %823
      %825 = vrot.lane.b32.xlu0 %v418, 55
      %v826 = vpop.permute.xlu0 %825
      %827 = vrot.lane.b32.xlu0 %v415, 55
      %v828 = vpop.permute.xlu0 %827
      %829 = vrot.lane.b32.xlu0 %v419, 55
      %v830 = vpop.permute.xlu0 %829
      %vm831 = vcmp.lt.s32.totalorder %v431, 55
      %v832 = vsel %vm831, %v828, %v830
      %v833 = vsel %vm831, %v826, %v828
      %v834 = vsel %vm831, %v824, %v826
      %v835 = vsel %vm831, %v830, %v824
      %s836 = scalar_lea.vmem %s1, 32
      %v837 = vld [vmem:[%s836] ss:$8 sm:$0xf]
      %v839 = vlaneseq
      %v840 = vshrl.u32 %v839, 7
      %v841 = vsub.s32 0, %v840
      %v842 = vrot.slane %v837, %v841
      %v843 = vlaneseq
      %v844 = vshrl.u32 %v843, 7
      %v845 = vsub.s32 1, %v844
      %v846 = vrot.slane %v837, %v845
      %v847 = vlaneseq
      %v848 = vshrl.u32 %v847, 7
      %v849 = vsub.s32 2, %v848
      %v850 = vrot.slane %v837, %v849
      %v851 = vlaneseq
      %v852 = vshrl.u32 %v851, 7
      %v853 = vsub.s32 3, %v852
      %v854 = vrot.slane %v837, %v853
      %v859 = vmul.f32 %v835, %v842
      %v860 = vmul.f32 %v834, %v846
      %v861 = vmul.f32 %v833, %v850
      %v862 = vmul.f32 %v832, %v854
      %863 = vst [vmem:[#allocation2 + $0x100] sm:$0xf] %v859
      %864 = vst [vmem:[#allocation2 + $0x108] sm:$0xf] %v860
      %865 = vst [vmem:[#allocation2 + $0x110] sm:$0xf] %v861
      %866 = vst [vmem:[#allocation2 + $0x118] sm:$0xf] %v862
      %867 = vrot.lane.b32.xlu0 %v414, 9
      %v868 = vpop.permute.xlu0 %867
      %869 = vrot.lane.b32.xlu0 %v418, 9
      %v870 = vpop.permute.xlu0 %869
      %871 = vrot.lane.b32.xlu0 %v415, 9
      %v872 = vpop.permute.xlu0 %871
      %873 = vrot.lane.b32.xlu0 %v419, 9
      %v874 = vpop.permute.xlu0 %873
      %vm875 = vcmp.lt.s32.totalorder %v431, 9
      %v876 = vsel %vm875, %v872, %v874
      %v877 = vsel %vm875, %v870, %v872
      %v878 = vsel %vm875, %v868, %v870
      %v879 = vsel %vm875, %v874, %v868
      %s880 = scalar_lea.vmem %s1, 33
      %v881 = vld [vmem:[%s880] ss:$8 sm:$0xf]
      %v883 = vlaneseq
      %v884 = vshrl.u32 %v883, 7
      %v885 = vsub.s32 0, %v884
      %v886 = vrot.slane %v881, %v885
      %v887 = vlaneseq
      %v888 = vshrl.u32 %v887, 7
      %v889 = vsub.s32 1, %v888
      %v890 = vrot.slane %v881, %v889
      %v891 = vlaneseq
      %v892 = vshrl.u32 %v891, 7
      %v893 = vsub.s32 2, %v892
      %v894 = vrot.slane %v881, %v893
      %v895 = vlaneseq
      %v896 = vshrl.u32 %v895, 7
      %v897 = vsub.s32 3, %v896
      %v898 = vrot.slane %v881, %v897
      %v903 = vmul.f32 %v879, %v886
      %v904 = vmul.f32 %v878, %v890
      %v905 = vmul.f32 %v877, %v894
      %v906 = vmul.f32 %v876, %v898
      %v911 = vrot.slane %v903, 4
      %v912 = vrot.slane %v904, 4
      %v913 = vrot.slane %v905, 4
      %v914 = vrot.slane %v906, 4
      %919 = vst [vmem:[#allocation2 + $0x100] sm:$0xf0] %v911
      %920 = vst [vmem:[#allocation2 + $0x108] sm:$0xf0] %v912
      %921 = vst [vmem:[#allocation2 + $0x110] sm:$0xf0] %v913
      %922 = vst [vmem:[#allocation2 + $0x118] sm:$0xf0] %v914
      %923 = vrot.lane.b32.xlu0 %v414, 8
      %v924 = vpop.permute.xlu0 %923
      %925 = vrot.lane.b32.xlu0 %v418, 8
      %v926 = vpop.permute.xlu0 %925
      %927 = vrot.lane.b32.xlu0 %v415, 8
      %v928 = vpop.permute.xlu0 %927
      %929 = vrot.lane.b32.xlu0 %v419, 8
      %v930 = vpop.permute.xlu0 %929
      %vm931 = vcmp.lt.s32.totalorder %v431, 8
      %v932 = vsel %vm931, %v928, %v930
      %v933 = vsel %vm931, %v926, %v928
      %v934 = vsel %vm931, %v924, %v926
      %v935 = vsel %vm931, %v930, %v924
      %s936 = scalar_lea.vmem %s1, 34
      %v937 = vld [vmem:[%s936] ss:$8 sm:$0xf]
      %v939 = vlaneseq
      %v940 = vshrl.u32 %v939, 7
      %v941 = vsub.s32 0, %v940
      %v942 = vrot.slane %v937, %v941
      %v943 = vlaneseq
      %v944 = vshrl.u32 %v943, 7
      %v945 = vsub.s32 1, %v944
      %v946 = vrot.slane %v937, %v945
      %v947 = vlaneseq
      %v948 = vshrl.u32 %v947, 7
      %v949 = vsub.s32 2, %v948
      %v950 = vrot.slane %v937, %v949
      %v951 = vlaneseq
      %v952 = vshrl.u32 %v951, 7
      %v953 = vsub.s32 3, %v952
      %v954 = vrot.slane %v937, %v953
      %v959 = vmul.f32 %v935, %v942
      %v960 = vmul.f32 %v934, %v946
      %v961 = vmul.f32 %v933, %v950
      %v962 = vmul.f32 %v932, %v954
      %963 = vst [vmem:[#allocation2 + $0x140] sm:$0xf] %v959
      %964 = vst [vmem:[#allocation2 + $0x148] sm:$0xf] %v960
      %965 = vst [vmem:[#allocation2 + $0x150] sm:$0xf] %v961
      %966 = vst [vmem:[#allocation2 + $0x158] sm:$0xf] %v962
      %967 = vrot.lane.b32.xlu0 %v414, 7
      %v968 = vpop.permute.xlu0 %967
      %969 = vrot.lane.b32.xlu0 %v418, 7
      %v970 = vpop.permute.xlu0 %969
      %971 = vrot.lane.b32.xlu0 %v415, 7
      %v972 = vpop.permute.xlu0 %971
      %973 = vrot.lane.b32.xlu0 %v419, 7
      %v974 = vpop.permute.xlu0 %973
      %vm975 = vcmp.lt.s32.totalorder %v431, 7
      %v976 = vsel %vm975, %v972, %v974
      %v977 = vsel %vm975, %v970, %v972
      %v978 = vsel %vm975, %v968, %v970
      %v979 = vsel %vm975, %v974, %v968
      %s980 = scalar_lea.vmem %s1, 35
      %v981 = vld [vmem:[%s980] ss:$8 sm:$0xf]
      %v983 = vlaneseq
      %v984 = vshrl.u32 %v983, 7
      %v985 = vsub.s32 0, %v984
      %v986 = vrot.slane %v981, %v985
      %v987 = vlaneseq
      %v988 = vshrl.u32 %v987, 7
      %v989 = vsub.s32 1, %v988
      %v990 = vrot.slane %v981, %v989
      %v991 = vlaneseq
      %v992 = vshrl.u32 %v991, 7
      %v993 = vsub.s32 2, %v992
      %v994 = vrot.slane %v981, %v993
      %v995 = vlaneseq
      %v996 = vshrl.u32 %v995, 7
      %v997 = vsub.s32 3, %v996
      %v998 = vrot.slane %v981, %v997
      %v1003 = vmul.f32 %v979, %v986
      %v1004 = vmul.f32 %v978, %v990
      %v1005 = vmul.f32 %v977, %v994
      %v1006 = vmul.f32 %v976, %v998
      %v1011 = vrot.slane %v1003, 4
      %v1012 = vrot.slane %v1004, 4
      %v1013 = vrot.slane %v1005, 4
      %v1014 = vrot.slane %v1006, 4
      %1019 = vst [vmem:[#allocation2 + $0x140] sm:$0xf0] %v1011
      %1020 = vst [vmem:[#allocation2 + $0x148] sm:$0xf0] %v1012
      %1021 = vst [vmem:[#allocation2 + $0x150] sm:$0xf0] %v1013
      %1022 = vst [vmem:[#allocation2 + $0x158] sm:$0xf0] %v1014
      %1023 = vrot.lane.b32.xlu0 %v414, 1
      %v1024 = vpop.permute.xlu0 %1023
      %1025 = vrot.lane.b32.xlu0 %v418, 1
      %v1026 = vpop.permute.xlu0 %1025
      %1027 = vrot.lane.b32.xlu0 %v415, 1
      %v1028 = vpop.permute.xlu0 %1027
      %1029 = vrot.lane.b32.xlu0 %v419, 1
      %v1030 = vpop.permute.xlu0 %1029
      %vm1031 = vcmp.lt.s32.totalorder %v431, 1
      %v1032 = vsel %vm1031, %v1028, %v1030
      %v1033 = vsel %vm1031, %v1026, %v1028
      %v1034 = vsel %vm1031, %v1024, %v1026
      %v1035 = vsel %vm1031, %v1030, %v1024
      %s1036 = scalar_lea.vmem %s1, 36
      %v1037 = vld [vmem:[%s1036] ss:$8 sm:$0xf]
      %v1039 = vlaneseq
      %v1040 = vshrl.u32 %v1039, 7
      %v1041 = vsub.s32 0, %v1040
      %v1042 = vrot.slane %v1037, %v1041
      %v1043 = vlaneseq
      %v1044 = vshrl.u32 %v1043, 7
      %v1045 = vsub.s32 1, %v1044
      %v1046 = vrot.slane %v1037, %v1045
      %v1047 = vlaneseq
      %v1048 = vshrl.u32 %v1047, 7
      %v1049 = vsub.s32 2, %v1048
      %v1050 = vrot.slane %v1037, %v1049
      %v1051 = vlaneseq
      %v1052 = vshrl.u32 %v1051, 7
      %v1053 = vsub.s32 3, %v1052
      %v1054 = vrot.slane %v1037, %v1053
      %v1059 = vmul.f32 %v1035, %v1042
      %v1060 = vmul.f32 %v1034, %v1046
      %v1061 = vmul.f32 %v1033, %v1050
      %v1062 = vmul.f32 %v1032, %v1054
      %1063 = vst [vmem:[#allocation2 + $0x180] sm:$0xf] %v1059
      %1064 = vst [vmem:[#allocation2 + $0x188] sm:$0xf] %v1060
      %1065 = vst [vmem:[#allocation2 + $0x190] sm:$0xf] %v1061
      %1066 = vst [vmem:[#allocation2 + $0x198] sm:$0xf] %v1062
      %v1067 = vcombine.low %v414, %v414
      %v1068 = vcombine.low %v415, %v415
      %1071 = vst [vmem:[#allocation2 + $0x180] sm:$0xf0] %v1067
      %1072 = vst [vmem:[#allocation2 + $0x188] sm:$0xf0] %v414
      %1073 = vst [vmem:[#allocation2 + $0x190] sm:$0xf0] %v1068
      %1074 = vst [vmem:[#allocation2 + $0x198] sm:$0xf0] %v415
      %1075 = vrot.lane.b32.xlu0 %v414, 127
      %v1076 = vpop.permute.xlu0 %1075
      %1077 = vrot.lane.b32.xlu0 %v418, 127
      %v1078 = vpop.permute.xlu0 %1077
      %1079 = vrot.lane.b32.xlu0 %v415, 127
      %v1080 = vpop.permute.xlu0 %1079
      %1081 = vrot.lane.b32.xlu0 %v419, 127
      %v1082 = vpop.permute.xlu0 %1081
      %vm1083 = vcmp.lt.s32.totalorder %v431, 127
      %v1084 = vsel %vm1083, %v1080, %v1082
      %v1085 = vsel %vm1083, %v1078, %v1080
      %v1086 = vsel %vm1083, %v1076, %v1078
      %v1087 = vsel %vm1083, %v1082, %v1076
      %s1088 = scalar_lea.vmem %s1, 38
      %v1089 = vld [vmem:[%s1088] ss:$8 sm:$0xf]
      %v1091 = vlaneseq
      %v1092 = vshrl.u32 %v1091, 7
      %v1093 = vsub.s32 0, %v1092
      %v1094 = vrot.slane %v1089, %v1093
      %v1095 = vlaneseq
      %v1096 = vshrl.u32 %v1095, 7
      %v1097 = vsub.s32 1, %v1096
      %v1098 = vrot.slane %v1089, %v1097
      %v1099 = vlaneseq
      %v1100 = vshrl.u32 %v1099, 7
      %v1101 = vsub.s32 2, %v1100
      %v1102 = vrot.slane %v1089, %v1101
      %v1103 = vlaneseq
      %v1104 = vshrl.u32 %v1103, 7
      %v1105 = vsub.s32 3, %v1104
      %v1106 = vrot.slane %v1089, %v1105
      %v1111 = vmul.f32 %v1086, %v1094
      %v1112 = vmul.f32 %v1085, %v1098
      %v1113 = vmul.f32 %v1084, %v1102
      %v1114 = vmul.f32 %v1087, %v1106
      %1115 = vst [vmem:[#allocation2 + $0x1c0] sm:$0xf] %v1111
      %1116 = vst [vmem:[#allocation2 + $0x1c8] sm:$0xf] %v1112
      %1117 = vst [vmem:[#allocation2 + $0x1d0] sm:$0xf] %v1113
      %1118 = vst [vmem:[#allocation2 + $0x1d8] sm:$0xf] %v1114
      %1119 = vrot.lane.b32.xlu0 %v414, 121
      %v1120 = vpop.permute.xlu0 %1119
      %1121 = vrot.lane.b32.xlu0 %v418, 121
      %v1122 = vpop.permute.xlu0 %1121
      %1123 = vrot.lane.b32.xlu0 %v415, 121
      %v1124 = vpop.permute.xlu0 %1123
      %1125 = vrot.lane.b32.xlu0 %v419, 121
      %v1126 = vpop.permute.xlu0 %1125
      %vm1127 = vcmp.lt.s32.totalorder %v431, 121
      %v1128 = vsel %vm1127, %v1124, %v1126
      %v1129 = vsel %vm1127, %v1122, %v1124
      %v1130 = vsel %vm1127, %v1120, %v1122
      %v1131 = vsel %vm1127, %v1126, %v1120
      %s1132 = scalar_lea.vmem %s1, 39
      %v1133 = vld [vmem:[%s1132] ss:$8 sm:$0xf]
      %v1135 = vlaneseq
      %v1136 = vshrl.u32 %v1135, 7
      %v1137 = vsub.s32 0, %v1136
      %v1138 = vrot.slane %v1133, %v1137
      %v1139 = vlaneseq
      %v1140 = vshrl.u32 %v1139, 7
      %v1141 = vsub.s32 1, %v1140
      %v1142 = vrot.slane %v1133, %v1141
      %v1143 = vlaneseq
      %v1144 = vshrl.u32 %v1143, 7
      %v1145 = vsub.s32 2, %v1144
      %v1146 = vrot.slane %v1133, %v1145
      %v1147 = vlaneseq
      %v1148 = vshrl.u32 %v1147, 7
      %v1149 = vsub.s32 3, %v1148
      %v1150 = vrot.slane %v1133, %v1149
      %v1155 = vmul.f32 %v1130, %v1138
      %v1156 = vmul.f32 %v1129, %v1142
      %v1157 = vmul.f32 %v1128, %v1146
      %v1158 = vmul.f32 %v1131, %v1150
      %v1163 = vrot.slane %v1155, 4
      %v1164 = vrot.slane %v1156, 4
      %v1165 = vrot.slane %v1157, 4
      %v1166 = vrot.slane %v1158, 4
      %1171 = vst [vmem:[#allocation2 + $0x1c0] sm:$0xf0] %v1163
      %1172 = vst [vmem:[#allocation2 + $0x1c8] sm:$0xf0] %v1164
      %1173 = vst [vmem:[#allocation2 + $0x1d0] sm:$0xf0] %v1165
      %1174 = vst [vmem:[#allocation2 + $0x1d8] sm:$0xf0] %v1166
      %1175 = vrot.lane.b32.xlu0 %v414, 120
      %v1176 = vpop.permute.xlu0 %1175
      %1177 = vrot.lane.b32.xlu0 %v418, 120
      %v1178 = vpop.permute.xlu0 %1177
      %1179 = vrot.lane.b32.xlu0 %v415, 120
      %v1180 = vpop.permute.xlu0 %1179
      %1181 = vrot.lane.b32.xlu0 %v419, 120
      %v1182 = vpop.permute.xlu0 %1181
      %vm1183 = vcmp.lt.s32.totalorder %v431, 120
      %v1184 = vsel %vm1183, %v1180, %v1182
      %v1185 = vsel %vm1183, %v1178, %v1180
      %v1186 = vsel %vm1183, %v1176, %v1178
      %v1187 = vsel %vm1183, %v1182, %v1176
      %s1188 = scalar_lea.vmem %s1, 64
      %v1189 = vld [vmem:[%s1188] ss:$8 sm:$0xf]
      %v1191 = vlaneseq
      %v1192 = vshrl.u32 %v1191, 7
      %v1193 = vsub.s32 0, %v1192
      %v1194 = vrot.slane %v1189, %v1193
      %v1195 = vlaneseq
      %v1196 = vshrl.u32 %v1195, 7
      %v1197 = vsub.s32 1, %v1196
      %v1198 = vrot.slane %v1189, %v1197
      %v1199 = vlaneseq
      %v1200 = vshrl.u32 %v1199, 7
      %v1201 = vsub.s32 2, %v1200
      %v1202 = vrot.slane %v1189, %v1201
      %v1203 = vlaneseq
      %v1204 = vshrl.u32 %v1203, 7
      %v1205 = vsub.s32 3, %v1204
      %v1206 = vrot.slane %v1189, %v1205
      %v1211 = vmul.f32 %v1186, %v1194
      %v1212 = vmul.f32 %v1185, %v1198
      %v1213 = vmul.f32 %v1184, %v1202
      %v1214 = vmul.f32 %v1187, %v1206
      %1215 = vst [vmem:[#allocation2 + $0x200] sm:$0xf] %v1211
      %1216 = vst [vmem:[#allocation2 + $0x208] sm:$0xf] %v1212
      %1217 = vst [vmem:[#allocation2 + $0x210] sm:$0xf] %v1213
      %1218 = vst [vmem:[#allocation2 + $0x218] sm:$0xf] %v1214
      %1219 = vrot.lane.b32.xlu0 %v414, 119
      %v1220 = vpop.permute.xlu0 %1219
      %1221 = vrot.lane.b32.xlu0 %v418, 119
      %v1222 = vpop.permute.xlu0 %1221
      %1223 = vrot.lane.b32.xlu0 %v415, 119
      %v1224 = vpop.permute.xlu0 %1223
      %1225 = vrot.lane.b32.xlu0 %v419, 119
      %v1226 = vpop.permute.xlu0 %1225
      %vm1227 = vcmp.lt.s32.totalorder %v431, 119
      %v1228 = vsel %vm1227, %v1224, %v1226
      %v1229 = vsel %vm1227, %v1222, %v1224
      %v1230 = vsel %vm1227, %v1220, %v1222
      %v1231 = vsel %vm1227, %v1226, %v1220
      %s1232 = scalar_lea.vmem %s1, 65
      %v1233 = vld [vmem:[%s1232] ss:$8 sm:$0xf]
      %v1235 = vlaneseq
      %v1236 = vshrl.u32 %v1235, 7
      %v1237 = vsub.s32 0, %v1236
      %v1238 = vrot.slane %v1233, %v1237
      %v1239 = vlaneseq
      %v1240 = vshrl.u32 %v1239, 7
      %v1241 = vsub.s32 1, %v1240
      %v1242 = vrot.slane %v1233, %v1241
      %v1243 = vlaneseq
      %v1244 = vshrl.u32 %v1243, 7
      %v1245 = vsub.s32 2, %v1244
      %v1246 = vrot.slane %v1233, %v1245
      %v1247 = vlaneseq
      %v1248 = vshrl.u32 %v1247, 7
      %v1249 = vsub.s32 3, %v1248
      %v1250 = vrot.slane %v1233, %v1249
      %v1255 = vmul.f32 %v1230, %v1238
      %v1256 = vmul.f32 %v1229, %v1242
      %v1257 = vmul.f32 %v1228, %v1246
      %v1258 = vmul.f32 %v1231, %v1250
      %v1263 = vrot.slane %v1255, 4
      %v1264 = vrot.slane %v1256, 4
      %v1265 = vrot.slane %v1257, 4
      %v1266 = vrot.slane %v1258, 4
      %1271 = vst [vmem:[#allocation2 + $0x200] sm:$0xf0] %v1263
      %1272 = vst [vmem:[#allocation2 + $0x208] sm:$0xf0] %v1264
      %1273 = vst [vmem:[#allocation2 + $0x210] sm:$0xf0] %v1265
      %1274 = vst [vmem:[#allocation2 + $0x218] sm:$0xf0] %v1266
      %s1275 = scalar_lea.vmem %s1, 66
      %v1276 = vld [vmem:[%s1275] ss:$8 sm:$0xf]
      %v1278 = vlaneseq
      %v1279 = vshrl.u32 %v1278, 7
      %v1280 = vsub.s32 0, %v1279
      %v1281 = vrot.slane %v1276, %v1280
      %v1282 = vlaneseq
      %v1283 = vshrl.u32 %v1282, 7
      %v1284 = vsub.s32 1, %v1283
      %v1285 = vrot.slane %v1276, %v1284
      %v1286 = vlaneseq
      %v1287 = vshrl.u32 %v1286, 7
      %v1288 = vsub.s32 2, %v1287
      %v1289 = vrot.slane %v1276, %v1288
      %v1290 = vlaneseq
      %v1291 = vshrl.u32 %v1290, 7
      %v1292 = vsub.s32 3, %v1291
      %v1293 = vrot.slane %v1276, %v1292
      %v1298 = vmul.f32 %v435, %v1281
      %v1299 = vmul.f32 %v434, %v1285
      %v1300 = vmul.f32 %v433, %v1289
      %v1301 = vmul.f32 %v436, %v1293
      %1302 = vst [vmem:[#allocation2 + $0x240] sm:$0xf] %v1298
      %1303 = vst [vmem:[#allocation2 + $0x248] sm:$0xf] %v1299
      %1304 = vst [vmem:[#allocation2 + $0x250] sm:$0xf] %v1300
      %1305 = vst [vmem:[#allocation2 + $0x258] sm:$0xf] %v1301
      %s1306 = scalar_lea.vmem %s1, 67
      %v1307 = vld [vmem:[%s1306] ss:$8 sm:$0xf]
      %v1309 = vlaneseq
      %v1310 = vshrl.u32 %v1309, 7
      %v1311 = vsub.s32 0, %v1310
      %v1312 = vrot.slane %v1307, %v1311
      %v1313 = vlaneseq
      %v1314 = vshrl.u32 %v1313, 7
      %v1315 = vsub.s32 1, %v1314
      %v1316 = vrot.slane %v1307, %v1315
      %v1317 = vlaneseq
      %v1318 = vshrl.u32 %v1317, 7
      %v1319 = vsub.s32 2, %v1318
      %v1320 = vrot.slane %v1307, %v1319
      %v1321 = vlaneseq
      %v1322 = vshrl.u32 %v1321, 7
      %v1323 = vsub.s32 3, %v1322
      %v1324 = vrot.slane %v1307, %v1323
      %v1329 = vmul.f32 %v478, %v1312
      %v1330 = vmul.f32 %v477, %v1316
      %v1331 = vmul.f32 %v476, %v1320
      %v1332 = vmul.f32 %v479, %v1324
      %v1337 = vrot.slane %v1329, 4
      %v1338 = vrot.slane %v1330, 4
      %v1339 = vrot.slane %v1331, 4
      %v1340 = vrot.slane %v1332, 4
      %1345 = vst [vmem:[#allocation2 + $0x240] sm:$0xf0] %v1337
      %1346 = vst [vmem:[#allocation2 + $0x248] sm:$0xf0] %v1338
      %1347 = vst [vmem:[#allocation2 + $0x250] sm:$0xf0] %v1339
      %1348 = vst [vmem:[#allocation2 + $0x258] sm:$0xf0] %v1340
      %s1349 = scalar_lea.vmem %s1, 68
      %v1350 = vld [vmem:[%s1349] ss:$8 sm:$0xf]
      %v1352 = vlaneseq
      %v1353 = vshrl.u32 %v1352, 7
      %v1354 = vsub.s32 0, %v1353
      %v1355 = vrot.slane %v1350, %v1354
      %v1356 = vlaneseq
      %v1357 = vshrl.u32 %v1356, 7
      %v1358 = vsub.s32 1, %v1357
      %v1359 = vrot.slane %v1350, %v1358
      %v1360 = vlaneseq
      %v1361 = vshrl.u32 %v1360, 7
      %v1362 = vsub.s32 2, %v1361
      %v1363 = vrot.slane %v1350, %v1362
      %v1364 = vlaneseq
      %v1365 = vshrl.u32 %v1364, 7
      %v1366 = vsub.s32 3, %v1365
      %v1367 = vrot.slane %v1350, %v1366
      %v1372 = vmul.f32 %v534, %v1355
      %v1373 = vmul.f32 %v533, %v1359
      %v1374 = vmul.f32 %v532, %v1363
      %v1375 = vmul.f32 %v535, %v1367
      %1376 = vst [vmem:[#allocation2 + $0x280] sm:$0xf] %v1372
      %1377 = vst [vmem:[#allocation2 + $0x288] sm:$0xf] %v1373
      %1378 = vst [vmem:[#allocation2 + $0x290] sm:$0xf] %v1374
      %1379 = vst [vmem:[#allocation2 + $0x298] sm:$0xf] %v1375
      %s1380 = scalar_lea.vmem %s1, 69
      %v1381 = vld [vmem:[%s1380] ss:$8 sm:$0xf]
      %v1383 = vlaneseq
      %v1384 = vshrl.u32 %v1383, 7
      %v1385 = vsub.s32 0, %v1384
      %v1386 = vrot.slane %v1381, %v1385
      %v1387 = vlaneseq
      %v1388 = vshrl.u32 %v1387, 7
      %v1389 = vsub.s32 1, %v1388
      %v1390 = vrot.slane %v1381, %v1389
      %v1391 = vlaneseq
      %v1392 = vshrl.u32 %v1391, 7
      %v1393 = vsub.s32 2, %v1392
      %v1394 = vrot.slane %v1381, %v1393
      %v1395 = vlaneseq
      %v1396 = vshrl.u32 %v1395, 7
      %v1397 = vsub.s32 3, %v1396
      %v1398 = vrot.slane %v1381, %v1397
      %v1403 = vmul.f32 %v578, %v1386
      %v1404 = vmul.f32 %v577, %v1390
      %v1405 = vmul.f32 %v576, %v1394
      %v1406 = vmul.f32 %v579, %v1398
      %v1411 = vrot.slane %v1403, 4
      %v1412 = vrot.slane %v1404, 4
      %v1413 = vrot.slane %v1405, 4
      %v1414 = vrot.slane %v1406, 4
      %1419 = vst [vmem:[#allocation2 + $0x280] sm:$0xf0] %v1411
      %1420 = vst [vmem:[#allocation2 + $0x288] sm:$0xf0] %v1412
      %1421 = vst [vmem:[#allocation2 + $0x290] sm:$0xf0] %v1413
      %1422 = vst [vmem:[#allocation2 + $0x298] sm:$0xf0] %v1414
      %s1423 = scalar_lea.vmem %s1, 70
      %v1424 = vld [vmem:[%s1423] ss:$8 sm:$0xf]
      %v1426 = vlaneseq
      %v1427 = vshrl.u32 %v1426, 7
      %v1428 = vsub.s32 0, %v1427
      %v1429 = vrot.slane %v1424, %v1428
      %v1430 = vlaneseq
      %v1431 = vshrl.u32 %v1430, 7
      %v1432 = vsub.s32 1, %v1431
      %v1433 = vrot.slane %v1424, %v1432
      %v1434 = vlaneseq
      %v1435 = vshrl.u32 %v1434, 7
      %v1436 = vsub.s32 2, %v1435
      %v1437 = vrot.slane %v1424, %v1436
      %v1438 = vlaneseq
      %v1439 = vshrl.u32 %v1438, 7
      %v1440 = vsub.s32 3, %v1439
      %v1441 = vrot.slane %v1424, %v1440
      %v1446 = vmul.f32 %v634, %v1429
      %v1447 = vmul.f32 %v633, %v1433
      %v1448 = vmul.f32 %v632, %v1437
      %v1449 = vmul.f32 %v635, %v1441
      %1450 = vst [vmem:[#allocation2 + $0x2c0] sm:$0xf] %v1446
      %1451 = vst [vmem:[#allocation2 + $0x2c8] sm:$0xf] %v1447
      %1452 = vst [vmem:[#allocation2 + $0x2d0] sm:$0xf] %v1448
      %1453 = vst [vmem:[#allocation2 + $0x2d8] sm:$0xf] %v1449
      %s1454 = scalar_lea.vmem %s1, 71
      %v1455 = vld [vmem:[%s1454] ss:$8 sm:$0xf]
      %v1457 = vlaneseq
      %v1458 = vshrl.u32 %v1457, 7
      %v1459 = vsub.s32 0, %v1458
      %v1460 = vrot.slane %v1455, %v1459
      %v1461 = vlaneseq
      %v1462 = vshrl.u32 %v1461, 7
      %v1463 = vsub.s32 1, %v1462
      %v1464 = vrot.slane %v1455, %v1463
      %v1465 = vlaneseq
      %v1466 = vshrl.u32 %v1465, 7
      %v1467 = vsub.s32 2, %v1466
      %v1468 = vrot.slane %v1455, %v1467
      %v1469 = vlaneseq
      %v1470 = vshrl.u32 %v1469, 7
      %v1471 = vsub.s32 3, %v1470
      %v1472 = vrot.slane %v1455, %v1471
      %v1477 = vmul.f32 %v678, %v1460
      %v1478 = vmul.f32 %v677, %v1464
      %v1479 = vmul.f32 %v676, %v1468
      %v1480 = vmul.f32 %v679, %v1472
      %v1485 = vrot.slane %v1477, 4
      %v1486 = vrot.slane %v1478, 4
      %v1487 = vrot.slane %v1479, 4
      %v1488 = vrot.slane %v1480, 4
      %1493 = vst [vmem:[#allocation2 + $0x2c0] sm:$0xf0] %v1485
      %1494 = vst [vmem:[#allocation2 + $0x2c8] sm:$0xf0] %v1486
      %1495 = vst [vmem:[#allocation2 + $0x2d0] sm:$0xf0] %v1487
      %1496 = vst [vmem:[#allocation2 + $0x2d8] sm:$0xf0] %v1488
      %s1497 = scalar_lea.vmem %s1, 96
      %v1498 = vld [vmem:[%s1497] ss:$8 sm:$0xf]
      %v1500 = vlaneseq
      %v1501 = vshrl.u32 %v1500, 7
      %v1502 = vsub.s32 0, %v1501
      %v1503 = vrot.slane %v1498, %v1502
      %v1504 = vlaneseq
      %v1505 = vshrl.u32 %v1504, 7
      %v1506 = vsub.s32 1, %v1505
      %v1507 = vrot.slane %v1498, %v1506
      %v1508 = vlaneseq
      %v1509 = vshrl.u32 %v1508, 7
      %v1510 = vsub.s32 2, %v1509
      %v1511 = vrot.slane %v1498, %v1510
      %v1512 = vlaneseq
      %v1513 = vshrl.u32 %v1512, 7
      %v1514 = vsub.s32 3, %v1513
      %v1515 = vrot.slane %v1498, %v1514
      %v1520 = vmul.f32 %v734, %v1503
      %v1521 = vmul.f32 %v733, %v1507
      %v1522 = vmul.f32 %v732, %v1511
      %v1523 = vmul.f32 %v735, %v1515
      %1524 = vst [vmem:[#allocation2 + $0x300] sm:$0xf] %v1520
      %1525 = vst [vmem:[#allocation2 + $0x308] sm:$0xf] %v1521
      %1526 = vst [vmem:[#allocation2 + $0x310] sm:$0xf] %v1522
      %1527 = vst [vmem:[#allocation2 + $0x318] sm:$0xf] %v1523
      %s1528 = scalar_lea.vmem %s1, 97
      %v1529 = vld [vmem:[%s1528] ss:$8 sm:$0xf]
      %v1531 = vlaneseq
      %v1532 = vshrl.u32 %v1531, 7
      %v1533 = vsub.s32 0, %v1532
      %v1534 = vrot.slane %v1529, %v1533
      %v1535 = vlaneseq
      %v1536 = vshrl.u32 %v1535, 7
      %v1537 = vsub.s32 1, %v1536
      %v1538 = vrot.slane %v1529, %v1537
      %v1539 = vlaneseq
      %v1540 = vshrl.u32 %v1539, 7
      %v1541 = vsub.s32 2, %v1540
      %v1542 = vrot.slane %v1529, %v1541
      %v1543 = vlaneseq
      %v1544 = vshrl.u32 %v1543, 7
      %v1545 = vsub.s32 3, %v1544
      %v1546 = vrot.slane %v1529, %v1545
      %v1551 = vmul.f32 %v778, %v1534
      %v1552 = vmul.f32 %v777, %v1538
      %v1553 = vmul.f32 %v776, %v1542
      %v1554 = vmul.f32 %v779, %v1546
      %v1559 = vrot.slane %v1551, 4
      %v1560 = vrot.slane %v1552, 4
      %v1561 = vrot.slane %v1553, 4
      %v1562 = vrot.slane %v1554, 4
      %1567 = vst [vmem:[#allocation2 + $0x300] sm:$0xf0] %v1559
      %1568 = vst [vmem:[#allocation2 + $0x308] sm:$0xf0] %v1560
      %1569 = vst [vmem:[#allocation2 + $0x310] sm:$0xf0] %v1561
      %1570 = vst [vmem:[#allocation2 + $0x318] sm:$0xf0] %v1562
      %s1571 = scalar_lea.vmem %s1, 98
      %v1572 = vld [vmem:[%s1571] ss:$8 sm:$0xf]
      %v1574 = vlaneseq
      %v1575 = vshrl.u32 %v1574, 7
      %v1576 = vsub.s32 0, %v1575
      %v1577 = vrot.slane %v1572, %v1576
      %v1578 = vlaneseq
      %v1579 = vshrl.u32 %v1578, 7
      %v1580 = vsub.s32 1, %v1579
      %v1581 = vrot.slane %v1572, %v1580
      %v1582 = vlaneseq
      %v1583 = vshrl.u32 %v1582, 7
      %v1584 = vsub.s32 2, %v1583
      %v1585 = vrot.slane %v1572, %v1584
      %v1586 = vlaneseq
      %v1587 = vshrl.u32 %v1586, 7
      %v1588 = vsub.s32 3, %v1587
      %v1589 = vrot.slane %v1572, %v1588
      %v1594 = vmul.f32 %v834, %v1577
      %v1595 = vmul.f32 %v833, %v1581
      %v1596 = vmul.f32 %v832, %v1585
      %v1597 = vmul.f32 %v835, %v1589
      %1598 = vst [vmem:[#allocation2 + $0x340] sm:$0xf] %v1594
      %1599 = vst [vmem:[#allocation2 + $0x348] sm:$0xf] %v1595
      %1600 = vst [vmem:[#allocation2 + $0x350] sm:$0xf] %v1596
      %1601 = vst [vmem:[#allocation2 + $0x358] sm:$0xf] %v1597
      %v1602 = vld [vmem:[%s4] sm:$0xf]
      %v1603 = vld [vmem:[#allocation2] sm:$0xff]
      %v1604 = vld [vmem:[#allocation2 + $0x8] sm:$0xff]
      %v1605 = vld [vmem:[#allocation2 + $0x10] sm:$0xff]
      %v1606 = vld [vmem:[#allocation2 + $0x18] sm:$0xff]
      %v1607 = vld [vmem:[#allocation2 + $0x40] sm:$0xff]
      %v1608 = vld [vmem:[#allocation2 + $0x48] sm:$0xff]
      %v1609 = vld [vmem:[#allocation2 + $0x50] sm:$0xff]
      %v1610 = vld [vmem:[#allocation2 + $0x58] sm:$0xff]
      %v1611 = vld [vmem:[#allocation2 + $0x80] sm:$0xff]
      %v1612 = vld [vmem:[#allocation2 + $0x88] sm:$0xff]
      %v1613 = vld [vmem:[#allocation2 + $0x90] sm:$0xff]
      %v1614 = vld [vmem:[#allocation2 + $0x98] sm:$0xff]
      %v1615 = vld [vmem:[#allocation2 + $0xc0] sm:$0xff]
      %v1616 = vld [vmem:[#allocation2 + $0xc8] sm:$0xff]
      %v1617 = vld [vmem:[#allocation2 + $0xd0] sm:$0xff]
      %v1618 = vld [vmem:[#allocation2 + $0xd8] sm:$0xff]
      %v1619 = vld [vmem:[#allocation2 + $0x100] sm:$0xff]
      %v1620 = vld [vmem:[#allocation2 + $0x108] sm:$0xff]
      %v1621 = vld [vmem:[#allocation2 + $0x110] sm:$0xff]
      %v1622 = vld [vmem:[#allocation2 + $0x118] sm:$0xff]
      %v1623 = vld [vmem:[#allocation2 + $0x140] sm:$0xff]
      %v1624 = vld [vmem:[#allocation2 + $0x148] sm:$0xff]
      %v1625 = vld [vmem:[#allocation2 + $0x150] sm:$0xff]
      %v1626 = vld [vmem:[#allocation2 + $0x158] sm:$0xff]
      %v1627 = vld [vmem:[#allocation2 + $0x180] sm:$0xff]
      %v1628 = vld [vmem:[#allocation2 + $0x188] sm:$0xff]
      %v1629 = vld [vmem:[#allocation2 + $0x190] sm:$0xff]
      %v1630 = vld [vmem:[#allocation2 + $0x198] sm:$0xff]
      %v1631 = vld [vmem:[#allocation2 + $0x1c0] sm:$0xff]
      %v1632 = vld [vmem:[#allocation2 + $0x1c8] sm:$0xff]
      %v1633 = vld [vmem:[#allocation2 + $0x1d0] sm:$0xff]
      %v1634 = vld [vmem:[#allocation2 + $0x1d8] sm:$0xff]
      %v1635 = vld [vmem:[#allocation2 + $0x200] sm:$0xff]
      %v1636 = vld [vmem:[#allocation2 + $0x208] sm:$0xff]
      %v1637 = vld [vmem:[#allocation2 + $0x210] sm:$0xff]
      %v1638 = vld [vmem:[#allocation2 + $0x218] sm:$0xff]
      %v1639 = vld [vmem:[#allocation2 + $0x240] sm:$0xff]
      %v1640 = vld [vmem:[#allocation2 + $0x248] sm:$0xff]
      %v1641 = vld [vmem:[#allocation2 + $0x250] sm:$0xff]
      %v1642 = vld [vmem:[#allocation2 + $0x258] sm:$0xff]
      %v1643 = vld [vmem:[#allocation2 + $0x280] sm:$0xff]
      %v1644 = vld [vmem:[#allocation2 + $0x288] sm:$0xff]
      %v1645 = vld [vmem:[#allocation2 + $0x290] sm:$0xff]
      %v1646 = vld [vmem:[#allocation2 + $0x298] sm:$0xff]
      %v1647 = vld [vmem:[#allocation2 + $0x2c0] sm:$0xff]
      %v1648 = vld [vmem:[#allocation2 + $0x2c8] sm:$0xff]
      %v1649 = vld [vmem:[#allocation2 + $0x2d0] sm:$0xff]
      %v1650 = vld [vmem:[#allocation2 + $0x2d8] sm:$0xff]
      %v1651 = vld [vmem:[#allocation2 + $0x300] sm:$0xff]
      %v1652 = vld [vmem:[#allocation2 + $0x308] sm:$0xff]
      %v1653 = vld [vmem:[#allocation2 + $0x310] sm:$0xff]
      %v1654 = vld [vmem:[#allocation2 + $0x318] sm:$0xff]
      %v1655 = vld [vmem:[#allocation2 + $0x340] sm:$0xf]
      %v1656 = vld [vmem:[#allocation2 + $0x348] sm:$0xf]
      %v1657 = vld [vmem:[#allocation2 + $0x350] sm:$0xf]
      %v1658 = vld [vmem:[#allocation2 + $0x358] sm:$0xf]
      %v1659 = vld [vmem:[%s5] sm:$0xf]
      %1661 = vset.pattern.permute.xlu0 0
      %1662 = vperm.xlu0 %1661, %v1659
      %v1663 = vpop.permute.xlu0 %1662
      %vm1665 = vcmask 883712
      %v1667 = vsel %vm1665, %v1602, 0
      %vm1669 = vcmask 1043456
      %v1671 = vsel %vm1669, %v1655, 0
      %v1674 = vsel %vm1669, %v1656, 0
      %v1677 = vsel %vm1669, %v1657, 0
      %v1680 = vsel %vm1669, %v1658, 0
      %1682 = vmatprep.subr.mxu0 %v1604
      %1683 = vmatpush1.msra.mxu0 %v1603
      %1684 = vmatprep.subr.mxu0 %v1608
      %1685 = vmatpush1.msra.mxu0 %v1607
      %1686 = vmatprep.subr.mxu0 %v1612
      %1687 = vmatpush1.msra.mxu0 %v1611
      %1688 = vmatprep.subr.mxu0 %v1616
      %1689 = vmatpush1.msra.mxu0 %v1615
      %1690 = vmatprep.subr.mxu0 %v1620
      %1691 = vmatpush1.msra.mxu0 %v1619
      %1692 = vmatprep.subr.mxu0 %v1624
      %1693 = vmatpush1.msra.mxu0 %v1623
      %1694 = vmatprep.subr.mxu0 %v1628
      %1695 = vmatpush1.msra.mxu0 %v1627
      %1696 = vmatprep.subr.mxu0 %v1632
      %1697 = vmatpush1.msra.mxu0 %v1631
      %1698 = vmatprep.subr.mxu0 %v1636
      %1699 = vmatpush1.msra.mxu0 %v1635
      %1700 = vmatprep.subr.mxu0 %v1640
      %1701 = vmatpush1.msra.mxu0 %v1639
      %1702 = vmatprep.subr.mxu0 %v1644
      %1703 = vmatpush1.msra.mxu0 %v1643
      %1704 = vmatprep.subr.mxu0 %v1648
      %1705 = vmatpush1.msra.mxu0 %v1647
      %1706 = vmatprep.subr.mxu0 %v1652
      %1707 = vmatpush1.msra.mxu0 %v1651
      %1708 = vmatprep.subr.mxu0 %v1674
      %1709 = vmatpush1.msra.mxu0 %v1671
      %1710 = vmatprep.subr.mxu0 0.0
      %1711 = vmatpush1.msra.mxu0 0.0
      %1712 = vmatprep.subr.mxu0 0.0
      %1713 = vmatpush1.msra.mxu0 0.0
      %1714 = vmatprep.subr.mxu0 0.0
      %1715 = vmatpush1.msra.mxu0 0.0
      %1716 = vmatprep.subr.mxu0 0.0
      %1717 = vmatpush1.msra.mxu0 0.0
      %1718 = vmatprep.subr.mxu0 0.0
      %1719 = vmatpush1.msra.mxu0 0.0
      %1720 = vmatprep.subr.mxu0 0.0
      %1721 = vmatpush1.msra.mxu0 0.0
      %1722 = vmatprep.subr.mxu0 0.0
      %1723 = vmatpush1.msra.mxu0 0.0
      %1724 = vmatprep.subr.mxu0 0.0
      %1725 = vmatpush1.msra.mxu0 0.0
      %1726 = vmatprep.subr.mxu0 0.0
      %1727 = vmatpush1.msra.mxu0 0.0
      %1728 = vmatprep.subr.mxu0 0.0
      %1729 = vmatpush1.msra.mxu0 0.0
      %1730 = vmatprep.subr.mxu0 0.0
      %1731 = vmatpush1.msra.mxu0 0.0
      %1732 = vmatprep.subr.mxu0 0.0
      %1733 = vmatpush1.msra.mxu0 0.0
      %1734 = vmatprep.subr.mxu0 0.0
      %1735 = vmatpush1.msra.mxu0 0.0
      %1736 = vmatprep.subr.mxu0 0.0
      %1737 = vmatpush1.msra.mxu0 0.0
      %1738 = vmatprep.subr.mxu0 0.0
      %1739 = vmatpush1.msra.mxu0 0.0
      %1740 = vmatprep.subr.mxu0 0.0
      %1741 = vmatpush1.msra.mxu0 0.0
      %1742 = vmatprep.subr.mxu0 0.0
      %1743 = vmatpush1.msra.mxu0 0.0
      %1744 = vmatprep.subr.mxu0 0.0
      %1745 = vmatpush1.msra.mxu0 0.0
      %1746 = vmatprep.mubr.f32.mxu0 0.0
      %1747 = vmatmul.mubr.f32.gmra.mrb[0].mxu0 %v1667
      %v1748 = vpop.f32.mrb[0].mxu0
      %v1749 = vadd.f32 %v1663, %v1748
      %v1750 = vpop.f32.mrb[0].mxu0
      %v1751 = vadd.f32 %v1663, %v1750
      %1752 = vdwg.mxu0
      %1753 = vmatprep.subr.mxu0 %v1606
      %1754 = vmatpush1.msra.mxu0 %v1605
      %1755 = vmatprep.subr.mxu0 %v1610
      %1756 = vmatpush1.msra.mxu0 %v1609
      %1757 = vmatprep.subr.mxu0 %v1614
      %1758 = vmatpush1.msra.mxu0 %v1613
      %1759 = vmatprep.subr.mxu0 %v1618
      %1760 = vmatpush1.msra.mxu0 %v1617
      %1761 = vmatprep.subr.mxu0 %v1622
      %1762 = vmatpush1.msra.mxu0 %v1621
      %1763 = vmatprep.subr.mxu0 %v1626
      %1764 = vmatpush1.msra.mxu0 %v1625
      %1765 = vmatprep.subr.mxu0 %v1630
      %1766 = vmatpush1.msra.mxu0 %v1629
      %1767 = vmatprep.subr.mxu0 %v1634
      %1768 = vmatpush1.msra.mxu0 %v1633
      %1769 = vmatprep.subr.mxu0 %v1638
      %1770 = vmatpush1.msra.mxu0 %v1637
      %1771 = vmatprep.subr.mxu0 %v1642
      %1772 = vmatpush1.msra.mxu0 %v1641
      %1773 = vmatprep.subr.mxu0 %v1646
      %1774 = vmatpush1.msra.mxu0 %v1645
      %1775 = vmatprep.subr.mxu0 %v1650
      %1776 = vmatpush1.msra.mxu0 %v1649
      %1777 = vmatprep.subr.mxu0 %v1654
      %1778 = vmatpush1.msra.mxu0 %v1653
      %1779 = vmatprep.subr.mxu0 %v1680
      %1780 = vmatpush1.msra.mxu0 %v1677
      %1781 = vmatprep.subr.mxu0 0.0
      %1782 = vmatpush1.msra.mxu0 0.0
      %1783 = vmatprep.subr.mxu0 0.0
      %1784 = vmatpush1.msra.mxu0 0.0
      %1785 = vmatprep.subr.mxu0 0.0
      %1786 = vmatpush1.msra.mxu0 0.0
      %1787 = vmatprep.subr.mxu0 0.0
      %1788 = vmatpush1.msra.mxu0 0.0
      %1789 = vmatprep.subr.mxu0 0.0
      %1790 = vmatpush1.msra.mxu0 0.0
      %1791 = vmatprep.subr.mxu0 0.0
      %1792 = vmatpush1.msra.mxu0 0.0
      %1793 = vmatprep.subr.mxu0 0.0
      %1794 = vmatpush1.msra.mxu0 0.0
      %1795 = vmatprep.subr.mxu0 0.0
      %1796 = vmatpush1.msra.mxu0 0.0
      %1797 = vmatprep.subr.mxu0 0.0
      %1798 = vmatpush1.msra.mxu0 0.0
      %1799 = vmatprep.subr.mxu0 0.0
      %1800 = vmatpush1.msra.mxu0 0.0
      %1801 = vmatprep.subr.mxu0 0.0
      %1802 = vmatpush1.msra.mxu0 0.0
      %1803 = vmatprep.subr.mxu0 0.0
      %1804 = vmatpush1.msra.mxu0 0.0
      %1805 = vmatprep.subr.mxu0 0.0
      %1806 = vmatpush1.msra.mxu0 0.0
      %1807 = vmatprep.subr.mxu0 0.0
      %1808 = vmatpush1.msra.mxu0 0.0
      %1809 = vmatprep.subr.mxu0 0.0
      %1810 = vmatpush1.msra.mxu0 0.0
      %1811 = vmatprep.subr.mxu0 0.0
      %1812 = vmatpush1.msra.mxu0 0.0
      %1813 = vmatprep.subr.mxu0 0.0
      %1814 = vmatpush1.msra.mxu0 0.0
      %1815 = vmatprep.subr.mxu0 0.0
      %1816 = vmatpush1.msra.mxu0 0.0
      %1817 = vmatprep.mubr.f32.mxu0 0.0
      %1818 = vmatmul.mubr.f32.gmra.mrb[0].mxu0 %v1667
      %v1819 = vpop.f32.mrb[0].mxu0
      %v1820 = vadd.f32 %v1663, %v1819
      %v1821 = vpop.f32.mrb[0].mxu0
      %v1822 = vadd.f32 %v1663, %v1821
      %1823 = vdwg.mxu0
      %1824 = vrot.lane.b32.xlu0 %v414, 91
      %v1825 = vpop.permute.xlu0 %1824
      %1826 = vrot.lane.b32.xlu0 %v418, 91
      %v1827 = vpop.permute.xlu0 %1826
      %1828 = vrot.lane.b32.xlu0 %v415, 91
      %v1829 = vpop.permute.xlu0 %1828
      %1830 = vrot.lane.b32.xlu0 %v419, 91
      %v1831 = vpop.permute.xlu0 %1830
      %1832 = vrot.lane.b32.xlu0 %v1749, 91
      %v1833 = vpop.permute.xlu0 %1832
      %1834 = vrot.lane.b32.xlu0 %v1751, 91
      %v1835 = vpop.permute.xlu0 %1834
      %1836 = vrot.lane.b32.xlu0 %v1820, 91
      %v1837 = vpop.permute.xlu0 %1836
      %1838 = vrot.lane.b32.xlu0 %v1822, 91
      %v1839 = vpop.permute.xlu0 %1838
      %vm1840 = vcmp.lt.s32.totalorder %v431, 91
      %v1841 = vsel %vm1840, %v1837, %v1839
      %v1842 = vsel %vm1840, %v1835, %v1837
      %v1843 = vsel %vm1840, %v1833, %v1835
      %v1844 = vsel %vm1840, %v1831, %v1833
      %v1845 = vsel %vm1840, %v1829, %v1831
      %v1846 = vsel %vm1840, %v1827, %v1829
      %v1847 = vsel %vm1840, %v1825, %v1827
      %v1848 = vsel %vm1840, %v1839, %v1825
      %v1849 = vld [vmem:[%s2] ss:$8 sm:$0xf]
      %v1850 = vld [vmem:[%s2] ss:$8 sm:$0xf0]
      %v1851 = vor.u32 %v1849, %v1850
      %v1853 = vlaneseq
      %v1854 = vshrl.u32 %v1853, 7
      %v1855 = vsub.s32 0, %v1854
      %v1856 = vrot.slane %v1851, %v1855
      %v1857 = vlaneseq
      %v1858 = vshrl.u32 %v1857, 7
      %v1859 = vsub.s32 1, %v1858
      %v1860 = vrot.slane %v1851, %v1859
      %v1861 = vlaneseq
      %v1862 = vshrl.u32 %v1861, 7
      %v1863 = vsub.s32 2, %v1862
      %v1864 = vrot.slane %v1851, %v1863
      %v1865 = vlaneseq
      %v1866 = vshrl.u32 %v1865, 7
      %v1867 = vsub.s32 3, %v1866
      %v1868 = vrot.slane %v1851, %v1867
      %v1869 = vlaneseq
      %v1870 = vshrl.u32 %v1869, 7
      %v1871 = vsub.s32 4, %v1870
      %v1872 = vrot.slane %v1851, %v1871
      %v1873 = vlaneseq
      %v1874 = vshrl.u32 %v1873, 7
      %v1875 = vsub.s32 5, %v1874
      %v1876 = vrot.slane %v1851, %v1875
      %v1877 = vlaneseq
      %v1878 = vshrl.u32 %v1877, 7
      %v1879 = vsub.s32 6, %v1878
      %v1880 = vrot.slane %v1851, %v1879
      %v1881 = vlaneseq
      %v1882 = vshrl.u32 %v1881, 7
      %v1883 = vsub.s32 7, %v1882
      %v1884 = vrot.slane %v1851, %v1883
      %v1893 = vmul.f32 %v1841, %v1856
      %v1894 = vmul.f32 %v1848, %v1860
      %v1895 = vmul.f32 %v1847, %v1864
      %v1896 = vmul.f32 %v1846, %v1868
      %v1897 = vmul.f32 %v1845, %v1872
      %v1898 = vmul.f32 %v1844, %v1876
      %v1899 = vmul.f32 %v1843, %v1880
      %v1900 = vmul.f32 %v1842, %v1884
      %1901 = vst [vmem:[#allocation2] sm:$0xf] %v1893
      %1902 = vst [vmem:[#allocation2 + $0x8] sm:$0xf] %v1894
      %1903 = vst [vmem:[#allocation2 + $0x10] sm:$0xf] %v1895
      %1904 = vst [vmem:[#allocation2 + $0x18] sm:$0xf] %v1896
      %1905 = vst [vmem:[#allocation2 + $0x20] sm:$0xf] %v1897
      %1906 = vst [vmem:[#allocation2 + $0x28] sm:$0xf] %v1898
      %1907 = vst [vmem:[#allocation2 + $0x30] sm:$0xf] %v1899
      %1908 = vst [vmem:[#allocation2 + $0x38] sm:$0xf] %v1900
      %1909 = vrot.lane.b32.xlu0 %v414, 88
      %v1910 = vpop.permute.xlu0 %1909
      %1911 = vrot.lane.b32.xlu0 %v418, 88
      %v1912 = vpop.permute.xlu0 %1911
      %1913 = vrot.lane.b32.xlu0 %v415, 88
      %v1914 = vpop.permute.xlu0 %1913
      %1915 = vrot.lane.b32.xlu0 %v419, 88
      %v1916 = vpop.permute.xlu0 %1915
      %1917 = vrot.lane.b32.xlu0 %v1749, 88
      %v1918 = vpop.permute.xlu0 %1917
      %1919 = vrot.lane.b32.xlu0 %v1751, 88
      %v1920 = vpop.permute.xlu0 %1919
      %1921 = vrot.lane.b32.xlu0 %v1820, 88
      %v1922 = vpop.permute.xlu0 %1921
      %1923 = vrot.lane.b32.xlu0 %v1822, 88
      %v1924 = vpop.permute.xlu0 %1923
      %vm1925 = vcmp.lt.s32.totalorder %v431, 88
      %v1926 = vsel %vm1925, %v1922, %v1924
      %v1927 = vsel %vm1925, %v1920, %v1922
      %v1928 = vsel %vm1925, %v1918, %v1920
      %v1929 = vsel %vm1925, %v1916, %v1918
      %v1930 = vsel %vm1925, %v1914, %v1916
      %v1931 = vsel %vm1925, %v1912, %v1914
      %v1932 = vsel %vm1925, %v1910, %v1912
      %v1933 = vsel %vm1925, %v1924, %v1910
      %s1934 = scalar_lea.vmem %s2, 1
      %v1935 = vld [vmem:[%s1934] ss:$8 sm:$0xf]
      %v1936 = vld [vmem:[%s1934] ss:$8 sm:$0xf0]
      %v1937 = vor.u32 %v1935, %v1936
      %v1939 = vlaneseq
      %v1940 = vshrl.u32 %v1939, 7
      %v1941 = vsub.s32 0, %v1940
      %v1942 = vrot.slane %v1937, %v1941
      %v1943 = vlaneseq
      %v1944 = vshrl.u32 %v1943, 7
      %v1945 = vsub.s32 1, %v1944
      %v1946 = vrot.slane %v1937, %v1945
      %v1947 = vlaneseq
      %v1948 = vshrl.u32 %v1947, 7
      %v1949 = vsub.s32 2, %v1948
      %v1950 = vrot.slane %v1937, %v1949
      %v1951 = vlaneseq
      %v1952 = vshrl.u32 %v1951, 7
      %v1953 = vsub.s32 3, %v1952
      %v1954 = vrot.slane %v1937, %v1953
      %v1955 = vlaneseq
      %v1956 = vshrl.u32 %v1955, 7
      %v1957 = vsub.s32 4, %v1956
      %v1958 = vrot.slane %v1937, %v1957
      %v1959 = vlaneseq
      %v1960 = vshrl.u32 %v1959, 7
      %v1961 = vsub.s32 5, %v1960
      %v1962 = vrot.slane %v1937, %v1961
      %v1963 = vlaneseq
      %v1964 = vshrl.u32 %v1963, 7
      %v1965 = vsub.s32 6, %v1964
      %v1966 = vrot.slane %v1937, %v1965
      %v1967 = vlaneseq
      %v1968 = vshrl.u32 %v1967, 7
      %v1969 = vsub.s32 7, %v1968
      %v1970 = vrot.slane %v1937, %v1969
      %v1979 = vmul.f32 %v1926, %v1942
      %v1980 = vmul.f32 %v1933, %v1946
      %v1981 = vmul.f32 %v1932, %v1950
      %v1982 = vmul.f32 %v1931, %v1954
      %v1983 = vmul.f32 %v1930, %v1958
      %v1984 = vmul.f32 %v1929, %v1962
      %v1985 = vmul.f32 %v1928, %v1966
      %v1986 = vmul.f32 %v1927, %v1970
      %v1995 = vrot.slane %v1979, 4
      %v1996 = vrot.slane %v1980, 4
      %v1997 = vrot.slane %v1981, 4
      %v1998 = vrot.slane %v1982, 4
      %v1999 = vrot.slane %v1983, 4
      %v2000 = vrot.slane %v1984, 4
      %v2001 = vrot.slane %v1985, 4
      %v2002 = vrot.slane %v1986, 4
      %2011 = vst [vmem:[#allocation2] sm:$0xf0] %v1995
      %2012 = vst [vmem:[#allocation2 + $0x8] sm:$0xf0] %v1996
      %2013 = vst [vmem:[#allocation2 + $0x10] sm:$0xf0] %v1997
      %2014 = vst [vmem:[#allocation2 + $0x18] sm:$0xf0] %v1998
      %2015 = vst [vmem:[#allocation2 + $0x20] sm:$0xf0] %v1999
      %2016 = vst [vmem:[#allocation2 + $0x28] sm:$0xf0] %v2000
      %2017 = vst [vmem:[#allocation2 + $0x30] sm:$0xf0] %v2001
      %2018 = vst [vmem:[#allocation2 + $0x38] sm:$0xf0] %v2002
      %2019 = vrot.lane.b32.xlu0 %v414, 85
      %v2020 = vpop.permute.xlu0 %2019
      %2021 = vrot.lane.b32.xlu0 %v418, 85
      %v2022 = vpop.permute.xlu0 %2021
      %2023 = vrot.lane.b32.xlu0 %v415, 85
      %v2024 = vpop.permute.xlu0 %2023
      %2025 = vrot.lane.b32.xlu0 %v419, 85
      %v2026 = vpop.permute.xlu0 %2025
      %2027 = vrot.lane.b32.xlu0 %v1749, 85
      %v2028 = vpop.permute.xlu0 %2027
      %2029 = vrot.lane.b32.xlu0 %v1751, 85
      %v2030 = vpop.permute.xlu0 %2029
      %2031 = vrot.lane.b32.xlu0 %v1820, 85
      %v2032 = vpop.permute.xlu0 %2031
      %2033 = vrot.lane.b32.xlu0 %v1822, 85
      %v2034 = vpop.permute.xlu0 %2033
      %vm2035 = vcmp.lt.s32.totalorder %v431, 85
      %v2036 = vsel %vm2035, %v2032, %v2034
      %v2037 = vsel %vm2035, %v2030, %v2032
      %v2038 = vsel %vm2035, %v2028, %v2030
      %v2039 = vsel %vm2035, %v2026, %v2028
      %v2040 = vsel %vm2035, %v2024, %v2026
      %v2041 = vsel %vm2035, %v2022, %v2024
      %v2042 = vsel %vm2035, %v2020, %v2022
      %v2043 = vsel %vm2035, %v2034, %v2020
      %s2044 = scalar_lea.vmem %s2, 2
      %v2045 = vld [vmem:[%s2044] ss:$8 sm:$0xf]
      %v2046 = vld [vmem:[%s2044] ss:$8 sm:$0xf0]
      %v2047 = vor.u32 %v2045, %v2046
      %v2049 = vlaneseq
      %v2050 = vshrl.u32 %v2049, 7
      %v2051 = vsub.s32 0, %v2050
      %v2052 = vrot.slane %v2047, %v2051
      %v2053 = vlaneseq
      %v2054 = vshrl.u32 %v2053, 7
      %v2055 = vsub.s32 1, %v2054
      %v2056 = vrot.slane %v2047, %v2055
      %v2057 = vlaneseq
      %v2058 = vshrl.u32 %v2057, 7
      %v2059 = vsub.s32 2, %v2058
      %v2060 = vrot.slane %v2047, %v2059
      %v2061 = vlaneseq
      %v2062 = vshrl.u32 %v2061, 7
      %v2063 = vsub.s32 3, %v2062
      %v2064 = vrot.slane %v2047, %v2063
      %v2065 = vlaneseq
      %v2066 = vshrl.u32 %v2065, 7
      %v2067 = vsub.s32 4, %v2066
      %v2068 = vrot.slane %v2047, %v2067
      %v2069 = vlaneseq
      %v2070 = vshrl.u32 %v2069, 7
      %v2071 = vsub.s32 5, %v2070
      %v2072 = vrot.slane %v2047, %v2071
      %v2073 = vlaneseq
      %v2074 = vshrl.u32 %v2073, 7
      %v2075 = vsub.s32 6, %v2074
      %v2076 = vrot.slane %v2047, %v2075
      %v2077 = vlaneseq
      %v2078 = vshrl.u32 %v2077, 7
      %v2079 = vsub.s32 7, %v2078
      %v2080 = vrot.slane %v2047, %v2079
      %v2089 = vmul.f32 %v2036, %v2052
      %v2090 = vmul.f32 %v2043, %v2056
      %v2091 = vmul.f32 %v2042, %v2060
      %v2092 = vmul.f32 %v2041, %v2064
      %v2093 = vmul.f32 %v2040, %v2068
      %v2094 = vmul.f32 %v2039, %v2072
      %v2095 = vmul.f32 %v2038, %v2076
      %v2096 = vmul.f32 %v2037, %v2080
      %2097 = vst [vmem:[#allocation2 + $0x40] sm:$0xf] %v2089
      %2098 = vst [vmem:[#allocation2 + $0x48] sm:$0xf] %v2090
      %2099 = vst [vmem:[#allocation2 + $0x50] sm:$0xf] %v2091
      %2100 = vst [vmem:[#allocation2 + $0x58] sm:$0xf] %v2092
      %2101 = vst [vmem:[#allocation2 + $0x60] sm:$0xf] %v2093
      %2102 = vst [vmem:[#allocation2 + $0x68] sm:$0xf] %v2094
      %2103 = vst [vmem:[#allocation2 + $0x70] sm:$0xf] %v2095
      %2104 = vst [vmem:[#allocation2 + $0x78] sm:$0xf] %v2096
      %2105 = vrot.lane.b32.xlu0 %v414, 67
      %v2106 = vpop.permute.xlu0 %2105
      %2107 = vrot.lane.b32.xlu0 %v418, 67
      %v2108 = vpop.permute.xlu0 %2107
      %2109 = vrot.lane.b32.xlu0 %v415, 67
      %v2110 = vpop.permute.xlu0 %2109
      %2111 = vrot.lane.b32.xlu0 %v419, 67
      %v2112 = vpop.permute.xlu0 %2111
      %2113 = vrot.lane.b32.xlu0 %v1749, 67
      %v2114 = vpop.permute.xlu0 %2113
      %2115 = vrot.lane.b32.xlu0 %v1751, 67
      %v2116 = vpop.permute.xlu0 %2115
      %2117 = vrot.lane.b32.xlu0 %v1820, 67
      %v2118 = vpop.permute.xlu0 %2117
      %2119 = vrot.lane.b32.xlu0 %v1822, 67
      %v2120 = vpop.permute.xlu0 %2119
      %vm2121 = vcmp.lt.s32.totalorder %v431, 67
      %v2122 = vsel %vm2121, %v2118, %v2120
      %v2123 = vsel %vm2121, %v2116, %v2118
      %v2124 = vsel %vm2121, %v2114, %v2116
      %v2125 = vsel %vm2121, %v2112, %v2114
      %v2126 = vsel %vm2121, %v2110, %v2112
      %v2127 = vsel %vm2121, %v2108, %v2110
      %v2128 = vsel %vm2121, %v2106, %v2108
      %v2129 = vsel %vm2121, %v2120, %v2106
      %s2130 = scalar_lea.vmem %s2, 3
      %v2131 = vld [vmem:[%s2130] ss:$8 sm:$0xf]
      %v2132 = vld [vmem:[%s2130] ss:$8 sm:$0xf0]
      %v2133 = vor.u32 %v2131, %v2132
      %v2135 = vlaneseq
      %v2136 = vshrl.u32 %v2135, 7
      %v2137 = vsub.s32 0, %v2136
      %v2138 = vrot.slane %v2133, %v2137
      %v2139 = vlaneseq
      %v2140 = vshrl.u32 %v2139, 7
      %v2141 = vsub.s32 1, %v2140
      %v2142 = vrot.slane %v2133, %v2141
      %v2143 = vlaneseq
      %v2144 = vshrl.u32 %v2143, 7
      %v2145 = vsub.s32 2, %v2144
      %v2146 = vrot.slane %v2133, %v2145
      %v2147 = vlaneseq
      %v2148 = vshrl.u32 %v2147, 7
      %v2149 = vsub.s32 3, %v2148
      %v2150 = vrot.slane %v2133, %v2149
      %v2151 = vlaneseq
      %v2152 = vshrl.u32 %v2151, 7
      %v2153 = vsub.s32 4, %v2152
      %v2154 = vrot.slane %v2133, %v2153
      %v2155 = vlaneseq
      %v2156 = vshrl.u32 %v2155, 7
      %v2157 = vsub.s32 5, %v2156
      %v2158 = vrot.slane %v2133, %v2157
      %v2159 = vlaneseq
      %v2160 = vshrl.u32 %v2159, 7
      %v2161 = vsub.s32 6, %v2160
      %v2162 = vrot.slane %v2133, %v2161
      %v2163 = vlaneseq
      %v2164 = vshrl.u32 %v2163, 7
      %v2165 = vsub.s32 7, %v2164
      %v2166 = vrot.slane %v2133, %v2165
      %v2175 = vmul.f32 %v2122, %v2138
      %v2176 = vmul.f32 %v2129, %v2142
      %v2177 = vmul.f32 %v2128, %v2146
      %v2178 = vmul.f32 %v2127, %v2150
      %v2179 = vmul.f32 %v2126, %v2154
      %v2180 = vmul.f32 %v2125, %v2158
      %v2181 = vmul.f32 %v2124, %v2162
      %v2182 = vmul.f32 %v2123, %v2166
      %v2191 = vrot.slane %v2175, 4
      %v2192 = vrot.slane %v2176, 4
      %v2193 = vrot.slane %v2177, 4
      %v2194 = vrot.slane %v2178, 4
      %v2195 = vrot.slane %v2179, 4
      %v2196 = vrot.slane %v2180, 4
      %v2197 = vrot.slane %v2181, 4
      %v2198 = vrot.slane %v2182, 4
      %2207 = vst [vmem:[#allocation2 + $0x40] sm:$0xf0] %v2191
      %2208 = vst [vmem:[#allocation2 + $0x48] sm:$0xf0] %v2192
      %2209 = vst [vmem:[#allocation2 + $0x50] sm:$0xf0] %v2193
      %2210 = vst [vmem:[#allocation2 + $0x58] sm:$0xf0] %v2194
      %2211 = vst [vmem:[#allocation2 + $0x60] sm:$0xf0] %v2195
      %2212 = vst [vmem:[#allocation2 + $0x68] sm:$0xf0] %v2196
      %2213 = vst [vmem:[#allocation2 + $0x70] sm:$0xf0] %v2197
      %2214 = vst [vmem:[#allocation2 + $0x78] sm:$0xf0] %v2198
      %2215 = vrot.lane.b32.xlu0 %v1749, 64
      %v2216 = vpop.permute.xlu0 %2215
      %2217 = vrot.lane.b32.xlu0 %v1751, 64
      %v2218 = vpop.permute.xlu0 %2217
      %2219 = vrot.lane.b32.xlu0 %v1820, 64
      %v2220 = vpop.permute.xlu0 %2219
      %2221 = vrot.lane.b32.xlu0 %v1822, 64
      %v2222 = vpop.permute.xlu0 %2221
      %v2223 = vsel %vm631, %v2220, %v2222
      %v2224 = vsel %vm631, %v2218, %v2220
      %v2225 = vsel %vm631, %v2216, %v2218
      %v2226 = vsel %vm631, %v630, %v2216
      %v2227 = vsel %vm631, %v2222, %v624
      %s2228 = scalar_lea.vmem %s2, 4
      %v2229 = vld [vmem:[%s2228] ss:$8 sm:$0xf]
      %v2230 = vld [vmem:[%s2228] ss:$8 sm:$0xf0]
      %v2231 = vor.u32 %v2229, %v2230
      %v2233 = vlaneseq
      %v2234 = vshrl.u32 %v2233, 7
      %v2235 = vsub.s32 0, %v2234
      %v2236 = vrot.slane %v2231, %v2235
      %v2237 = vlaneseq
      %v2238 = vshrl.u32 %v2237, 7
      %v2239 = vsub.s32 1, %v2238
      %v2240 = vrot.slane %v2231, %v2239
      %v2241 = vlaneseq
      %v2242 = vshrl.u32 %v2241, 7
      %v2243 = vsub.s32 2, %v2242
      %v2244 = vrot.slane %v2231, %v2243
      %v2245 = vlaneseq
      %v2246 = vshrl.u32 %v2245, 7
      %v2247 = vsub.s32 3, %v2246
      %v2248 = vrot.slane %v2231, %v2247
      %v2249 = vlaneseq
      %v2250 = vshrl.u32 %v2249, 7
      %v2251 = vsub.s32 4, %v2250
      %v2252 = vrot.slane %v2231, %v2251
      %v2253 = vlaneseq
      %v2254 = vshrl.u32 %v2253, 7
      %v2255 = vsub.s32 5, %v2254
      %v2256 = vrot.slane %v2231, %v2255
      %v2257 = vlaneseq
      %v2258 = vshrl.u32 %v2257, 7
      %v2259 = vsub.s32 6, %v2258
      %v2260 = vrot.slane %v2231, %v2259
      %v2261 = vlaneseq
      %v2262 = vshrl.u32 %v2261, 7
      %v2263 = vsub.s32 7, %v2262
      %v2264 = vrot.slane %v2231, %v2263
      %v2273 = vmul.f32 %v2223, %v2236
      %v2274 = vmul.f32 %v2227, %v2240
      %v2275 = vmul.f32 %v634, %v2244
      %v2276 = vmul.f32 %v633, %v2248
      %v2277 = vmul.f32 %v632, %v2252
      %v2278 = vmul.f32 %v2226, %v2256
      %v2279 = vmul.f32 %v2225, %v2260
      %v2280 = vmul.f32 %v2224, %v2264
      %2281 = vst [vmem:[#allocation2 + $0x80] sm:$0xf] %v2273
      %2282 = vst [vmem:[#allocation2 + $0x88] sm:$0xf] %v2274
      %2283 = vst [vmem:[#allocation2 + $0x90] sm:$0xf] %v2275
      %2284 = vst [vmem:[#allocation2 + $0x98] sm:$0xf] %v2276
      %2285 = vst [vmem:[#allocation2 + $0xa0] sm:$0xf] %v2277
      %2286 = vst [vmem:[#allocation2 + $0xa8] sm:$0xf] %v2278
      %2287 = vst [vmem:[#allocation2 + $0xb0] sm:$0xf] %v2279
      %2288 = vst [vmem:[#allocation2 + $0xb8] sm:$0xf] %v2280
      %2289 = vrot.lane.b32.xlu0 %v414, 61
      %v2290 = vpop.permute.xlu0 %2289
      %2291 = vrot.lane.b32.xlu0 %v418, 61
      %v2292 = vpop.permute.xlu0 %2291
      %2293 = vrot.lane.b32.xlu0 %v415, 61
      %v2294 = vpop.permute.xlu0 %2293
      %2295 = vrot.lane.b32.xlu0 %v419, 61
      %v2296 = vpop.permute.xlu0 %2295
      %2297 = vrot.lane.b32.xlu0 %v1749, 61
      %v2298 = vpop.permute.xlu0 %2297
      %2299 = vrot.lane.b32.xlu0 %v1751, 61
      %v2300 = vpop.permute.xlu0 %2299
      %2301 = vrot.lane.b32.xlu0 %v1820, 61
      %v2302 = vpop.permute.xlu0 %2301
      %2303 = vrot.lane.b32.xlu0 %v1822, 61
      %v2304 = vpop.permute.xlu0 %2303
      %vm2305 = vcmp.lt.s32.totalorder %v431, 61
      %v2306 = vsel %vm2305, %v2302, %v2304
      %v2307 = vsel %vm2305, %v2300, %v2302
      %v2308 = vsel %vm2305, %v2298, %v2300
      %v2309 = vsel %vm2305, %v2296, %v2298
      %v2310 = vsel %vm2305, %v2294, %v2296
      %v2311 = vsel %vm2305, %v2292, %v2294
      %v2312 = vsel %vm2305, %v2290, %v2292
      %v2313 = vsel %vm2305, %v2304, %v2290
      %s2314 = scalar_lea.vmem %s2, 5
      %v2315 = vld [vmem:[%s2314] ss:$8 sm:$0xf]
      %v2316 = vld [vmem:[%s2314] ss:$8 sm:$0xf0]
      %v2317 = vor.u32 %v2315, %v2316
      %v2319 = vlaneseq
      %v2320 = vshrl.u32 %v2319, 7
      %v2321 = vsub.s32 0, %v2320
      %v2322 = vrot.slane %v2317, %v2321
      %v2323 = vlaneseq
      %v2324 = vshrl.u32 %v2323, 7
      %v2325 = vsub.s32 1, %v2324
      %v2326 = vrot.slane %v2317, %v2325
      %v2327 = vlaneseq
      %v2328 = vshrl.u32 %v2327, 7
      %v2329 = vsub.s32 2, %v2328
      %v2330 = vrot.slane %v2317, %v2329
      %v2331 = vlaneseq
      %v2332 = vshrl.u32 %v2331, 7
      %v2333 = vsub.s32 3, %v2332
      %v2334 = vrot.slane %v2317, %v2333
      %v2335 = vlaneseq
      %v2336 = vshrl.u32 %v2335, 7
      %v2337 = vsub.s32 4, %v2336
      %v2338 = vrot.slane %v2317, %v2337
      %v2339 = vlaneseq
      %v2340 = vshrl.u32 %v2339, 7
      %v2341 = vsub.s32 5, %v2340
      %v2342 = vrot.slane %v2317, %v2341
      %v2343 = vlaneseq
      %v2344 = vshrl.u32 %v2343, 7
      %v2345 = vsub.s32 6, %v2344
      %v2346 = vrot.slane %v2317, %v2345
      %v2347 = vlaneseq
      %v2348 = vshrl.u32 %v2347, 7
      %v2349 = vsub.s32 7, %v2348
      %v2350 = vrot.slane %v2317, %v2349
      %v2359 = vmul.f32 %v2306, %v2322
      %v2360 = vmul.f32 %v2313, %v2326
      %v2361 = vmul.f32 %v2312, %v2330
      %v2362 = vmul.f32 %v2311, %v2334
      %v2363 = vmul.f32 %v2310, %v2338
      %v2364 = vmul.f32 %v2309, %v2342
      %v2365 = vmul.f32 %v2308, %v2346
      %v2366 = vmul.f32 %v2307, %v2350
      %v2375 = vrot.slane %v2359, 4
      %v2376 = vrot.slane %v2360, 4
      %v2377 = vrot.slane %v2361, 4
      %v2378 = vrot.slane %v2362, 4
      %v2379 = vrot.slane %v2363, 4
      %v2380 = vrot.slane %v2364, 4
      %v2381 = vrot.slane %v2365, 4
      %v2382 = vrot.slane %v2366, 4
      %2391 = vst [vmem:[#allocation2 + $0x80] sm:$0xf0] %v2375
      %2392 = vst [vmem:[#allocation2 + $0x88] sm:$0xf0] %v2376
      %2393 = vst [vmem:[#allocation2 + $0x90] sm:$0xf0] %v2377
      %2394 = vst [vmem:[#allocation2 + $0x98] sm:$0xf0] %v2378
      %2395 = vst [vmem:[#allocation2 + $0xa0] sm:$0xf0] %v2379
      %2396 = vst [vmem:[#allocation2 + $0xa8] sm:$0xf0] %v2380
      %2397 = vst [vmem:[#allocation2 + $0xb0] sm:$0xf0] %v2381
      %2398 = vst [vmem:[#allocation2 + $0xb8] sm:$0xf0] %v2382
      %2399 = vrot.lane.b32.xlu0 %v414, 43
      %v2400 = vpop.permute.xlu0 %2399
      %2401 = vrot.lane.b32.xlu0 %v418, 43
      %v2402 = vpop.permute.xlu0 %2401
      %2403 = vrot.lane.b32.xlu0 %v415, 43
      %v2404 = vpop.permute.xlu0 %2403
      %2405 = vrot.lane.b32.xlu0 %v419, 43
      %v2406 = vpop.permute.xlu0 %2405
      %2407 = vrot.lane.b32.xlu0 %v1749, 43
      %v2408 = vpop.permute.xlu0 %2407
      %2409 = vrot.lane.b32.xlu0 %v1751, 43
      %v2410 = vpop.permute.xlu0 %2409
      %2411 = vrot.lane.b32.xlu0 %v1820, 43
      %v2412 = vpop.permute.xlu0 %2411
      %2413 = vrot.lane.b32.xlu0 %v1822, 43
      %v2414 = vpop.permute.xlu0 %2413
      %vm2415 = vcmp.lt.s32.totalorder %v431, 43
      %v2416 = vsel %vm2415, %v2412, %v2414
      %v2417 = vsel %vm2415, %v2410, %v2412
      %v2418 = vsel %vm2415, %v2408, %v2410
      %v2419 = vsel %vm2415, %v2406, %v2408
      %v2420 = vsel %vm2415, %v2404, %v2406
      %v2421 = vsel %vm2415, %v2402, %v2404
      %v2422 = vsel %vm2415, %v2400, %v2402
      %v2423 = vsel %vm2415, %v2414, %v2400
      %s2424 = scalar_lea.vmem %s2, 6
      %v2425 = vld [vmem:[%s2424] ss:$8 sm:$0xf]
      %v2426 = vld [vmem:[%s2424] ss:$8 sm:$0xf0]
      %v2427 = vor.u32 %v2425, %v2426
      %v2429 = vlaneseq
      %v2430 = vshrl.u32 %v2429, 7
      %v2431 = vsub.s32 0, %v2430
      %v2432 = vrot.slane %v2427, %v2431
      %v2433 = vlaneseq
      %v2434 = vshrl.u32 %v2433, 7
      %v2435 = vsub.s32 1, %v2434
      %v2436 = vrot.slane %v2427, %v2435
      %v2437 = vlaneseq
      %v2438 = vshrl.u32 %v2437, 7
      %v2439 = vsub.s32 2, %v2438
      %v2440 = vrot.slane %v2427, %v2439
      %v2441 = vlaneseq
      %v2442 = vshrl.u32 %v2441, 7
      %v2443 = vsub.s32 3, %v2442
      %v2444 = vrot.slane %v2427, %v2443
      %v2445 = vlaneseq
      %v2446 = vshrl.u32 %v2445, 7
      %v2447 = vsub.s32 4, %v2446
      %v2448 = vrot.slane %v2427, %v2447
      %v2449 = vlaneseq
      %v2450 = vshrl.u32 %v2449, 7
      %v2451 = vsub.s32 5, %v2450
      %v2452 = vrot.slane %v2427, %v2451
      %v2453 = vlaneseq
      %v2454 = vshrl.u32 %v2453, 7
      %v2455 = vsub.s32 6, %v2454
      %v2456 = vrot.slane %v2427, %v2455
      %v2457 = vlaneseq
      %v2458 = vshrl.u32 %v2457, 7
      %v2459 = vsub.s32 7, %v2458
      %v2460 = vrot.slane %v2427, %v2459
      %v2469 = vmul.f32 %v2416, %v2432
      %v2470 = vmul.f32 %v2423, %v2436
      %v2471 = vmul.f32 %v2422, %v2440
      %v2472 = vmul.f32 %v2421, %v2444
      %v2473 = vmul.f32 %v2420, %v2448
      %v2474 = vmul.f32 %v2419, %v2452
      %v2475 = vmul.f32 %v2418, %v2456
      %v2476 = vmul.f32 %v2417, %v2460
      %2477 = vst [vmem:[#allocation2 + $0xc0] sm:$0xf] %v2469
      %2478 = vst [vmem:[#allocation2 + $0xc8] sm:$0xf] %v2470
      %2479 = vst [vmem:[#allocation2 + $0xd0] sm:$0xf] %v2471
      %2480 = vst [vmem:[#allocation2 + $0xd8] sm:$0xf] %v2472
      %2481 = vst [vmem:[#allocation2 + $0xe0] sm:$0xf] %v2473
      %2482 = vst [vmem:[#allocation2 + $0xe8] sm:$0xf] %v2474
      %2483 = vst [vmem:[#allocation2 + $0xf0] sm:$0xf] %v2475
      %2484 = vst [vmem:[#allocation2 + $0xf8] sm:$0xf] %v2476
      %2485 = vrot.lane.b32.xlu0 %v414, 40
      %v2486 = vpop.permute.xlu0 %2485
      %2487 = vrot.lane.b32.xlu0 %v418, 40
      %v2488 = vpop.permute.xlu0 %2487
      %2489 = vrot.lane.b32.xlu0 %v415, 40
      %v2490 = vpop.permute.xlu0 %2489
      %2491 = vrot.lane.b32.xlu0 %v419, 40
      %v2492 = vpop.permute.xlu0 %2491
      %2493 = vrot.lane.b32.xlu0 %v1749, 40
      %v2494 = vpop.permute.xlu0 %2493
      %2495 = vrot.lane.b32.xlu0 %v1751, 40
      %v2496 = vpop.permute.xlu0 %2495
      %2497 = vrot.lane.b32.xlu0 %v1820, 40
      %v2498 = vpop.permute.xlu0 %2497
      %2499 = vrot.lane.b32.xlu0 %v1822, 40
      %v2500 = vpop.permute.xlu0 %2499
      %vm2501 = vcmp.lt.s32.totalorder %v431, 40
      %v2502 = vsel %vm2501, %v2498, %v2500
      %v2503 = vsel %vm2501, %v2496, %v2498
      %v2504 = vsel %vm2501, %v2494, %v2496
      %v2505 = vsel %vm2501, %v2492, %v2494
      %v2506 = vsel %vm2501, %v2490, %v2492
      %v2507 = vsel %vm2501, %v2488, %v2490
      %v2508 = vsel %vm2501, %v2486, %v2488
      %v2509 = vsel %vm2501, %v2500, %v2486
      %s2510 = scalar_lea.vmem %s2, 7
      %v2511 = vld [vmem:[%s2510] ss:$8 sm:$0xf]
      %v2512 = vld [vmem:[%s2510] ss:$8 sm:$0xf0]
      %v2513 = vor.u32 %v2511, %v2512
      %v2515 = vlaneseq
      %v2516 = vshrl.u32 %v2515, 7
      %v2517 = vsub.s32 0, %v2516
      %v2518 = vrot.slane %v2513, %v2517
      %v2519 = vlaneseq
      %v2520 = vshrl.u32 %v2519, 7
      %v2521 = vsub.s32 1, %v2520
      %v2522 = vrot.slane %v2513, %v2521
      %v2523 = vlaneseq
      %v2524 = vshrl.u32 %v2523, 7
      %v2525 = vsub.s32 2, %v2524
      %v2526 = vrot.slane %v2513, %v2525
      %v2527 = vlaneseq
      %v2528 = vshrl.u32 %v2527, 7
      %v2529 = vsub.s32 3, %v2528
      %v2530 = vrot.slane %v2513, %v2529
      %v2531 = vlaneseq
      %v2532 = vshrl.u32 %v2531, 7
      %v2533 = vsub.s32 4, %v2532
      %v2534 = vrot.slane %v2513, %v2533
      %v2535 = vlaneseq
      %v2536 = vshrl.u32 %v2535, 7
      %v2537 = vsub.s32 5, %v2536
      %v2538 = vrot.slane %v2513, %v2537
      %v2539 = vlaneseq
      %v2540 = vshrl.u32 %v2539, 7
      %v2541 = vsub.s32 6, %v2540
      %v2542 = vrot.slane %v2513, %v2541
      %v2543 = vlaneseq
      %v2544 = vshrl.u32 %v2543, 7
      %v2545 = vsub.s32 7, %v2544
      %v2546 = vrot.slane %v2513, %v2545
      %v2555 = vmul.f32 %v2502, %v2518
      %v2556 = vmul.f32 %v2509, %v2522
      %v2557 = vmul.f32 %v2508, %v2526
      %v2558 = vmul.f32 %v2507, %v2530
      %v2559 = vmul.f32 %v2506, %v2534
      %v2560 = vmul.f32 %v2505, %v2538
      %v2561 = vmul.f32 %v2504, %v2542
      %v2562 = vmul.f32 %v2503, %v2546
      %v2571 = vrot.slane %v2555, 4
      %v2572 = vrot.slane %v2556, 4
      %v2573 = vrot.slane %v2557, 4
      %v2574 = vrot.slane %v2558, 4
      %v2575 = vrot.slane %v2559, 4
      %v2576 = vrot.slane %v2560, 4
      %v2577 = vrot.slane %v2561, 4
      %v2578 = vrot.slane %v2562, 4
      %2587 = vst [vmem:[#allocation2 + $0xc0] sm:$0xf0] %v2571
      %2588 = vst [vmem:[#allocation2 + $0xc8] sm:$0xf0] %v2572
      %2589 = vst [vmem:[#allocation2 + $0xd0] sm:$0xf0] %v2573
      %2590 = vst [vmem:[#allocation2 + $0xd8] sm:$0xf0] %v2574
      %2591 = vst [vmem:[#allocation2 + $0xe0] sm:$0xf0] %v2575
      %2592 = vst [vmem:[#allocation2 + $0xe8] sm:$0xf0] %v2576
      %2593 = vst [vmem:[#allocation2 + $0xf0] sm:$0xf0] %v2577
      %2594 = vst [vmem:[#allocation2 + $0xf8] sm:$0xf0] %v2578
      %2595 = vrot.lane.b32.xlu0 %v414, 37
      %v2596 = vpop.permute.xlu0 %2595
      %2597 = vrot.lane.b32.xlu0 %v418, 37
      %v2598 = vpop.permute.xlu0 %2597
      %2599 = vrot.lane.b32.xlu0 %v415, 37
      %v2600 = vpop.permute.xlu0 %2599
      %2601 = vrot.lane.b32.xlu0 %v419, 37
      %v2602 = vpop.permute.xlu0 %2601
      %2603 = vrot.lane.b32.xlu0 %v1749, 37
      %v2604 = vpop.permute.xlu0 %2603
      %2605 = vrot.lane.b32.xlu0 %v1751, 37
      %v2606 = vpop.permute.xlu0 %2605
      %2607 = vrot.lane.b32.xlu0 %v1820, 37
      %v2608 = vpop.permute.xlu0 %2607
      %2609 = vrot.lane.b32.xlu0 %v1822, 37
      %v2610 = vpop.permute.xlu0 %2609
      %vm2611 = vcmp.lt.s32.totalorder %v431, 37
      %v2612 = vsel %vm2611, %v2608, %v2610
      %v2613 = vsel %vm2611, %v2606, %v2608
      %v2614 = vsel %vm2611, %v2604, %v2606
      %v2615 = vsel %vm2611, %v2602, %v2604
      %v2616 = vsel %vm2611, %v2600, %v2602
      %v2617 = vsel %vm2611, %v2598, %v2600
      %v2618 = vsel %vm2611, %v2596, %v2598
      %v2619 = vsel %vm2611, %v2610, %v2596
      %s2620 = scalar_lea.vmem %s2, 64
      %v2621 = vld [vmem:[%s2620] ss:$8 sm:$0xf]
      %v2622 = vld [vmem:[%s2620] ss:$8 sm:$0xf0]
      %v2623 = vor.u32 %v2621, %v2622
      %v2625 = vlaneseq
      %v2626 = vshrl.u32 %v2625, 7
      %v2627 = vsub.s32 0, %v2626
      %v2628 = vrot.slane %v2623, %v2627
      %v2629 = vlaneseq
      %v2630 = vshrl.u32 %v2629, 7
      %v2631 = vsub.s32 1, %v2630
      %v2632 = vrot.slane %v2623, %v2631
      %v2633 = vlaneseq
      %v2634 = vshrl.u32 %v2633, 7
      %v2635 = vsub.s32 2, %v2634
      %v2636 = vrot.slane %v2623, %v2635
      %v2637 = vlaneseq
      %v2638 = vshrl.u32 %v2637, 7
      %v2639 = vsub.s32 3, %v2638
      %v2640 = vrot.slane %v2623, %v2639
      %v2641 = vlaneseq
      %v2642 = vshrl.u32 %v2641, 7
      %v2643 = vsub.s32 4, %v2642
      %v2644 = vrot.slane %v2623, %v2643
      %v2645 = vlaneseq
      %v2646 = vshrl.u32 %v2645, 7
      %v2647 = vsub.s32 5, %v2646
      %v2648 = vrot.slane %v2623, %v2647
      %v2649 = vlaneseq
      %v2650 = vshrl.u32 %v2649, 7
      %v2651 = vsub.s32 6, %v2650
      %v2652 = vrot.slane %v2623, %v2651
      %v2653 = vlaneseq
      %v2654 = vshrl.u32 %v2653, 7
      %v2655 = vsub.s32 7, %v2654
      %v2656 = vrot.slane %v2623, %v2655
      %v2665 = vmul.f32 %v2612, %v2628
      %v2666 = vmul.f32 %v2619, %v2632
      %v2667 = vmul.f32 %v2618, %v2636
      %v2668 = vmul.f32 %v2617, %v2640
      %v2669 = vmul.f32 %v2616, %v2644
      %v2670 = vmul.f32 %v2615, %v2648
      %v2671 = vmul.f32 %v2614, %v2652
      %v2672 = vmul.f32 %v2613, %v2656
      %2673 = vst [vmem:[#allocation2 + $0x100] sm:$0xf] %v2665
      %2674 = vst [vmem:[#allocation2 + $0x108] sm:$0xf] %v2666
      %2675 = vst [vmem:[#allocation2 + $0x110] sm:$0xf] %v2667
      %2676 = vst [vmem:[#allocation2 + $0x118] sm:$0xf] %v2668
      %2677 = vst [vmem:[#allocation2 + $0x120] sm:$0xf] %v2669
      %2678 = vst [vmem:[#allocation2 + $0x128] sm:$0xf] %v2670
      %2679 = vst [vmem:[#allocation2 + $0x130] sm:$0xf] %v2671
      %2680 = vst [vmem:[#allocation2 + $0x138] sm:$0xf] %v2672
      %2681 = vrot.lane.b32.xlu0 %v414, 27
      %v2682 = vpop.permute.xlu0 %2681
      %2683 = vrot.lane.b32.xlu0 %v418, 27
      %v2684 = vpop.permute.xlu0 %2683
      %2685 = vrot.lane.b32.xlu0 %v415, 27
      %v2686 = vpop.permute.xlu0 %2685
      %2687 = vrot.lane.b32.xlu0 %v419, 27
      %v2688 = vpop.permute.xlu0 %2687
      %2689 = vrot.lane.b32.xlu0 %v1749, 27
      %v2690 = vpop.permute.xlu0 %2689
      %2691 = vrot.lane.b32.xlu0 %v1751, 27
      %v2692 = vpop.permute.xlu0 %2691
      %2693 = vrot.lane.b32.xlu0 %v1820, 27
      %v2694 = vpop.permute.xlu0 %2693
      %2695 = vrot.lane.b32.xlu0 %v1822, 27
      %v2696 = vpop.permute.xlu0 %2695
      %vm2697 = vcmp.lt.s32.totalorder %v431, 27
      %v2698 = vsel %vm2697, %v2694, %v2696
      %v2699 = vsel %vm2697, %v2692, %v2694
      %v2700 = vsel %vm2697, %v2690, %v2692
      %v2701 = vsel %vm2697, %v2688, %v2690
      %v2702 = vsel %vm2697, %v2686, %v2688
      %v2703 = vsel %vm2697, %v2684, %v2686
      %v2704 = vsel %vm2697, %v2682, %v2684
      %v2705 = vsel %vm2697, %v2696, %v2682
      %s2706 = scalar_lea.vmem %s2, 65
      %v2707 = vld [vmem:[%s2706] ss:$8 sm:$0xf]
      %v2708 = vld [vmem:[%s2706] ss:$8 sm:$0xf0]
      %v2709 = vor.u32 %v2707, %v2708
      %v2711 = vlaneseq
      %v2712 = vshrl.u32 %v2711, 7
      %v2713 = vsub.s32 0, %v2712
      %v2714 = vrot.slane %v2709, %v2713
      %v2715 = vlaneseq
      %v2716 = vshrl.u32 %v2715, 7
      %v2717 = vsub.s32 1, %v2716
      %v2718 = vrot.slane %v2709, %v2717
      %v2719 = vlaneseq
      %v2720 = vshrl.u32 %v2719, 7
      %v2721 = vsub.s32 2, %v2720
      %v2722 = vrot.slane %v2709, %v2721
      %v2723 = vlaneseq
      %v2724 = vshrl.u32 %v2723, 7
      %v2725 = vsub.s32 3, %v2724
      %v2726 = vrot.slane %v2709, %v2725
      %v2727 = vlaneseq
      %v2728 = vshrl.u32 %v2727, 7
      %v2729 = vsub.s32 4, %v2728
      %v2730 = vrot.slane %v2709, %v2729
      %v2731 = vlaneseq
      %v2732 = vshrl.u32 %v2731, 7
      %v2733 = vsub.s32 5, %v2732
      %v2734 = vrot.slane %v2709, %v2733
      %v2735 = vlaneseq
      %v2736 = vshrl.u32 %v2735, 7
      %v2737 = vsub.s32 6, %v2736
      %v2738 = vrot.slane %v2709, %v2737
      %v2739 = vlaneseq
      %v2740 = vshrl.u32 %v2739, 7
      %v2741 = vsub.s32 7, %v2740
      %v2742 = vrot.slane %v2709, %v2741
      %v2751 = vmul.f32 %v2705, %v2714
      %v2752 = vmul.f32 %v2704, %v2718
      %v2753 = vmul.f32 %v2703, %v2722
      %v2754 = vmul.f32 %v2702, %v2726
      %v2755 = vmul.f32 %v2701, %v2730
      %v2756 = vmul.f32 %v2700, %v2734
      %v2757 = vmul.f32 %v2699, %v2738
      %v2758 = vmul.f32 %v2698, %v2742
      %v2767 = vrot.slane %v2751, 4
      %v2768 = vrot.slane %v2752, 4
      %v2769 = vrot.slane %v2753, 4
      %v2770 = vrot.slane %v2754, 4
      %v2771 = vrot.slane %v2755, 4
      %v2772 = vrot.slane %v2756, 4
      %v2773 = vrot.slane %v2757, 4
      %v2774 = vrot.slane %v2758, 4
      %2783 = vst [vmem:[#allocation2 + $0x100] sm:$0xf0] %v2767
      %2784 = vst [vmem:[#allocation2 + $0x108] sm:$0xf0] %v2768
      %2785 = vst [vmem:[#allocation2 + $0x110] sm:$0xf0] %v2769
      %2786 = vst [vmem:[#allocation2 + $0x118] sm:$0xf0] %v2770
      %2787 = vst [vmem:[#allocation2 + $0x120] sm:$0xf0] %v2771
      %2788 = vst [vmem:[#allocation2 + $0x128] sm:$0xf0] %v2772
      %2789 = vst [vmem:[#allocation2 + $0x130] sm:$0xf0] %v2773
      %2790 = vst [vmem:[#allocation2 + $0x138] sm:$0xf0] %v2774
      %2791 = vrot.lane.b32.xlu0 %v414, 24
      %v2792 = vpop.permute.xlu0 %2791
      %2793 = vrot.lane.b32.xlu0 %v418, 24
      %v2794 = vpop.permute.xlu0 %2793
      %2795 = vrot.lane.b32.xlu0 %v415, 24
      %v2796 = vpop.permute.xlu0 %2795
      %2797 = vrot.lane.b32.xlu0 %v419, 24
      %v2798 = vpop.permute.xlu0 %2797
      %2799 = vrot.lane.b32.xlu0 %v1749, 24
      %v2800 = vpop.permute.xlu0 %2799
      %2801 = vrot.lane.b32.xlu0 %v1751, 24
      %v2802 = vpop.permute.xlu0 %2801
      %2803 = vrot.lane.b32.xlu0 %v1820, 24
      %v2804 = vpop.permute.xlu0 %2803
      %2805 = vrot.lane.b32.xlu0 %v1822, 24
      %v2806 = vpop.permute.xlu0 %2805
      %vm2807 = vcmp.lt.s32.totalorder %v431, 24
      %v2808 = vsel %vm2807, %v2804, %v2806
      %v2809 = vsel %vm2807, %v2802, %v2804
      %v2810 = vsel %vm2807, %v2800, %v2802
      %v2811 = vsel %vm2807, %v2798, %v2800
      %v2812 = vsel %vm2807, %v2796, %v2798
      %v2813 = vsel %vm2807, %v2794, %v2796
      %v2814 = vsel %vm2807, %v2792, %v2794
      %v2815 = vsel %vm2807, %v2806, %v2792
      %s2816 = scalar_lea.vmem %s2, 66
      %v2817 = vld [vmem:[%s2816] ss:$8 sm:$0xf]
      %v2818 = vld [vmem:[%s2816] ss:$8 sm:$0xf0]
      %v2819 = vor.u32 %v2817, %v2818
      %v2821 = vlaneseq
      %v2822 = vshrl.u32 %v2821, 7
      %v2823 = vsub.s32 0, %v2822
      %v2824 = vrot.slane %v2819, %v2823
      %v2825 = vlaneseq
      %v2826 = vshrl.u32 %v2825, 7
      %v2827 = vsub.s32 1, %v2826
      %v2828 = vrot.slane %v2819, %v2827
      %v2829 = vlaneseq
      %v2830 = vshrl.u32 %v2829, 7
      %v2831 = vsub.s32 2, %v2830
      %v2832 = vrot.slane %v2819, %v2831
      %v2833 = vlaneseq
      %v2834 = vshrl.u32 %v2833, 7
      %v2835 = vsub.s32 3, %v2834
      %v2836 = vrot.slane %v2819, %v2835
      %v2837 = vlaneseq
      %v2838 = vshrl.u32 %v2837, 7
      %v2839 = vsub.s32 4, %v2838
      %v2840 = vrot.slane %v2819, %v2839
      %v2841 = vlaneseq
      %v2842 = vshrl.u32 %v2841, 7
      %v2843 = vsub.s32 5, %v2842
      %v2844 = vrot.slane %v2819, %v2843
      %v2845 = vlaneseq
      %v2846 = vshrl.u32 %v2845, 7
      %v2847 = vsub.s32 6, %v2846
      %v2848 = vrot.slane %v2819, %v2847
      %v2849 = vlaneseq
      %v2850 = vshrl.u32 %v2849, 7
      %v2851 = vsub.s32 7, %v2850
      %v2852 = vrot.slane %v2819, %v2851
      %v2861 = vmul.f32 %v2815, %v2824
      %v2862 = vmul.f32 %v2814, %v2828
      %v2863 = vmul.f32 %v2813, %v2832
      %v2864 = vmul.f32 %v2812, %v2836
      %v2865 = vmul.f32 %v2811, %v2840
      %v2866 = vmul.f32 %v2810, %v2844
      %v2867 = vmul.f32 %v2809, %v2848
      %v2868 = vmul.f32 %v2808, %v2852
      %2869 = vst [vmem:[#allocation2 + $0x140] sm:$0xf] %v2861
      %2870 = vst [vmem:[#allocation2 + $0x148] sm:$0xf] %v2862
      %2871 = vst [vmem:[#allocation2 + $0x150] sm:$0xf] %v2863
      %2872 = vst [vmem:[#allocation2 + $0x158] sm:$0xf] %v2864
      %2873 = vst [vmem:[#allocation2 + $0x160] sm:$0xf] %v2865
      %2874 = vst [vmem:[#allocation2 + $0x168] sm:$0xf] %v2866
      %2875 = vst [vmem:[#allocation2 + $0x170] sm:$0xf] %v2867
      %2876 = vst [vmem:[#allocation2 + $0x178] sm:$0xf] %v2868
      %2877 = vrot.lane.b32.xlu0 %v414, 21
      %v2878 = vpop.permute.xlu0 %2877
      %2879 = vrot.lane.b32.xlu0 %v418, 21
      %v2880 = vpop.permute.xlu0 %2879
      %2881 = vrot.lane.b32.xlu0 %v415, 21
      %v2882 = vpop.permute.xlu0 %2881
      %2883 = vrot.lane.b32.xlu0 %v419, 21
      %v2884 = vpop.permute.xlu0 %2883
      %2885 = vrot.lane.b32.xlu0 %v1749, 21
      %v2886 = vpop.permute.xlu0 %2885
      %2887 = vrot.lane.b32.xlu0 %v1751, 21
      %v2888 = vpop.permute.xlu0 %2887
      %2889 = vrot.lane.b32.xlu0 %v1820, 21
      %v2890 = vpop.permute.xlu0 %2889
      %2891 = vrot.lane.b32.xlu0 %v1822, 21
      %v2892 = vpop.permute.xlu0 %2891
      %vm2893 = vcmp.lt.s32.totalorder %v431, 21
      %v2894 = vsel %vm2893, %v2890, %v2892
      %v2895 = vsel %vm2893, %v2888, %v2890
      %v2896 = vsel %vm2893, %v2886, %v2888
      %v2897 = vsel %vm2893, %v2884, %v2886
      %v2898 = vsel %vm2893, %v2882, %v2884
      %v2899 = vsel %vm2893, %v2880, %v2882
      %v2900 = vsel %vm2893, %v2878, %v2880
      %v2901 = vsel %vm2893, %v2892, %v2878
      %s2902 = scalar_lea.vmem %s2, 67
      %v2903 = vld [vmem:[%s2902] ss:$8 sm:$0xf]
      %v2904 = vld [vmem:[%s2902] ss:$8 sm:$0xf0]
      %v2905 = vor.u32 %v2903, %v2904
      %v2907 = vlaneseq
      %v2908 = vshrl.u32 %v2907, 7
      %v2909 = vsub.s32 0, %v2908
      %v2910 = vrot.slane %v2905, %v2909
      %v2911 = vlaneseq
      %v2912 = vshrl.u32 %v2911, 7
      %v2913 = vsub.s32 1, %v2912
      %v2914 = vrot.slane %v2905, %v2913
      %v2915 = vlaneseq
      %v2916 = vshrl.u32 %v2915, 7
      %v2917 = vsub.s32 2, %v2916
      %v2918 = vrot.slane %v2905, %v2917
      %v2919 = vlaneseq
      %v2920 = vshrl.u32 %v2919, 7
      %v2921 = vsub.s32 3, %v2920
      %v2922 = vrot.slane %v2905, %v2921
      %v2923 = vlaneseq
      %v2924 = vshrl.u32 %v2923, 7
      %v2925 = vsub.s32 4, %v2924
      %v2926 = vrot.slane %v2905, %v2925
      %v2927 = vlaneseq
      %v2928 = vshrl.u32 %v2927, 7
      %v2929 = vsub.s32 5, %v2928
      %v2930 = vrot.slane %v2905, %v2929
      %v2931 = vlaneseq
      %v2932 = vshrl.u32 %v2931, 7
      %v2933 = vsub.s32 6, %v2932
      %v2934 = vrot.slane %v2905, %v2933
      %v2935 = vlaneseq
      %v2936 = vshrl.u32 %v2935, 7
      %v2937 = vsub.s32 7, %v2936
      %v2938 = vrot.slane %v2905, %v2937
      %v2947 = vmul.f32 %v2901, %v2910
      %v2948 = vmul.f32 %v2900, %v2914
      %v2949 = vmul.f32 %v2899, %v2918
      %v2950 = vmul.f32 %v2898, %v2922
      %v2951 = vmul.f32 %v2897, %v2926
      %v2952 = vmul.f32 %v2896, %v2930
      %v2953 = vmul.f32 %v2895, %v2934
      %v2954 = vmul.f32 %v2894, %v2938
      %v2963 = vrot.slane %v2947, 4
      %v2964 = vrot.slane %v2948, 4
      %v2965 = vrot.slane %v2949, 4
      %v2966 = vrot.slane %v2950, 4
      %v2967 = vrot.slane %v2951, 4
      %v2968 = vrot.slane %v2952, 4
      %v2969 = vrot.slane %v2953, 4
      %v2970 = vrot.slane %v2954, 4
      %2979 = vst [vmem:[#allocation2 + $0x140] sm:$0xf0] %v2963
      %2980 = vst [vmem:[#allocation2 + $0x148] sm:$0xf0] %v2964
      %2981 = vst [vmem:[#allocation2 + $0x150] sm:$0xf0] %v2965
      %2982 = vst [vmem:[#allocation2 + $0x158] sm:$0xf0] %v2966
      %2983 = vst [vmem:[#allocation2 + $0x160] sm:$0xf0] %v2967
      %2984 = vst [vmem:[#allocation2 + $0x168] sm:$0xf0] %v2968
      %2985 = vst [vmem:[#allocation2 + $0x170] sm:$0xf0] %v2969
      %2986 = vst [vmem:[#allocation2 + $0x178] sm:$0xf0] %v2970
      %2987 = vrot.lane.b32.xlu0 %v414, 3
      %v2988 = vpop.permute.xlu0 %2987
      %2989 = vrot.lane.b32.xlu0 %v418, 3
      %v2990 = vpop.permute.xlu0 %2989
      %2991 = vrot.lane.b32.xlu0 %v415, 3
      %v2992 = vpop.permute.xlu0 %2991
      %2993 = vrot.lane.b32.xlu0 %v419, 3
      %v2994 = vpop.permute.xlu0 %2993
      %2995 = vrot.lane.b32.xlu0 %v1749, 3
      %v2996 = vpop.permute.xlu0 %2995
      %2997 = vrot.lane.b32.xlu0 %v1751, 3
      %v2998 = vpop.permute.xlu0 %2997
      %2999 = vrot.lane.b32.xlu0 %v1820, 3
      %v3000 = vpop.permute.xlu0 %2999
      %3001 = vrot.lane.b32.xlu0 %v1822, 3
      %v3002 = vpop.permute.xlu0 %3001
      %vm3003 = vcmp.lt.s32.totalorder %v431, 3
      %v3004 = vsel %vm3003, %v3000, %v3002
      %v3005 = vsel %vm3003, %v2998, %v3000
      %v3006 = vsel %vm3003, %v2996, %v2998
      %v3007 = vsel %vm3003, %v2994, %v2996
      %v3008 = vsel %vm3003, %v2992, %v2994
      %v3009 = vsel %vm3003, %v2990, %v2992
      %v3010 = vsel %vm3003, %v2988, %v2990
      %v3011 = vsel %vm3003, %v3002, %v2988
      %s3012 = scalar_lea.vmem %s2, 68
      %v3013 = vld [vmem:[%s3012] ss:$8 sm:$0xf]
      %v3014 = vld [vmem:[%s3012] ss:$8 sm:$0xf0]
      %v3015 = vor.u32 %v3013, %v3014
      %v3017 = vlaneseq
      %v3018 = vshrl.u32 %v3017, 7
      %v3019 = vsub.s32 0, %v3018
      %v3020 = vrot.slane %v3015, %v3019
      %v3021 = vlaneseq
      %v3022 = vshrl.u32 %v3021, 7
      %v3023 = vsub.s32 1, %v3022
      %v3024 = vrot.slane %v3015, %v3023
      %v3025 = vlaneseq
      %v3026 = vshrl.u32 %v3025, 7
      %v3027 = vsub.s32 2, %v3026
      %v3028 = vrot.slane %v3015, %v3027
      %v3029 = vlaneseq
      %v3030 = vshrl.u32 %v3029, 7
      %v3031 = vsub.s32 3, %v3030
      %v3032 = vrot.slane %v3015, %v3031
      %v3033 = vlaneseq
      %v3034 = vshrl.u32 %v3033, 7
      %v3035 = vsub.s32 4, %v3034
      %v3036 = vrot.slane %v3015, %v3035
      %v3037 = vlaneseq
      %v3038 = vshrl.u32 %v3037, 7
      %v3039 = vsub.s32 5, %v3038
      %v3040 = vrot.slane %v3015, %v3039
      %v3041 = vlaneseq
      %v3042 = vshrl.u32 %v3041, 7
      %v3043 = vsub.s32 6, %v3042
      %v3044 = vrot.slane %v3015, %v3043
      %v3045 = vlaneseq
      %v3046 = vshrl.u32 %v3045, 7
      %v3047 = vsub.s32 7, %v3046
      %v3048 = vrot.slane %v3015, %v3047
      %v3057 = vmul.f32 %v3011, %v3020
      %v3058 = vmul.f32 %v3010, %v3024
      %v3059 = vmul.f32 %v3009, %v3028
      %v3060 = vmul.f32 %v3008, %v3032
      %v3061 = vmul.f32 %v3007, %v3036
      %v3062 = vmul.f32 %v3006, %v3040
      %v3063 = vmul.f32 %v3005, %v3044
      %v3064 = vmul.f32 %v3004, %v3048
      %3065 = vst [vmem:[#allocation2 + $0x180] sm:$0xf] %v3057
      %3066 = vst [vmem:[#allocation2 + $0x188] sm:$0xf] %v3058
      %3067 = vst [vmem:[#allocation2 + $0x190] sm:$0xf] %v3059
      %3068 = vst [vmem:[#allocation2 + $0x198] sm:$0xf] %v3060
      %3069 = vst [vmem:[#allocation2 + $0x1a0] sm:$0xf] %v3061
      %3070 = vst [vmem:[#allocation2 + $0x1a8] sm:$0xf] %v3062
      %3071 = vst [vmem:[#allocation2 + $0x1b0] sm:$0xf] %v3063
      %3072 = vst [vmem:[#allocation2 + $0x1b8] sm:$0xf] %v3064
      %v3077 = vrot.slane %v414, 4
      %v3078 = vrot.slane %v418, 4
      %v3079 = vrot.slane %v415, 4
      %v3080 = vrot.slane %v419, 4
      %v3081 = vrot.slane %v1749, 4
      %v3082 = vrot.slane %v1751, 4
      %v3083 = vrot.slane %v1820, 4
      %v3084 = vrot.slane %v1822, 4
      %3093 = vst [vmem:[#allocation2 + $0x180] sm:$0xf0] %v3077
      %3094 = vst [vmem:[#allocation2 + $0x188] sm:$0xf0] %v3078
      %3095 = vst [vmem:[#allocation2 + $0x190] sm:$0xf0] %v3079
      %3096 = vst [vmem:[#allocation2 + $0x198] sm:$0xf0] %v3080
      %3097 = vst [vmem:[#allocation2 + $0x1a0] sm:$0xf0] %v3081
      %3098 = vst [vmem:[#allocation2 + $0x1a8] sm:$0xf0] %v3082
      %3099 = vst [vmem:[#allocation2 + $0x1b0] sm:$0xf0] %v3083
      %3100 = vst [vmem:[#allocation2 + $0x1b8] sm:$0xf0] %v3084
      %3101 = vrot.lane.b32.xlu0 %v414, 125
      %v3102 = vpop.permute.xlu0 %3101
      %3103 = vrot.lane.b32.xlu0 %v418, 125
      %v3104 = vpop.permute.xlu0 %3103
      %3105 = vrot.lane.b32.xlu0 %v415, 125
      %v3106 = vpop.permute.xlu0 %3105
      %3107 = vrot.lane.b32.xlu0 %v419, 125
      %v3108 = vpop.permute.xlu0 %3107
      %3109 = vrot.lane.b32.xlu0 %v1749, 125
      %v3110 = vpop.permute.xlu0 %3109
      %3111 = vrot.lane.b32.xlu0 %v1751, 125
      %v3112 = vpop.permute.xlu0 %3111
      %3113 = vrot.lane.b32.xlu0 %v1820, 125
      %v3114 = vpop.permute.xlu0 %3113
      %3115 = vrot.lane.b32.xlu0 %v1822, 125
      %v3116 = vpop.permute.xlu0 %3115
      %vm3117 = vcmp.lt.s32.totalorder %v431, 125
      %v3118 = vsel %vm3117, %v3114, %v3116
      %v3119 = vsel %vm3117, %v3112, %v3114
      %v3120 = vsel %vm3117, %v3110, %v3112
      %v3121 = vsel %vm3117, %v3108, %v3110
      %v3122 = vsel %vm3117, %v3106, %v3108
      %v3123 = vsel %vm3117, %v3104, %v3106
      %v3124 = vsel %vm3117, %v3102, %v3104
      %v3125 = vsel %vm3117, %v3116, %v3102
      %s3126 = scalar_lea.vmem %s2, 70
      %v3127 = vld [vmem:[%s3126] ss:$8 sm:$0xf]
      %v3128 = vld [vmem:[%s3126] ss:$8 sm:$0xf0]
      %v3129 = vor.u32 %v3127, %v3128
      %v3131 = vlaneseq
      %v3132 = vshrl.u32 %v3131, 7
      %v3133 = vsub.s32 0, %v3132
      %v3134 = vrot.slane %v3129, %v3133
      %v3135 = vlaneseq
      %v3136 = vshrl.u32 %v3135, 7
      %v3137 = vsub.s32 1, %v3136
      %v3138 = vrot.slane %v3129, %v3137
      %v3139 = vlaneseq
      %v3140 = vshrl.u32 %v3139, 7
      %v3141 = vsub.s32 2, %v3140
      %v3142 = vrot.slane %v3129, %v3141
      %v3143 = vlaneseq
      %v3144 = vshrl.u32 %v3143, 7
      %v3145 = vsub.s32 3, %v3144
      %v3146 = vrot.slane %v3129, %v3145
      %v3147 = vlaneseq
      %v3148 = vshrl.u32 %v3147, 7
      %v3149 = vsub.s32 4, %v3148
      %v3150 = vrot.slane %v3129, %v3149
      %v3151 = vlaneseq
      %v3152 = vshrl.u32 %v3151, 7
      %v3153 = vsub.s32 5, %v3152
      %v3154 = vrot.slane %v3129, %v3153
      %v3155 = vlaneseq
      %v3156 = vshrl.u32 %v3155, 7
      %v3157 = vsub.s32 6, %v3156
      %v3158 = vrot.slane %v3129, %v3157
      %v3159 = vlaneseq
      %v3160 = vshrl.u32 %v3159, 7
      %v3161 = vsub.s32 7, %v3160
      %v3162 = vrot.slane %v3129, %v3161
      %v3171 = vmul.f32 %v3124, %v3134
      %v3172 = vmul.f32 %v3123, %v3138
      %v3173 = vmul.f32 %v3122, %v3142
      %v3174 = vmul.f32 %v3121, %v3146
      %v3175 = vmul.f32 %v3120, %v3150
      %v3176 = vmul.f32 %v3119, %v3154
      %v3177 = vmul.f32 %v3118, %v3158
      %v3178 = vmul.f32 %v3125, %v3162
      %3179 = vst [vmem:[#allocation2 + $0x1c0] sm:$0xf] %v3171
      %3180 = vst [vmem:[#allocation2 + $0x1c8] sm:$0xf] %v3172
      %3181 = vst [vmem:[#allocation2 + $0x1d0] sm:$0xf] %v3173
      %3182 = vst [vmem:[#allocation2 + $0x1d8] sm:$0xf] %v3174
      %3183 = vst [vmem:[#allocation2 + $0x1e0] sm:$0xf] %v3175
      %3184 = vst [vmem:[#allocation2 + $0x1e8] sm:$0xf] %v3176
      %3185 = vst [vmem:[#allocation2 + $0x1f0] sm:$0xf] %v3177
      %3186 = vst [vmem:[#allocation2 + $0x1f8] sm:$0xf] %v3178
      %3187 = vrot.lane.b32.xlu0 %v414, 107
      %v3188 = vpop.permute.xlu0 %3187
      %3189 = vrot.lane.b32.xlu0 %v418, 107
      %v3190 = vpop.permute.xlu0 %3189
      %3191 = vrot.lane.b32.xlu0 %v415, 107
      %v3192 = vpop.permute.xlu0 %3191
      %3193 = vrot.lane.b32.xlu0 %v419, 107
      %v3194 = vpop.permute.xlu0 %3193
      %3195 = vrot.lane.b32.xlu0 %v1749, 107
      %v3196 = vpop.permute.xlu0 %3195
      %3197 = vrot.lane.b32.xlu0 %v1751, 107
      %v3198 = vpop.permute.xlu0 %3197
      %3199 = vrot.lane.b32.xlu0 %v1820, 107
      %v3200 = vpop.permute.xlu0 %3199
      %3201 = vrot.lane.b32.xlu0 %v1822, 107
      %v3202 = vpop.permute.xlu0 %3201
      %vm3203 = vcmp.lt.s32.totalorder %v431, 107
      %v3204 = vsel %vm3203, %v3200, %v3202
      %v3205 = vsel %vm3203, %v3198, %v3200
      %v3206 = vsel %vm3203, %v3196, %v3198
      %v3207 = vsel %vm3203, %v3194, %v3196
      %v3208 = vsel %vm3203, %v3192, %v3194
      %v3209 = vsel %vm3203, %v3190, %v3192
      %v3210 = vsel %vm3203, %v3188, %v3190
      %v3211 = vsel %vm3203, %v3202, %v3188
      %s3212 = scalar_lea.vmem %s2, 71
      %v3213 = vld [vmem:[%s3212] ss:$8 sm:$0xf]
      %v3214 = vld [vmem:[%s3212] ss:$8 sm:$0xf0]
      %v3215 = vor.u32 %v3213, %v3214
      %v3217 = vlaneseq
      %v3218 = vshrl.u32 %v3217, 7
      %v3219 = vsub.s32 0, %v3218
      %v3220 = vrot.slane %v3215, %v3219
      %v3221 = vlaneseq
      %v3222 = vshrl.u32 %v3221, 7
      %v3223 = vsub.s32 1, %v3222
      %v3224 = vrot.slane %v3215, %v3223
      %v3225 = vlaneseq
      %v3226 = vshrl.u32 %v3225, 7
      %v3227 = vsub.s32 2, %v3226
      %v3228 = vrot.slane %v3215, %v3227
      %v3229 = vlaneseq
      %v3230 = vshrl.u32 %v3229, 7
      %v3231 = vsub.s32 3, %v3230
      %v3232 = vrot.slane %v3215, %v3231
      %v3233 = vlaneseq
      %v3234 = vshrl.u32 %v3233, 7
      %v3235 = vsub.s32 4, %v3234
      %v3236 = vrot.slane %v3215, %v3235
      %v3237 = vlaneseq
      %v3238 = vshrl.u32 %v3237, 7
      %v3239 = vsub.s32 5, %v3238
      %v3240 = vrot.slane %v3215, %v3239
      %v3241 = vlaneseq
      %v3242 = vshrl.u32 %v3241, 7
      %v3243 = vsub.s32 6, %v3242
      %v3244 = vrot.slane %v3215, %v3243
      %v3245 = vlaneseq
      %v3246 = vshrl.u32 %v3245, 7
      %v3247 = vsub.s32 7, %v3246
      %v3248 = vrot.slane %v3215, %v3247
      %v3257 = vmul.f32 %v3210, %v3220
      %v3258 = vmul.f32 %v3209, %v3224
      %v3259 = vmul.f32 %v3208, %v3228
      %v3260 = vmul.f32 %v3207, %v3232
      %v3261 = vmul.f32 %v3206, %v3236
      %v3262 = vmul.f32 %v3205, %v3240
      %v3263 = vmul.f32 %v3204, %v3244
      %v3264 = vmul.f32 %v3211, %v3248
      %v3273 = vrot.slane %v3257, 4
      %v3274 = vrot.slane %v3258, 4
      %v3275 = vrot.slane %v3259, 4
      %v3276 = vrot.slane %v3260, 4
      %v3277 = vrot.slane %v3261, 4
      %v3278 = vrot.slane %v3262, 4
      %v3279 = vrot.slane %v3263, 4
      %v3280 = vrot.slane %v3264, 4
      %3289 = vst [vmem:[#allocation2 + $0x1c0] sm:$0xf0] %v3273
      %3290 = vst [vmem:[#allocation2 + $0x1c8] sm:$0xf0] %v3274
      %3291 = vst [vmem:[#allocation2 + $0x1d0] sm:$0xf0] %v3275
      %3292 = vst [vmem:[#allocation2 + $0x1d8] sm:$0xf0] %v3276
      %3293 = vst [vmem:[#allocation2 + $0x1e0] sm:$0xf0] %v3277
      %3294 = vst [vmem:[#allocation2 + $0x1e8] sm:$0xf0] %v3278
      %3295 = vst [vmem:[#allocation2 + $0x1f0] sm:$0xf0] %v3279
      %3296 = vst [vmem:[#allocation2 + $0x1f8] sm:$0xf0] %v3280
      %3297 = vrot.lane.b32.xlu0 %v414, 104
      %v3298 = vpop.permute.xlu0 %3297
      %3299 = vrot.lane.b32.xlu0 %v418, 104
      %v3300 = vpop.permute.xlu0 %3299
      %3301 = vrot.lane.b32.xlu0 %v415, 104
      %v3302 = vpop.permute.xlu0 %3301
      %3303 = vrot.lane.b32.xlu0 %v419, 104
      %v3304 = vpop.permute.xlu0 %3303
      %3305 = vrot.lane.b32.xlu0 %v1749, 104
      %v3306 = vpop.permute.xlu0 %3305
      %3307 = vrot.lane.b32.xlu0 %v1751, 104
      %v3308 = vpop.permute.xlu0 %3307
      %3309 = vrot.lane.b32.xlu0 %v1820, 104
      %v3310 = vpop.permute.xlu0 %3309
      %3311 = vrot.lane.b32.xlu0 %v1822, 104
      %v3312 = vpop.permute.xlu0 %3311
      %vm3313 = vcmp.lt.s32.totalorder %v431, 104
      %v3314 = vsel %vm3313, %v3310, %v3312
      %v3315 = vsel %vm3313, %v3308, %v3310
      %v3316 = vsel %vm3313, %v3306, %v3308
      %v3317 = vsel %vm3313, %v3304, %v3306
      %v3318 = vsel %vm3313, %v3302, %v3304
      %v3319 = vsel %vm3313, %v3300, %v3302
      %v3320 = vsel %vm3313, %v3298, %v3300
      %v3321 = vsel %vm3313, %v3312, %v3298
      %s3322 = scalar_lea.vmem %s2, 128
      %v3323 = vld [vmem:[%s3322] ss:$8 sm:$0xf]
      %v3324 = vld [vmem:[%s3322] ss:$8 sm:$0xf0]
      %v3325 = vor.u32 %v3323, %v3324
      %v3327 = vlaneseq
      %v3328 = vshrl.u32 %v3327, 7
      %v3329 = vsub.s32 0, %v3328
      %v3330 = vrot.slane %v3325, %v3329
      %v3331 = vlaneseq
      %v3332 = vshrl.u32 %v3331, 7
      %v3333 = vsub.s32 1, %v3332
      %v3334 = vrot.slane %v3325, %v3333
      %v3335 = vlaneseq
      %v3336 = vshrl.u32 %v3335, 7
      %v3337 = vsub.s32 2, %v3336
      %v3338 = vrot.slane %v3325, %v3337
      %v3339 = vlaneseq
      %v3340 = vshrl.u32 %v3339, 7
      %v3341 = vsub.s32 3, %v3340
      %v3342 = vrot.slane %v3325, %v3341
      %v3343 = vlaneseq
      %v3344 = vshrl.u32 %v3343, 7
      %v3345 = vsub.s32 4, %v3344
      %v3346 = vrot.slane %v3325, %v3345
      %v3347 = vlaneseq
      %v3348 = vshrl.u32 %v3347, 7
      %v3349 = vsub.s32 5, %v3348
      %v3350 = vrot.slane %v3325, %v3349
      %v3351 = vlaneseq
      %v3352 = vshrl.u32 %v3351, 7
      %v3353 = vsub.s32 6, %v3352
      %v3354 = vrot.slane %v3325, %v3353
      %v3355 = vlaneseq
      %v3356 = vshrl.u32 %v3355, 7
      %v3357 = vsub.s32 7, %v3356
      %v3358 = vrot.slane %v3325, %v3357
      %v3367 = vmul.f32 %v3320, %v3330
      %v3368 = vmul.f32 %v3319, %v3334
      %v3369 = vmul.f32 %v3318, %v3338
      %v3370 = vmul.f32 %v3317, %v3342
      %v3371 = vmul.f32 %v3316, %v3346
      %v3372 = vmul.f32 %v3315, %v3350
      %v3373 = vmul.f32 %v3314, %v3354
      %v3374 = vmul.f32 %v3321, %v3358
      %3375 = vst [vmem:[#allocation2 + $0x200] sm:$0xf] %v3367
      %3376 = vst [vmem:[#allocation2 + $0x208] sm:$0xf] %v3368
      %3377 = vst [vmem:[#allocation2 + $0x210] sm:$0xf] %v3369
      %3378 = vst [vmem:[#allocation2 + $0x218] sm:$0xf] %v3370
      %3379 = vst [vmem:[#allocation2 + $0x220] sm:$0xf] %v3371
      %3380 = vst [vmem:[#allocation2 + $0x228] sm:$0xf] %v3372
      %3381 = vst [vmem:[#allocation2 + $0x230] sm:$0xf] %v3373
      %3382 = vst [vmem:[#allocation2 + $0x238] sm:$0xf] %v3374
      %3383 = vrot.lane.b32.xlu0 %v414, 101
      %v3384 = vpop.permute.xlu0 %3383
      %3385 = vrot.lane.b32.xlu0 %v418, 101
      %v3386 = vpop.permute.xlu0 %3385
      %3387 = vrot.lane.b32.xlu0 %v415, 101
      %v3388 = vpop.permute.xlu0 %3387
      %3389 = vrot.lane.b32.xlu0 %v419, 101
      %v3390 = vpop.permute.xlu0 %3389
      %3391 = vrot.lane.b32.xlu0 %v1749, 101
      %v3392 = vpop.permute.xlu0 %3391
      %3393 = vrot.lane.b32.xlu0 %v1751, 101
      %v3394 = vpop.permute.xlu0 %3393
      %3395 = vrot.lane.b32.xlu0 %v1820, 101
      %v3396 = vpop.permute.xlu0 %3395
      %3397 = vrot.lane.b32.xlu0 %v1822, 101
      %v3398 = vpop.permute.xlu0 %3397
      %vm3399 = vcmp.lt.s32.totalorder %v431, 101
      %v3400 = vsel %vm3399, %v3396, %v3398
      %v3401 = vsel %vm3399, %v3394, %v3396
      %v3402 = vsel %vm3399, %v3392, %v3394
      %v3403 = vsel %vm3399, %v3390, %v3392
      %v3404 = vsel %vm3399, %v3388, %v3390
      %v3405 = vsel %vm3399, %v3386, %v3388
      %v3406 = vsel %vm3399, %v3384, %v3386
      %v3407 = vsel %vm3399, %v3398, %v3384
      %s3408 = scalar_lea.vmem %s2, 129
      %v3409 = vld [vmem:[%s3408] ss:$8 sm:$0xf]
      %v3410 = vld [vmem:[%s3408] ss:$8 sm:$0xf0]
      %v3411 = vor.u32 %v3409, %v3410
      %v3413 = vlaneseq
      %v3414 = vshrl.u32 %v3413, 7
      %v3415 = vsub.s32 0, %v3414
      %v3416 = vrot.slane %v3411, %v3415
      %v3417 = vlaneseq
      %v3418 = vshrl.u32 %v3417, 7
      %v3419 = vsub.s32 1, %v3418
      %v3420 = vrot.slane %v3411, %v3419
      %v3421 = vlaneseq
      %v3422 = vshrl.u32 %v3421, 7
      %v3423 = vsub.s32 2, %v3422
      %v3424 = vrot.slane %v3411, %v3423
      %v3425 = vlaneseq
      %v3426 = vshrl.u32 %v3425, 7
      %v3427 = vsub.s32 3, %v3426
      %v3428 = vrot.slane %v3411, %v3427
      %v3429 = vlaneseq
      %v3430 = vshrl.u32 %v3429, 7
      %v3431 = vsub.s32 4, %v3430
      %v3432 = vrot.slane %v3411, %v3431
      %v3433 = vlaneseq
      %v3434 = vshrl.u32 %v3433, 7
      %v3435 = vsub.s32 5, %v3434
      %v3436 = vrot.slane %v3411, %v3435
      %v3437 = vlaneseq
      %v3438 = vshrl.u32 %v3437, 7
      %v3439 = vsub.s32 6, %v3438
      %v3440 = vrot.slane %v3411, %v3439
      %v3441 = vlaneseq
      %v3442 = vshrl.u32 %v3441, 7
      %v3443 = vsub.s32 7, %v3442
      %v3444 = vrot.slane %v3411, %v3443
      %v3453 = vmul.f32 %v3406, %v3416
      %v3454 = vmul.f32 %v3405, %v3420
      %v3455 = vmul.f32 %v3404, %v3424
      %v3456 = vmul.f32 %v3403, %v3428
      %v3457 = vmul.f32 %v3402, %v3432
      %v3458 = vmul.f32 %v3401, %v3436
      %v3459 = vmul.f32 %v3400, %v3440
      %v3460 = vmul.f32 %v3407, %v3444
      %v3469 = vrot.slane %v3453, 4
      %v3470 = vrot.slane %v3454, 4
      %v3471 = vrot.slane %v3455, 4
      %v3472 = vrot.slane %v3456, 4
      %v3473 = vrot.slane %v3457, 4
      %v3474 = vrot.slane %v3458, 4
      %v3475 = vrot.slane %v3459, 4
      %v3476 = vrot.slane %v3460, 4
      %3485 = vst [vmem:[#allocation2 + $0x200] sm:$0xf0] %v3469
      %3486 = vst [vmem:[#allocation2 + $0x208] sm:$0xf0] %v3470
      %3487 = vst [vmem:[#allocation2 + $0x210] sm:$0xf0] %v3471
      %3488 = vst [vmem:[#allocation2 + $0x218] sm:$0xf0] %v3472
      %3489 = vst [vmem:[#allocation2 + $0x220] sm:$0xf0] %v3473
      %3490 = vst [vmem:[#allocation2 + $0x228] sm:$0xf0] %v3474
      %3491 = vst [vmem:[#allocation2 + $0x230] sm:$0xf0] %v3475
      %3492 = vst [vmem:[#allocation2 + $0x238] sm:$0xf0] %v3476
      %s3493 = scalar_lea.vmem %s2, 130
      %v3494 = vld [vmem:[%s3493] ss:$8 sm:$0xf]
      %v3495 = vld [vmem:[%s3493] ss:$8 sm:$0xf0]
      %v3496 = vor.u32 %v3494, %v3495
      %v3498 = vlaneseq
      %v3499 = vshrl.u32 %v3498, 7
      %v3500 = vsub.s32 0, %v3499
      %v3501 = vrot.slane %v3496, %v3500
      %v3502 = vlaneseq
      %v3503 = vshrl.u32 %v3502, 7
      %v3504 = vsub.s32 1, %v3503
      %v3505 = vrot.slane %v3496, %v3504
      %v3506 = vlaneseq
      %v3507 = vshrl.u32 %v3506, 7
      %v3508 = vsub.s32 2, %v3507
      %v3509 = vrot.slane %v3496, %v3508
      %v3510 = vlaneseq
      %v3511 = vshrl.u32 %v3510, 7
      %v3512 = vsub.s32 3, %v3511
      %v3513 = vrot.slane %v3496, %v3512
      %v3514 = vlaneseq
      %v3515 = vshrl.u32 %v3514, 7
      %v3516 = vsub.s32 4, %v3515
      %v3517 = vrot.slane %v3496, %v3516
      %v3518 = vlaneseq
      %v3519 = vshrl.u32 %v3518, 7
      %v3520 = vsub.s32 5, %v3519
      %v3521 = vrot.slane %v3496, %v3520
      %v3522 = vlaneseq
      %v3523 = vshrl.u32 %v3522, 7
      %v3524 = vsub.s32 6, %v3523
      %v3525 = vrot.slane %v3496, %v3524
      %v3526 = vlaneseq
      %v3527 = vshrl.u32 %v3526, 7
      %v3528 = vsub.s32 7, %v3527
      %v3529 = vrot.slane %v3496, %v3528
      %v3538 = vmul.f32 %v1846, %v3501
      %v3539 = vmul.f32 %v1845, %v3505
      %v3540 = vmul.f32 %v1844, %v3509
      %v3541 = vmul.f32 %v1843, %v3513
      %v3542 = vmul.f32 %v1842, %v3517
      %v3543 = vmul.f32 %v1841, %v3521
      %v3544 = vmul.f32 %v1848, %v3525
      %v3545 = vmul.f32 %v1847, %v3529
      %3546 = vst [vmem:[#allocation2 + $0x240] sm:$0xf] %v3538
      %3547 = vst [vmem:[#allocation2 + $0x248] sm:$0xf] %v3539
      %3548 = vst [vmem:[#allocation2 + $0x250] sm:$0xf] %v3540
      %3549 = vst [vmem:[#allocation2 + $0x258] sm:$0xf] %v3541
      %3550 = vst [vmem:[#allocation2 + $0x260] sm:$0xf] %v3542
      %3551 = vst [vmem:[#allocation2 + $0x268] sm:$0xf] %v3543
      %3552 = vst [vmem:[#allocation2 + $0x270] sm:$0xf] %v3544
      %3553 = vst [vmem:[#allocation2 + $0x278] sm:$0xf] %v3545
      %s3554 = scalar_lea.vmem %s2, 131
      %v3555 = vld [vmem:[%s3554] ss:$8 sm:$0xf]
      %v3556 = vld [vmem:[%s3554] ss:$8 sm:$0xf0]
      %v3557 = vor.u32 %v3555, %v3556
      %v3559 = vlaneseq
      %v3560 = vshrl.u32 %v3559, 7
      %v3561 = vsub.s32 0, %v3560
      %v3562 = vrot.slane %v3557, %v3561
      %v3563 = vlaneseq
      %v3564 = vshrl.u32 %v3563, 7
      %v3565 = vsub.s32 1, %v3564
      %v3566 = vrot.slane %v3557, %v3565
      %v3567 = vlaneseq
      %v3568 = vshrl.u32 %v3567, 7
      %v3569 = vsub.s32 2, %v3568
      %v3570 = vrot.slane %v3557, %v3569
      %v3571 = vlaneseq
      %v3572 = vshrl.u32 %v3571, 7
      %v3573 = vsub.s32 3, %v3572
      %v3574 = vrot.slane %v3557, %v3573
      %v3575 = vlaneseq
      %v3576 = vshrl.u32 %v3575, 7
      %v3577 = vsub.s32 4, %v3576
      %v3578 = vrot.slane %v3557, %v3577
      %v3579 = vlaneseq
      %v3580 = vshrl.u32 %v3579, 7
      %v3581 = vsub.s32 5, %v3580
      %v3582 = vrot.slane %v3557, %v3581
      %v3583 = vlaneseq
      %v3584 = vshrl.u32 %v3583, 7
      %v3585 = vsub.s32 6, %v3584
      %v3586 = vrot.slane %v3557, %v3585
      %v3587 = vlaneseq
      %v3588 = vshrl.u32 %v3587, 7
      %v3589 = vsub.s32 7, %v3588
      %v3590 = vrot.slane %v3557, %v3589
      %v3599 = vmul.f32 %v1931, %v3562
      %v3600 = vmul.f32 %v1930, %v3566
      %v3601 = vmul.f32 %v1929, %v3570
      %v3602 = vmul.f32 %v1928, %v3574
      %v3603 = vmul.f32 %v1927, %v3578
      %v3604 = vmul.f32 %v1926, %v3582
      %v3605 = vmul.f32 %v1933, %v3586
      %v3606 = vmul.f32 %v1932, %v3590
      %v3615 = vrot.slane %v3599, 4
      %v3616 = vrot.slane %v3600, 4
      %v3617 = vrot.slane %v3601, 4
      %v3618 = vrot.slane %v3602, 4
      %v3619 = vrot.slane %v3603, 4
      %v3620 = vrot.slane %v3604, 4
      %v3621 = vrot.slane %v3605, 4
      %v3622 = vrot.slane %v3606, 4
      %3631 = vst [vmem:[#allocation2 + $0x240] sm:$0xf0] %v3615
      %3632 = vst [vmem:[#allocation2 + $0x248] sm:$0xf0] %v3616
      %3633 = vst [vmem:[#allocation2 + $0x250] sm:$0xf0] %v3617
      %3634 = vst [vmem:[#allocation2 + $0x258] sm:$0xf0] %v3618
      %3635 = vst [vmem:[#allocation2 + $0x260] sm:$0xf0] %v3619
      %3636 = vst [vmem:[#allocation2 + $0x268] sm:$0xf0] %v3620
      %3637 = vst [vmem:[#allocation2 + $0x270] sm:$0xf0] %v3621
      %3638 = vst [vmem:[#allocation2 + $0x278] sm:$0xf0] %v3622
      %s3639 = scalar_lea.vmem %s2, 132
      %v3640 = vld [vmem:[%s3639] ss:$8 sm:$0xf]
      %v3641 = vld [vmem:[%s3639] ss:$8 sm:$0xf0]
      %v3642 = vor.u32 %v3640, %v3641
      %v3644 = vlaneseq
      %v3645 = vshrl.u32 %v3644, 7
      %v3646 = vsub.s32 0, %v3645
      %v3647 = vrot.slane %v3642, %v3646
      %v3648 = vlaneseq
      %v3649 = vshrl.u32 %v3648, 7
      %v3650 = vsub.s32 1, %v3649
      %v3651 = vrot.slane %v3642, %v3650
      %v3652 = vlaneseq
      %v3653 = vshrl.u32 %v3652, 7
      %v3654 = vsub.s32 2, %v3653
      %v3655 = vrot.slane %v3642, %v3654
      %v3656 = vlaneseq
      %v3657 = vshrl.u32 %v3656, 7
      %v3658 = vsub.s32 3, %v3657
      %v3659 = vrot.slane %v3642, %v3658
      %v3660 = vlaneseq
      %v3661 = vshrl.u32 %v3660, 7
      %v3662 = vsub.s32 4, %v3661
      %v3663 = vrot.slane %v3642, %v3662
      %v3664 = vlaneseq
      %v3665 = vshrl.u32 %v3664, 7
      %v3666 = vsub.s32 5, %v3665
      %v3667 = vrot.slane %v3642, %v3666
      %v3668 = vlaneseq
      %v3669 = vshrl.u32 %v3668, 7
      %v3670 = vsub.s32 6, %v3669
      %v3671 = vrot.slane %v3642, %v3670
      %v3672 = vlaneseq
      %v3673 = vshrl.u32 %v3672, 7
      %v3674 = vsub.s32 7, %v3673
      %v3675 = vrot.slane %v3642, %v3674
      %v3684 = vmul.f32 %v2041, %v3647
      %v3685 = vmul.f32 %v2040, %v3651
      %v3686 = vmul.f32 %v2039, %v3655
      %v3687 = vmul.f32 %v2038, %v3659
      %v3688 = vmul.f32 %v2037, %v3663
      %v3689 = vmul.f32 %v2036, %v3667
      %v3690 = vmul.f32 %v2043, %v3671
      %v3691 = vmul.f32 %v2042, %v3675
      %3692 = vst [vmem:[#allocation2 + $0x280] sm:$0xf] %v3684
      %3693 = vst [vmem:[#allocation2 + $0x288] sm:$0xf] %v3685
      %3694 = vst [vmem:[#allocation2 + $0x290] sm:$0xf] %v3686
      %3695 = vst [vmem:[#allocation2 + $0x298] sm:$0xf] %v3687
      %3696 = vst [vmem:[#allocation2 + $0x2a0] sm:$0xf] %v3688
      %3697 = vst [vmem:[#allocation2 + $0x2a8] sm:$0xf] %v3689
      %3698 = vst [vmem:[#allocation2 + $0x2b0] sm:$0xf] %v3690
      %3699 = vst [vmem:[#allocation2 + $0x2b8] sm:$0xf] %v3691
      %s3700 = scalar_lea.vmem %s2, 133
      %v3701 = vld [vmem:[%s3700] ss:$8 sm:$0xf]
      %v3702 = vld [vmem:[%s3700] ss:$8 sm:$0xf0]
      %v3703 = vor.u32 %v3701, %v3702
      %v3705 = vlaneseq
      %v3706 = vshrl.u32 %v3705, 7
      %v3707 = vsub.s32 0, %v3706
      %v3708 = vrot.slane %v3703, %v3707
      %v3709 = vlaneseq
      %v3710 = vshrl.u32 %v3709, 7
      %v3711 = vsub.s32 1, %v3710
      %v3712 = vrot.slane %v3703, %v3711
      %v3713 = vlaneseq
      %v3714 = vshrl.u32 %v3713, 7
      %v3715 = vsub.s32 2, %v3714
      %v3716 = vrot.slane %v3703, %v3715
      %v3717 = vlaneseq
      %v3718 = vshrl.u32 %v3717, 7
      %v3719 = vsub.s32 3, %v3718
      %v3720 = vrot.slane %v3703, %v3719
      %v3721 = vlaneseq
      %v3722 = vshrl.u32 %v3721, 7
      %v3723 = vsub.s32 4, %v3722
      %v3724 = vrot.slane %v3703, %v3723
      %v3725 = vlaneseq
      %v3726 = vshrl.u32 %v3725, 7
      %v3727 = vsub.s32 5, %v3726
      %v3728 = vrot.slane %v3703, %v3727
      %v3729 = vlaneseq
      %v3730 = vshrl.u32 %v3729, 7
      %v3731 = vsub.s32 6, %v3730
      %v3732 = vrot.slane %v3703, %v3731
      %v3733 = vlaneseq
      %v3734 = vshrl.u32 %v3733, 7
      %v3735 = vsub.s32 7, %v3734
      %v3736 = vrot.slane %v3703, %v3735
      %v3745 = vmul.f32 %v2127, %v3708
      %v3746 = vmul.f32 %v2126, %v3712
      %v3747 = vmul.f32 %v2125, %v3716
      %v3748 = vmul.f32 %v2124, %v3720
      %v3749 = vmul.f32 %v2123, %v3724
      %v3750 = vmul.f32 %v2122, %v3728
      %v3751 = vmul.f32 %v2129, %v3732
      %v3752 = vmul.f32 %v2128, %v3736
      %v3761 = vrot.slane %v3745, 4
      %v3762 = vrot.slane %v3746, 4
      %v3763 = vrot.slane %v3747, 4
      %v3764 = vrot.slane %v3748, 4
      %v3765 = vrot.slane %v3749, 4
      %v3766 = vrot.slane %v3750, 4
      %v3767 = vrot.slane %v3751, 4
      %v3768 = vrot.slane %v3752, 4
      %3777 = vst [vmem:[#allocation2 + $0x280] sm:$0xf0] %v3761
      %3778 = vst [vmem:[#allocation2 + $0x288] sm:$0xf0] %v3762
      %3779 = vst [vmem:[#allocation2 + $0x290] sm:$0xf0] %v3763
      %3780 = vst [vmem:[#allocation2 + $0x298] sm:$0xf0] %v3764
      %3781 = vst [vmem:[#allocation2 + $0x2a0] sm:$0xf0] %v3765
      %3782 = vst [vmem:[#allocation2 + $0x2a8] sm:$0xf0] %v3766
      %3783 = vst [vmem:[#allocation2 + $0x2b0] sm:$0xf0] %v3767
      %3784 = vst [vmem:[#allocation2 + $0x2b8] sm:$0xf0] %v3768
      %s3785 = scalar_lea.vmem %s2, 134
      %v3786 = vld [vmem:[%s3785] ss:$8 sm:$0xf]
      %v3787 = vld [vmem:[%s3785] ss:$8 sm:$0xf0]
      %v3788 = vor.u32 %v3786, %v3787
      %v3790 = vlaneseq
      %v3791 = vshrl.u32 %v3790, 7
      %v3792 = vsub.s32 0, %v3791
      %v3793 = vrot.slane %v3788, %v3792
      %v3794 = vlaneseq
      %v3795 = vshrl.u32 %v3794, 7
      %v3796 = vsub.s32 1, %v3795
      %v3797 = vrot.slane %v3788, %v3796
      %v3798 = vlaneseq
      %v3799 = vshrl.u32 %v3798, 7
      %v3800 = vsub.s32 2, %v3799
      %v3801 = vrot.slane %v3788, %v3800
      %v3802 = vlaneseq
      %v3803 = vshrl.u32 %v3802, 7
      %v3804 = vsub.s32 3, %v3803
      %v3805 = vrot.slane %v3788, %v3804
      %v3806 = vlaneseq
      %v3807 = vshrl.u32 %v3806, 7
      %v3808 = vsub.s32 4, %v3807
      %v3809 = vrot.slane %v3788, %v3808
      %v3810 = vlaneseq
      %v3811 = vshrl.u32 %v3810, 7
      %v3812 = vsub.s32 5, %v3811
      %v3813 = vrot.slane %v3788, %v3812
      %v3814 = vlaneseq
      %v3815 = vshrl.u32 %v3814, 7
      %v3816 = vsub.s32 6, %v3815
      %v3817 = vrot.slane %v3788, %v3816
      %v3818 = vlaneseq
      %v3819 = vshrl.u32 %v3818, 7
      %v3820 = vsub.s32 7, %v3819
      %v3821 = vrot.slane %v3788, %v3820
      %v3830 = vmul.f32 %v633, %v3793
      %v3831 = vmul.f32 %v632, %v3797
      %v3832 = vmul.f32 %v2226, %v3801
      %v3833 = vmul.f32 %v2225, %v3805
      %v3834 = vmul.f32 %v2224, %v3809
      %v3835 = vmul.f32 %v2223, %v3813
      %v3836 = vmul.f32 %v2227, %v3817
      %v3837 = vmul.f32 %v634, %v3821
      %3838 = vst [vmem:[#allocation2 + $0x2c0] sm:$0xf] %v3830
      %3839 = vst [vmem:[#allocation2 + $0x2c8] sm:$0xf] %v3831
      %3840 = vst [vmem:[#allocation2 + $0x2d0] sm:$0xf] %v3832
      %3841 = vst [vmem:[#allocation2 + $0x2d8] sm:$0xf] %v3833
      %3842 = vst [vmem:[#allocation2 + $0x2e0] sm:$0xf] %v3834
      %3843 = vst [vmem:[#allocation2 + $0x2e8] sm:$0xf] %v3835
      %3844 = vst [vmem:[#allocation2 + $0x2f0] sm:$0xf] %v3836
      %3845 = vst [vmem:[#allocation2 + $0x2f8] sm:$0xf] %v3837
      %s3846 = scalar_lea.vmem %s2, 135
      %v3847 = vld [vmem:[%s3846] ss:$8 sm:$0xf]
      %v3848 = vld [vmem:[%s3846] ss:$8 sm:$0xf0]
      %v3849 = vor.u32 %v3847, %v3848
      %v3851 = vlaneseq
      %v3852 = vshrl.u32 %v3851, 7
      %v3853 = vsub.s32 0, %v3852
      %v3854 = vrot.slane %v3849, %v3853
      %v3855 = vlaneseq
      %v3856 = vshrl.u32 %v3855, 7
      %v3857 = vsub.s32 1, %v3856
      %v3858 = vrot.slane %v3849, %v3857
      %v3859 = vlaneseq
      %v3860 = vshrl.u32 %v3859, 7
      %v3861 = vsub.s32 2, %v3860
      %v3862 = vrot.slane %v3849, %v3861
      %v3863 = vlaneseq
      %v3864 = vshrl.u32 %v3863, 7
      %v3865 = vsub.s32 3, %v3864
      %v3866 = vrot.slane %v3849, %v3865
      %v3867 = vlaneseq
      %v3868 = vshrl.u32 %v3867, 7
      %v3869 = vsub.s32 4, %v3868
      %v3870 = vrot.slane %v3849, %v3869
      %v3871 = vlaneseq
      %v3872 = vshrl.u32 %v3871, 7
      %v3873 = vsub.s32 5, %v3872
      %v3874 = vrot.slane %v3849, %v3873
      %v3875 = vlaneseq
      %v3876 = vshrl.u32 %v3875, 7
      %v3877 = vsub.s32 6, %v3876
      %v3878 = vrot.slane %v3849, %v3877
      %v3879 = vlaneseq
      %v3880 = vshrl.u32 %v3879, 7
      %v3881 = vsub.s32 7, %v3880
      %v3882 = vrot.slane %v3849, %v3881
      %v3891 = vmul.f32 %v2311, %v3854
      %v3892 = vmul.f32 %v2310, %v3858
      %v3893 = vmul.f32 %v2309, %v3862
      %v3894 = vmul.f32 %v2308, %v3866
      %v3895 = vmul.f32 %v2307, %v3870
      %v3896 = vmul.f32 %v2306, %v3874
      %v3897 = vmul.f32 %v2313, %v3878
      %v3898 = vmul.f32 %v2312, %v3882
      %v3907 = vrot.slane %v3891, 4
      %v3908 = vrot.slane %v3892, 4
      %v3909 = vrot.slane %v3893, 4
      %v3910 = vrot.slane %v3894, 4
      %v3911 = vrot.slane %v3895, 4
      %v3912 = vrot.slane %v3896, 4
      %v3913 = vrot.slane %v3897, 4
      %v3914 = vrot.slane %v3898, 4
      %3923 = vst [vmem:[#allocation2 + $0x2c0] sm:$0xf0] %v3907
      %3924 = vst [vmem:[#allocation2 + $0x2c8] sm:$0xf0] %v3908
      %3925 = vst [vmem:[#allocation2 + $0x2d0] sm:$0xf0] %v3909
      %3926 = vst [vmem:[#allocation2 + $0x2d8] sm:$0xf0] %v3910
      %3927 = vst [vmem:[#allocation2 + $0x2e0] sm:$0xf0] %v3911
      %3928 = vst [vmem:[#allocation2 + $0x2e8] sm:$0xf0] %v3912
      %3929 = vst [vmem:[#allocation2 + $0x2f0] sm:$0xf0] %v3913
      %3930 = vst [vmem:[#allocation2 + $0x2f8] sm:$0xf0] %v3914
      %s3931 = scalar_lea.vmem %s2, 192
      %v3932 = vld [vmem:[%s3931] ss:$8 sm:$0xf]
      %v3933 = vld [vmem:[%s3931] ss:$8 sm:$0xf0]
      %v3934 = vor.u32 %v3932, %v3933
      %v3936 = vlaneseq
      %v3937 = vshrl.u32 %v3936, 7
      %v3938 = vsub.s32 0, %v3937
      %v3939 = vrot.slane %v3934, %v3938
      %v3940 = vlaneseq
      %v3941 = vshrl.u32 %v3940, 7
      %v3942 = vsub.s32 1, %v3941
      %v3943 = vrot.slane %v3934, %v3942
      %v3944 = vlaneseq
      %v3945 = vshrl.u32 %v3944, 7
      %v3946 = vsub.s32 2, %v3945
      %v3947 = vrot.slane %v3934, %v3946
      %v3948 = vlaneseq
      %v3949 = vshrl.u32 %v3948, 7
      %v3950 = vsub.s32 3, %v3949
      %v3951 = vrot.slane %v3934, %v3950
      %v3952 = vlaneseq
      %v3953 = vshrl.u32 %v3952, 7
      %v3954 = vsub.s32 4, %v3953
      %v3955 = vrot.slane %v3934, %v3954
      %v3956 = vlaneseq
      %v3957 = vshrl.u32 %v3956, 7
      %v3958 = vsub.s32 5, %v3957
      %v3959 = vrot.slane %v3934, %v3958
      %v3960 = vlaneseq
      %v3961 = vshrl.u32 %v3960, 7
      %v3962 = vsub.s32 6, %v3961
      %v3963 = vrot.slane %v3934, %v3962
      %v3964 = vlaneseq
      %v3965 = vshrl.u32 %v3964, 7
      %v3966 = vsub.s32 7, %v3965
      %v3967 = vrot.slane %v3934, %v3966
      %v3976 = vmul.f32 %v2421, %v3939
      %v3977 = vmul.f32 %v2420, %v3943
      %v3978 = vmul.f32 %v2419, %v3947
      %v3979 = vmul.f32 %v2418, %v3951
      %v3980 = vmul.f32 %v2417, %v3955
      %v3981 = vmul.f32 %v2416, %v3959
      %v3982 = vmul.f32 %v2423, %v3963
      %v3983 = vmul.f32 %v2422, %v3967
      %3984 = vst [vmem:[#allocation2 + $0x300] sm:$0xf] %v3976
      %3985 = vst [vmem:[#allocation2 + $0x308] sm:$0xf] %v3977
      %3986 = vst [vmem:[#allocation2 + $0x310] sm:$0xf] %v3978
      %3987 = vst [vmem:[#allocation2 + $0x318] sm:$0xf] %v3979
      %3988 = vst [vmem:[#allocation2 + $0x320] sm:$0xf] %v3980
      %3989 = vst [vmem:[#allocation2 + $0x328] sm:$0xf] %v3981
      %3990 = vst [vmem:[#allocation2 + $0x330] sm:$0xf] %v3982
      %3991 = vst [vmem:[#allocation2 + $0x338] sm:$0xf] %v3983
      %s3992 = scalar_lea.vmem %s2, 193
      %v3993 = vld [vmem:[%s3992] ss:$8 sm:$0xf]
      %v3994 = vld [vmem:[%s3992] ss:$8 sm:$0xf0]
      %v3995 = vor.u32 %v3993, %v3994
      %v3997 = vlaneseq
      %v3998 = vshrl.u32 %v3997, 7
      %v3999 = vsub.s32 0, %v3998
      %v4000 = vrot.slane %v3995, %v3999
      %v4001 = vlaneseq
      %v4002 = vshrl.u32 %v4001, 7
      %v4003 = vsub.s32 1, %v4002
      %v4004 = vrot.slane %v3995, %v4003
      %v4005 = vlaneseq
      %v4006 = vshrl.u32 %v4005, 7
      %v4007 = vsub.s32 2, %v4006
      %v4008 = vrot.slane %v3995, %v4007
      %v4009 = vlaneseq
      %v4010 = vshrl.u32 %v4009, 7
      %v4011 = vsub.s32 3, %v4010
      %v4012 = vrot.slane %v3995, %v4011
      %v4013 = vlaneseq
      %v4014 = vshrl.u32 %v4013, 7
      %v4015 = vsub.s32 4, %v4014
      %v4016 = vrot.slane %v3995, %v4015
      %v4017 = vlaneseq
      %v4018 = vshrl.u32 %v4017, 7
      %v4019 = vsub.s32 5, %v4018
      %v4020 = vrot.slane %v3995, %v4019
      %v4021 = vlaneseq
      %v4022 = vshrl.u32 %v4021, 7
      %v4023 = vsub.s32 6, %v4022
      %v4024 = vrot.slane %v3995, %v4023
      %v4025 = vlaneseq
      %v4026 = vshrl.u32 %v4025, 7
      %v4027 = vsub.s32 7, %v4026
      %v4028 = vrot.slane %v3995, %v4027
      %v4037 = vmul.f32 %v2507, %v4000
      %v4038 = vmul.f32 %v2506, %v4004
      %v4039 = vmul.f32 %v2505, %v4008
      %v4040 = vmul.f32 %v2504, %v4012
      %v4041 = vmul.f32 %v2503, %v4016
      %v4042 = vmul.f32 %v2502, %v4020
      %v4043 = vmul.f32 %v2509, %v4024
      %v4044 = vmul.f32 %v2508, %v4028
      %v4053 = vrot.slane %v4037, 4
      %v4054 = vrot.slane %v4038, 4
      %v4055 = vrot.slane %v4039, 4
      %v4056 = vrot.slane %v4040, 4
      %v4057 = vrot.slane %v4041, 4
      %v4058 = vrot.slane %v4042, 4
      %v4059 = vrot.slane %v4043, 4
      %v4060 = vrot.slane %v4044, 4
      %4069 = vst [vmem:[#allocation2 + $0x300] sm:$0xf0] %v4053
      %4070 = vst [vmem:[#allocation2 + $0x308] sm:$0xf0] %v4054
      %4071 = vst [vmem:[#allocation2 + $0x310] sm:$0xf0] %v4055
      %4072 = vst [vmem:[#allocation2 + $0x318] sm:$0xf0] %v4056
      %4073 = vst [vmem:[#allocation2 + $0x320] sm:$0xf0] %v4057
      %4074 = vst [vmem:[#allocation2 + $0x328] sm:$0xf0] %v4058
      %4075 = vst [vmem:[#allocation2 + $0x330] sm:$0xf0] %v4059
      %4076 = vst [vmem:[#allocation2 + $0x338] sm:$0xf0] %v4060
      %s4077 = scalar_lea.vmem %s2, 194
      %v4078 = vld [vmem:[%s4077] ss:$8 sm:$0xf]
      %v4079 = vld [vmem:[%s4077] ss:$8 sm:$0xf0]
      %v4080 = vor.u32 %v4078, %v4079
      %v4082 = vlaneseq
      %v4083 = vshrl.u32 %v4082, 7
      %v4084 = vsub.s32 0, %v4083
      %v4085 = vrot.slane %v4080, %v4084
      %v4086 = vlaneseq
      %v4087 = vshrl.u32 %v4086, 7
      %v4088 = vsub.s32 1, %v4087
      %v4089 = vrot.slane %v4080, %v4088
      %v4090 = vlaneseq
      %v4091 = vshrl.u32 %v4090, 7
      %v4092 = vsub.s32 2, %v4091
      %v4093 = vrot.slane %v4080, %v4092
      %v4094 = vlaneseq
      %v4095 = vshrl.u32 %v4094, 7
      %v4096 = vsub.s32 3, %v4095
      %v4097 = vrot.slane %v4080, %v4096
      %v4098 = vlaneseq
      %v4099 = vshrl.u32 %v4098, 7
      %v4100 = vsub.s32 4, %v4099
      %v4101 = vrot.slane %v4080, %v4100
      %v4102 = vlaneseq
      %v4103 = vshrl.u32 %v4102, 7
      %v4104 = vsub.s32 5, %v4103
      %v4105 = vrot.slane %v4080, %v4104
      %v4106 = vlaneseq
      %v4107 = vshrl.u32 %v4106, 7
      %v4108 = vsub.s32 6, %v4107
      %v4109 = vrot.slane %v4080, %v4108
      %v4110 = vlaneseq
      %v4111 = vshrl.u32 %v4110, 7
      %v4112 = vsub.s32 7, %v4111
      %v4113 = vrot.slane %v4080, %v4112
      %v4122 = vmul.f32 %v2617, %v4085
      %v4123 = vmul.f32 %v2616, %v4089
      %v4124 = vmul.f32 %v2615, %v4093
      %v4125 = vmul.f32 %v2614, %v4097
      %v4126 = vmul.f32 %v2613, %v4101
      %v4127 = vmul.f32 %v2612, %v4105
      %v4128 = vmul.f32 %v2619, %v4109
      %v4129 = vmul.f32 %v2618, %v4113
      %4130 = vst [vmem:[#allocation2 + $0x340] sm:$0xf] %v4122
      %4131 = vst [vmem:[#allocation2 + $0x348] sm:$0xf] %v4123
      %4132 = vst [vmem:[#allocation2 + $0x350] sm:$0xf] %v4124
      %4133 = vst [vmem:[#allocation2 + $0x358] sm:$0xf] %v4125
      %4134 = vst [vmem:[#allocation2 + $0x360] sm:$0xf] %v4126
      %4135 = vst [vmem:[#allocation2 + $0x368] sm:$0xf] %v4127
      %4136 = vst [vmem:[#allocation2 + $0x370] sm:$0xf] %v4128
      %4137 = vst [vmem:[#allocation2 + $0x378] sm:$0xf] %v4129
      %v4138 = vld [vmem:[%s6] sm:$0xf]
      %v4139 = vld [vmem:[#allocation2] sm:$0xff]
      %v4140 = vld [vmem:[#allocation2 + $0x8] sm:$0xff]
      %v4141 = vld [vmem:[#allocation2 + $0x10] sm:$0xff]
      %v4142 = vld [vmem:[#allocation2 + $0x18] sm:$0xff]
      %v4143 = vld [vmem:[#allocation2 + $0x20] sm:$0xff]
      %v4144 = vld [vmem:[#allocation2 + $0x28] sm:$0xff]
      %v4145 = vld [vmem:[#allocation2 + $0x30] sm:$0xff]
      %v4146 = vld [vmem:[#allocation2 + $0x38] sm:$0xff]
      %v4147 = vld [vmem:[#allocation2 + $0x40] sm:$0xff]
      %v4148 = vld [vmem:[#allocation2 + $0x48] sm:$0xff]
      %v4149 = vld [vmem:[#allocation2 + $0x50] sm:$0xff]
      %v4150 = vld [vmem:[#allocation2 + $0x58] sm:$0xff]
      %v4151 = vld [vmem:[#allocation2 + $0x60] sm:$0xff]
      %v4152 = vld [vmem:[#allocation2 + $0x68] sm:$0xff]
      %v4153 = vld [vmem:[#allocation2 + $0x70] sm:$0xff]
      %v4154 = vld [vmem:[#allocation2 + $0x78] sm:$0xff]
      %v4155 = vld [vmem:[#allocation2 + $0x80] sm:$0xff]
      %v4156 = vld [vmem:[#allocation2 + $0x88] sm:$0xff]
      %v4157 = vld [vmem:[#allocation2 + $0x90] sm:$0xff]
      %v4158 = vld [vmem:[#allocation2 + $0x98] sm:$0xff]
      %v4159 = vld [vmem:[#allocation2 + $0xa0] sm:$0xff]
      %v4160 = vld [vmem:[#allocation2 + $0xa8] sm:$0xff]
      %v4161 = vld [vmem:[#allocation2 + $0xb0] sm:$0xff]
      %v4162 = vld [vmem:[#allocation2 + $0xb8] sm:$0xff]
      %v4163 = vld [vmem:[#allocation2 + $0xc0] sm:$0xff]
      %v4164 = vld [vmem:[#allocation2 + $0xc8] sm:$0xff]
      %v4165 = vld [vmem:[#allocation2 + $0xd0] sm:$0xff]
      %v4166 = vld [vmem:[#allocation2 + $0xd8] sm:$0xff]
      %v4167 = vld [vmem:[#allocation2 + $0xe0] sm:$0xff]
      %v4168 = vld [vmem:[#allocation2 + $0xe8] sm:$0xff]
      %v4169 = vld [vmem:[#allocation2 + $0xf0] sm:$0xff]
      %v4170 = vld [vmem:[#allocation2 + $0xf8] sm:$0xff]
      %v4171 = vld [vmem:[#allocation2 + $0x100] sm:$0xff]
      %v4172 = vld [vmem:[#allocation2 + $0x108] sm:$0xff]
      %v4173 = vld [vmem:[#allocation2 + $0x110] sm:$0xff]
      %v4174 = vld [vmem:[#allocation2 + $0x118] sm:$0xff]
      %v4175 = vld [vmem:[#allocation2 + $0x120] sm:$0xff]
      %v4176 = vld [vmem:[#allocation2 + $0x128] sm:$0xff]
      %v4177 = vld [vmem:[#allocation2 + $0x130] sm:$0xff]
      %v4178 = vld [vmem:[#allocation2 + $0x138] sm:$0xff]
      %v4179 = vld [vmem:[#allocation2 + $0x140] sm:$0xff]
      %v4180 = vld [vmem:[#allocation2 + $0x148] sm:$0xff]
      %v4181 = vld [vmem:[#allocation2 + $0x150] sm:$0xff]
      %v4182 = vld [vmem:[#allocation2 + $0x158] sm:$0xff]
      %v4183 = vld [vmem:[#allocation2 + $0x160] sm:$0xff]
      %v4184 = vld [vmem:[#allocation2 + $0x168] sm:$0xff]
      %v4185 = vld [vmem:[#allocation2 + $0x170] sm:$0xff]
      %v4186 = vld [vmem:[#allocation2 + $0x178] sm:$0xff]
      %v4187 = vld [vmem:[#allocation2 + $0x180] sm:$0xff]
      %v4188 = vld [vmem:[#allocation2 + $0x188] sm:$0xff]
      %v4189 = vld [vmem:[#allocation2 + $0x190] sm:$0xff]
      %v4190 = vld [vmem:[#allocation2 + $0x198] sm:$0xff]
      %v4191 = vld [vmem:[#allocation2 + $0x1a0] sm:$0xff]
      %v4192 = vld [vmem:[#allocation2 + $0x1a8] sm:$0xff]
      %v4193 = vld [vmem:[#allocation2 + $0x1b0] sm:$0xff]
      %v4194 = vld [vmem:[#allocation2 + $0x1b8] sm:$0xff]
      %v4195 = vld [vmem:[#allocation2 + $0x1c0] sm:$0xff]
      %v4196 = vld [vmem:[#allocation2 + $0x1c8] sm:$0xff]
      %v4197 = vld [vmem:[#allocation2 + $0x1d0] sm:$0xff]
      %v4198 = vld [vmem:[#allocation2 + $0x1d8] sm:$0xff]
      %v4199 = vld [vmem:[#allocation2 + $0x1e0] sm:$0xff]
      %v4200 = vld [vmem:[#allocation2 + $0x1e8] sm:$0xff]
      %v4201 = vld [vmem:[#allocation2 + $0x1f0] sm:$0xff]
      %v4202 = vld [vmem:[#allocation2 + $0x1f8] sm:$0xff]
      %v4203 = vld [vmem:[#allocation2 + $0x200] sm:$0xff]
      %v4204 = vld [vmem:[#allocation2 + $0x208] sm:$0xff]
      %v4205 = vld [vmem:[#allocation2 + $0x210] sm:$0xff]
      %v4206 = vld [vmem:[#allocation2 + $0x218] sm:$0xff]
      %v4207 = vld [vmem:[#allocation2 + $0x220] sm:$0xff]
      %v4208 = vld [vmem:[#allocation2 + $0x228] sm:$0xff]
      %v4209 = vld [vmem:[#allocation2 + $0x230] sm:$0xff]
      %v4210 = vld [vmem:[#allocation2 + $0x238] sm:$0xff]
      %v4211 = vld [vmem:[#allocation2 + $0x240] sm:$0xff]
      %v4212 = vld [vmem:[#allocation2 + $0x248] sm:$0xff]
      %v4213 = vld [vmem:[#allocation2 + $0x250] sm:$0xff]
      %v4214 = vld [vmem:[#allocation2 + $0x258] sm:$0xff]
      %v4215 = vld [vmem:[#allocation2 + $0x260] sm:$0xff]
      %v4216 = vld [vmem:[#allocation2 + $0x268] sm:$0xff]
      %v4217 = vld [vmem:[#allocation2 + $0x270] sm:$0xff]
      %v4218 = vld [vmem:[#allocation2 + $0x278] sm:$0xff]
      %v4219 = vld [vmem:[#allocation2 + $0x280] sm:$0xff]
      %v4220 = vld [vmem:[#allocation2 + $0x288] sm:$0xff]
      %v4221 = vld [vmem:[#allocation2 + $0x290] sm:$0xff]
      %v4222 = vld [vmem:[#allocation2 + $0x298] sm:$0xff]
      %v4223 = vld [vmem:[#allocation2 + $0x2a0] sm:$0xff]
      %v4224 = vld [vmem:[#allocation2 + $0x2a8] sm:$0xff]
      %v4225 = vld [vmem:[#allocation2 + $0x2b0] sm:$0xff]
      %v4226 = vld [vmem:[#allocation2 + $0x2b8] sm:$0xff]
      %v4227 = vld [vmem:[#allocation2 + $0x2c0] sm:$0xff]
      %v4228 = vld [vmem:[#allocation2 + $0x2c8] sm:$0xff]
      %v4229 = vld [vmem:[#allocation2 + $0x2d0] sm:$0xff]
      %v4230 = vld [vmem:[#allocation2 + $0x2d8] sm:$0xff]
      %v4231 = vld [vmem:[#allocation2 + $0x2e0] sm:$0xff]
      %v4232 = vld [vmem:[#allocation2 + $0x2e8] sm:$0xff]
      %v4233 = vld [vmem:[#allocation2 + $0x2f0] sm:$0xff]
      %v4234 = vld [vmem:[#allocation2 + $0x2f8] sm:$0xff]
      %v4235 = vld [vmem:[#allocation2 + $0x300] sm:$0xff]
      %v4236 = vld [vmem:[#allocation2 + $0x308] sm:$0xff]
      %v4237 = vld [vmem:[#allocation2 + $0x310] sm:$0xff]
      %v4238 = vld [vmem:[#allocation2 + $0x318] sm:$0xff]
      %v4239 = vld [vmem:[#allocation2 + $0x320] sm:$0xff]
      %v4240 = vld [vmem:[#allocation2 + $0x328] sm:$0xff]
      %v4241 = vld [vmem:[#allocation2 + $0x330] sm:$0xff]
      %v4242 = vld [vmem:[#allocation2 + $0x338] sm:$0xff]
      %v4243 = vld [vmem:[#allocation2 + $0x340] sm:$0xf]
      %v4244 = vld [vmem:[#allocation2 + $0x348] sm:$0xf]
      %v4245 = vld [vmem:[#allocation2 + $0x350] sm:$0xf]
      %v4246 = vld [vmem:[#allocation2 + $0x358] sm:$0xf]
      %v4247 = vld [vmem:[#allocation2 + $0x360] sm:$0xf]
      %v4248 = vld [vmem:[#allocation2 + $0x368] sm:$0xf]
      %v4249 = vld [vmem:[#allocation2 + $0x370] sm:$0xf]
      %v4250 = vld [vmem:[#allocation2 + $0x378] sm:$0xf]
      %v4251 = vld [vmem:[%s7] sm:$0xf]
      %4253 = vset.pattern.permute.xlu0 0
      %4254 = vperm.xlu0 %4253, %v4251
      %v4255 = vpop.permute.xlu0 %4254
      %v4258 = vsel %vm1665, %v4138, 0
      %v4261 = vsel %vm1669, %v4243, 0
      %v4264 = vsel %vm1669, %v4244, 0
      %v4267 = vsel %vm1669, %v4245, 0
      %v4270 = vsel %vm1669, %v4246, 0
      %v4273 = vsel %vm1669, %v4247, 0
      %v4276 = vsel %vm1669, %v4248, 0
      %v4279 = vsel %vm1669, %v4249, 0
      %v4282 = vsel %vm1669, %v4250, 0
      %4284 = vmatprep.subr.mxu0 %v4140
      %4285 = vmatpush1.msra.mxu0 %v4139
      %4286 = vmatprep.subr.mxu0 %v4148
      %4287 = vmatpush1.msra.mxu0 %v4147
      %4288 = vmatprep.subr.mxu0 %v4156
      %4289 = vmatpush1.msra.mxu0 %v4155
      %4290 = vmatprep.subr.mxu0 %v4164
      %4291 = vmatpush1.msra.mxu0 %v4163
      %4292 = vmatprep.subr.mxu0 %v4172
      %4293 = vmatpush1.msra.mxu0 %v4171
      %4294 = vmatprep.subr.mxu0 %v4180
      %4295 = vmatpush1.msra.mxu0 %v4179
      %4296 = vmatprep.subr.mxu0 %v4188
      %4297 = vmatpush1.msra.mxu0 %v4187
      %4298 = vmatprep.subr.mxu0 %v4196
      %4299 = vmatpush1.msra.mxu0 %v4195
      %4300 = vmatprep.subr.mxu0 %v4204
      %4301 = vmatpush1.msra.mxu0 %v4203
      %4302 = vmatprep.subr.mxu0 %v4212
      %4303 = vmatpush1.msra.mxu0 %v4211
      %4304 = vmatprep.subr.mxu0 %v4220
      %4305 = vmatpush1.msra.mxu0 %v4219
      %4306 = vmatprep.subr.mxu0 %v4228
      %4307 = vmatpush1.msra.mxu0 %v4227
      %4308 = vmatprep.subr.mxu0 %v4236
      %4309 = vmatpush1.msra.mxu0 %v4235
      %4310 = vmatprep.subr.mxu0 %v4264
      %4311 = vmatpush1.msra.mxu0 %v4261
      %4312 = vmatprep.subr.mxu0 0.0
      %4313 = vmatpush1.msra.mxu0 0.0
      %4314 = vmatprep.subr.mxu0 0.0
      %4315 = vmatpush1.msra.mxu0 0.0
      %4316 = vmatprep.subr.mxu0 0.0
      %4317 = vmatpush1.msra.mxu0 0.0
      %4318 = vmatprep.subr.mxu0 0.0
      %4319 = vmatpush1.msra.mxu0 0.0
      %4320 = vmatprep.subr.mxu0 0.0
      %4321 = vmatpush1.msra.mxu0 0.0
      %4322 = vmatprep.subr.mxu0 0.0
      %4323 = vmatpush1.msra.mxu0 0.0
      %4324 = vmatprep.subr.mxu0 0.0
      %4325 = vmatpush1.msra.mxu0 0.0
      %4326 = vmatprep.subr.mxu0 0.0
      %4327 = vmatpush1.msra.mxu0 0.0
      %4328 = vmatprep.subr.mxu0 0.0
      %4329 = vmatpush1.msra.mxu0 0.0
      %4330 = vmatprep.subr.mxu0 0.0
      %4331 = vmatpush1.msra.mxu0 0.0
      %4332 = vmatprep.subr.mxu0 0.0
      %4333 = vmatpush1.msra.mxu0 0.0
      %4334 = vmatprep.subr.mxu0 0.0
      %4335 = vmatpush1.msra.mxu0 0.0
      %4336 = vmatprep.subr.mxu0 0.0
      %4337 = vmatpush1.msra.mxu0 0.0
      %4338 = vmatprep.subr.mxu0 0.0
      %4339 = vmatpush1.msra.mxu0 0.0
      %4340 = vmatprep.subr.mxu0 0.0
      %4341 = vmatpush1.msra.mxu0 0.0
      %4342 = vmatprep.subr.mxu0 0.0
      %4343 = vmatpush1.msra.mxu0 0.0
      %4344 = vmatprep.subr.mxu0 0.0
      %4345 = vmatpush1.msra.mxu0 0.0
      %4346 = vmatprep.subr.mxu0 0.0
      %4347 = vmatpush1.msra.mxu0 0.0
      %4348 = vmatprep.mubr.f32.mxu0 0.0
      %4349 = vmatmul.mubr.f32.gmra.mrb[0].mxu0 %v4258
      %v4350 = vpop.f32.mrb[0].mxu0
      %v4351 = vadd.f32 %v4255, %v4350
      %v4352 = vpop.f32.mrb[0].mxu0
      %v4353 = vadd.f32 %v4255, %v4352
      %4354 = vdwg.mxu0
      %4355 = vmatprep.subr.mxu0 %v4142
      %4356 = vmatpush1.msra.mxu0 %v4141
      %4357 = vmatprep.subr.mxu0 %v4150
      %4358 = vmatpush1.msra.mxu0 %v4149
      %4359 = vmatprep.subr.mxu0 %v4158
      %4360 = vmatpush1.msra.mxu0 %v4157
      %4361 = vmatprep.subr.mxu0 %v4166
      %4362 = vmatpush1.msra.mxu0 %v4165
      %4363 = vmatprep.subr.mxu0 %v4174
      %4364 = vmatpush1.msra.mxu0 %v4173
      %4365 = vmatprep.subr.mxu0 %v4182
      %4366 = vmatpush1.msra.mxu0 %v4181
      %4367 = vmatprep.subr.mxu0 %v4190
      %4368 = vmatpush1.msra.mxu0 %v4189
      %4369 = vmatprep.subr.mxu0 %v4198
      %4370 = vmatpush1.msra.mxu0 %v4197
      %4371 = vmatprep.subr.mxu0 %v4206
      %4372 = vmatpush1.msra.mxu0 %v4205
      %4373 = vmatprep.subr.mxu0 %v4214
      %4374 = vmatpush1.msra.mxu0 %v4213
      %4375 = vmatprep.subr.mxu0 %v4222
      %4376 = vmatpush1.msra.mxu0 %v4221
      %4377 = vmatprep.subr.mxu0 %v4230
      %4378 = vmatpush1.msra.mxu0 %v4229
      %4379 = vmatprep.subr.mxu0 %v4238
      %4380 = vmatpush1.msra.mxu0 %v4237
      %4381 = vmatprep.subr.mxu0 %v4270
      %4382 = vmatpush1.msra.mxu0 %v4267
      %4383 = vmatprep.subr.mxu0 0.0
      %4384 = vmatpush1.msra.mxu0 0.0
      %4385 = vmatprep.subr.mxu0 0.0
      %4386 = vmatpush1.msra.mxu0 0.0
      %4387 = vmatprep.subr.mxu0 0.0
      %4388 = vmatpush1.msra.mxu0 0.0
      %4389 = vmatprep.subr.mxu0 0.0
      %4390 = vmatpush1.msra.mxu0 0.0
      %4391 = vmatprep.subr.mxu0 0.0
      %4392 = vmatpush1.msra.mxu0 0.0
      %4393 = vmatprep.subr.mxu0 0.0
      %4394 = vmatpush1.msra.mxu0 0.0
      %4395 = vmatprep.subr.mxu0 0.0
      %4396 = vmatpush1.msra.mxu0 0.0
      %4397 = vmatprep.subr.mxu0 0.0
      %4398 = vmatpush1.msra.mxu0 0.0
      %4399 = vmatprep.subr.mxu0 0.0
      %4400 = vmatpush1.msra.mxu0 0.0
      %4401 = vmatprep.subr.mxu0 0.0
      %4402 = vmatpush1.msra.mxu0 0.0
      %4403 = vmatprep.subr.mxu0 0.0
      %4404 = vmatpush1.msra.mxu0 0.0
      %4405 = vmatprep.subr.mxu0 0.0
      %4406 = vmatpush1.msra.mxu0 0.0
      %4407 = vmatprep.subr.mxu0 0.0
      %4408 = vmatpush1.msra.mxu0 0.0
      %4409 = vmatprep.subr.mxu0 0.0
      %4410 = vmatpush1.msra.mxu0 0.0
      %4411 = vmatprep.subr.mxu0 0.0
      %4412 = vmatpush1.msra.mxu0 0.0
      %4413 = vmatprep.subr.mxu0 0.0
      %4414 = vmatpush1.msra.mxu0 0.0
      %4415 = vmatprep.subr.mxu0 0.0
      %4416 = vmatpush1.msra.mxu0 0.0
      %4417 = vmatprep.subr.mxu0 0.0
      %4418 = vmatpush1.msra.mxu0 0.0
      %4419 = vmatprep.mubr.f32.mxu0 0.0
      %4420 = vmatmul.mubr.f32.gmra.mrb[0].mxu0 %v4258
      %v4421 = vpop.f32.mrb[0].mxu0
      %v4422 = vadd.f32 %v4255, %v4421
      %v4423 = vpop.f32.mrb[0].mxu0
      %v4424 = vadd.f32 %v4255, %v4423
      %4425 = vdwg.mxu0
      %4426 = vmatprep.subr.mxu0 %v4144
      %4427 = vmatpush1.msra.mxu0 %v4143
      %4428 = vmatprep.subr.mxu0 %v4152
      %4429 = vmatpush1.msra.mxu0 %v4151
      %4430 = vmatprep.subr.mxu0 %v4160
      %4431 = vmatpush1.msra.mxu0 %v4159
      %4432 = vmatprep.subr.mxu0 %v4168
      %4433 = vmatpush1.msra.mxu0 %v4167
      %4434 = vmatprep.subr.mxu0 %v4176
      %4435 = vmatpush1.msra.mxu0 %v4175
      %4436 = vmatprep.subr.mxu0 %v4184
      %4437 = vmatpush1.msra.mxu0 %v4183
      %4438 = vmatprep.subr.mxu0 %v4192
      %4439 = vmatpush1.msra.mxu0 %v4191
      %4440 = vmatprep.subr.mxu0 %v4200
      %4441 = vmatpush1.msra.mxu0 %v4199
      %4442 = vmatprep.subr.mxu0 %v4208
      %4443 = vmatpush1.msra.mxu0 %v4207
      %4444 = vmatprep.subr.mxu0 %v4216
      %4445 = vmatpush1.msra.mxu0 %v4215
      %4446 = vmatprep.subr.mxu0 %v4224
      %4447 = vmatpush1.msra.mxu0 %v4223
      %4448 = vmatprep.subr.mxu0 %v4232
      %4449 = vmatpush1.msra.mxu0 %v4231
      %4450 = vmatprep.subr.mxu0 %v4240
      %4451 = vmatpush1.msra.mxu0 %v4239
      %4452 = vmatprep.subr.mxu0 %v4276
      %4453 = vmatpush1.msra.mxu0 %v4273
      %4454 = vmatprep.subr.mxu0 0.0
      %4455 = vmatpush1.msra.mxu0 0.0
      %4456 = vmatprep.subr.mxu0 0.0
      %4457 = vmatpush1.msra.mxu0 0.0
      %4458 = vmatprep.subr.mxu0 0.0
      %4459 = vmatpush1.msra.mxu0 0.0
      %4460 = vmatprep.subr.mxu0 0.0
      %4461 = vmatpush1.msra.mxu0 0.0
      %4462 = vmatprep.subr.mxu0 0.0
      %4463 = vmatpush1.msra.mxu0 0.0
      %4464 = vmatprep.subr.mxu0 0.0
      %4465 = vmatpush1.msra.mxu0 0.0
      %4466 = vmatprep.subr.mxu0 0.0
      %4467 = vmatpush1.msra.mxu0 0.0
      %4468 = vmatprep.subr.mxu0 0.0
      %4469 = vmatpush1.msra.mxu0 0.0
      %4470 = vmatprep.subr.mxu0 0.0
      %4471 = vmatpush1.msra.mxu0 0.0
      %4472 = vmatprep.subr.mxu0 0.0
      %4473 = vmatpush1.msra.mxu0 0.0
      %4474 = vmatprep.subr.mxu0 0.0
      %4475 = vmatpush1.msra.mxu0 0.0
      %4476 = vmatprep.subr.mxu0 0.0
      %4477 = vmatpush1.msra.mxu0 0.0
      %4478 = vmatprep.subr.mxu0 0.0
      %4479 = vmatpush1.msra.mxu0 0.0
      %4480 = vmatprep.subr.mxu0 0.0
      %4481 = vmatpush1.msra.mxu0 0.0
      %4482 = vmatprep.subr.mxu0 0.0
      %4483 = vmatpush1.msra.mxu0 0.0
      %4484 = vmatprep.subr.mxu0 0.0
      %4485 = vmatpush1.msra.mxu0 0.0
      %4486 = vmatprep.subr.mxu0 0.0
      %4487 = vmatpush1.msra.mxu0 0.0
      %4488 = vmatprep.subr.mxu0 0.0
      %4489 = vmatpush1.msra.mxu0 0.0
      %4490 = vmatprep.mubr.f32.mxu0 0.0
      %4491 = vmatmul.mubr.f32.gmra.mrb[0].mxu0 %v4258
      %v4492 = vpop.f32.mrb[0].mxu0
      %v4493 = vadd.f32 %v4255, %v4492
      %v4494 = vpop.f32.mrb[0].mxu0
      %v4495 = vadd.f32 %v4255, %v4494
      %4496 = vdwg.mxu0
      %4497 = vmatprep.subr.mxu0 %v4146
      %4498 = vmatpush1.msra.mxu0 %v4145
      %4499 = vmatprep.subr.mxu0 %v4154
      %4500 = vmatpush1.msra.mxu0 %v4153
      %4501 = vmatprep.subr.mxu0 %v4162
      %4502 = vmatpush1.msra.mxu0 %v4161
      %4503 = vmatprep.subr.mxu0 %v4170
      %4504 = vmatpush1.msra.mxu0 %v4169
      %4505 = vmatprep.subr.mxu0 %v4178
      %4506 = vmatpush1.msra.mxu0 %v4177
      %4507 = vmatprep.subr.mxu0 %v4186
      %4508 = vmatpush1.msra.mxu0 %v4185
      %4509 = vmatprep.subr.mxu0 %v4194
      %4510 = vmatpush1.msra.mxu0 %v4193
      %4511 = vmatprep.subr.mxu0 %v4202
      %4512 = vmatpush1.msra.mxu0 %v4201
      %4513 = vmatprep.subr.mxu0 %v4210
      %4514 = vmatpush1.msra.mxu0 %v4209
      %4515 = vmatprep.subr.mxu0 %v4218
      %4516 = vmatpush1.msra.mxu0 %v4217
      %4517 = vmatprep.subr.mxu0 %v4226
      %4518 = vmatpush1.msra.mxu0 %v4225
      %4519 = vmatprep.subr.mxu0 %v4234
      %4520 = vmatpush1.msra.mxu0 %v4233
      %4521 = vmatprep.subr.mxu0 %v4242
      %4522 = vmatpush1.msra.mxu0 %v4241
      %4523 = vmatprep.subr.mxu0 %v4282
      %4524 = vmatpush1.msra.mxu0 %v4279
      %4525 = vmatprep.subr.mxu0 0.0
      %4526 = vmatpush1.msra.mxu0 0.0
      %4527 = vmatprep.subr.mxu0 0.0
      %4528 = vmatpush1.msra.mxu0 0.0
      %4529 = vmatprep.subr.mxu0 0.0
      %4530 = vmatpush1.msra.mxu0 0.0
      %4531 = vmatprep.subr.mxu0 0.0
      %4532 = vmatpush1.msra.mxu0 0.0
      %4533 = vmatprep.subr.mxu0 0.0
      %4534 = vmatpush1.msra.mxu0 0.0
      %4535 = vmatprep.subr.mxu0 0.0
      %4536 = vmatpush1.msra.mxu0 0.0
      %4537 = vmatprep.subr.mxu0 0.0
      %4538 = vmatpush1.msra.mxu0 0.0
      %4539 = vmatprep.subr.mxu0 0.0
      %4540 = vmatpush1.msra.mxu0 0.0
      %4541 = vmatprep.subr.mxu0 0.0
      %4542 = vmatpush1.msra.mxu0 0.0
      %4543 = vmatprep.subr.mxu0 0.0
      %4544 = vmatpush1.msra.mxu0 0.0
      %4545 = vmatprep.subr.mxu0 0.0
      %4546 = vmatpush1.msra.mxu0 0.0
      %4547 = vmatprep.subr.mxu0 0.0
      %4548 = vmatpush1.msra.mxu0 0.0
      %4549 = vmatprep.subr.mxu0 0.0
      %4550 = vmatpush1.msra.mxu0 0.0
      %4551 = vmatprep.subr.mxu0 0.0
      %4552 = vmatpush1.msra.mxu0 0.0
      %4553 = vmatprep.subr.mxu0 0.0
      %4554 = vmatpush1.msra.mxu0 0.0
      %4555 = vmatprep.subr.mxu0 0.0
      %4556 = vmatpush1.msra.mxu0 0.0
      %4557 = vmatprep.subr.mxu0 0.0
      %4558 = vmatpush1.msra.mxu0 0.0
      %4559 = vmatprep.subr.mxu0 0.0
      %4560 = vmatpush1.msra.mxu0 0.0
      %4561 = vmatprep.mubr.f32.mxu0 0.0
      %4562 = vmatmul.mubr.f32.gmra.mrb[0].mxu0 %v4258
      %v4563 = vpop.f32.mrb[0].mxu0
      %v4564 = vadd.f32 %v4255, %v4563
      %v4565 = vpop.f32.mrb[0].mxu0
      %v4566 = vadd.f32 %v4255, %v4565
      %4567 = vdwg.mxu0
      %v4568 = vld [vmem:[%s10] sm:$0xf]
      %v4569 = vld [vmem:[%s11] sm:$0xf]
      %4571 = vset.pattern.permute.xlu0 0
      %4572 = vperm.xlu0 %4571, %v4569
      %v4573 = vpop.permute.xlu0 %4572
      %vm4575 = vcmask 31744
      %v4577 = vsel %vm4575, %v4568, 0
      %v4580 = vsel %vm1669, %v4351, 0
      %v4583 = vsel %vm1669, %v4353, 0
      %v4586 = vsel %vm1669, %v4422, 0
      %v4589 = vsel %vm1669, %v4424, 0
      %v4592 = vsel %vm1669, %v4493, 0
      %v4595 = vsel %vm1669, %v4495, 0
      %v4598 = vsel %vm1669, %v4564, 0
      %v4601 = vsel %vm1669, %v4566, 0
      %4603 = vmatprep.subr.mxu0 %v4583
      %4604 = vmatpush1.msra.mxu0 %v4580
      %4605 = vmatprep.subr.mxu0 0.0
      %4606 = vmatpush1.msra.mxu0 0.0
      %4607 = vmatprep.subr.mxu0 0.0
      %4608 = vmatpush1.msra.mxu0 0.0
      %4609 = vmatprep.subr.mxu0 0.0
      %4610 = vmatpush1.msra.mxu0 0.0
      %4611 = vmatprep.subr.mxu0 0.0
      %4612 = vmatpush1.msra.mxu0 0.0
      %4613 = vmatprep.subr.mxu0 0.0
      %4614 = vmatpush1.msra.mxu0 0.0
      %4615 = vmatprep.subr.mxu0 0.0
      %4616 = vmatpush1.msra.mxu0 0.0
      %4617 = vmatprep.subr.mxu0 0.0
      %4618 = vmatpush1.msra.mxu0 0.0
      %4619 = vmatprep.subr.mxu0 0.0
      %4620 = vmatpush1.msra.mxu0 0.0
      %4621 = vmatprep.subr.mxu0 0.0
      %4622 = vmatpush1.msra.mxu0 0.0
      %4623 = vmatprep.subr.mxu0 0.0
      %4624 = vmatpush1.msra.mxu0 0.0
      %4625 = vmatprep.subr.mxu0 0.0
      %4626 = vmatpush1.msra.mxu0 0.0
      %4627 = vmatprep.subr.mxu0 0.0
      %4628 = vmatpush1.msra.mxu0 0.0
      %4629 = vmatprep.subr.mxu0 0.0
      %4630 = vmatpush1.msra.mxu0 0.0
      %4631 = vmatprep.subr.mxu0 0.0
      %4632 = vmatpush1.msra.mxu0 0.0
      %4633 = vmatprep.subr.mxu0 0.0
      %4634 = vmatpush1.msra.mxu0 0.0
      %4635 = vmatprep.subr.mxu0 0.0
      %4636 = vmatpush1.msra.mxu0 0.0
      %4637 = vmatprep.subr.mxu0 0.0
      %4638 = vmatpush1.msra.mxu0 0.0
      %4639 = vmatprep.subr.mxu0 0.0
      %4640 = vmatpush1.msra.mxu0 0.0
      %4641 = vmatprep.subr.mxu0 0.0
      %4642 = vmatpush1.msra.mxu0 0.0
      %4643 = vmatprep.subr.mxu0 0.0
      %4644 = vmatpush1.msra.mxu0 0.0
      %4645 = vmatprep.subr.mxu0 0.0
      %4646 = vmatpush1.msra.mxu0 0.0
      %4647 = vmatprep.subr.mxu0 0.0
      %4648 = vmatpush1.msra.mxu0 0.0
      %4649 = vmatprep.subr.mxu0 0.0
      %4650 = vmatpush1.msra.mxu0 0.0
      %4651 = vmatprep.subr.mxu0 0.0
      %4652 = vmatpush1.msra.mxu0 0.0
      %4653 = vmatprep.subr.mxu0 0.0
      %4654 = vmatpush1.msra.mxu0 0.0
      %4655 = vmatprep.subr.mxu0 0.0
      %4656 = vmatpush1.msra.mxu0 0.0
      %4657 = vmatprep.subr.mxu0 0.0
      %4658 = vmatpush1.msra.mxu0 0.0
      %4659 = vmatprep.subr.mxu0 0.0
      %4660 = vmatpush1.msra.mxu0 0.0
      %4661 = vmatprep.subr.mxu0 0.0
      %4662 = vmatpush1.msra.mxu0 0.0
      %4663 = vmatprep.subr.mxu0 0.0
      %4664 = vmatpush1.msra.mxu0 0.0
      %4665 = vmatprep.subr.mxu0 0.0
      %4666 = vmatpush1.msra.mxu0 0.0
      %4667 = vmatprep.mubr.f32.mxu0 0.0
      %4668 = vmatmul.mubr.f32.gmra.mrb[0].mxu0 %v4577
      %v4669 = vpop.f32.mrb[0].mxu0
      %v4670 = vadd.f32 %v4573, %v4669
      %v4671 = vpop.f32.mrb[0].mxu0
      %v4672 = vadd.f32 %v4573, %v4671
      %4673 = vdwg.mxu0
      %4674 = vmatprep.subr.mxu0 %v4589
      %4675 = vmatpush1.msra.mxu0 %v4586
      %4676 = vmatprep.subr.mxu0 0.0
      %4677 = vmatpush1.msra.mxu0 0.0
      %4678 = vmatprep.subr.mxu0 0.0
      %4679 = vmatpush1.msra.mxu0 0.0
      %4680 = vmatprep.subr.mxu0 0.0
      %4681 = vmatpush1.msra.mxu0 0.0
      %4682 = vmatprep.subr.mxu0 0.0
      %4683 = vmatpush1.msra.mxu0 0.0
      %4684 = vmatprep.subr.mxu0 0.0
      %4685 = vmatpush1.msra.mxu0 0.0
      %4686 = vmatprep.subr.mxu0 0.0
      %4687 = vmatpush1.msra.mxu0 0.0
      %4688 = vmatprep.subr.mxu0 0.0
      %4689 = vmatpush1.msra.mxu0 0.0
      %4690 = vmatprep.subr.mxu0 0.0
      %4691 = vmatpush1.msra.mxu0 0.0
      %4692 = vmatprep.subr.mxu0 0.0
      %4693 = vmatpush1.msra.mxu0 0.0
      %4694 = vmatprep.subr.mxu0 0.0
      %4695 = vmatpush1.msra.mxu0 0.0
      %4696 = vmatprep.subr.mxu0 0.0
      %4697 = vmatpush1.msra.mxu0 0.0
      %4698 = vmatprep.subr.mxu0 0.0
      %4699 = vmatpush1.msra.mxu0 0.0
      %4700 = vmatprep.subr.mxu0 0.0
      %4701 = vmatpush1.msra.mxu0 0.0
      %4702 = vmatprep.subr.mxu0 0.0
      %4703 = vmatpush1.msra.mxu0 0.0
      %4704 = vmatprep.subr.mxu0 0.0
      %4705 = vmatpush1.msra.mxu0 0.0
      %4706 = vmatprep.subr.mxu0 0.0
      %4707 = vmatpush1.msra.mxu0 0.0
      %4708 = vmatprep.subr.mxu0 0.0
      %4709 = vmatpush1.msra.mxu0 0.0
      %4710 = vmatprep.subr.mxu0 0.0
      %4711 = vmatpush1.msra.mxu0 0.0
      %4712 = vmatprep.subr.mxu0 0.0
      %4713 = vmatpush1.msra.mxu0 0.0
      %4714 = vmatprep.subr.mxu0 0.0
      %4715 = vmatpush1.msra.mxu0 0.0
      %4716 = vmatprep.subr.mxu0 0.0
      %4717 = vmatpush1.msra.mxu0 0.0
      %4718 = vmatprep.subr.mxu0 0.0
      %4719 = vmatpush1.msra.mxu0 0.0
      %4720 = vmatprep.subr.mxu0 0.0
      %4721 = vmatpush1.msra.mxu0 0.0
      %4722 = vmatprep.subr.mxu0 0.0
      %4723 = vmatpush1.msra.mxu0 0.0
      %4724 = vmatprep.subr.mxu0 0.0
      %4725 = vmatpush1.msra.mxu0 0.0
      %4726 = vmatprep.subr.mxu0 0.0
      %4727 = vmatpush1.msra.mxu0 0.0
      %4728 = vmatprep.subr.mxu0 0.0
      %4729 = vmatpush1.msra.mxu0 0.0
      %4730 = vmatprep.subr.mxu0 0.0
      %4731 = vmatpush1.msra.mxu0 0.0
      %4732 = vmatprep.subr.mxu0 0.0
      %4733 = vmatpush1.msra.mxu0 0.0
      %4734 = vmatprep.subr.mxu0 0.0
      %4735 = vmatpush1.msra.mxu0 0.0
      %4736 = vmatprep.subr.mxu0 0.0
      %4737 = vmatpush1.msra.mxu0 0.0
      %4738 = vmatprep.mubr.f32.mxu0 0.0
      %4739 = vmatmul.mubr.f32.gmra.mrb[0].mxu0 %v4577
      %v4740 = vpop.f32.mrb[0].mxu0
      %v4741 = vadd.f32 %v4573, %v4740
      %v4742 = vpop.f32.mrb[0].mxu0
      %v4743 = vadd.f32 %v4573, %v4742
      %4744 = vdwg.mxu0
      %4745 = vmatprep.subr.mxu0 %v4595
      %4746 = vmatpush1.msra.mxu0 %v4592
      %4747 = vmatprep.subr.mxu0 0.0
      %4748 = vmatpush1.msra.mxu0 0.0
      %4749 = vmatprep.subr.mxu0 0.0
      %4750 = vmatpush1.msra.mxu0 0.0
      %4751 = vmatprep.subr.mxu0 0.0
      %4752 = vmatpush1.msra.mxu0 0.0
      %4753 = vmatprep.subr.mxu0 0.0
      %4754 = vmatpush1.msra.mxu0 0.0
      %4755 = vmatprep.subr.mxu0 0.0
      %4756 = vmatpush1.msra.mxu0 0.0
      %4757 = vmatprep.subr.mxu0 0.0
      %4758 = vmatpush1.msra.mxu0 0.0
      %4759 = vmatprep.subr.mxu0 0.0
      %4760 = vmatpush1.msra.mxu0 0.0
      %4761 = vmatprep.subr.mxu0 0.0
      %4762 = vmatpush1.msra.mxu0 0.0
      %4763 = vmatprep.subr.mxu0 0.0
      %4764 = vmatpush1.msra.mxu0 0.0
      %4765 = vmatprep.subr.mxu0 0.0
      %4766 = vmatpush1.msra.mxu0 0.0
      %4767 = vmatprep.subr.mxu0 0.0
      %4768 = vmatpush1.msra.mxu0 0.0
      %4769 = vmatprep.subr.mxu0 0.0
      %4770 = vmatpush1.msra.mxu0 0.0
      %4771 = vmatprep.subr.mxu0 0.0
      %4772 = vmatpush1.msra.mxu0 0.0
      %4773 = vmatprep.subr.mxu0 0.0
      %4774 = vmatpush1.msra.mxu0 0.0
      %4775 = vmatprep.subr.mxu0 0.0
      %4776 = vmatpush1.msra.mxu0 0.0
      %4777 = vmatprep.subr.mxu0 0.0
      %4778 = vmatpush1.msra.mxu0 0.0
      %4779 = vmatprep.subr.mxu0 0.0
      %4780 = vmatpush1.msra.mxu0 0.0
      %4781 = vmatprep.subr.mxu0 0.0
      %4782 = vmatpush1.msra.mxu0 0.0
      %4783 = vmatprep.subr.mxu0 0.0
      %4784 = vmatpush1.msra.mxu0 0.0
      %4785 = vmatprep.subr.mxu0 0.0
      %4786 = vmatpush1.msra.mxu0 0.0
      %4787 = vmatprep.subr.mxu0 0.0
      %4788 = vmatpush1.msra.mxu0 0.0
      %4789 = vmatprep.subr.mxu0 0.0
      %4790 = vmatpush1.msra.mxu0 0.0
      %4791 = vmatprep.subr.mxu0 0.0
      %4792 = vmatpush1.msra.mxu0 0.0
      %4793 = vmatprep.subr.mxu0 0.0
      %4794 = vmatpush1.msra.mxu0 0.0
      %4795 = vmatprep.subr.mxu0 0.0
      %4796 = vmatpush1.msra.mxu0 0.0
      %4797 = vmatprep.subr.mxu0 0.0
      %4798 = vmatpush1.msra.mxu0 0.0
      %4799 = vmatprep.subr.mxu0 0.0
      %4800 = vmatpush1.msra.mxu0 0.0
      %4801 = vmatprep.subr.mxu0 0.0
      %4802 = vmatpush1.msra.mxu0 0.0
      %4803 = vmatprep.subr.mxu0 0.0
      %4804 = vmatpush1.msra.mxu0 0.0
      %4805 = vmatprep.subr.mxu0 0.0
      %4806 = vmatpush1.msra.mxu0 0.0
      %4807 = vmatprep.subr.mxu0 0.0
      %4808 = vmatpush1.msra.mxu0 0.0
      %4809 = vmatprep.mubr.f32.mxu0 0.0
      %4810 = vmatmul.mubr.f32.gmra.mrb[0].mxu0 %v4577
      %v4811 = vpop.f32.mrb[0].mxu0
      %v4812 = vadd.f32 %v4573, %v4811
      %v4813 = vpop.f32.mrb[0].mxu0
      %v4814 = vadd.f32 %v4573, %v4813
      %4815 = vdwg.mxu0
      %4816 = vmatprep.subr.mxu0 %v4601
      %4817 = vmatpush1.msra.mxu0 %v4598
      %4818 = vmatprep.subr.mxu0 0.0
      %4819 = vmatpush1.msra.mxu0 0.0
      %4820 = vmatprep.subr.mxu0 0.0
      %4821 = vmatpush1.msra.mxu0 0.0
      %4822 = vmatprep.subr.mxu0 0.0
      %4823 = vmatpush1.msra.mxu0 0.0
      %4824 = vmatprep.subr.mxu0 0.0
      %4825 = vmatpush1.msra.mxu0 0.0
      %4826 = vmatprep.subr.mxu0 0.0
      %4827 = vmatpush1.msra.mxu0 0.0
      %4828 = vmatprep.subr.mxu0 0.0
      %4829 = vmatpush1.msra.mxu0 0.0
      %4830 = vmatprep.subr.mxu0 0.0
      %4831 = vmatpush1.msra.mxu0 0.0
      %4832 = vmatprep.subr.mxu0 0.0
      %4833 = vmatpush1.msra.mxu0 0.0
      %4834 = vmatprep.subr.mxu0 0.0
      %4835 = vmatpush1.msra.mxu0 0.0
      %4836 = vmatprep.subr.mxu0 0.0
      %4837 = vmatpush1.msra.mxu0 0.0
      %4838 = vmatprep.subr.mxu0 0.0
      %4839 = vmatpush1.msra.mxu0 0.0
      %4840 = vmatprep.subr.mxu0 0.0
      %4841 = vmatpush1.msra.mxu0 0.0
      %4842 = vmatprep.subr.mxu0 0.0
      %4843 = vmatpush1.msra.mxu0 0.0
      %4844 = vmatprep.subr.mxu0 0.0
      %4845 = vmatpush1.msra.mxu0 0.0
      %4846 = vmatprep.subr.mxu0 0.0
      %4847 = vmatpush1.msra.mxu0 0.0
      %4848 = vmatprep.subr.mxu0 0.0
      %4849 = vmatpush1.msra.mxu0 0.0
      %4850 = vmatprep.subr.mxu0 0.0
      %4851 = vmatpush1.msra.mxu0 0.0
      %4852 = vmatprep.subr.mxu0 0.0
      %4853 = vmatpush1.msra.mxu0 0.0
      %4854 = vmatprep.subr.mxu0 0.0
      %4855 = vmatpush1.msra.mxu0 0.0
      %4856 = vmatprep.subr.mxu0 0.0
      %4857 = vmatpush1.msra.mxu0 0.0
      %4858 = vmatprep.subr.mxu0 0.0
      %4859 = vmatpush1.msra.mxu0 0.0
      %4860 = vmatprep.subr.mxu0 0.0
      %4861 = vmatpush1.msra.mxu0 0.0
      %4862 = vmatprep.subr.mxu0 0.0
      %4863 = vmatpush1.msra.mxu0 0.0
      %4864 = vmatprep.subr.mxu0 0.0
      %4865 = vmatpush1.msra.mxu0 0.0
      %4866 = vmatprep.subr.mxu0 0.0
      %4867 = vmatpush1.msra.mxu0 0.0
      %4868 = vmatprep.subr.mxu0 0.0
      %4869 = vmatpush1.msra.mxu0 0.0
      %4870 = vmatprep.subr.mxu0 0.0
      %4871 = vmatpush1.msra.mxu0 0.0
      %4872 = vmatprep.subr.mxu0 0.0
      %4873 = vmatpush1.msra.mxu0 0.0
      %4874 = vmatprep.subr.mxu0 0.0
      %4875 = vmatpush1.msra.mxu0 0.0
      %4876 = vmatprep.subr.mxu0 0.0
      %4877 = vmatpush1.msra.mxu0 0.0
      %4878 = vmatprep.subr.mxu0 0.0
      %4879 = vmatpush1.msra.mxu0 0.0
      %4880 = vmatprep.mubr.f32.mxu0 0.0
      %4881 = vmatmul.mubr.f32.gmra.mrb[0].mxu0 %v4577
      %v4882 = vpop.f32.mrb[0].mxu0
      %v4883 = vadd.f32 %v4573, %v4882
      %v4884 = vpop.f32.mrb[0].mxu0
      %v4885 = vadd.f32 %v4573, %v4884
      %4886 = vdwg.mxu0
      %v4887 = vmax.f32 %v4670, 0.0
      %v4888 = vmax.f32 %v4672, 0.0
      %v4889 = vmax.f32 %v4741, 0.0
      %v4890 = vmax.f32 %v4743, 0.0
      %v4891 = vmax.f32 %v4812, 0.0
      %v4892 = vmax.f32 %v4814, 0.0
      %v4893 = vmax.f32 %v4883, 0.0
      %v4894 = vmax.f32 %v4885, 0.0
      %4895 = vrot.lane.b32.xlu0 %v4493, 109
      %v4896 = vpop.permute.xlu0 %4895
      %4897 = vrot.lane.b32.xlu0 %v4495, 109
      %v4898 = vpop.permute.xlu0 %4897
      %4899 = vrot.lane.b32.xlu0 %v4564, 109
      %v4900 = vpop.permute.xlu0 %4899
      %4901 = vrot.lane.b32.xlu0 %v4566, 109
      %v4902 = vpop.permute.xlu0 %4901
      %vm4903 = vcmp.lt.s32.totalorder %v431, 109
      %v4904 = vsel %vm4903, %v4900, %v4902
      %v4905 = vsel %vm4903, %v4898, %v4900
      %v4906 = vsel %vm4903, %v4896, %v4898
      %v4907 = vsel %vm4903, %v4902, %v4896
      %v4908 = vld [vmem:[%s3] ss:$8 sm:$0xf]
      %v4910 = vlaneseq
      %v4911 = vshrl.u32 %v4910, 7
      %v4912 = vsub.s32 0, %v4911
      %v4913 = vrot.slane %v4908, %v4912
      %v4914 = vlaneseq
      %v4915 = vshrl.u32 %v4914, 7
      %v4916 = vsub.s32 1, %v4915
      %v4917 = vrot.slane %v4908, %v4916
      %v4918 = vlaneseq
      %v4919 = vshrl.u32 %v4918, 7
      %v4920 = vsub.s32 2, %v4919
      %v4921 = vrot.slane %v4908, %v4920
      %v4922 = vlaneseq
      %v4923 = vshrl.u32 %v4922, 7
      %v4924 = vsub.s32 3, %v4923
      %v4925 = vrot.slane %v4908, %v4924
      %v4930 = vmul.f32 %v4905, %v4913
      %v4931 = vmul.f32 %v4904, %v4917
      %v4932 = vmul.f32 %v4907, %v4921
      %v4933 = vmul.f32 %v4906, %v4925
      %4934 = vst [vmem:[#allocation2] sm:$0xf] %v4930
      %4935 = vst [vmem:[#allocation2 + $0x8] sm:$0xf] %v4931
      %4936 = vst [vmem:[#allocation2 + $0x10] sm:$0xf] %v4932
      %4937 = vst [vmem:[#allocation2 + $0x18] sm:$0xf] %v4933
      %4938 = vrot.lane.b32.xlu0 %v4493, 104
      %v4939 = vpop.permute.xlu0 %4938
      %4940 = vrot.lane.b32.xlu0 %v4495, 104
      %v4941 = vpop.permute.xlu0 %4940
      %4942 = vrot.lane.b32.xlu0 %v4564, 104
      %v4943 = vpop.permute.xlu0 %4942
      %4944 = vrot.lane.b32.xlu0 %v4566, 104
      %v4945 = vpop.permute.xlu0 %4944
      %v4946 = vsel %vm3313, %v4943, %v4945
      %v4947 = vsel %vm3313, %v4941, %v4943
      %v4948 = vsel %vm3313, %v4939, %v4941
      %v4949 = vsel %vm3313, %v4945, %v4939
      %s4950 = scalar_lea.vmem %s3, 1
      %v4951 = vld [vmem:[%s4950] ss:$8 sm:$0xf]
      %v4953 = vlaneseq
      %v4954 = vshrl.u32 %v4953, 7
      %v4955 = vsub.s32 0, %v4954
      %v4956 = vrot.slane %v4951, %v4955
      %v4957 = vlaneseq
      %v4958 = vshrl.u32 %v4957, 7
      %v4959 = vsub.s32 1, %v4958
      %v4960 = vrot.slane %v4951, %v4959
      %v4961 = vlaneseq
      %v4962 = vshrl.u32 %v4961, 7
      %v4963 = vsub.s32 2, %v4962
      %v4964 = vrot.slane %v4951, %v4963
      %v4965 = vlaneseq
      %v4966 = vshrl.u32 %v4965, 7
      %v4967 = vsub.s32 3, %v4966
      %v4968 = vrot.slane %v4951, %v4967
      %v4973 = vmul.f32 %v4947, %v4956
      %v4974 = vmul.f32 %v4946, %v4960
      %v4975 = vmul.f32 %v4949, %v4964
      %v4976 = vmul.f32 %v4948, %v4968
      %v4981 = vrot.slane %v4973, 4
      %v4982 = vrot.slane %v4974, 4
      %v4983 = vrot.slane %v4975, 4
      %v4984 = vrot.slane %v4976, 4
      %4989 = vst [vmem:[#allocation2] sm:$0xf0] %v4981
      %4990 = vst [vmem:[#allocation2 + $0x8] sm:$0xf0] %v4982
      %4991 = vst [vmem:[#allocation2 + $0x10] sm:$0xf0] %v4983
      %4992 = vst [vmem:[#allocation2 + $0x18] sm:$0xf0] %v4984
      %4993 = vrot.lane.b32.xlu0 %v4493, 99
      %v4994 = vpop.permute.xlu0 %4993
      %4995 = vrot.lane.b32.xlu0 %v4495, 99
      %v4996 = vpop.permute.xlu0 %4995
      %4997 = vrot.lane.b32.xlu0 %v4564, 99
      %v4998 = vpop.permute.xlu0 %4997
      %4999 = vrot.lane.b32.xlu0 %v4566, 99
      %v5000 = vpop.permute.xlu0 %4999
      %vm5001 = vcmp.lt.s32.totalorder %v431, 99
      %v5002 = vsel %vm5001, %v4998, %v5000
      %v5003 = vsel %vm5001, %v4996, %v4998
      %v5004 = vsel %vm5001, %v4994, %v4996
      %v5005 = vsel %vm5001, %v5000, %v4994
      %s5006 = scalar_lea.vmem %s3, 2
      %v5007 = vld [vmem:[%s5006] ss:$8 sm:$0xf]
      %v5009 = vlaneseq
      %v5010 = vshrl.u32 %v5009, 7
      %v5011 = vsub.s32 0, %v5010
      %v5012 = vrot.slane %v5007, %v5011
      %v5013 = vlaneseq
      %v5014 = vshrl.u32 %v5013, 7
      %v5015 = vsub.s32 1, %v5014
      %v5016 = vrot.slane %v5007, %v5015
      %v5017 = vlaneseq
      %v5018 = vshrl.u32 %v5017, 7
      %v5019 = vsub.s32 2, %v5018
      %v5020 = vrot.slane %v5007, %v5019
      %v5021 = vlaneseq
      %v5022 = vshrl.u32 %v5021, 7
      %v5023 = vsub.s32 3, %v5022
      %v5024 = vrot.slane %v5007, %v5023
      %v5029 = vmul.f32 %v5003, %v5012
      %v5030 = vmul.f32 %v5002, %v5016
      %v5031 = vmul.f32 %v5005, %v5020
      %v5032 = vmul.f32 %v5004, %v5024
      %5033 = vst [vmem:[#allocation2 + $0x40] sm:$0xf] %v5029
      %5034 = vst [vmem:[#allocation2 + $0x48] sm:$0xf] %v5030
      %5035 = vst [vmem:[#allocation2 + $0x50] sm:$0xf] %v5031
      %5036 = vst [vmem:[#allocation2 + $0x58] sm:$0xf] %v5032
      %5037 = vrot.lane.b32.xlu0 %v4493, 69
      %v5038 = vpop.permute.xlu0 %5037
      %5039 = vrot.lane.b32.xlu0 %v4495, 69
      %v5040 = vpop.permute.xlu0 %5039
      %5041 = vrot.lane.b32.xlu0 %v4564, 69
      %v5042 = vpop.permute.xlu0 %5041
      %5043 = vrot.lane.b32.xlu0 %v4566, 69
      %v5044 = vpop.permute.xlu0 %5043
      %vm5045 = vcmp.lt.s32.totalorder %v431, 69
      %v5046 = vsel %vm5045, %v5042, %v5044
      %v5047 = vsel %vm5045, %v5040, %v5042
      %v5048 = vsel %vm5045, %v5038, %v5040
      %v5049 = vsel %vm5045, %v5044, %v5038
      %s5050 = scalar_lea.vmem %s3, 3
      %v5051 = vld [vmem:[%s5050] ss:$8 sm:$0xf]
      %v5053 = vlaneseq
      %v5054 = vshrl.u32 %v5053, 7
      %v5055 = vsub.s32 0, %v5054
      %v5056 = vrot.slane %v5051, %v5055
      %v5057 = vlaneseq
      %v5058 = vshrl.u32 %v5057, 7
      %v5059 = vsub.s32 1, %v5058
      %v5060 = vrot.slane %v5051, %v5059
      %v5061 = vlaneseq
      %v5062 = vshrl.u32 %v5061, 7
      %v5063 = vsub.s32 2, %v5062
      %v5064 = vrot.slane %v5051, %v5063
      %v5065 = vlaneseq
      %v5066 = vshrl.u32 %v5065, 7
      %v5067 = vsub.s32 3, %v5066
      %v5068 = vrot.slane %v5051, %v5067
      %v5073 = vmul.f32 %v5047, %v5056
      %v5074 = vmul.f32 %v5046, %v5060
      %v5075 = vmul.f32 %v5049, %v5064
      %v5076 = vmul.f32 %v5048, %v5068
      %v5081 = vrot.slane %v5073, 4
      %v5082 = vrot.slane %v5074, 4
      %v5083 = vrot.slane %v5075, 4
      %v5084 = vrot.slane %v5076, 4
      %5089 = vst [vmem:[#allocation2 + $0x40] sm:$0xf0] %v5081
      %5090 = vst [vmem:[#allocation2 + $0x48] sm:$0xf0] %v5082
      %5091 = vst [vmem:[#allocation2 + $0x50] sm:$0xf0] %v5083
      %5092 = vst [vmem:[#allocation2 + $0x58] sm:$0xf0] %v5084
      %5093 = vrot.lane.b32.xlu0 %v4493, 64
      %v5094 = vpop.permute.xlu0 %5093
      %5095 = vrot.lane.b32.xlu0 %v4495, 64
      %v5096 = vpop.permute.xlu0 %5095
      %5097 = vrot.lane.b32.xlu0 %v4564, 64
      %v5098 = vpop.permute.xlu0 %5097
      %5099 = vrot.lane.b32.xlu0 %v4566, 64
      %v5100 = vpop.permute.xlu0 %5099
      %v5101 = vsel %vm631, %v5098, %v5100
      %v5102 = vsel %vm631, %v5096, %v5098
      %v5103 = vsel %vm631, %v5094, %v5096
      %v5104 = vsel %vm631, %v5100, %v5094
      %s5105 = scalar_lea.vmem %s3, 4
      %v5106 = vld [vmem:[%s5105] ss:$8 sm:$0xf]
      %v5108 = vlaneseq
      %v5109 = vshrl.u32 %v5108, 7
      %v5110 = vsub.s32 0, %v5109
      %v5111 = vrot.slane %v5106, %v5110
      %v5112 = vlaneseq
      %v5113 = vshrl.u32 %v5112, 7
      %v5114 = vsub.s32 1, %v5113
      %v5115 = vrot.slane %v5106, %v5114
      %v5116 = vlaneseq
      %v5117 = vshrl.u32 %v5116, 7
      %v5118 = vsub.s32 2, %v5117
      %v5119 = vrot.slane %v5106, %v5118
      %v5120 = vlaneseq
      %v5121 = vshrl.u32 %v5120, 7
      %v5122 = vsub.s32 3, %v5121
      %v5123 = vrot.slane %v5106, %v5122
      %v5128 = vmul.f32 %v5102, %v5111
      %v5129 = vmul.f32 %v5101, %v5115
      %v5130 = vmul.f32 %v5104, %v5119
      %v5131 = vmul.f32 %v5103, %v5123
      %5132 = vst [vmem:[#allocation2 + $0x80] sm:$0xf] %v5128
      %5133 = vst [vmem:[#allocation2 + $0x88] sm:$0xf] %v5129
      %5134 = vst [vmem:[#allocation2 + $0x90] sm:$0xf] %v5130
      %5135 = vst [vmem:[#allocation2 + $0x98] sm:$0xf] %v5131
      %5136 = vrot.lane.b32.xlu0 %v4493, 59
      %v5137 = vpop.permute.xlu0 %5136
      %5138 = vrot.lane.b32.xlu0 %v4495, 59
      %v5139 = vpop.permute.xlu0 %5138
      %5140 = vrot.lane.b32.xlu0 %v4564, 59
      %v5141 = vpop.permute.xlu0 %5140
      %5142 = vrot.lane.b32.xlu0 %v4566, 59
      %v5143 = vpop.permute.xlu0 %5142
      %vm5144 = vcmp.lt.s32.totalorder %v431, 59
      %v5145 = vsel %vm5144, %v5141, %v5143
      %v5146 = vsel %vm5144, %v5139, %v5141
      %v5147 = vsel %vm5144, %v5137, %v5139
      %v5148 = vsel %vm5144, %v5143, %v5137
      %s5149 = scalar_lea.vmem %s3, 5
      %v5150 = vld [vmem:[%s5149] ss:$8 sm:$0xf]
      %v5152 = vlaneseq
      %v5153 = vshrl.u32 %v5152, 7
      %v5154 = vsub.s32 0, %v5153
      %v5155 = vrot.slane %v5150, %v5154
      %v5156 = vlaneseq
      %v5157 = vshrl.u32 %v5156, 7
      %v5158 = vsub.s32 1, %v5157
      %v5159 = vrot.slane %v5150, %v5158
      %v5160 = vlaneseq
      %v5161 = vshrl.u32 %v5160, 7
      %v5162 = vsub.s32 2, %v5161
      %v5163 = vrot.slane %v5150, %v5162
      %v5164 = vlaneseq
      %v5165 = vshrl.u32 %v5164, 7
      %v5166 = vsub.s32 3, %v5165
      %v5167 = vrot.slane %v5150, %v5166
      %v5172 = vmul.f32 %v5146, %v5155
      %v5173 = vmul.f32 %v5145, %v5159
      %v5174 = vmul.f32 %v5148, %v5163
      %v5175 = vmul.f32 %v5147, %v5167
      %v5180 = vrot.slane %v5172, 4
      %v5181 = vrot.slane %v5173, 4
      %v5182 = vrot.slane %v5174, 4
      %v5183 = vrot.slane %v5175, 4
      %5188 = vst [vmem:[#allocation2 + $0x80] sm:$0xf0] %v5180
      %5189 = vst [vmem:[#allocation2 + $0x88] sm:$0xf0] %v5181
      %5190 = vst [vmem:[#allocation2 + $0x90] sm:$0xf0] %v5182
      %5191 = vst [vmem:[#allocation2 + $0x98] sm:$0xf0] %v5183
      %5192 = vrot.lane.b32.xlu0 %v4493, 29
      %v5193 = vpop.permute.xlu0 %5192
      %5194 = vrot.lane.b32.xlu0 %v4495, 29
      %v5195 = vpop.permute.xlu0 %5194
      %5196 = vrot.lane.b32.xlu0 %v4564, 29
      %v5197 = vpop.permute.xlu0 %5196
      %5198 = vrot.lane.b32.xlu0 %v4566, 29
      %v5199 = vpop.permute.xlu0 %5198
      %vm5200 = vcmp.lt.s32.totalorder %v431, 29
      %v5201 = vsel %vm5200, %v5197, %v5199
      %v5202 = vsel %vm5200, %v5195, %v5197
      %v5203 = vsel %vm5200, %v5193, %v5195
      %v5204 = vsel %vm5200, %v5199, %v5193
      %s5205 = scalar_lea.vmem %s3, 6
      %v5206 = vld [vmem:[%s5205] ss:$8 sm:$0xf]
      %v5208 = vlaneseq
      %v5209 = vshrl.u32 %v5208, 7
      %v5210 = vsub.s32 0, %v5209
      %v5211 = vrot.slane %v5206, %v5210
      %v5212 = vlaneseq
      %v5213 = vshrl.u32 %v5212, 7
      %v5214 = vsub.s32 1, %v5213
      %v5215 = vrot.slane %v5206, %v5214
      %v5216 = vlaneseq
      %v5217 = vshrl.u32 %v5216, 7
      %v5218 = vsub.s32 2, %v5217
      %v5219 = vrot.slane %v5206, %v5218
      %v5220 = vlaneseq
      %v5221 = vshrl.u32 %v5220, 7
      %v5222 = vsub.s32 3, %v5221
      %v5223 = vrot.slane %v5206, %v5222
      %v5228 = vmul.f32 %v5202, %v5211
      %v5229 = vmul.f32 %v5201, %v5215
      %v5230 = vmul.f32 %v5204, %v5219
      %v5231 = vmul.f32 %v5203, %v5223
      %5232 = vst [vmem:[#allocation2 + $0xc0] sm:$0xf] %v5228
      %5233 = vst [vmem:[#allocation2 + $0xc8] sm:$0xf] %v5229
      %5234 = vst [vmem:[#allocation2 + $0xd0] sm:$0xf] %v5230
      %5235 = vst [vmem:[#allocation2 + $0xd8] sm:$0xf] %v5231
      %5236 = vrot.lane.b32.xlu0 %v4493, 24
      %v5237 = vpop.permute.xlu0 %5236
      %5238 = vrot.lane.b32.xlu0 %v4495, 24
      %v5239 = vpop.permute.xlu0 %5238
      %5240 = vrot.lane.b32.xlu0 %v4564, 24
      %v5241 = vpop.permute.xlu0 %5240
      %5242 = vrot.lane.b32.xlu0 %v4566, 24
      %v5243 = vpop.permute.xlu0 %5242
      %v5244 = vsel %vm2807, %v5241, %v5243
      %v5245 = vsel %vm2807, %v5239, %v5241
      %v5246 = vsel %vm2807, %v5237, %v5239
      %v5247 = vsel %vm2807, %v5243, %v5237
      %s5248 = scalar_lea.vmem %s3, 7
      %v5249 = vld [vmem:[%s5248] ss:$8 sm:$0xf]
      %v5251 = vlaneseq
      %v5252 = vshrl.u32 %v5251, 7
      %v5253 = vsub.s32 0, %v5252
      %v5254 = vrot.slane %v5249, %v5253
      %v5255 = vlaneseq
      %v5256 = vshrl.u32 %v5255, 7
      %v5257 = vsub.s32 1, %v5256
      %v5258 = vrot.slane %v5249, %v5257
      %v5259 = vlaneseq
      %v5260 = vshrl.u32 %v5259, 7
      %v5261 = vsub.s32 2, %v5260
      %v5262 = vrot.slane %v5249, %v5261
      %v5263 = vlaneseq
      %v5264 = vshrl.u32 %v5263, 7
      %v5265 = vsub.s32 3, %v5264
      %v5266 = vrot.slane %v5249, %v5265
      %v5271 = vmul.f32 %v5245, %v5254
      %v5272 = vmul.f32 %v5244, %v5258
      %v5273 = vmul.f32 %v5247, %v5262
      %v5274 = vmul.f32 %v5246, %v5266
      %v5279 = vrot.slane %v5271, 4
      %v5280 = vrot.slane %v5272, 4
      %v5281 = vrot.slane %v5273, 4
      %v5282 = vrot.slane %v5274, 4
      %5287 = vst [vmem:[#allocation2 + $0xc0] sm:$0xf0] %v5279
      %5288 = vst [vmem:[#allocation2 + $0xc8] sm:$0xf0] %v5280
      %5289 = vst [vmem:[#allocation2 + $0xd0] sm:$0xf0] %v5281
      %5290 = vst [vmem:[#allocation2 + $0xd8] sm:$0xf0] %v5282
      %5291 = vrot.lane.b32.xlu0 %v4493, 19
      %v5292 = vpop.permute.xlu0 %5291
      %5293 = vrot.lane.b32.xlu0 %v4495, 19
      %v5294 = vpop.permute.xlu0 %5293
      %5295 = vrot.lane.b32.xlu0 %v4564, 19
      %v5296 = vpop.permute.xlu0 %5295
      %5297 = vrot.lane.b32.xlu0 %v4566, 19
      %v5298 = vpop.permute.xlu0 %5297
      %vm5299 = vcmp.lt.s32.totalorder %v431, 19
      %v5300 = vsel %vm5299, %v5296, %v5298
      %v5301 = vsel %vm5299, %v5294, %v5296
      %v5302 = vsel %vm5299, %v5292, %v5294
      %v5303 = vsel %vm5299, %v5298, %v5292
      %s5304 = scalar_lea.vmem %s3, 32
      %v5305 = vld [vmem:[%s5304] ss:$8 sm:$0xf]
      %v5307 = vlaneseq
      %v5308 = vshrl.u32 %v5307, 7
      %v5309 = vsub.s32 0, %v5308
      %v5310 = vrot.slane %v5305, %v5309
      %v5311 = vlaneseq
      %v5312 = vshrl.u32 %v5311, 7
      %v5313 = vsub.s32 1, %v5312
      %v5314 = vrot.slane %v5305, %v5313
      %v5315 = vlaneseq
      %v5316 = vshrl.u32 %v5315, 7
      %v5317 = vsub.s32 2, %v5316
      %v5318 = vrot.slane %v5305, %v5317
      %v5319 = vlaneseq
      %v5320 = vshrl.u32 %v5319, 7
      %v5321 = vsub.s32 3, %v5320
      %v5322 = vrot.slane %v5305, %v5321
      %v5327 = vmul.f32 %v5301, %v5310
      %v5328 = vmul.f32 %v5300, %v5314
      %v5329 = vmul.f32 %v5303, %v5318
      %v5330 = vmul.f32 %v5302, %v5322
      %5331 = vst [vmem:[#allocation2 + $0x100] sm:$0xf] %v5327
      %5332 = vst [vmem:[#allocation2 + $0x108] sm:$0xf] %v5328
      %5333 = vst [vmem:[#allocation2 + $0x110] sm:$0xf] %v5329
      %5334 = vst [vmem:[#allocation2 + $0x118] sm:$0xf] %v5330
      %5335 = vrot.lane.b32.xlu0 %v4493, 45
      %v5336 = vpop.permute.xlu0 %5335
      %5337 = vrot.lane.b32.xlu0 %v4495, 45
      %v5338 = vpop.permute.xlu0 %5337
      %5339 = vrot.lane.b32.xlu0 %v4564, 45
      %v5340 = vpop.permute.xlu0 %5339
      %5341 = vrot.lane.b32.xlu0 %v4566, 45
      %v5342 = vpop.permute.xlu0 %5341
      %vm5343 = vcmp.lt.s32.totalorder %v431, 45
      %v5344 = vsel %vm5343, %v5340, %v5342
      %v5345 = vsel %vm5343, %v5338, %v5340
      %v5346 = vsel %vm5343, %v5336, %v5338
      %v5347 = vsel %vm5343, %v5342, %v5336
      %s5348 = scalar_lea.vmem %s3, 33
      %v5349 = vld [vmem:[%s5348] ss:$8 sm:$0xf]
      %v5351 = vlaneseq
      %v5352 = vshrl.u32 %v5351, 7
      %v5353 = vsub.s32 0, %v5352
      %v5354 = vrot.slane %v5349, %v5353
      %v5355 = vlaneseq
      %v5356 = vshrl.u32 %v5355, 7
      %v5357 = vsub.s32 1, %v5356
      %v5358 = vrot.slane %v5349, %v5357
      %v5359 = vlaneseq
      %v5360 = vshrl.u32 %v5359, 7
      %v5361 = vsub.s32 2, %v5360
      %v5362 = vrot.slane %v5349, %v5361
      %v5363 = vlaneseq
      %v5364 = vshrl.u32 %v5363, 7
      %v5365 = vsub.s32 3, %v5364
      %v5366 = vrot.slane %v5349, %v5365
      %v5371 = vmul.f32 %v5347, %v5354
      %v5372 = vmul.f32 %v5346, %v5358
      %v5373 = vmul.f32 %v5345, %v5362
      %v5374 = vmul.f32 %v5344, %v5366
      %v5379 = vrot.slane %v5371, 4
      %v5380 = vrot.slane %v5372, 4
      %v5381 = vrot.slane %v5373, 4
      %v5382 = vrot.slane %v5374, 4
      %5387 = vst [vmem:[#allocation2 + $0x100] sm:$0xf0] %v5379
      %5388 = vst [vmem:[#allocation2 + $0x108] sm:$0xf0] %v5380
      %5389 = vst [vmem:[#allocation2 + $0x110] sm:$0xf0] %v5381
      %5390 = vst [vmem:[#allocation2 + $0x118] sm:$0xf0] %v5382
      %5391 = vrot.lane.b32.xlu0 %v4493, 40
      %v5392 = vpop.permute.xlu0 %5391
      %5393 = vrot.lane.b32.xlu0 %v4495, 40
      %v5394 = vpop.permute.xlu0 %5393
      %5395 = vrot.lane.b32.xlu0 %v4564, 40
      %v5396 = vpop.permute.xlu0 %5395
      %5397 = vrot.lane.b32.xlu0 %v4566, 40
      %v5398 = vpop.permute.xlu0 %5397
      %v5399 = vsel %vm2501, %v5396, %v5398
      %v5400 = vsel %vm2501, %v5394, %v5396
      %v5401 = vsel %vm2501, %v5392, %v5394
      %v5402 = vsel %vm2501, %v5398, %v5392
      %s5403 = scalar_lea.vmem %s3, 34
      %v5404 = vld [vmem:[%s5403] ss:$8 sm:$0xf]
      %v5406 = vlaneseq
      %v5407 = vshrl.u32 %v5406, 7
      %v5408 = vsub.s32 0, %v5407
      %v5409 = vrot.slane %v5404, %v5408
      %v5410 = vlaneseq
      %v5411 = vshrl.u32 %v5410, 7
      %v5412 = vsub.s32 1, %v5411
      %v5413 = vrot.slane %v5404, %v5412
      %v5414 = vlaneseq
      %v5415 = vshrl.u32 %v5414, 7
      %v5416 = vsub.s32 2, %v5415
      %v5417 = vrot.slane %v5404, %v5416
      %v5418 = vlaneseq
      %v5419 = vshrl.u32 %v5418, 7
      %v5420 = vsub.s32 3, %v5419
      %v5421 = vrot.slane %v5404, %v5420
      %v5426 = vmul.f32 %v5402, %v5409
      %v5427 = vmul.f32 %v5401, %v5413
      %v5428 = vmul.f32 %v5400, %v5417
      %v5429 = vmul.f32 %v5399, %v5421
      %5430 = vst [vmem:[#allocation2 + $0x140] sm:$0xf] %v5426
      %5431 = vst [vmem:[#allocation2 + $0x148] sm:$0xf] %v5427
      %5432 = vst [vmem:[#allocation2 + $0x150] sm:$0xf] %v5428
      %5433 = vst [vmem:[#allocation2 + $0x158] sm:$0xf] %v5429
      %5434 = vrot.lane.b32.xlu0 %v4493, 35
      %v5435 = vpop.permute.xlu0 %5434
      %5436 = vrot.lane.b32.xlu0 %v4495, 35
      %v5437 = vpop.permute.xlu0 %5436
      %5438 = vrot.lane.b32.xlu0 %v4564, 35
      %v5439 = vpop.permute.xlu0 %5438
      %5440 = vrot.lane.b32.xlu0 %v4566, 35
      %v5441 = vpop.permute.xlu0 %5440
      %vm5442 = vcmp.lt.s32.totalorder %v431, 35
      %v5443 = vsel %vm5442, %v5439, %v5441
      %v5444 = vsel %vm5442, %v5437, %v5439
      %v5445 = vsel %vm5442, %v5435, %v5437
      %v5446 = vsel %vm5442, %v5441, %v5435
      %s5447 = scalar_lea.vmem %s3, 35
      %v5448 = vld [vmem:[%s5447] ss:$8 sm:$0xf]
      %v5450 = vlaneseq
      %v5451 = vshrl.u32 %v5450, 7
      %v5452 = vsub.s32 0, %v5451
      %v5453 = vrot.slane %v5448, %v5452
      %v5454 = vlaneseq
      %v5455 = vshrl.u32 %v5454, 7
      %v5456 = vsub.s32 1, %v5455
      %v5457 = vrot.slane %v5448, %v5456
      %v5458 = vlaneseq
      %v5459 = vshrl.u32 %v5458, 7
      %v5460 = vsub.s32 2, %v5459
      %v5461 = vrot.slane %v5448, %v5460
      %v5462 = vlaneseq
      %v5463 = vshrl.u32 %v5462, 7
      %v5464 = vsub.s32 3, %v5463
      %v5465 = vrot.slane %v5448, %v5464
      %v5470 = vmul.f32 %v5446, %v5453
      %v5471 = vmul.f32 %v5445, %v5457
      %v5472 = vmul.f32 %v5444, %v5461
      %v5473 = vmul.f32 %v5443, %v5465
      %v5478 = vrot.slane %v5470, 4
      %v5479 = vrot.slane %v5471, 4
      %v5480 = vrot.slane %v5472, 4
      %v5481 = vrot.slane %v5473, 4
      %5486 = vst [vmem:[#allocation2 + $0x140] sm:$0xf0] %v5478
      %5487 = vst [vmem:[#allocation2 + $0x148] sm:$0xf0] %v5479
      %5488 = vst [vmem:[#allocation2 + $0x150] sm:$0xf0] %v5480
      %5489 = vst [vmem:[#allocation2 + $0x158] sm:$0xf0] %v5481
      %5490 = vrot.lane.b32.xlu0 %v4493, 5
      %v5491 = vpop.permute.xlu0 %5490
      %5492 = vrot.lane.b32.xlu0 %v4495, 5
      %v5493 = vpop.permute.xlu0 %5492
      %5494 = vrot.lane.b32.xlu0 %v4564, 5
      %v5495 = vpop.permute.xlu0 %5494
      %5496 = vrot.lane.b32.xlu0 %v4566, 5
      %v5497 = vpop.permute.xlu0 %5496
      %vm5498 = vcmp.lt.s32.totalorder %v431, 5
      %v5499 = vsel %vm5498, %v5495, %v5497
      %v5500 = vsel %vm5498, %v5493, %v5495
      %v5501 = vsel %vm5498, %v5491, %v5493
      %v5502 = vsel %vm5498, %v5497, %v5491
      %s5503 = scalar_lea.vmem %s3, 36
      %v5504 = vld [vmem:[%s5503] ss:$8 sm:$0xf]
      %v5506 = vlaneseq
      %v5507 = vshrl.u32 %v5506, 7
      %v5508 = vsub.s32 0, %v5507
      %v5509 = vrot.slane %v5504, %v5508
      %v5510 = vlaneseq
      %v5511 = vshrl.u32 %v5510, 7
      %v5512 = vsub.s32 1, %v5511
      %v5513 = vrot.slane %v5504, %v5512
      %v5514 = vlaneseq
      %v5515 = vshrl.u32 %v5514, 7
      %v5516 = vsub.s32 2, %v5515
      %v5517 = vrot.slane %v5504, %v5516
      %v5518 = vlaneseq
      %v5519 = vshrl.u32 %v5518, 7
      %v5520 = vsub.s32 3, %v5519
      %v5521 = vrot.slane %v5504, %v5520
      %v5526 = vmul.f32 %v5502, %v5509
      %v5527 = vmul.f32 %v5501, %v5513
      %v5528 = vmul.f32 %v5500, %v5517
      %v5529 = vmul.f32 %v5499, %v5521
      %5530 = vst [vmem:[#allocation2 + $0x180] sm:$0xf] %v5526
      %5531 = vst [vmem:[#allocation2 + $0x188] sm:$0xf] %v5527
      %5532 = vst [vmem:[#allocation2 + $0x190] sm:$0xf] %v5528
      %5533 = vst [vmem:[#allocation2 + $0x198] sm:$0xf] %v5529
      %v5534 = vrot.slane %v4493, 4
      %v5535 = vrot.slane %v4495, 4
      %v5536 = vrot.slane %v4564, 4
      %v5537 = vrot.slane %v4566, 4
      %5542 = vst [vmem:[#allocation2 + $0x180] sm:$0xf0] %v5534
      %5543 = vst [vmem:[#allocation2 + $0x188] sm:$0xf0] %v5535
      %5544 = vst [vmem:[#allocation2 + $0x190] sm:$0xf0] %v5536
      %5545 = vst [vmem:[#allocation2 + $0x198] sm:$0xf0] %v5537
      %5546 = vrot.lane.b32.xlu0 %v4493, 123
      %v5547 = vpop.permute.xlu0 %5546
      %5548 = vrot.lane.b32.xlu0 %v4495, 123
      %v5549 = vpop.permute.xlu0 %5548
      %5550 = vrot.lane.b32.xlu0 %v4564, 123
      %v5551 = vpop.permute.xlu0 %5550
      %5552 = vrot.lane.b32.xlu0 %v4566, 123
      %v5553 = vpop.permute.xlu0 %5552
      %vm5554 = vcmp.lt.s32.totalorder %v431, 123
      %v5555 = vsel %vm5554, %v5551, %v5553
      %v5556 = vsel %vm5554, %v5549, %v5551
      %v5557 = vsel %vm5554, %v5547, %v5549
      %v5558 = vsel %vm5554, %v5553, %v5547
      %s5559 = scalar_lea.vmem %s3, 38
      %v5560 = vld [vmem:[%s5559] ss:$8 sm:$0xf]
      %v5562 = vlaneseq
      %v5563 = vshrl.u32 %v5562, 7
      %v5564 = vsub.s32 0, %v5563
      %v5565 = vrot.slane %v5560, %v5564
      %v5566 = vlaneseq
      %v5567 = vshrl.u32 %v5566, 7
      %v5568 = vsub.s32 1, %v5567
      %v5569 = vrot.slane %v5560, %v5568
      %v5570 = vlaneseq
      %v5571 = vshrl.u32 %v5570, 7
      %v5572 = vsub.s32 2, %v5571
      %v5573 = vrot.slane %v5560, %v5572
      %v5574 = vlaneseq
      %v5575 = vshrl.u32 %v5574, 7
      %v5576 = vsub.s32 3, %v5575
      %v5577 = vrot.slane %v5560, %v5576
      %v5582 = vmul.f32 %v5557, %v5565
      %v5583 = vmul.f32 %v5556, %v5569
      %v5584 = vmul.f32 %v5555, %v5573
      %v5585 = vmul.f32 %v5558, %v5577
      %5586 = vst [vmem:[#allocation2 + $0x1c0] sm:$0xf] %v5582
      %5587 = vst [vmem:[#allocation2 + $0x1c8] sm:$0xf] %v5583
      %5588 = vst [vmem:[#allocation2 + $0x1d0] sm:$0xf] %v5584
      %5589 = vst [vmem:[#allocation2 + $0x1d8] sm:$0xf] %v5585
      %5590 = vrot.lane.b32.xlu0 %v4493, 93
      %v5591 = vpop.permute.xlu0 %5590
      %5592 = vrot.lane.b32.xlu0 %v4495, 93
      %v5593 = vpop.permute.xlu0 %5592
      %5594 = vrot.lane.b32.xlu0 %v4564, 93
      %v5595 = vpop.permute.xlu0 %5594
      %5596 = vrot.lane.b32.xlu0 %v4566, 93
      %v5597 = vpop.permute.xlu0 %5596
      %vm5598 = vcmp.lt.s32.totalorder %v431, 93
      %v5599 = vsel %vm5598, %v5595, %v5597
      %v5600 = vsel %vm5598, %v5593, %v5595
      %v5601 = vsel %vm5598, %v5591, %v5593
      %v5602 = vsel %vm5598, %v5597, %v5591
      %s5603 = scalar_lea.vmem %s3, 39
      %v5604 = vld [vmem:[%s5603] ss:$8 sm:$0xf]
      %v5606 = vlaneseq
      %v5607 = vshrl.u32 %v5606, 7
      %v5608 = vsub.s32 0, %v5607
      %v5609 = vrot.slane %v5604, %v5608
      %v5610 = vlaneseq
      %v5611 = vshrl.u32 %v5610, 7
      %v5612 = vsub.s32 1, %v5611
      %v5613 = vrot.slane %v5604, %v5612
      %v5614 = vlaneseq
      %v5615 = vshrl.u32 %v5614, 7
      %v5616 = vsub.s32 2, %v5615
      %v5617 = vrot.slane %v5604, %v5616
      %v5618 = vlaneseq
      %v5619 = vshrl.u32 %v5618, 7
      %v5620 = vsub.s32 3, %v5619
      %v5621 = vrot.slane %v5604, %v5620
      %v5626 = vmul.f32 %v5601, %v5609
      %v5627 = vmul.f32 %v5600, %v5613
      %v5628 = vmul.f32 %v5599, %v5617
      %v5629 = vmul.f32 %v5602, %v5621
      %v5634 = vrot.slane %v5626, 4
      %v5635 = vrot.slane %v5627, 4
      %v5636 = vrot.slane %v5628, 4
      %v5637 = vrot.slane %v5629, 4
      %5642 = vst [vmem:[#allocation2 + $0x1c0] sm:$0xf0] %v5634
      %5643 = vst [vmem:[#allocation2 + $0x1c8] sm:$0xf0] %v5635
      %5644 = vst [vmem:[#allocation2 + $0x1d0] sm:$0xf0] %v5636
      %5645 = vst [vmem:[#allocation2 + $0x1d8] sm:$0xf0] %v5637
      %5646 = vrot.lane.b32.xlu0 %v4493, 88
      %v5647 = vpop.permute.xlu0 %5646
      %5648 = vrot.lane.b32.xlu0 %v4495, 88
      %v5649 = vpop.permute.xlu0 %5648
      %5650 = vrot.lane.b32.xlu0 %v4564, 88
      %v5651 = vpop.permute.xlu0 %5650
      %5652 = vrot.lane.b32.xlu0 %v4566, 88
      %v5653 = vpop.permute.xlu0 %5652
      %v5654 = vsel %vm1925, %v5651, %v5653
      %v5655 = vsel %vm1925, %v5649, %v5651
      %v5656 = vsel %vm1925, %v5647, %v5649
      %v5657 = vsel %vm1925, %v5653, %v5647
      %s5658 = scalar_lea.vmem %s3, 64
      %v5659 = vld [vmem:[%s5658] ss:$8 sm:$0xf]
      %v5661 = vlaneseq
      %v5662 = vshrl.u32 %v5661, 7
      %v5663 = vsub.s32 0, %v5662
      %v5664 = vrot.slane %v5659, %v5663
      %v5665 = vlaneseq
      %v5666 = vshrl.u32 %v5665, 7
      %v5667 = vsub.s32 1, %v5666
      %v5668 = vrot.slane %v5659, %v5667
      %v5669 = vlaneseq
      %v5670 = vshrl.u32 %v5669, 7
      %v5671 = vsub.s32 2, %v5670
      %v5672 = vrot.slane %v5659, %v5671
      %v5673 = vlaneseq
      %v5674 = vshrl.u32 %v5673, 7
      %v5675 = vsub.s32 3, %v5674
      %v5676 = vrot.slane %v5659, %v5675
      %v5681 = vmul.f32 %v5656, %v5664
      %v5682 = vmul.f32 %v5655, %v5668
      %v5683 = vmul.f32 %v5654, %v5672
      %v5684 = vmul.f32 %v5657, %v5676
      %5685 = vst [vmem:[#allocation2 + $0x200] sm:$0xf] %v5681
      %5686 = vst [vmem:[#allocation2 + $0x208] sm:$0xf] %v5682
      %5687 = vst [vmem:[#allocation2 + $0x210] sm:$0xf] %v5683
      %5688 = vst [vmem:[#allocation2 + $0x218] sm:$0xf] %v5684
      %5689 = vrot.lane.b32.xlu0 %v4493, 83
      %v5690 = vpop.permute.xlu0 %5689
      %5691 = vrot.lane.b32.xlu0 %v4495, 83
      %v5692 = vpop.permute.xlu0 %5691
      %5693 = vrot.lane.b32.xlu0 %v4564, 83
      %v5694 = vpop.permute.xlu0 %5693
      %5695 = vrot.lane.b32.xlu0 %v4566, 83
      %v5696 = vpop.permute.xlu0 %5695
      %vm5697 = vcmp.lt.s32.totalorder %v431, 83
      %v5698 = vsel %vm5697, %v5694, %v5696
      %v5699 = vsel %vm5697, %v5692, %v5694
      %v5700 = vsel %vm5697, %v5690, %v5692
      %v5701 = vsel %vm5697, %v5696, %v5690
      %s5702 = scalar_lea.vmem %s3, 65
      %v5703 = vld [vmem:[%s5702] ss:$8 sm:$0xf]
      %v5705 = vlaneseq
      %v5706 = vshrl.u32 %v5705, 7
      %v5707 = vsub.s32 0, %v5706
      %v5708 = vrot.slane %v5703, %v5707
      %v5709 = vlaneseq
      %v5710 = vshrl.u32 %v5709, 7
      %v5711 = vsub.s32 1, %v5710
      %v5712 = vrot.slane %v5703, %v5711
      %v5713 = vlaneseq
      %v5714 = vshrl.u32 %v5713, 7
      %v5715 = vsub.s32 2, %v5714
      %v5716 = vrot.slane %v5703, %v5715
      %v5717 = vlaneseq
      %v5718 = vshrl.u32 %v5717, 7
      %v5719 = vsub.s32 3, %v5718
      %v5720 = vrot.slane %v5703, %v5719
      %v5725 = vmul.f32 %v5700, %v5708
      %v5726 = vmul.f32 %v5699, %v5712
      %v5727 = vmul.f32 %v5698, %v5716
      %v5728 = vmul.f32 %v5701, %v5720
      %v5733 = vrot.slane %v5725, 4
      %v5734 = vrot.slane %v5726, 4
      %v5735 = vrot.slane %v5727, 4
      %v5736 = vrot.slane %v5728, 4
      %5741 = vst [vmem:[#allocation2 + $0x200] sm:$0xf0] %v5733
      %5742 = vst [vmem:[#allocation2 + $0x208] sm:$0xf0] %v5734
      %5743 = vst [vmem:[#allocation2 + $0x210] sm:$0xf0] %v5735
      %5744 = vst [vmem:[#allocation2 + $0x218] sm:$0xf0] %v5736
      %s5745 = scalar_lea.vmem %s3, 66
      %v5746 = vld [vmem:[%s5745] ss:$8 sm:$0xf]
      %v5748 = vlaneseq
      %v5749 = vshrl.u32 %v5748, 7
      %v5750 = vsub.s32 0, %v5749
      %v5751 = vrot.slane %v5746, %v5750
      %v5752 = vlaneseq
      %v5753 = vshrl.u32 %v5752, 7
      %v5754 = vsub.s32 1, %v5753
      %v5755 = vrot.slane %v5746, %v5754
      %v5756 = vlaneseq
      %v5757 = vshrl.u32 %v5756, 7
      %v5758 = vsub.s32 2, %v5757
      %v5759 = vrot.slane %v5746, %v5758
      %v5760 = vlaneseq
      %v5761 = vshrl.u32 %v5760, 7
      %v5762 = vsub.s32 3, %v5761
      %v5763 = vrot.slane %v5746, %v5762
      %v5768 = vmul.f32 %v4904, %v5751
      %v5769 = vmul.f32 %v4907, %v5755
      %v5770 = vmul.f32 %v4906, %v5759
      %v5771 = vmul.f32 %v4905, %v5763
      %5772 = vst [vmem:[#allocation2 + $0x240] sm:$0xf] %v5768
      %5773 = vst [vmem:[#allocation2 + $0x248] sm:$0xf] %v5769
      %5774 = vst [vmem:[#allocation2 + $0x250] sm:$0xf] %v5770
      %5775 = vst [vmem:[#allocation2 + $0x258] sm:$0xf] %v5771
      %s5776 = scalar_lea.vmem %s3, 67
      %v5777 = vld [vmem:[%s5776] ss:$8 sm:$0xf]
      %v5779 = vlaneseq
      %v5780 = vshrl.u32 %v5779, 7
      %v5781 = vsub.s32 0, %v5780
      %v5782 = vrot.slane %v5777, %v5781
      %v5783 = vlaneseq
      %v5784 = vshrl.u32 %v5783, 7
      %v5785 = vsub.s32 1, %v5784
      %v5786 = vrot.slane %v5777, %v5785
      %v5787 = vlaneseq
      %v5788 = vshrl.u32 %v5787, 7
      %v5789 = vsub.s32 2, %v5788
      %v5790 = vrot.slane %v5777, %v5789
      %v5791 = vlaneseq
      %v5792 = vshrl.u32 %v5791, 7
      %v5793 = vsub.s32 3, %v5792
      %v5794 = vrot.slane %v5777, %v5793
      %v5799 = vmul.f32 %v4946, %v5782
      %v5800 = vmul.f32 %v4949, %v5786
      %v5801 = vmul.f32 %v4948, %v5790
      %v5802 = vmul.f32 %v4947, %v5794
      %v5807 = vrot.slane %v5799, 4
      %v5808 = vrot.slane %v5800, 4
      %v5809 = vrot.slane %v5801, 4
      %v5810 = vrot.slane %v5802, 4
      %5815 = vst [vmem:[#allocation2 + $0x240] sm:$0xf0] %v5807
      %5816 = vst [vmem:[#allocation2 + $0x248] sm:$0xf0] %v5808
      %5817 = vst [vmem:[#allocation2 + $0x250] sm:$0xf0] %v5809
      %5818 = vst [vmem:[#allocation2 + $0x258] sm:$0xf0] %v5810
      %s5819 = scalar_lea.vmem %s3, 68
      %v5820 = vld [vmem:[%s5819] ss:$8 sm:$0xf]
      %v5822 = vlaneseq
      %v5823 = vshrl.u32 %v5822, 7
      %v5824 = vsub.s32 0, %v5823
      %v5825 = vrot.slane %v5820, %v5824
      %v5826 = vlaneseq
      %v5827 = vshrl.u32 %v5826, 7
      %v5828 = vsub.s32 1, %v5827
      %v5829 = vrot.slane %v5820, %v5828
      %v5830 = vlaneseq
      %v5831 = vshrl.u32 %v5830, 7
      %v5832 = vsub.s32 2, %v5831
      %v5833 = vrot.slane %v5820, %v5832
      %v5834 = vlaneseq
      %v5835 = vshrl.u32 %v5834, 7
      %v5836 = vsub.s32 3, %v5835
      %v5837 = vrot.slane %v5820, %v5836
      %v5842 = vmul.f32 %v5002, %v5825
      %v5843 = vmul.f32 %v5005, %v5829
      %v5844 = vmul.f32 %v5004, %v5833
      %v5845 = vmul.f32 %v5003, %v5837
      %5846 = vst [vmem:[#allocation2 + $0x280] sm:$0xf] %v5842
      %5847 = vst [vmem:[#allocation2 + $0x288] sm:$0xf] %v5843
      %5848 = vst [vmem:[#allocation2 + $0x290] sm:$0xf] %v5844
      %5849 = vst [vmem:[#allocation2 + $0x298] sm:$0xf] %v5845
      %s5850 = scalar_lea.vmem %s3, 69
      %v5851 = vld [vmem:[%s5850] ss:$8 sm:$0xf]
      %v5853 = vlaneseq
      %v5854 = vshrl.u32 %v5853, 7
      %v5855 = vsub.s32 0, %v5854
      %v5856 = vrot.slane %v5851, %v5855
      %v5857 = vlaneseq
      %v5858 = vshrl.u32 %v5857, 7
      %v5859 = vsub.s32 1, %v5858
      %v5860 = vrot.slane %v5851, %v5859
      %v5861 = vlaneseq
      %v5862 = vshrl.u32 %v5861, 7
      %v5863 = vsub.s32 2, %v5862
      %v5864 = vrot.slane %v5851, %v5863
      %v5865 = vlaneseq
      %v5866 = vshrl.u32 %v5865, 7
      %v5867 = vsub.s32 3, %v5866
      %v5868 = vrot.slane %v5851, %v5867
      %v5873 = vmul.f32 %v5046, %v5856
      %v5874 = vmul.f32 %v5049, %v5860
      %v5875 = vmul.f32 %v5048, %v5864
      %v5876 = vmul.f32 %v5047, %v5868
      %v5881 = vrot.slane %v5873, 4
      %v5882 = vrot.slane %v5874, 4
      %v5883 = vrot.slane %v5875, 4
      %v5884 = vrot.slane %v5876, 4
      %5889 = vst [vmem:[#allocation2 + $0x280] sm:$0xf0] %v5881
      %5890 = vst [vmem:[#allocation2 + $0x288] sm:$0xf0] %v5882
      %5891 = vst [vmem:[#allocation2 + $0x290] sm:$0xf0] %v5883
      %5892 = vst [vmem:[#allocation2 + $0x298] sm:$0xf0] %v5884
      %s5893 = scalar_lea.vmem %s3, 70
      %v5894 = vld [vmem:[%s5893] ss:$8 sm:$0xf]
      %v5896 = vlaneseq
      %v5897 = vshrl.u32 %v5896, 7
      %v5898 = vsub.s32 0, %v5897
      %v5899 = vrot.slane %v5894, %v5898
      %v5900 = vlaneseq
      %v5901 = vshrl.u32 %v5900, 7
      %v5902 = vsub.s32 1, %v5901
      %v5903 = vrot.slane %v5894, %v5902
      %v5904 = vlaneseq
      %v5905 = vshrl.u32 %v5904, 7
      %v5906 = vsub.s32 2, %v5905
      %v5907 = vrot.slane %v5894, %v5906
      %v5908 = vlaneseq
      %v5909 = vshrl.u32 %v5908, 7
      %v5910 = vsub.s32 3, %v5909
      %v5911 = vrot.slane %v5894, %v5910
      %v5916 = vmul.f32 %v5101, %v5899
      %v5917 = vmul.f32 %v5104, %v5903
      %v5918 = vmul.f32 %v5103, %v5907
      %v5919 = vmul.f32 %v5102, %v5911
      %5920 = vst [vmem:[#allocation2 + $0x2c0] sm:$0xf] %v5916
      %5921 = vst [vmem:[#allocation2 + $0x2c8] sm:$0xf] %v5917
      %5922 = vst [vmem:[#allocation2 + $0x2d0] sm:$0xf] %v5918
      %5923 = vst [vmem:[#allocation2 + $0x2d8] sm:$0xf] %v5919
      %s5924 = scalar_lea.vmem %s3, 71
      %v5925 = vld [vmem:[%s5924] ss:$8 sm:$0xf]
      %v5927 = vlaneseq
      %v5928 = vshrl.u32 %v5927, 7
      %v5929 = vsub.s32 0, %v5928
      %v5930 = vrot.slane %v5925, %v5929
      %v5931 = vlaneseq
      %v5932 = vshrl.u32 %v5931, 7
      %v5933 = vsub.s32 1, %v5932
      %v5934 = vrot.slane %v5925, %v5933
      %v5935 = vlaneseq
      %v5936 = vshrl.u32 %v5935, 7
      %v5937 = vsub.s32 2, %v5936
      %v5938 = vrot.slane %v5925, %v5937
      %v5939 = vlaneseq
      %v5940 = vshrl.u32 %v5939, 7
      %v5941 = vsub.s32 3, %v5940
      %v5942 = vrot.slane %v5925, %v5941
      %v5947 = vmul.f32 %v5145, %v5930
      %v5948 = vmul.f32 %v5148, %v5934
      %v5949 = vmul.f32 %v5147, %v5938
      %v5950 = vmul.f32 %v5146, %v5942
      %v5955 = vrot.slane %v5947, 4
      %v5956 = vrot.slane %v5948, 4
      %v5957 = vrot.slane %v5949, 4
      %v5958 = vrot.slane %v5950, 4
      %5963 = vst [vmem:[#allocation2 + $0x2c0] sm:$0xf0] %v5955
      %5964 = vst [vmem:[#allocation2 + $0x2c8] sm:$0xf0] %v5956
      %5965 = vst [vmem:[#allocation2 + $0x2d0] sm:$0xf0] %v5957
      %5966 = vst [vmem:[#allocation2 + $0x2d8] sm:$0xf0] %v5958
      %s5967 = scalar_lea.vmem %s3, 96
      %v5968 = vld [vmem:[%s5967] ss:$8 sm:$0xf]
      %v5970 = vlaneseq
      %v5971 = vshrl.u32 %v5970, 7
      %v5972 = vsub.s32 0, %v5971
      %v5973 = vrot.slane %v5968, %v5972
      %v5974 = vlaneseq
      %v5975 = vshrl.u32 %v5974, 7
      %v5976 = vsub.s32 1, %v5975
      %v5977 = vrot.slane %v5968, %v5976
      %v5978 = vlaneseq
      %v5979 = vshrl.u32 %v5978, 7
      %v5980 = vsub.s32 2, %v5979
      %v5981 = vrot.slane %v5968, %v5980
      %v5982 = vlaneseq
      %v5983 = vshrl.u32 %v5982, 7
      %v5984 = vsub.s32 3, %v5983
      %v5985 = vrot.slane %v5968, %v5984
      %v5990 = vmul.f32 %v5201, %v5973
      %v5991 = vmul.f32 %v5204, %v5977
      %v5992 = vmul.f32 %v5203, %v5981
      %v5993 = vmul.f32 %v5202, %v5985
      %5994 = vst [vmem:[#allocation2 + $0x300] sm:$0xf] %v5990
      %5995 = vst [vmem:[#allocation2 + $0x308] sm:$0xf] %v5991
      %5996 = vst [vmem:[#allocation2 + $0x310] sm:$0xf] %v5992
      %5997 = vst [vmem:[#allocation2 + $0x318] sm:$0xf] %v5993
      %s5998 = scalar_lea.vmem %s3, 97
      %v5999 = vld [vmem:[%s5998] ss:$8 sm:$0xf]
      %v6001 = vlaneseq
      %v6002 = vshrl.u32 %v6001, 7
      %v6003 = vsub.s32 0, %v6002
      %v6004 = vrot.slane %v5999, %v6003
      %v6005 = vlaneseq
      %v6006 = vshrl.u32 %v6005, 7
      %v6007 = vsub.s32 1, %v6006
      %v6008 = vrot.slane %v5999, %v6007
      %v6009 = vlaneseq
      %v6010 = vshrl.u32 %v6009, 7
      %v6011 = vsub.s32 2, %v6010
      %v6012 = vrot.slane %v5999, %v6011
      %v6013 = vlaneseq
      %v6014 = vshrl.u32 %v6013, 7
      %v6015 = vsub.s32 3, %v6014
      %v6016 = vrot.slane %v5999, %v6015
      %v6021 = vmul.f32 %v5244, %v6004
      %v6022 = vmul.f32 %v5247, %v6008
      %v6023 = vmul.f32 %v5246, %v6012
      %v6024 = vmul.f32 %v5245, %v6016
      %v6029 = vrot.slane %v6021, 4
      %v6030 = vrot.slane %v6022, 4
      %v6031 = vrot.slane %v6023, 4
      %v6032 = vrot.slane %v6024, 4
      %6037 = vst [vmem:[#allocation2 + $0x300] sm:$0xf0] %v6029
      %6038 = vst [vmem:[#allocation2 + $0x308] sm:$0xf0] %v6030
      %6039 = vst [vmem:[#allocation2 + $0x310] sm:$0xf0] %v6031
      %6040 = vst [vmem:[#allocation2 + $0x318] sm:$0xf0] %v6032
      %s6041 = scalar_lea.vmem %s3, 98
      %v6042 = vld [vmem:[%s6041] ss:$8 sm:$0xf]
      %v6044 = vlaneseq
      %v6045 = vshrl.u32 %v6044, 7
      %v6046 = vsub.s32 0, %v6045
      %v6047 = vrot.slane %v6042, %v6046
      %v6048 = vlaneseq
      %v6049 = vshrl.u32 %v6048, 7
      %v6050 = vsub.s32 1, %v6049
      %v6051 = vrot.slane %v6042, %v6050
      %v6052 = vlaneseq
      %v6053 = vshrl.u32 %v6052, 7
      %v6054 = vsub.s32 2, %v6053
      %v6055 = vrot.slane %v6042, %v6054
      %v6056 = vlaneseq
      %v6057 = vshrl.u32 %v6056, 7
      %v6058 = vsub.s32 3, %v6057
      %v6059 = vrot.slane %v6042, %v6058
      %v6064 = vmul.f32 %v5300, %v6047
      %v6065 = vmul.f32 %v5303, %v6051
      %v6066 = vmul.f32 %v5302, %v6055
      %v6067 = vmul.f32 %v5301, %v6059
      %6068 = vst [vmem:[#allocation2 + $0x340] sm:$0xf] %v6064
      %6069 = vst [vmem:[#allocation2 + $0x348] sm:$0xf] %v6065
      %6070 = vst [vmem:[#allocation2 + $0x350] sm:$0xf] %v6066
      %6071 = vst [vmem:[#allocation2 + $0x358] sm:$0xf] %v6067
      %v6072 = vld [vmem:[%s8] sm:$0xf]
      %v6073 = vld [vmem:[#allocation2] sm:$0xff]
      %v6074 = vld [vmem:[#allocation2 + $0x8] sm:$0xff]
      %v6075 = vld [vmem:[#allocation2 + $0x10] sm:$0xff]
      %v6076 = vld [vmem:[#allocation2 + $0x18] sm:$0xff]
      %v6077 = vld [vmem:[#allocation2 + $0x40] sm:$0xff]
      %v6078 = vld [vmem:[#allocation2 + $0x48] sm:$0xff]
      %v6079 = vld [vmem:[#allocation2 + $0x50] sm:$0xff]
      %v6080 = vld [vmem:[#allocation2 + $0x58] sm:$0xff]
      %v6081 = vld [vmem:[#allocation2 + $0x80] sm:$0xff]
      %v6082 = vld [vmem:[#allocation2 + $0x88] sm:$0xff]
      %v6083 = vld [vmem:[#allocation2 + $0x90] sm:$0xff]
      %v6084 = vld [vmem:[#allocation2 + $0x98] sm:$0xff]
      %v6085 = vld [vmem:[#allocation2 + $0xc0] sm:$0xff]
      %v6086 = vld [vmem:[#allocation2 + $0xc8] sm:$0xff]
      %v6087 = vld [vmem:[#allocation2 + $0xd0] sm:$0xff]
      %v6088 = vld [vmem:[#allocation2 + $0xd8] sm:$0xff]
      %v6089 = vld [vmem:[#allocation2 + $0x100] sm:$0xff]
      %v6090 = vld [vmem:[#allocation2 + $0x108] sm:$0xff]
      %v6091 = vld [vmem:[#allocation2 + $0x110] sm:$0xff]
      %v6092 = vld [vmem:[#allocation2 + $0x118] sm:$0xff]
      %v6093 = vld [vmem:[#allocation2 + $0x140] sm:$0xff]
      %v6094 = vld [vmem:[#allocation2 + $0x148] sm:$0xff]
      %v6095 = vld [vmem:[#allocation2 + $0x150] sm:$0xff]
      %v6096 = vld [vmem:[#allocation2 + $0x158] sm:$0xff]
      %v6097 = vld [vmem:[#allocation2 + $0x180] sm:$0xff]
      %v6098 = vld [vmem:[#allocation2 + $0x188] sm:$0xff]
      %v6099 = vld [vmem:[#allocation2 + $0x190] sm:$0xff]
      %v6100 = vld [vmem:[#allocation2 + $0x198] sm:$0xff]
      %v6101 = vld [vmem:[#allocation2 + $0x1c0] sm:$0xff]
      %v6102 = vld [vmem:[#allocation2 + $0x1c8] sm:$0xff]
      %v6103 = vld [vmem:[#allocation2 + $0x1d0] sm:$0xff]
      %v6104 = vld [vmem:[#allocation2 + $0x1d8] sm:$0xff]
      %v6105 = vld [vmem:[#allocation2 + $0x200] sm:$0xff]
      %v6106 = vld [vmem:[#allocation2 + $0x208] sm:$0xff]
      %v6107 = vld [vmem:[#allocation2 + $0x210] sm:$0xff]
      %v6108 = vld [vmem:[#allocation2 + $0x218] sm:$0xff]
      %v6109 = vld [vmem:[#allocation2 + $0x240] sm:$0xff]
      %v6110 = vld [vmem:[#allocation2 + $0x248] sm:$0xff]
      %v6111 = vld [vmem:[#allocation2 + $0x250] sm:$0xff]
      %v6112 = vld [vmem:[#allocation2 + $0x258] sm:$0xff]
      %v6113 = vld [vmem:[#allocation2 + $0x280] sm:$0xff]
      %v6114 = vld [vmem:[#allocation2 + $0x288] sm:$0xff]
      %v6115 = vld [vmem:[#allocation2 + $0x290] sm:$0xff]
      %v6116 = vld [vmem:[#allocation2 + $0x298] sm:$0xff]
      %v6117 = vld [vmem:[#allocation2 + $0x2c0] sm:$0xff]
      %v6118 = vld [vmem:[#allocation2 + $0x2c8] sm:$0xff]
      %v6119 = vld [vmem:[#allocation2 + $0x2d0] sm:$0xff]
      %v6120 = vld [vmem:[#allocation2 + $0x2d8] sm:$0xff]
      %v6121 = vld [vmem:[#allocation2 + $0x300] sm:$0xff]
      %v6122 = vld [vmem:[#allocation2 + $0x308] sm:$0xff]
      %v6123 = vld [vmem:[#allocation2 + $0x310] sm:$0xff]
      %v6124 = vld [vmem:[#allocation2 + $0x318] sm:$0xff]
      %v6125 = vld [vmem:[#allocation2 + $0x340] sm:$0xf]
      %v6126 = vld [vmem:[#allocation2 + $0x348] sm:$0xf]
      %v6127 = vld [vmem:[#allocation2 + $0x350] sm:$0xf]
      %v6128 = vld [vmem:[#allocation2 + $0x358] sm:$0xf]
      %v6129 = vld [vmem:[%s9] sm:$0xf]
      %6131 = vset.pattern.permute.xlu0 0
      %6132 = vperm.xlu0 %6131, %v6129
      %v6133 = vpop.permute.xlu0 %6132
      %v6136 = vsel %vm1665, %v6072, 0
      %v6139 = vsel %vm1669, %v6125, 0
      %v6142 = vsel %vm1669, %v6126, 0
      %v6145 = vsel %vm1669, %v6127, 0
      %v6148 = vsel %vm1669, %v6128, 0
      %6150 = vmatprep.subr.mxu0 %v6074
      %6151 = vmatpush1.msra.mxu0 %v6073
      %6152 = vmatprep.subr.mxu0 %v6078
      %6153 = vmatpush1.msra.mxu0 %v6077
      %6154 = vmatprep.subr.mxu0 %v6082
      %6155 = vmatpush1.msra.mxu0 %v6081
      %6156 = vmatprep.subr.mxu0 %v6086
      %6157 = vmatpush1.msra.mxu0 %v6085
      %6158 = vmatprep.subr.mxu0 %v6090
      %6159 = vmatpush1.msra.mxu0 %v6089
      %6160 = vmatprep.subr.mxu0 %v6094
      %6161 = vmatpush1.msra.mxu0 %v6093
      %6162 = vmatprep.subr.mxu0 %v6098
      %6163 = vmatpush1.msra.mxu0 %v6097
      %6164 = vmatprep.subr.mxu0 %v6102
      %6165 = vmatpush1.msra.mxu0 %v6101
      %6166 = vmatprep.subr.mxu0 %v6106
      %6167 = vmatpush1.msra.mxu0 %v6105
      %6168 = vmatprep.subr.mxu0 %v6110
      %6169 = vmatpush1.msra.mxu0 %v6109
      %6170 = vmatprep.subr.mxu0 %v6114
      %6171 = vmatpush1.msra.mxu0 %v6113
      %6172 = vmatprep.subr.mxu0 %v6118
      %6173 = vmatpush1.msra.mxu0 %v6117
      %6174 = vmatprep.subr.mxu0 %v6122
      %6175 = vmatpush1.msra.mxu0 %v6121
      %6176 = vmatprep.subr.mxu0 %v6142
      %6177 = vmatpush1.msra.mxu0 %v6139
      %6178 = vmatprep.subr.mxu0 0.0
      %6179 = vmatpush1.msra.mxu0 0.0
      %6180 = vmatprep.subr.mxu0 0.0
      %6181 = vmatpush1.msra.mxu0 0.0
      %6182 = vmatprep.subr.mxu0 0.0
      %6183 = vmatpush1.msra.mxu0 0.0
      %6184 = vmatprep.subr.mxu0 0.0
      %6185 = vmatpush1.msra.mxu0 0.0
      %6186 = vmatprep.subr.mxu0 0.0
      %6187 = vmatpush1.msra.mxu0 0.0
      %6188 = vmatprep.subr.mxu0 0.0
      %6189 = vmatpush1.msra.mxu0 0.0
      %6190 = vmatprep.subr.mxu0 0.0
      %6191 = vmatpush1.msra.mxu0 0.0
      %6192 = vmatprep.subr.mxu0 0.0
      %6193 = vmatpush1.msra.mxu0 0.0
      %6194 = vmatprep.subr.mxu0 0.0
      %6195 = vmatpush1.msra.mxu0 0.0
      %6196 = vmatprep.subr.mxu0 0.0
      %6197 = vmatpush1.msra.mxu0 0.0
      %6198 = vmatprep.subr.mxu0 0.0
      %6199 = vmatpush1.msra.mxu0 0.0
      %6200 = vmatprep.subr.mxu0 0.0
      %6201 = vmatpush1.msra.mxu0 0.0
      %6202 = vmatprep.subr.mxu0 0.0
      %6203 = vmatpush1.msra.mxu0 0.0
      %6204 = vmatprep.subr.mxu0 0.0
      %6205 = vmatpush1.msra.mxu0 0.0
      %6206 = vmatprep.subr.mxu0 0.0
      %6207 = vmatpush1.msra.mxu0 0.0
      %6208 = vmatprep.subr.mxu0 0.0
      %6209 = vmatpush1.msra.mxu0 0.0
      %6210 = vmatprep.subr.mxu0 0.0
      %6211 = vmatpush1.msra.mxu0 0.0
      %6212 = vmatprep.subr.mxu0 0.0
      %6213 = vmatpush1.msra.mxu0 0.0
      %6214 = vmatprep.mubr.f32.mxu0 0.0
      %6215 = vmatmul.mubr.f32.gmra.mrb[0].mxu0 %v6136
      %v6216 = vpop.f32.mrb[0].mxu0
      %v6217 = vadd.f32 %v6133, %v6216
      %v6218 = vpop.f32.mrb[0].mxu0
      %v6219 = vadd.f32 %v6133, %v6218
      %6220 = vdwg.mxu0
      %6221 = vmatprep.subr.mxu0 %v6076
      %6222 = vmatpush1.msra.mxu0 %v6075
      %6223 = vmatprep.subr.mxu0 %v6080
      %6224 = vmatpush1.msra.mxu0 %v6079
      %6225 = vmatprep.subr.mxu0 %v6084
      %6226 = vmatpush1.msra.mxu0 %v6083
      %6227 = vmatprep.subr.mxu0 %v6088
      %6228 = vmatpush1.msra.mxu0 %v6087
      %6229 = vmatprep.subr.mxu0 %v6092
      %6230 = vmatpush1.msra.mxu0 %v6091
      %6231 = vmatprep.subr.mxu0 %v6096
      %6232 = vmatpush1.msra.mxu0 %v6095
      %6233 = vmatprep.subr.mxu0 %v6100
      %6234 = vmatpush1.msra.mxu0 %v6099
      %6235 = vmatprep.subr.mxu0 %v6104
      %6236 = vmatpush1.msra.mxu0 %v6103
      %6237 = vmatprep.subr.mxu0 %v6108
      %6238 = vmatpush1.msra.mxu0 %v6107
      %6239 = vmatprep.subr.mxu0 %v6112
      %6240 = vmatpush1.msra.mxu0 %v6111
      %6241 = vmatprep.subr.mxu0 %v6116
      %6242 = vmatpush1.msra.mxu0 %v6115
      %6243 = vmatprep.subr.mxu0 %v6120
      %6244 = vmatpush1.msra.mxu0 %v6119
      %6245 = vmatprep.subr.mxu0 %v6124
      %6246 = vmatpush1.msra.mxu0 %v6123
      %6247 = vmatprep.subr.mxu0 %v6148
      %6248 = vmatpush1.msra.mxu0 %v6145
      %6249 = vmatprep.subr.mxu0 0.0
      %6250 = vmatpush1.msra.mxu0 0.0
      %6251 = vmatprep.subr.mxu0 0.0
      %6252 = vmatpush1.msra.mxu0 0.0
      %6253 = vmatprep.subr.mxu0 0.0
      %6254 = vmatpush1.msra.mxu0 0.0
      %6255 = vmatprep.subr.mxu0 0.0
      %6256 = vmatpush1.msra.mxu0 0.0
      %6257 = vmatprep.subr.mxu0 0.0
      %6258 = vmatpush1.msra.mxu0 0.0
      %6259 = vmatprep.subr.mxu0 0.0
      %6260 = vmatpush1.msra.mxu0 0.0
      %6261 = vmatprep.subr.mxu0 0.0
      %6262 = vmatpush1.msra.mxu0 0.0
      %6263 = vmatprep.subr.mxu0 0.0
      %6264 = vmatpush1.msra.mxu0 0.0
      %6265 = vmatprep.subr.mxu0 0.0
      %6266 = vmatpush1.msra.mxu0 0.0
      %6267 = vmatprep.subr.mxu0 0.0
      %6268 = vmatpush1.msra.mxu0 0.0
      %6269 = vmatprep.subr.mxu0 0.0
      %6270 = vmatpush1.msra.mxu0 0.0
      %6271 = vmatprep.subr.mxu0 0.0
      %6272 = vmatpush1.msra.mxu0 0.0
      %6273 = vmatprep.subr.mxu0 0.0
      %6274 = vmatpush1.msra.mxu0 0.0
      %6275 = vmatprep.subr.mxu0 0.0
      %6276 = vmatpush1.msra.mxu0 0.0
      %6277 = vmatprep.subr.mxu0 0.0
      %6278 = vmatpush1.msra.mxu0 0.0
      %6279 = vmatprep.subr.mxu0 0.0
      %6280 = vmatpush1.msra.mxu0 0.0
      %6281 = vmatprep.subr.mxu0 0.0
      %6282 = vmatpush1.msra.mxu0 0.0
      %6283 = vmatprep.subr.mxu0 0.0
      %6284 = vmatpush1.msra.mxu0 0.0
      %6285 = vmatprep.mubr.f32.mxu0 0.0
      %6286 = vmatmul.mubr.f32.gmra.mrb[0].mxu0 %v6136
      %v6287 = vpop.f32.mrb[0].mxu0
      %v6288 = vadd.f32 %v6133, %v6287
      %v6289 = vpop.f32.mrb[0].mxu0
      %v6290 = vadd.f32 %v6133, %v6289
      %6291 = vdwg.mxu0
      %v6292 = vld [vmem:[%s10] sm:$0xf]
      %v6293 = vld [vmem:[%s11] sm:$0xf]
      %6295 = vset.pattern.permute.xlu0 0
      %6296 = vperm.xlu0 %6295, %v6293
      %v6297 = vpop.permute.xlu0 %6296
      %v6300 = vsel %vm4575, %v6292, 0
      %v6303 = vsel %vm1669, %v6217, 0
      %v6306 = vsel %vm1669, %v6219, 0
      %v6309 = vsel %vm1669, %v6288, 0
      %v6312 = vsel %vm1669, %v6290, 0
      %6314 = vmatprep.subr.mxu0 %v6306
      %6315 = vmatpush1.msra.mxu0 %v6303
      %6316 = vmatprep.subr.mxu0 0.0
      %6317 = vmatpush1.msra.mxu0 0.0
      %6318 = vmatprep.subr.mxu0 0.0
      %6319 = vmatpush1.msra.mxu0 0.0
      %6320 = vmatprep.subr.mxu0 0.0
      %6321 = vmatpush1.msra.mxu0 0.0
      %6322 = vmatprep.subr.mxu0 0.0
      %6323 = vmatpush1.msra.mxu0 0.0
      %6324 = vmatprep.subr.mxu0 0.0
      %6325 = vmatpush1.msra.mxu0 0.0
      %6326 = vmatprep.subr.mxu0 0.0
      %6327 = vmatpush1.msra.mxu0 0.0
      %6328 = vmatprep.subr.mxu0 0.0
      %6329 = vmatpush1.msra.mxu0 0.0
      %6330 = vmatprep.subr.mxu0 0.0
      %6331 = vmatpush1.msra.mxu0 0.0
      %6332 = vmatprep.subr.mxu0 0.0
      %6333 = vmatpush1.msra.mxu0 0.0
      %6334 = vmatprep.subr.mxu0 0.0
      %6335 = vmatpush1.msra.mxu0 0.0
      %6336 = vmatprep.subr.mxu0 0.0
      %6337 = vmatpush1.msra.mxu0 0.0
      %6338 = vmatprep.subr.mxu0 0.0
      %6339 = vmatpush1.msra.mxu0 0.0
      %6340 = vmatprep.subr.mxu0 0.0
      %6341 = vmatpush1.msra.mxu0 0.0
      %6342 = vmatprep.subr.mxu0 0.0
      %6343 = vmatpush1.msra.mxu0 0.0
      %6344 = vmatprep.subr.mxu0 0.0
      %6345 = vmatpush1.msra.mxu0 0.0
      %6346 = vmatprep.subr.mxu0 0.0
      %6347 = vmatpush1.msra.mxu0 0.0
      %6348 = vmatprep.subr.mxu0 0.0
      %6349 = vmatpush1.msra.mxu0 0.0
      %6350 = vmatprep.subr.mxu0 0.0
      %6351 = vmatpush1.msra.mxu0 0.0
      %6352 = vmatprep.subr.mxu0 0.0
      %6353 = vmatpush1.msra.mxu0 0.0
      %6354 = vmatprep.subr.mxu0 0.0
      %6355 = vmatpush1.msra.mxu0 0.0
      %6356 = vmatprep.subr.mxu0 0.0
      %6357 = vmatpush1.msra.mxu0 0.0
      %6358 = vmatprep.subr.mxu0 0.0
      %6359 = vmatpush1.msra.mxu0 0.0
      %6360 = vmatprep.subr.mxu0 0.0
      %6361 = vmatpush1.msra.mxu0 0.0
      %6362 = vmatprep.subr.mxu0 0.0
      %6363 = vmatpush1.msra.mxu0 0.0
      %6364 = vmatprep.subr.mxu0 0.0
      %6365 = vmatpush1.msra.mxu0 0.0
      %6366 = vmatprep.subr.mxu0 0.0
      %6367 = vmatpush1.msra.mxu0 0.0
      %6368 = vmatprep.subr.mxu0 0.0
      %6369 = vmatpush1.msra.mxu0 0.0
      %6370 = vmatprep.subr.mxu0 0.0
      %6371 = vmatpush1.msra.mxu0 0.0
      %6372 = vmatprep.subr.mxu0 0.0
      %6373 = vmatpush1.msra.mxu0 0.0
      %6374 = vmatprep.subr.mxu0 0.0
      %6375 = vmatpush1.msra.mxu0 0.0
      %6376 = vmatprep.subr.mxu0 0.0
      %6377 = vmatpush1.msra.mxu0 0.0
      %6378 = vmatprep.mubr.f32.mxu0 0.0
      %6379 = vmatmul.mubr.f32.gmra.mrb[0].mxu0 %v6300
      %v6380 = vpop.f32.mrb[0].mxu0
      %v6381 = vadd.f32 %v6297, %v6380
      %v6382 = vpop.f32.mrb[0].mxu0
      %v6383 = vadd.f32 %v6297, %v6382
      %6384 = vdwg.mxu0
      %6385 = vmatprep.subr.mxu0 %v6312
      %6386 = vmatpush1.msra.mxu0 %v6309
      %6387 = vmatprep.subr.mxu0 0.0
      %6388 = vmatpush1.msra.mxu0 0.0
      %6389 = vmatprep.subr.mxu0 0.0
      %6390 = vmatpush1.msra.mxu0 0.0
      %6391 = vmatprep.subr.mxu0 0.0
      %6392 = vmatpush1.msra.mxu0 0.0
      %6393 = vmatprep.subr.mxu0 0.0
      %6394 = vmatpush1.msra.mxu0 0.0
      %6395 = vmatprep.subr.mxu0 0.0
      %6396 = vmatpush1.msra.mxu0 0.0
      %6397 = vmatprep.subr.mxu0 0.0
      %6398 = vmatpush1.msra.mxu0 0.0
      %6399 = vmatprep.subr.mxu0 0.0
      %6400 = vmatpush1.msra.mxu0 0.0
      %6401 = vmatprep.subr.mxu0 0.0
      %6402 = vmatpush1.msra.mxu0 0.0
      %6403 = vmatprep.subr.mxu0 0.0
      %6404 = vmatpush1.msra.mxu0 0.0
      %6405 = vmatprep.subr.mxu0 0.0
      %6406 = vmatpush1.msra.mxu0 0.0
      %6407 = vmatprep.subr.mxu0 0.0
      %6408 = vmatpush1.msra.mxu0 0.0
      %6409 = vmatprep.subr.mxu0 0.0
      %6410 = vmatpush1.msra.mxu0 0.0
      %6411 = vmatprep.subr.mxu0 0.0
      %6412 = vmatpush1.msra.mxu0 0.0
      %6413 = vmatprep.subr.mxu0 0.0
      %6414 = vmatpush1.msra.mxu0 0.0
      %6415 = vmatprep.subr.mxu0 0.0
      %6416 = vmatpush1.msra.mxu0 0.0
      %6417 = vmatprep.subr.mxu0 0.0
      %6418 = vmatpush1.msra.mxu0 0.0
      %6419 = vmatprep.subr.mxu0 0.0
      %6420 = vmatpush1.msra.mxu0 0.0
      %6421 = vmatprep.subr.mxu0 0.0
      %6422 = vmatpush1.msra.mxu0 0.0
      %6423 = vmatprep.subr.mxu0 0.0
      %6424 = vmatpush1.msra.mxu0 0.0
      %6425 = vmatprep.subr.mxu0 0.0
      %6426 = vmatpush1.msra.mxu0 0.0
      %6427 = vmatprep.subr.mxu0 0.0
      %6428 = vmatpush1.msra.mxu0 0.0
      %6429 = vmatprep.subr.mxu0 0.0
      %6430 = vmatpush1.msra.mxu0 0.0
      %6431 = vmatprep.subr.mxu0 0.0
      %6432 = vmatpush1.msra.mxu0 0.0
      %6433 = vmatprep.subr.mxu0 0.0
      %6434 = vmatpush1.msra.mxu0 0.0
      %6435 = vmatprep.subr.mxu0 0.0
      %6436 = vmatpush1.msra.mxu0 0.0
      %6437 = vmatprep.subr.mxu0 0.0
      %6438 = vmatpush1.msra.mxu0 0.0
      %6439 = vmatprep.subr.mxu0 0.0
      %6440 = vmatpush1.msra.mxu0 0.0
      %6441 = vmatprep.subr.mxu0 0.0
      %6442 = vmatpush1.msra.mxu0 0.0
      %6443 = vmatprep.subr.mxu0 0.0
      %6444 = vmatpush1.msra.mxu0 0.0
      %6445 = vmatprep.subr.mxu0 0.0
      %6446 = vmatpush1.msra.mxu0 0.0
      %6447 = vmatprep.subr.mxu0 0.0
      %6448 = vmatpush1.msra.mxu0 0.0
      %6449 = vmatprep.mubr.f32.mxu0 0.0
      %6450 = vmatmul.mubr.f32.gmra.mrb[0].mxu0 %v6300
      %v6451 = vpop.f32.mrb[0].mxu0
      %v6452 = vadd.f32 %v6297, %v6451
      %v6453 = vpop.f32.mrb[0].mxu0
      %v6454 = vadd.f32 %v6297, %v6453
      %6455 = vdwg.mxu0
      %v6456 = vmax.f32 %v6381, 0.0
      %v6457 = vmax.f32 %v6383, 0.0
      %v6458 = vmax.f32 %v6452, 0.0
      %v6459 = vmax.f32 %v6454, 0.0
      %v6460 = vmax.f32 %v1749, 0.0
      %v6461 = vmax.f32 %v1751, 0.0
      %v6462 = vmax.f32 %v1820, 0.0
      %v6463 = vmax.f32 %v1822, 0.0
      %v6468 = vcombine.low %v6460, %v6461
      %v6469 = vcombine.low %v6462, %v6463
      %v6472 = vadd.f32 %v414, %v6468
      %v6473 = vadd.f32 %v415, %v6469
      %v6478 = vcombine.low %v4887, %v4888
      %v6479 = vcombine.low %v4889, %v4890
      %v6482 = vadd.f32 %v6472, %v6478
      %v6483 = vadd.f32 %v6473, %v6479
      %v6488 = vcombine.low %v4891, %v4892
      %v6489 = vcombine.low %v4893, %v4894
      %v6492 = vadd.f32 %v6482, %v6488
      %v6493 = vadd.f32 %v6483, %v6489
      %v6498 = vcombine.low %v6456, %v6457
      %v6499 = vcombine.low %v6458, %v6459
      %v6502 = vadd.f32 %v6492, %v6498
      %v6503 = vadd.f32 %v6493, %v6499
      %6504 = vst [vmem:[%s413] sm:$0xff] %v6502
      %6505 = vst [vmem:[%s413 + $0x8] sm:$0xff] %v6503
      %p6506 = scmp.lt.s32.totalorder %s23, 1
      %s6507 = scalar_select %p6506, %s23, 1
      %s6508 = smul.addr %s6507, 4
      %s6509 = smul.addr %s6508, 4
      %s6510 = scalar_lea.vmem %s12, %s6509
      // Predicated region
      $region69: #{dacblock_forward.1} parent=67 // pred_check
        %p6511 = pneg %p298
      $region70: #{dacblock_forward.1} parent=67 // pred_check_branch
        %6513 = sbr.rel (%p6511) target = $region72
      $region71: #{dacblock_forward.1} parent=67 // pred_region
        _
      $region72: #{dacblock_forward.1} parent=67 // pred_fallthru
        _
    $region68: #{dacblock_forward.1} parent=5 // pred_fallthru
      _
    %p6514 = scmp.le.s32.totalorder 2, %s18
    // Predicated region
    $region73: #{dacblock_forward.1} parent=5 // pred_check
      %p6515 = pneg %p6514
    $region74: #{dacblock_forward.1} parent=5 // pred_check_branch
      %6517 = sbr.rel (%p6515) target = $region76
    $region75: #{dacblock_forward.1} parent=5 // pred_region
      %s6518 = ssub.s32 %s18, 2
      // Predicated region
      $region77: #{dacblock_forward.1} parent=75 // pred_check
        %p6519 = pneg %p304
      $region78: #{dacblock_forward.1} parent=75 // pred_check_branch
        %6521 = sbr.rel (%p6519) target = $region80
      $region79: #{dacblock_forward.1} parent=75 // pred_region
        %p6522 = scmp.lt.s32.totalorder %s24, 1
        %s6523 = scalar_select %p6522, %s24, 1
        %s6524 = smul.addr %s6523, 4
        %s6525 = smul.addr %s6524, 4
        %s6526 = scalar_lea.vmem %s12, %s6525
      $region80: #{dacblock_forward.1} parent=75 // pred_fallthru
        _
    $region76: #{dacblock_forward.1} parent=5 // pred_fallthru
      _
  $region6: #{dacblock_forward.1} parent=0 // loop_footer
    %s22 = sadd.s32 1, %s18
  $region7: #{dacblock_forward.1} parent=0 // loop_footer_branch
    %17 = sbr.rel target = $region3
  $region8: #{dacblock_forward.1} parent=0 // loop_exit
    _

</llo_original>
